<compile_context>
chip_gen: v7x
topology: tpu7x:2x2x1
jax: 0.10.0
libtpu: 0.0.40
codegen_flags: <defaults>
</compile_context>

<pallas_src>
import functools

import numpy as np
import jax
import jax.numpy as jnp
from jax import lax
from jax.experimental import pallas as pl
from jax.experimental.pallas import tpu as pltpu

H = 25                      # hidden size
G4 = 4 * H                  # packed gates (order: i, f, o, g)
NUM_HEADS = 5
OUT_FEATS = 5
HF = NUM_HEADS * OUT_FEATS  # 25
T_HIST = 20
T_PRED = 30
N_OTHERS = 3
N_LANE = 4


# ----------------------------------------------------------------------------
# Fused Pallas kernel (entire forward pass)
# ----------------------------------------------------------------------------
def model_kernel(B, NE_pad,
                 x_ref,
                 enc_wih_ref, enc_whh_ref, enc_hmask_ref,
                 dec_wih_ref, dec_whh_ref, dec_b_ref,
                 gat_fcw_ref, gat_wal_ref, gat_war_ref, gat_bias_ref,
                 gat_smask_ref, sel_g_ref, sel_gT_ref, sel_bT_ref, expand_ref,
                 lin_w_ref, lin_b_ref,
                 out_ref, dec_hs_ref):
    f32 = jnp.float32

    # ---------------- fused history encoders (one block-diag LSTM) -----------
    # x_ref        : [T_HIST*NE_pad, 9]  block-diag input + one-hot bias column
    # enc_wih_ref  : [9, 4H]   enc_whh_ref : [3H, 4H]   enc_hmask_ref : [NE_pad, 3H]
    xproj = jnp.dot(x_ref[...], enc_wih_ref[...], preferred_element_type=f32)
    whh_blk = enc_whh_ref[...]
    hmask = enc_hmask_ref[...]
    h = jnp.zeros((NE_pad, H), f32)
    c = jnp.zeros((NE_pad, H), f32)
    for t in range(T_HIST):
        h3 = jnp.concatenate([h, h, h], axis=1) * hmask               # [NE_pad, 3H]
        g = xproj[t * NE_pad:(t + 1) * NE_pad, :] + jnp.dot(
            h3, whh_blk, preferred_element_type=f32)                  # [NE_pad, 4H]
        ifo = jax.nn.sigmoid(g[:, :3 * H])                            # i|f|o (1 EUP op)
        gg = jnp.tanh(g[:, 3 * H:])                                   # g     (1 EUP op)
        c = ifo[:, H:2 * H] * c + ifo[:, :H] * gg
        h = ifo[:, 2 * H:] * jnp.tanh(c)

    # row layout: agent(B) | lane(4B) | av(B) | others(3B) | pad
    agent_hn = h[:B, :]
    agent_cn = c[:B, :]
    lane_cn = c[B:5 * B, :]
    av_cn = c[5 * B:6 * B, :]
    ot_cn = c[6 * B:9 * B, :]

    # TODO(synk): env_lane_info (mean of lane codes per env) is computed in the
    # reference forward but never consumed downstream; intentionally skipped.

    # ---------------- fused hetero GAT (av_env | others_env | lane_env) ------
    dst = agent_cn                                            # env_agent_info (1 agent/env)
    src = jnp.concatenate([av_cn, ot_cn, lane_cn], axis=0)    # [8B, H], rel order 0|1|2
    src3 = jnp.concatenate([src, src, src], axis=1) * gat_smask_ref[...]   # [8B, 3H]
    fs = jnp.dot(src3, gat_fcw_ref[...], preferred_element_type=f32)       # [8B, HF]
    el = jnp.dot(src3, gat_wal_ref[...], preferred_element_type=f32)       # [8B, NH]
    er = jnp.concatenate(
        [jnp.dot(dst, gat_war_ref[r], preferred_element_type=f32) for r in range(3)],
        axis=0)                                                            # [3B, NH]
    e = el + jnp.dot(sel_g_ref[...], er, preferred_element_type=f32)       # [8B, NH]
    e = jnp.where(e > 0, e, 0.2 * e)                                       # LeakyReLU(0.2)
    e = e - jnp.max(e, axis=0, keepdims=True)   # column shift: softmax-invariant per group
    p = jnp.exp(e)
    denom = jnp.dot(sel_gT_ref[...], p, preferred_element_type=f32)        # [3B, NH]
    inv = pl.reciprocal(jnp.maximum(denom, 1e-20), approx=True)
    alpha = p * jnp.dot(sel_g_ref[...], inv, preferred_element_type=f32)   # [8B, NH]
    a_exp = jnp.dot(alpha, expand_ref[...], preferred_element_type=f32)    # [8B, HF]
    env_sum = jnp.dot(sel_bT_ref[...], a_exp * fs,
                      preferred_element_type=f32)                          # [B, HF]
    env_code = (env_sum + gat_bias_ref[...]) * (1.0 / 3.0)                 # mean aggregate

    # ---------------- decoder LSTM over t = 0.0, 0.1, ..., 2.9 ---------------
    dec_whh = dec_whh_ref[...]                                             # [H, 4H]
    t_col = lax.broadcasted_iota(jnp.int32, (T_PRED, 1), 0).astype(f32) * 0.1
    dec_xproj = t_col * dec_wih_ref[...] + dec_b_ref[...]                  # [T_PRED, 4H]

    hd = agent_hn
    cd = agent_cn + env_code
    for t in range(T_PRED):
        g = dec_xproj[t:t + 1, :] + jnp.dot(hd, dec_whh, preferred_element_type=f32)
        ifo = jax.nn.sigmoid(g[:, :3 * H])
        gg = jnp.tanh(g[:, 3 * H:])
        cd = ifo[:, H:2 * H] * cd + ifo[:, :H] * gg
        hd = ifo[:, 2 * H:] * jnp.tanh(cd)
        dec_hs_ref[t * B:(t + 1) * B, :] = hd                              # stash hidden

    # single fused 25 -> 2 projection over all decoded steps
    hs_all = dec_hs_ref[...]                                               # [T_PRED*B, H]
    out_ref[...] = jnp.dot(hs_all, lin_w_ref[...],
                           preferred_element_type=f32) + lin_b_ref[...]    # [T_PRED*B, 2]


# ----------------------------------------------------------------------------
# Static graph constants (regular scene: 1 agent / 1 av / 3 others / 4 lanes)
# ----------------------------------------------------------------------------
def _graph_constants(B):
    NE = 9 * B
    NE_pad = ((NE + 7) // 8) * 8
    NS = 8 * B

    # encoder id per row: agent(B)+lane(4B) -> 0, av(B) -> 1, others(3B) -> 2
    e_row = np.concatenate([np.zeros(5 * B), np.ones(B),
                            np.full(3 * B, 2)]).astype(np.int64)
    onehot_e = np.zeros((NE_pad, 3), np.float32)
    onehot_e[np.arange(NE), e_row] = 1.0
    enc_hmask = np.kron(onehot_e, np.ones((1, H), np.float32))         # [NE_pad, 3H]

    # GAT src rows: av(B) rel0 | others(3B) rel1 | lane(4B) rel2
    rel_row = np.concatenate([np.zeros(B), np.ones(3 * B),
                              np.full(4 * B, 2)]).astype(np.int64)
    bat_row = np.concatenate([np.arange(B), np.arange(3 * B) // 3,
                              np.arange(4 * B) // 4]).astype(np.int64)
    onehot_r = np.zeros((NS, 3), np.float32)
    onehot_r[np.arange(NS), rel_row] = 1.0
    gat_smask = np.kron(onehot_r, np.ones((1, H), np.float32))         # [NS, 3H]

    gid = rel_row * B + bat_row                                        # (rel, batch) group
    sel_g = np.zeros((NS, 3 * B), np.float32)
    sel_g[np.arange(NS), gid] = 1.0
    sel_bT = np.zeros((B, NS), np.float32)
    sel_bT[bat_row, np.arange(NS)] = 1.0

    return (NE_pad, jnp.asarray(onehot_e), jnp.asarray(enc_hmask),
            jnp.asarray(gat_smask), jnp.asarray(sel_g),
            jnp.asarray(sel_g.T), jnp.asarray(sel_bT))


# ----------------------------------------------------------------------------
# Wrapper
# ----------------------------------------------------------------------------
@jax.jit
def my_model_forward(params, agent_state, av_state, others_state, lane_state):
    B = agent_state.shape[0]
    (NE_pad, onehot_e, enc_hmask, gat_smask,
     sel_g, sel_gT, sel_bT) = _graph_constants(B)

    # node rows per time step: agent(B) | lane(4B) | av(B) | others(3B) | pad
    agent_t = jnp.transpose(agent_state[:, :T_HIST, :], (1, 0, 2))     # [20, B, 2]
    lane_t = jnp.transpose(lane_state, (1, 0, 2))                      # [20, 4B, 2]
    av_t = jnp.transpose(av_state, (1, 0, 2))                          # [20, B, 2]
    ot_t = jnp.transpose(others_state, (1, 0, 2))                      # [20, 3B, 2]
    x_all = jnp.concatenate([agent_t, lane_t, av_t, ot_t], axis=1)     # [20, 9B, 2]
    x_all = jnp.pad(x_all, ((0, 0), (0, NE_pad - 9 * B), (0, 0)))      # [20, NE_pad, 2]
    # block-diag input columns (0..5) + one-hot bias indicator columns (6..8)
    x_blk = (x_all[:, :, None, :] * onehot_e[None, :, :, None]).reshape(
        T_HIST, NE_pad, 6)
    x_aug = jnp.concatenate(
        [x_blk, jnp.broadcast_to(onehot_e[None], (T_HIST, NE_pad, 3))],
        axis=-1).reshape(T_HIST * NE_pad, 9)

    pred_flat = pl.pallas_call(
        functools.partial(model_kernel, B, NE_pad),
        out_shape=jax.ShapeDtypeStruct((T_PRED * B, 2), jnp.float32),
        scratch_shapes=[pltpu.VMEM((T_PRED * B, H), jnp.float32)],
    )(x_aug,
      params["enc_wih_pack"], params["enc_whh_blk"], enc_hmask,
      params["dec_wih"], params["dec_whh"], params["dec_b"],
      params["gat_fcw_blk"], params["gat_wal_blk"], params["gat_war"],
      params["gat_bias_sum"],
      gat_smask, sel_g, sel_gT, sel_bT, params["expand"],
      params["lin_w"], params["lin_b"])

    # [T_PRED*B, 2] (time-major) -> [B, T_PRED, 2]
    return pred_flat.reshape(T_PRED, B, 2).transpose(1, 0, 2)


# ----------------------------------------------------------------------------
# Parameter init (deterministic, synthetic; weights pre-packed for the kernel)
# ----------------------------------------------------------------------------
def init_params(key):
    ks = jax.random.split(key, 13)
    k = 1.0 / (H ** 0.5)

    def u(kk, shape, scale):
        return jax.random.uniform(kk, shape, jnp.float32, -scale, scale)

    # packed LSTM weights; encoder 0 = agent (also used for lanes), 1 = av, 2 = others
    enc_wih = u(ks[0], (3, 2, G4), k)
    enc_whh = u(ks[1], (3, H, G4), k)
    enc_b = u(ks[2], (3, 1, G4), k) + u(ks[3], (3, 1, G4), k)      # b_ih + b_hh
    dec_wih = u(ks[4], (1, G4), k)
    dec_whh = u(ks[5], (H, G4), k)
    dec_b = u(ks[6], (1, G4), k) + u(ks[7], (1, G4), k)

    # block-diag input projection with per-encoder bias folded into rows 6..8
    wih_pack = jnp.zeros((9, G4), jnp.float32)
    for e in range(3):
        wih_pack = wih_pack.at[2 * e:2 * e + 2, :].set(enc_wih[e])
        wih_pack = wih_pack.at[6 + e, :].set(enc_b[e, 0])
    whh_blk = enc_whh.reshape(3 * H, G4)                            # [3H, 4H]

    # GAT params, relation order 0 = av_env, 1 = others_env, 2 = lane_env
    fc_w = 0.1 * jax.random.normal(ks[8], (3, NUM_HEADS, H, OUT_FEATS), jnp.float32)
    attn_l = 0.1 * jax.random.normal(ks[9], (3, NUM_HEADS, OUT_FEATS), jnp.float32)
    attn_r = 0.1 * jax.random.normal(ks[10], (3, NUM_HEADS, OUT_FEATS), jnp.float32)
    gat_fcw = jnp.transpose(fc_w, (0, 2, 1, 3)).reshape(3, H, HF)   # head-major cols
    gat_wal = jnp.einsum('rhdf,rhf->rdh', fc_w, attn_l)             # [rel, H, NH]
    gat_war = jnp.einsum('rhdf,rhf->rdh', fc_w, attn_r)             # [rel, H, NH]
    gat_bias = jnp.zeros((3, 1, HF), jnp.float32)

    # 0/1 matrix expanding per-head alpha [*, NH] to head-major [*, NH*F]
    expand = jnp.kron(jnp.eye(NUM_HEADS, dtype=jnp.float32),
                      jnp.ones((1, OUT_FEATS), jnp.float32))        # [NH, HF]

    lin_w = u(ks[11], (H, 2), k)
    lin_b = u(ks[12], (1, 2), k)

    return dict(enc_wih_pack=wih_pack, enc_whh_blk=whh_blk,
                dec_wih=dec_wih, dec_whh=dec_whh, dec_b=dec_b,
                gat_fcw_blk=gat_fcw.reshape(3 * H, HF),
                gat_wal_blk=gat_wal.reshape(3 * H, NUM_HEADS),
                gat_war=gat_war,
                gat_bias_sum=jnp.sum(gat_bias, axis=0),             # [1, HF]
                expand=expand, lin_w=lin_w, lin_b=lin_b)


# ----------------------------------------------------------------------------
if __name__ == "__main__":
    key = jax.random.PRNGKey(0)
    kp, k1, k2, k3, k4 = jax.random.split(key, 5)

    params = init_params(kp)

    B = 2
    # synthetic heterograph node data (regular: 1 agent / 1 av / 3 others / 4 lanes per env)
    agent_state = jax.random.normal(k1, (B, 50, 2), jnp.float32)       # forward slices [:, :20, :]
    av_state = jax.random.normal(k2, (B, T_HIST, 2), jnp.float32)
    others_state = jax.random.normal(k3, (B * N_OTHERS, T_HIST, 2), jnp.float32)
    lane_state = jax.random.normal(k4, (B * N_LANE, T_HIST, 2), jnp.float32)

    pred = my_model_forward(params, agent_state, av_state, others_state, lane_state)
    pred = jax.block_until_ready(pred)
    assert pred.shape == (B, T_PRED, 2)
    assert bool(jnp.all(jnp.isfinite(pred)))
    print("KERNEL_OK")
</pallas_src>

<mosaic_0001>
module attributes {stable_mosaic.version = 11 : i64} {
  func.func @model_kernel(%arg0: memref<480x9xf32, #tpu.memory_space<vmem>>, %arg1: memref<9x100xf32, #tpu.memory_space<vmem>>, %arg2: memref<75x100xf32, #tpu.memory_space<vmem>>, %arg3: memref<24x75xf32, #tpu.memory_space<vmem>>, %arg4: memref<1x100xf32, #tpu.memory_space<vmem>>, %arg5: memref<25x100xf32, #tpu.memory_space<vmem>>, %arg6: memref<1x100xf32, #tpu.memory_space<vmem>>, %arg7: memref<75x25xf32, #tpu.memory_space<vmem>>, %arg8: memref<75x5xf32, #tpu.memory_space<vmem>>, %arg9: memref<3x25x5xf32, #tpu.memory_space<vmem>>, %arg10: memref<1x25xf32, #tpu.memory_space<vmem>>, %arg11: memref<16x75xf32, #tpu.memory_space<vmem>>, %arg12: memref<16x6xf32, #tpu.memory_space<vmem>>, %arg13: memref<6x16xf32, #tpu.memory_space<vmem>>, %arg14: memref<2x16xf32, #tpu.memory_space<vmem>>, %arg15: memref<5x25xf32, #tpu.memory_space<vmem>>, %arg16: memref<25x2xf32, #tpu.memory_space<vmem>>, %arg17: memref<1x2xf32, #tpu.memory_space<vmem>>, %arg18: memref<60x2xf32, #tpu.memory_space<vmem>>, %arg19: memref<60x25xf32, #tpu.memory_space<vmem>>) attributes {dimension_semantics = [], scalar_prefetch = 0 : i64, scratch_operands = 1 : i64, tpu.core_type = #tpu.core_type<tc>} {
    %c0 = arith.constant 0 : index
    %c0_0 = arith.constant 0 : index
    %0 = vector.load %arg0[%c0, %c0_0] : memref<480x9xf32, #tpu.memory_space<vmem>>, vector<480x9xf32>
    %c0_1 = arith.constant 0 : index
    %c0_2 = arith.constant 0 : index
    %1 = vector.load %arg1[%c0_1, %c0_2] : memref<9x100xf32, #tpu.memory_space<vmem>>, vector<9x100xf32>
    %cst = arith.constant dense<0.000000e+00> : vector<480x100xf32>
    %2 = tpu.matmul %0, %1, %cst {dimension_numbers = #tpu.dot_dimension_numbers<[1], [0], [0], [1], [0, 0, 1, 1], [], []>} : vector<480x9xf32>, vector<9x100xf32>, vector<480x100xf32> -> vector<480x100xf32>
    %c0_3 = arith.constant 0 : index
    %c0_4 = arith.constant 0 : index
    %3 = vector.load %arg2[%c0_3, %c0_4] : memref<75x100xf32, #tpu.memory_space<vmem>>, vector<75x100xf32>
    %c0_5 = arith.constant 0 : index
    %c0_6 = arith.constant 0 : index
    %4 = vector.load %arg3[%c0_5, %c0_6] : memref<24x75xf32, #tpu.memory_space<vmem>>, vector<24x75xf32>
    %cst_7 = arith.constant 0.000000e+00 : f32
    %5 = vector.broadcast %cst_7 : f32 to vector<24x25xf32>
    %cst_8 = arith.constant 0.000000e+00 : f32
    %6 = vector.broadcast %cst_8 : f32 to vector<24x25xf32>
    %7 = tpu.concatenate %5, %5, %5 in 1 : vector<24x25xf32>, vector<24x25xf32>, vector<24x25xf32> -> vector<24x75xf32>
    %8 = arith.mulf %7, %4 : vector<24x75xf32>
    %9 = vector.extract_strided_slice %2 {offsets = [0, 0], sizes = [24, 100], strides = [1, 1]} : vector<480x100xf32> to vector<24x100xf32>
    %cst_9 = arith.constant dense<0.000000e+00> : vector<24x100xf32>
    %10 = tpu.matmul %8, %3, %cst_9 {dimension_numbers = #tpu.dot_dimension_numbers<[1], [0], [0], [1], [0, 0, 1, 1], [], []>} : vector<24x75xf32>, vector<75x100xf32>, vector<24x100xf32> -> vector<24x100xf32>
    %11 = arith.addf %9, %10 : vector<24x100xf32>
    %12 = vector.extract_strided_slice %11 {offsets = [0, 0], sizes = [24, 75], strides = [1, 1]} : vector<24x100xf32> to vector<24x75xf32>
    %13 = arith.negf %12 : vector<24x75xf32>
    %14 = math.exp %13 : vector<24x75xf32>
    %cst_10 = arith.constant 1.000000e+00 : f32
    %15 = vector.broadcast %cst_10 : f32 to vector<24x75xf32>
    %16 = arith.addf %15, %14 : vector<24x75xf32>
    %17 = arith.divf %15, %16 : vector<24x75xf32>
    %18 = vector.extract_strided_slice %11 {offsets = [0, 75], sizes = [24, 25], strides = [1, 1]} : vector<24x100xf32> to vector<24x25xf32>
    %19 = math.tanh %18 : vector<24x25xf32>
    %20 = vector.extract_strided_slice %17 {offsets = [0, 25], sizes = [24, 25], strides = [1, 1]} : vector<24x75xf32> to vector<24x25xf32>
    %21 = arith.mulf %20, %6 : vector<24x25xf32>
    %22 = vector.extract_strided_slice %17 {offsets = [0, 0], sizes = [24, 25], strides = [1, 1]} : vector<24x75xf32> to vector<24x25xf32>
    %23 = arith.mulf %22, %19 : vector<24x25xf32>
    %24 = arith.addf %21, %23 : vector<24x25xf32>
    %25 = vector.extract_strided_slice %17 {offsets = [0, 50], sizes = [24, 25], strides = [1, 1]} : vector<24x75xf32> to vector<24x25xf32>
    %26 = math.tanh %24 : vector<24x25xf32>
    %27 = arith.mulf %25, %26 : vector<24x25xf32>
    %28 = tpu.concatenate %27, %27, %27 in 1 : vector<24x25xf32>, vector<24x25xf32>, vector<24x25xf32> -> vector<24x75xf32>
    %29 = arith.mulf %28, %4 : vector<24x75xf32>
    %30 = vector.extract_strided_slice %2 {offsets = [24, 0], sizes = [24, 100], strides = [1, 1]} : vector<480x100xf32> to vector<24x100xf32>
    %cst_11 = arith.constant dense<0.000000e+00> : vector<24x100xf32>
    %31 = tpu.matmul %29, %3, %cst_11 {dimension_numbers = #tpu.dot_dimension_numbers<[1], [0], [0], [1], [0, 0, 1, 1], [], []>} : vector<24x75xf32>, vector<75x100xf32>, vector<24x100xf32> -> vector<24x100xf32>
    %32 = arith.addf %30, %31 : vector<24x100xf32>
    %33 = vector.extract_strided_slice %32 {offsets = [0, 0], sizes = [24, 75], strides = [1, 1]} : vector<24x100xf32> to vector<24x75xf32>
    %34 = arith.negf %33 : vector<24x75xf32>
    %35 = math.exp %34 : vector<24x75xf32>
    %cst_12 = arith.constant 1.000000e+00 : f32
    %36 = vector.broadcast %cst_12 : f32 to vector<24x75xf32>
    %37 = arith.addf %36, %35 : vector<24x75xf32>
    %38 = arith.divf %36, %37 : vector<24x75xf32>
    %39 = vector.extract_strided_slice %32 {offsets = [0, 75], sizes = [24, 25], strides = [1, 1]} : vector<24x100xf32> to vector<24x25xf32>
    %40 = math.tanh %39 : vector<24x25xf32>
    %41 = vector.extract_strided_slice %38 {offsets = [0, 25], sizes = [24, 25], strides = [1, 1]} : vector<24x75xf32> to vector<24x25xf32>
    %42 = arith.mulf %41, %24 : vector<24x25xf32>
    %43 = vector.extract_strided_slice %38 {offsets = [0, 0], sizes = [24, 25], strides = [1, 1]} : vector<24x75xf32> to vector<24x25xf32>
    %44 = arith.mulf %43, %40 : vector<24x25xf32>
    %45 = arith.addf %42, %44 : vector<24x25xf32>
    %46 = vector.extract_strided_slice %38 {offsets = [0, 50], sizes = [24, 25], strides = [1, 1]} : vector<24x75xf32> to vector<24x25xf32>
    %47 = math.tanh %45 : vector<24x25xf32>
    %48 = arith.mulf %46, %47 : vector<24x25xf32>
    %49 = tpu.concatenate %48, %48, %48 in 1 : vector<24x25xf32>, vector<24x25xf32>, vector<24x25xf32> -> vector<24x75xf32>
    %50 = arith.mulf %49, %4 : vector<24x75xf32>
    %51 = vector.extract_strided_slice %2 {offsets = [48, 0], sizes = [24, 100], strides = [1, 1]} : vector<480x100xf32> to vector<24x100xf32>
    %cst_13 = arith.constant dense<0.000000e+00> : vector<24x100xf32>
    %52 = tpu.matmul %50, %3, %cst_13 {dimension_numbers = #tpu.dot_dimension_numbers<[1], [0], [0], [1], [0, 0, 1, 1], [], []>} : vector<24x75xf32>, vector<75x100xf32>, vector<24x100xf32> -> vector<24x100xf32>
    %53 = arith.addf %51, %52 : vector<24x100xf32>
    %54 = vector.extract_strided_slice %53 {offsets = [0, 0], sizes = [24, 75], strides = [1, 1]} : vector<24x100xf32> to vector<24x75xf32>
    %55 = arith.negf %54 : vector<24x75xf32>
    %56 = math.exp %55 : vector<24x75xf32>
    %cst_14 = arith.constant 1.000000e+00 : f32
    %57 = vector.broadcast %cst_14 : f32 to vector<24x75xf32>
    %58 = arith.addf %57, %56 : vector<24x75xf32>
    %59 = arith.divf %57, %58 : vector<24x75xf32>
    %60 = vector.extract_strided_slice %53 {offsets = [0, 75], sizes = [24, 25], strides = [1, 1]} : vector<24x100xf32> to vector<24x25xf32>
    %61 = math.tanh %60 : vector<24x25xf32>
    %62 = vector.extract_strided_slice %59 {offsets = [0, 25], sizes = [24, 25], strides = [1, 1]} : vector<24x75xf32> to vector<24x25xf32>
    %63 = arith.mulf %62, %45 : vector<24x25xf32>
    %64 = vector.extract_strided_slice %59 {offsets = [0, 0], sizes = [24, 25], strides = [1, 1]} : vector<24x75xf32> to vector<24x25xf32>
    %65 = arith.mulf %64, %61 : vector<24x25xf32>
    %66 = arith.addf %63, %65 : vector<24x25xf32>
    %67 = vector.extract_strided_slice %59 {offsets = [0, 50], sizes = [24, 25], strides = [1, 1]} : vector<24x75xf32> to vector<24x25xf32>
    %68 = math.tanh %66 : vector<24x25xf32>
    %69 = arith.mulf %67, %68 : vector<24x25xf32>
    %70 = tpu.concatenate %69, %69, %69 in 1 : vector<24x25xf32>, vector<24x25xf32>, vector<24x25xf32> -> vector<24x75xf32>
    %71 = arith.mulf %70, %4 : vector<24x75xf32>
    %72 = vector.extract_strided_slice %2 {offsets = [72, 0], sizes = [24, 100], strides = [1, 1]} : vector<480x100xf32> to vector<24x100xf32>
    %cst_15 = arith.constant dense<0.000000e+00> : vector<24x100xf32>
    %73 = tpu.matmul %71, %3, %cst_15 {dimension_numbers = #tpu.dot_dimension_numbers<[1], [0], [0], [1], [0, 0, 1, 1], [], []>} : vector<24x75xf32>, vector<75x100xf32>, vector<24x100xf32> -> vector<24x100xf32>
    %74 = arith.addf %72, %73 : vector<24x100xf32>
    %75 = vector.extract_strided_slice %74 {offsets = [0, 0], sizes = [24, 75], strides = [1, 1]} : vector<24x100xf32> to vector<24x75xf32>
    %76 = arith.negf %75 : vector<24x75xf32>
    %77 = math.exp %76 : vector<24x75xf32>
    %cst_16 = arith.constant 1.000000e+00 : f32
    %78 = vector.broadcast %cst_16 : f32 to vector<24x75xf32>
    %79 = arith.addf %78, %77 : vector<24x75xf32>
    %80 = arith.divf %78, %79 : vector<24x75xf32>
    %81 = vector.extract_strided_slice %74 {offsets = [0, 75], sizes = [24, 25], strides = [1, 1]} : vector<24x100xf32> to vector<24x25xf32>
    %82 = math.tanh %81 : vector<24x25xf32>
    %83 = vector.extract_strided_slice %80 {offsets = [0, 25], sizes = [24, 25], strides = [1, 1]} : vector<24x75xf32> to vector<24x25xf32>
    %84 = arith.mulf %83, %66 : vector<24x25xf32>
    %85 = vector.extract_strided_slice %80 {offsets = [0, 0], sizes = [24, 25], strides = [1, 1]} : vector<24x75xf32> to vector<24x25xf32>
    %86 = arith.mulf %85, %82 : vector<24x25xf32>
    %87 = arith.addf %84, %86 : vector<24x25xf32>
    %88 = vector.extract_strided_slice %80 {offsets = [0, 50], sizes = [24, 25], strides = [1, 1]} : vector<24x75xf32> to vector<24x25xf32>
    %89 = math.tanh %87 : vector<24x25xf32>
    %90 = arith.mulf %88, %89 : vector<24x25xf32>
    %91 = tpu.concatenate %90, %90, %90 in 1 : vector<24x25xf32>, vector<24x25xf32>, vector<24x25xf32> -> vector<24x75xf32>
    %92 = arith.mulf %91, %4 : vector<24x75xf32>
    %93 = vector.extract_strided_slice %2 {offsets = [96, 0], sizes = [24, 100], strides = [1, 1]} : vector<480x100xf32> to vector<24x100xf32>
    %cst_17 = arith.constant dense<0.000000e+00> : vector<24x100xf32>
    %94 = tpu.matmul %92, %3, %cst_17 {dimension_numbers = #tpu.dot_dimension_numbers<[1], [0], [0], [1], [0, 0, 1, 1], [], []>} : vector<24x75xf32>, vector<75x100xf32>, vector<24x100xf32> -> vector<24x100xf32>
    %95 = arith.addf %93, %94 : vector<24x100xf32>
    %96 = vector.extract_strided_slice %95 {offsets = [0, 0], sizes = [24, 75], strides = [1, 1]} : vector<24x100xf32> to vector<24x75xf32>
    %97 = arith.negf %96 : vector<24x75xf32>
    %98 = math.exp %97 : vector<24x75xf32>
    %cst_18 = arith.constant 1.000000e+00 : f32
    %99 = vector.broadcast %cst_18 : f32 to vector<24x75xf32>
    %100 = arith.addf %99, %98 : vector<24x75xf32>
    %101 = arith.divf %99, %100 : vector<24x75xf32>
    %102 = vector.extract_strided_slice %95 {offsets = [0, 75], sizes = [24, 25], strides = [1, 1]} : vector<24x100xf32> to vector<24x25xf32>
    %103 = math.tanh %102 : vector<24x25xf32>
    %104 = vector.extract_strided_slice %101 {offsets = [0, 25], sizes = [24, 25], strides = [1, 1]} : vector<24x75xf32> to vector<24x25xf32>
    %105 = arith.mulf %104, %87 : vector<24x25xf32>
    %106 = vector.extract_strided_slice %101 {offsets = [0, 0], sizes = [24, 25], strides = [1, 1]} : vector<24x75xf32> to vector<24x25xf32>
    %107 = arith.mulf %106, %103 : vector<24x25xf32>
    %108 = arith.addf %105, %107 : vector<24x25xf32>
    %109 = vector.extract_strided_slice %101 {offsets = [0, 50], sizes = [24, 25], strides = [1, 1]} : vector<24x75xf32> to vector<24x25xf32>
    %110 = math.tanh %108 : vector<24x25xf32>
    %111 = arith.mulf %109, %110 : vector<24x25xf32>
    %112 = tpu.concatenate %111, %111, %111 in 1 : vector<24x25xf32>, vector<24x25xf32>, vector<24x25xf32> -> vector<24x75xf32>
    %113 = arith.mulf %112, %4 : vector<24x75xf32>
    %114 = vector.extract_strided_slice %2 {offsets = [120, 0], sizes = [24, 100], strides = [1, 1]} : vector<480x100xf32> to vector<24x100xf32>
    %cst_19 = arith.constant dense<0.000000e+00> : vector<24x100xf32>
    %115 = tpu.matmul %113, %3, %cst_19 {dimension_numbers = #tpu.dot_dimension_numbers<[1], [0], [0], [1], [0, 0, 1, 1], [], []>} : vector<24x75xf32>, vector<75x100xf32>, vector<24x100xf32> -> vector<24x100xf32>
    %116 = arith.addf %114, %115 : vector<24x100xf32>
    %117 = vector.extract_strided_slice %116 {offsets = [0, 0], sizes = [24, 75], strides = [1, 1]} : vector<24x100xf32> to vector<24x75xf32>
    %118 = arith.negf %117 : vector<24x75xf32>
    %119 = math.exp %118 : vector<24x75xf32>
    %cst_20 = arith.constant 1.000000e+00 : f32
    %120 = vector.broadcast %cst_20 : f32 to vector<24x75xf32>
    %121 = arith.addf %120, %119 : vector<24x75xf32>
    %122 = arith.divf %120, %121 : vector<24x75xf32>
    %123 = vector.extract_strided_slice %116 {offsets = [0, 75], sizes = [24, 25], strides = [1, 1]} : vector<24x100xf32> to vector<24x25xf32>
    %124 = math.tanh %123 : vector<24x25xf32>
    %125 = vector.extract_strided_slice %122 {offsets = [0, 25], sizes = [24, 25], strides = [1, 1]} : vector<24x75xf32> to vector<24x25xf32>
    %126 = arith.mulf %125, %108 : vector<24x25xf32>
    %127 = vector.extract_strided_slice %122 {offsets = [0, 0], sizes = [24, 25], strides = [1, 1]} : vector<24x75xf32> to vector<24x25xf32>
    %128 = arith.mulf %127, %124 : vector<24x25xf32>
    %129 = arith.addf %126, %128 : vector<24x25xf32>
    %130 = vector.extract_strided_slice %122 {offsets = [0, 50], sizes = [24, 25], strides = [1, 1]} : vector<24x75xf32> to vector<24x25xf32>
    %131 = math.tanh %129 : vector<24x25xf32>
    %132 = arith.mulf %130, %131 : vector<24x25xf32>
    %133 = tpu.concatenate %132, %132, %132 in 1 : vector<24x25xf32>, vector<24x25xf32>, vector<24x25xf32> -> vector<24x75xf32>
    %134 = arith.mulf %133, %4 : vector<24x75xf32>
    %135 = vector.extract_strided_slice %2 {offsets = [144, 0], sizes = [24, 100], strides = [1, 1]} : vector<480x100xf32> to vector<24x100xf32>
    %cst_21 = arith.constant dense<0.000000e+00> : vector<24x100xf32>
    %136 = tpu.matmul %134, %3, %cst_21 {dimension_numbers = #tpu.dot_dimension_numbers<[1], [0], [0], [1], [0, 0, 1, 1], [], []>} : vector<24x75xf32>, vector<75x100xf32>, vector<24x100xf32> -> vector<24x100xf32>
    %137 = arith.addf %135, %136 : vector<24x100xf32>
    %138 = vector.extract_strided_slice %137 {offsets = [0, 0], sizes = [24, 75], strides = [1, 1]} : vector<24x100xf32> to vector<24x75xf32>
    %139 = arith.negf %138 : vector<24x75xf32>
    %140 = math.exp %139 : vector<24x75xf32>
    %cst_22 = arith.constant 1.000000e+00 : f32
    %141 = vector.broadcast %cst_22 : f32 to vector<24x75xf32>
    %142 = arith.addf %141, %140 : vector<24x75xf32>
    %143 = arith.divf %141, %142 : vector<24x75xf32>
    %144 = vector.extract_strided_slice %137 {offsets = [0, 75], sizes = [24, 25], strides = [1, 1]} : vector<24x100xf32> to vector<24x25xf32>
    %145 = math.tanh %144 : vector<24x25xf32>
    %146 = vector.extract_strided_slice %143 {offsets = [0, 25], sizes = [24, 25], strides = [1, 1]} : vector<24x75xf32> to vector<24x25xf32>
    %147 = arith.mulf %146, %129 : vector<24x25xf32>
    %148 = vector.extract_strided_slice %143 {offsets = [0, 0], sizes = [24, 25], strides = [1, 1]} : vector<24x75xf32> to vector<24x25xf32>
    %149 = arith.mulf %148, %145 : vector<24x25xf32>
    %150 = arith.addf %147, %149 : vector<24x25xf32>
    %151 = vector.extract_strided_slice %143 {offsets = [0, 50], sizes = [24, 25], strides = [1, 1]} : vector<24x75xf32> to vector<24x25xf32>
    %152 = math.tanh %150 : vector<24x25xf32>
    %153 = arith.mulf %151, %152 : vector<24x25xf32>
    %154 = tpu.concatenate %153, %153, %153 in 1 : vector<24x25xf32>, vector<24x25xf32>, vector<24x25xf32> -> vector<24x75xf32>
    %155 = arith.mulf %154, %4 : vector<24x75xf32>
    %156 = vector.extract_strided_slice %2 {offsets = [168, 0], sizes = [24, 100], strides = [1, 1]} : vector<480x100xf32> to vector<24x100xf32>
    %cst_23 = arith.constant dense<0.000000e+00> : vector<24x100xf32>
    %157 = tpu.matmul %155, %3, %cst_23 {dimension_numbers = #tpu.dot_dimension_numbers<[1], [0], [0], [1], [0, 0, 1, 1], [], []>} : vector<24x75xf32>, vector<75x100xf32>, vector<24x100xf32> -> vector<24x100xf32>
    %158 = arith.addf %156, %157 : vector<24x100xf32>
    %159 = vector.extract_strided_slice %158 {offsets = [0, 0], sizes = [24, 75], strides = [1, 1]} : vector<24x100xf32> to vector<24x75xf32>
    %160 = arith.negf %159 : vector<24x75xf32>
    %161 = math.exp %160 : vector<24x75xf32>
    %cst_24 = arith.constant 1.000000e+00 : f32
    %162 = vector.broadcast %cst_24 : f32 to vector<24x75xf32>
    %163 = arith.addf %162, %161 : vector<24x75xf32>
    %164 = arith.divf %162, %163 : vector<24x75xf32>
    %165 = vector.extract_strided_slice %158 {offsets = [0, 75], sizes = [24, 25], strides = [1, 1]} : vector<24x100xf32> to vector<24x25xf32>
    %166 = math.tanh %165 : vector<24x25xf32>
    %167 = vector.extract_strided_slice %164 {offsets = [0, 25], sizes = [24, 25], strides = [1, 1]} : vector<24x75xf32> to vector<24x25xf32>
    %168 = arith.mulf %167, %150 : vector<24x25xf32>
    %169 = vector.extract_strided_slice %164 {offsets = [0, 0], sizes = [24, 25], strides = [1, 1]} : vector<24x75xf32> to vector<24x25xf32>
    %170 = arith.mulf %169, %166 : vector<24x25xf32>
    %171 = arith.addf %168, %170 : vector<24x25xf32>
    %172 = vector.extract_strided_slice %164 {offsets = [0, 50], sizes = [24, 25], strides = [1, 1]} : vector<24x75xf32> to vector<24x25xf32>
    %173 = math.tanh %171 : vector<24x25xf32>
    %174 = arith.mulf %172, %173 : vector<24x25xf32>
    %175 = tpu.concatenate %174, %174, %174 in 1 : vector<24x25xf32>, vector<24x25xf32>, vector<24x25xf32> -> vector<24x75xf32>
    %176 = arith.mulf %175, %4 : vector<24x75xf32>
    %177 = vector.extract_strided_slice %2 {offsets = [192, 0], sizes = [24, 100], strides = [1, 1]} : vector<480x100xf32> to vector<24x100xf32>
    %cst_25 = arith.constant dense<0.000000e+00> : vector<24x100xf32>
    %178 = tpu.matmul %176, %3, %cst_25 {dimension_numbers = #tpu.dot_dimension_numbers<[1], [0], [0], [1], [0, 0, 1, 1], [], []>} : vector<24x75xf32>, vector<75x100xf32>, vector<24x100xf32> -> vector<24x100xf32>
    %179 = arith.addf %177, %178 : vector<24x100xf32>
    %180 = vector.extract_strided_slice %179 {offsets = [0, 0], sizes = [24, 75], strides = [1, 1]} : vector<24x100xf32> to vector<24x75xf32>
    %181 = arith.negf %180 : vector<24x75xf32>
    %182 = math.exp %181 : vector<24x75xf32>
    %cst_26 = arith.constant 1.000000e+00 : f32
    %183 = vector.broadcast %cst_26 : f32 to vector<24x75xf32>
    %184 = arith.addf %183, %182 : vector<24x75xf32>
    %185 = arith.divf %183, %184 : vector<24x75xf32>
    %186 = vector.extract_strided_slice %179 {offsets = [0, 75], sizes = [24, 25], strides = [1, 1]} : vector<24x100xf32> to vector<24x25xf32>
    %187 = math.tanh %186 : vector<24x25xf32>
    %188 = vector.extract_strided_slice %185 {offsets = [0, 25], sizes = [24, 25], strides = [1, 1]} : vector<24x75xf32> to vector<24x25xf32>
    %189 = arith.mulf %188, %171 : vector<24x25xf32>
    %190 = vector.extract_strided_slice %185 {offsets = [0, 0], sizes = [24, 25], strides = [1, 1]} : vector<24x75xf32> to vector<24x25xf32>
    %191 = arith.mulf %190, %187 : vector<24x25xf32>
    %192 = arith.addf %189, %191 : vector<24x25xf32>
    %193 = vector.extract_strided_slice %185 {offsets = [0, 50], sizes = [24, 25], strides = [1, 1]} : vector<24x75xf32> to vector<24x25xf32>
    %194 = math.tanh %192 : vector<24x25xf32>
    %195 = arith.mulf %193, %194 : vector<24x25xf32>
    %196 = tpu.concatenate %195, %195, %195 in 1 : vector<24x25xf32>, vector<24x25xf32>, vector<24x25xf32> -> vector<24x75xf32>
    %197 = arith.mulf %196, %4 : vector<24x75xf32>
    %198 = vector.extract_strided_slice %2 {offsets = [216, 0], sizes = [24, 100], strides = [1, 1]} : vector<480x100xf32> to vector<24x100xf32>
    %cst_27 = arith.constant dense<0.000000e+00> : vector<24x100xf32>
    %199 = tpu.matmul %197, %3, %cst_27 {dimension_numbers = #tpu.dot_dimension_numbers<[1], [0], [0], [1], [0, 0, 1, 1], [], []>} : vector<24x75xf32>, vector<75x100xf32>, vector<24x100xf32> -> vector<24x100xf32>
    %200 = arith.addf %198, %199 : vector<24x100xf32>
    %201 = vector.extract_strided_slice %200 {offsets = [0, 0], sizes = [24, 75], strides = [1, 1]} : vector<24x100xf32> to vector<24x75xf32>
    %202 = arith.negf %201 : vector<24x75xf32>
    %203 = math.exp %202 : vector<24x75xf32>
    %cst_28 = arith.constant 1.000000e+00 : f32
    %204 = vector.broadcast %cst_28 : f32 to vector<24x75xf32>
    %205 = arith.addf %204, %203 : vector<24x75xf32>
    %206 = arith.divf %204, %205 : vector<24x75xf32>
    %207 = vector.extract_strided_slice %200 {offsets = [0, 75], sizes = [24, 25], strides = [1, 1]} : vector<24x100xf32> to vector<24x25xf32>
    %208 = math.tanh %207 : vector<24x25xf32>
    %209 = vector.extract_strided_slice %206 {offsets = [0, 25], sizes = [24, 25], strides = [1, 1]} : vector<24x75xf32> to vector<24x25xf32>
    %210 = arith.mulf %209, %192 : vector<24x25xf32>
    %211 = vector.extract_strided_slice %206 {offsets = [0, 0], sizes = [24, 25], strides = [1, 1]} : vector<24x75xf32> to vector<24x25xf32>
    %212 = arith.mulf %211, %208 : vector<24x25xf32>
    %213 = arith.addf %210, %212 : vector<24x25xf32>
    %214 = vector.extract_strided_slice %206 {offsets = [0, 50], sizes = [24, 25], strides = [1, 1]} : vector<24x75xf32> to vector<24x25xf32>
    %215 = math.tanh %213 : vector<24x25xf32>
    %216 = arith.mulf %214, %215 : vector<24x25xf32>
    %217 = tpu.concatenate %216, %216, %216 in 1 : vector<24x25xf32>, vector<24x25xf32>, vector<24x25xf32> -> vector<24x75xf32>
    %218 = arith.mulf %217, %4 : vector<24x75xf32>
    %219 = vector.extract_strided_slice %2 {offsets = [240, 0], sizes = [24, 100], strides = [1, 1]} : vector<480x100xf32> to vector<24x100xf32>
    %cst_29 = arith.constant dense<0.000000e+00> : vector<24x100xf32>
    %220 = tpu.matmul %218, %3, %cst_29 {dimension_numbers = #tpu.dot_dimension_numbers<[1], [0], [0], [1], [0, 0, 1, 1], [], []>} : vector<24x75xf32>, vector<75x100xf32>, vector<24x100xf32> -> vector<24x100xf32>
    %221 = arith.addf %219, %220 : vector<24x100xf32>
    %222 = vector.extract_strided_slice %221 {offsets = [0, 0], sizes = [24, 75], strides = [1, 1]} : vector<24x100xf32> to vector<24x75xf32>
    %223 = arith.negf %222 : vector<24x75xf32>
    %224 = math.exp %223 : vector<24x75xf32>
    %cst_30 = arith.constant 1.000000e+00 : f32
    %225 = vector.broadcast %cst_30 : f32 to vector<24x75xf32>
    %226 = arith.addf %225, %224 : vector<24x75xf32>
    %227 = arith.divf %225, %226 : vector<24x75xf32>
    %228 = vector.extract_strided_slice %221 {offsets = [0, 75], sizes = [24, 25], strides = [1, 1]} : vector<24x100xf32> to vector<24x25xf32>
    %229 = math.tanh %228 : vector<24x25xf32>
    %230 = vector.extract_strided_slice %227 {offsets = [0, 25], sizes = [24, 25], strides = [1, 1]} : vector<24x75xf32> to vector<24x25xf32>
    %231 = arith.mulf %230, %213 : vector<24x25xf32>
    %232 = vector.extract_strided_slice %227 {offsets = [0, 0], sizes = [24, 25], strides = [1, 1]} : vector<24x75xf32> to vector<24x25xf32>
    %233 = arith.mulf %232, %229 : vector<24x25xf32>
    %234 = arith.addf %231, %233 : vector<24x25xf32>
    %235 = vector.extract_strided_slice %227 {offsets = [0, 50], sizes = [24, 25], strides = [1, 1]} : vector<24x75xf32> to vector<24x25xf32>
    %236 = math.tanh %234 : vector<24x25xf32>
    %237 = arith.mulf %235, %236 : vector<24x25xf32>
    %238 = tpu.concatenate %237, %237, %237 in 1 : vector<24x25xf32>, vector<24x25xf32>, vector<24x25xf32> -> vector<24x75xf32>
    %239 = arith.mulf %238, %4 : vector<24x75xf32>
    %240 = vector.extract_strided_slice %2 {offsets = [264, 0], sizes = [24, 100], strides = [1, 1]} : vector<480x100xf32> to vector<24x100xf32>
    %cst_31 = arith.constant dense<0.000000e+00> : vector<24x100xf32>
    %241 = tpu.matmul %239, %3, %cst_31 {dimension_numbers = #tpu.dot_dimension_numbers<[1], [0], [0], [1], [0, 0, 1, 1], [], []>} : vector<24x75xf32>, vector<75x100xf32>, vector<24x100xf32> -> vector<24x100xf32>
    %242 = arith.addf %240, %241 : vector<24x100xf32>
    %243 = vector.extract_strided_slice %242 {offsets = [0, 0], sizes = [24, 75], strides = [1, 1]} : vector<24x100xf32> to vector<24x75xf32>
    %244 = arith.negf %243 : vector<24x75xf32>
    %245 = math.exp %244 : vector<24x75xf32>
    %cst_32 = arith.constant 1.000000e+00 : f32
    %246 = vector.broadcast %cst_32 : f32 to vector<24x75xf32>
    %247 = arith.addf %246, %245 : vector<24x75xf32>
    %248 = arith.divf %246, %247 : vector<24x75xf32>
    %249 = vector.extract_strided_slice %242 {offsets = [0, 75], sizes = [24, 25], strides = [1, 1]} : vector<24x100xf32> to vector<24x25xf32>
    %250 = math.tanh %249 : vector<24x25xf32>
    %251 = vector.extract_strided_slice %248 {offsets = [0, 25], sizes = [24, 25], strides = [1, 1]} : vector<24x75xf32> to vector<24x25xf32>
    %252 = arith.mulf %251, %234 : vector<24x25xf32>
    %253 = vector.extract_strided_slice %248 {offsets = [0, 0], sizes = [24, 25], strides = [1, 1]} : vector<24x75xf32> to vector<24x25xf32>
    %254 = arith.mulf %253, %250 : vector<24x25xf32>
    %255 = arith.addf %252, %254 : vector<24x25xf32>
    %256 = vector.extract_strided_slice %248 {offsets = [0, 50], sizes = [24, 25], strides = [1, 1]} : vector<24x75xf32> to vector<24x25xf32>
    %257 = math.tanh %255 : vector<24x25xf32>
    %258 = arith.mulf %256, %257 : vector<24x25xf32>
    %259 = tpu.concatenate %258, %258, %258 in 1 : vector<24x25xf32>, vector<24x25xf32>, vector<24x25xf32> -> vector<24x75xf32>
    %260 = arith.mulf %259, %4 : vector<24x75xf32>
    %261 = vector.extract_strided_slice %2 {offsets = [288, 0], sizes = [24, 100], strides = [1, 1]} : vector<480x100xf32> to vector<24x100xf32>
    %cst_33 = arith.constant dense<0.000000e+00> : vector<24x100xf32>
    %262 = tpu.matmul %260, %3, %cst_33 {dimension_numbers = #tpu.dot_dimension_numbers<[1], [0], [0], [1], [0, 0, 1, 1], [], []>} : vector<24x75xf32>, vector<75x100xf32>, vector<24x100xf32> -> vector<24x100xf32>
    %263 = arith.addf %261, %262 : vector<24x100xf32>
    %264 = vector.extract_strided_slice %263 {offsets = [0, 0], sizes = [24, 75], strides = [1, 1]} : vector<24x100xf32> to vector<24x75xf32>
    %265 = arith.negf %264 : vector<24x75xf32>
    %266 = math.exp %265 : vector<24x75xf32>
    %cst_34 = arith.constant 1.000000e+00 : f32
    %267 = vector.broadcast %cst_34 : f32 to vector<24x75xf32>
    %268 = arith.addf %267, %266 : vector<24x75xf32>
    %269 = arith.divf %267, %268 : vector<24x75xf32>
    %270 = vector.extract_strided_slice %263 {offsets = [0, 75], sizes = [24, 25], strides = [1, 1]} : vector<24x100xf32> to vector<24x25xf32>
    %271 = math.tanh %270 : vector<24x25xf32>
    %272 = vector.extract_strided_slice %269 {offsets = [0, 25], sizes = [24, 25], strides = [1, 1]} : vector<24x75xf32> to vector<24x25xf32>
    %273 = arith.mulf %272, %255 : vector<24x25xf32>
    %274 = vector.extract_strided_slice %269 {offsets = [0, 0], sizes = [24, 25], strides = [1, 1]} : vector<24x75xf32> to vector<24x25xf32>
    %275 = arith.mulf %274, %271 : vector<24x25xf32>
    %276 = arith.addf %273, %275 : vector<24x25xf32>
    %277 = vector.extract_strided_slice %269 {offsets = [0, 50], sizes = [24, 25], strides = [1, 1]} : vector<24x75xf32> to vector<24x25xf32>
    %278 = math.tanh %276 : vector<24x25xf32>
    %279 = arith.mulf %277, %278 : vector<24x25xf32>
    %280 = tpu.concatenate %279, %279, %279 in 1 : vector<24x25xf32>, vector<24x25xf32>, vector<24x25xf32> -> vector<24x75xf32>
    %281 = arith.mulf %280, %4 : vector<24x75xf32>
    %282 = vector.extract_strided_slice %2 {offsets = [312, 0], sizes = [24, 100], strides = [1, 1]} : vector<480x100xf32> to vector<24x100xf32>
    %cst_35 = arith.constant dense<0.000000e+00> : vector<24x100xf32>
    %283 = tpu.matmul %281, %3, %cst_35 {dimension_numbers = #tpu.dot_dimension_numbers<[1], [0], [0], [1], [0, 0, 1, 1], [], []>} : vector<24x75xf32>, vector<75x100xf32>, vector<24x100xf32> -> vector<24x100xf32>
    %284 = arith.addf %282, %283 : vector<24x100xf32>
    %285 = vector.extract_strided_slice %284 {offsets = [0, 0], sizes = [24, 75], strides = [1, 1]} : vector<24x100xf32> to vector<24x75xf32>
    %286 = arith.negf %285 : vector<24x75xf32>
    %287 = math.exp %286 : vector<24x75xf32>
    %cst_36 = arith.constant 1.000000e+00 : f32
    %288 = vector.broadcast %cst_36 : f32 to vector<24x75xf32>
    %289 = arith.addf %288, %287 : vector<24x75xf32>
    %290 = arith.divf %288, %289 : vector<24x75xf32>
    %291 = vector.extract_strided_slice %284 {offsets = [0, 75], sizes = [24, 25], strides = [1, 1]} : vector<24x100xf32> to vector<24x25xf32>
    %292 = math.tanh %291 : vector<24x25xf32>
    %293 = vector.extract_strided_slice %290 {offsets = [0, 25], sizes = [24, 25], strides = [1, 1]} : vector<24x75xf32> to vector<24x25xf32>
    %294 = arith.mulf %293, %276 : vector<24x25xf32>
    %295 = vector.extract_strided_slice %290 {offsets = [0, 0], sizes = [24, 25], strides = [1, 1]} : vector<24x75xf32> to vector<24x25xf32>
    %296 = arith.mulf %295, %292 : vector<24x25xf32>
    %297 = arith.addf %294, %296 : vector<24x25xf32>
    %298 = vector.extract_strided_slice %290 {offsets = [0, 50], sizes = [24, 25], strides = [1, 1]} : vector<24x75xf32> to vector<24x25xf32>
    %299 = math.tanh %297 : vector<24x25xf32>
    %300 = arith.mulf %298, %299 : vector<24x25xf32>
    %301 = tpu.concatenate %300, %300, %300 in 1 : vector<24x25xf32>, vector<24x25xf32>, vector<24x25xf32> -> vector<24x75xf32>
    %302 = arith.mulf %301, %4 : vector<24x75xf32>
    %303 = vector.extract_strided_slice %2 {offsets = [336, 0], sizes = [24, 100], strides = [1, 1]} : vector<480x100xf32> to vector<24x100xf32>
    %cst_37 = arith.constant dense<0.000000e+00> : vector<24x100xf32>
    %304 = tpu.matmul %302, %3, %cst_37 {dimension_numbers = #tpu.dot_dimension_numbers<[1], [0], [0], [1], [0, 0, 1, 1], [], []>} : vector<24x75xf32>, vector<75x100xf32>, vector<24x100xf32> -> vector<24x100xf32>
    %305 = arith.addf %303, %304 : vector<24x100xf32>
    %306 = vector.extract_strided_slice %305 {offsets = [0, 0], sizes = [24, 75], strides = [1, 1]} : vector<24x100xf32> to vector<24x75xf32>
    %307 = arith.negf %306 : vector<24x75xf32>
    %308 = math.exp %307 : vector<24x75xf32>
    %cst_38 = arith.constant 1.000000e+00 : f32
    %309 = vector.broadcast %cst_38 : f32 to vector<24x75xf32>
    %310 = arith.addf %309, %308 : vector<24x75xf32>
    %311 = arith.divf %309, %310 : vector<24x75xf32>
    %312 = vector.extract_strided_slice %305 {offsets = [0, 75], sizes = [24, 25], strides = [1, 1]} : vector<24x100xf32> to vector<24x25xf32>
    %313 = math.tanh %312 : vector<24x25xf32>
    %314 = vector.extract_strided_slice %311 {offsets = [0, 25], sizes = [24, 25], strides = [1, 1]} : vector<24x75xf32> to vector<24x25xf32>
    %315 = arith.mulf %314, %297 : vector<24x25xf32>
    %316 = vector.extract_strided_slice %311 {offsets = [0, 0], sizes = [24, 25], strides = [1, 1]} : vector<24x75xf32> to vector<24x25xf32>
    %317 = arith.mulf %316, %313 : vector<24x25xf32>
    %318 = arith.addf %315, %317 : vector<24x25xf32>
    %319 = vector.extract_strided_slice %311 {offsets = [0, 50], sizes = [24, 25], strides = [1, 1]} : vector<24x75xf32> to vector<24x25xf32>
    %320 = math.tanh %318 : vector<24x25xf32>
    %321 = arith.mulf %319, %320 : vector<24x25xf32>
    %322 = tpu.concatenate %321, %321, %321 in 1 : vector<24x25xf32>, vector<24x25xf32>, vector<24x25xf32> -> vector<24x75xf32>
    %323 = arith.mulf %322, %4 : vector<24x75xf32>
    %324 = vector.extract_strided_slice %2 {offsets = [360, 0], sizes = [24, 100], strides = [1, 1]} : vector<480x100xf32> to vector<24x100xf32>
    %cst_39 = arith.constant dense<0.000000e+00> : vector<24x100xf32>
    %325 = tpu.matmul %323, %3, %cst_39 {dimension_numbers = #tpu.dot_dimension_numbers<[1], [0], [0], [1], [0, 0, 1, 1], [], []>} : vector<24x75xf32>, vector<75x100xf32>, vector<24x100xf32> -> vector<24x100xf32>
    %326 = arith.addf %324, %325 : vector<24x100xf32>
    %327 = vector.extract_strided_slice %326 {offsets = [0, 0], sizes = [24, 75], strides = [1, 1]} : vector<24x100xf32> to vector<24x75xf32>
    %328 = arith.negf %327 : vector<24x75xf32>
    %329 = math.exp %328 : vector<24x75xf32>
    %cst_40 = arith.constant 1.000000e+00 : f32
    %330 = vector.broadcast %cst_40 : f32 to vector<24x75xf32>
    %331 = arith.addf %330, %329 : vector<24x75xf32>
    %332 = arith.divf %330, %331 : vector<24x75xf32>
    %333 = vector.extract_strided_slice %326 {offsets = [0, 75], sizes = [24, 25], strides = [1, 1]} : vector<24x100xf32> to vector<24x25xf32>
    %334 = math.tanh %333 : vector<24x25xf32>
    %335 = vector.extract_strided_slice %332 {offsets = [0, 25], sizes = [24, 25], strides = [1, 1]} : vector<24x75xf32> to vector<24x25xf32>
    %336 = arith.mulf %335, %318 : vector<24x25xf32>
    %337 = vector.extract_strided_slice %332 {offsets = [0, 0], sizes = [24, 25], strides = [1, 1]} : vector<24x75xf32> to vector<24x25xf32>
    %338 = arith.mulf %337, %334 : vector<24x25xf32>
    %339 = arith.addf %336, %338 : vector<24x25xf32>
    %340 = vector.extract_strided_slice %332 {offsets = [0, 50], sizes = [24, 25], strides = [1, 1]} : vector<24x75xf32> to vector<24x25xf32>
    %341 = math.tanh %339 : vector<24x25xf32>
    %342 = arith.mulf %340, %341 : vector<24x25xf32>
    %343 = tpu.concatenate %342, %342, %342 in 1 : vector<24x25xf32>, vector<24x25xf32>, vector<24x25xf32> -> vector<24x75xf32>
    %344 = arith.mulf %343, %4 : vector<24x75xf32>
    %345 = vector.extract_strided_slice %2 {offsets = [384, 0], sizes = [24, 100], strides = [1, 1]} : vector<480x100xf32> to vector<24x100xf32>
    %cst_41 = arith.constant dense<0.000000e+00> : vector<24x100xf32>
    %346 = tpu.matmul %344, %3, %cst_41 {dimension_numbers = #tpu.dot_dimension_numbers<[1], [0], [0], [1], [0, 0, 1, 1], [], []>} : vector<24x75xf32>, vector<75x100xf32>, vector<24x100xf32> -> vector<24x100xf32>
    %347 = arith.addf %345, %346 : vector<24x100xf32>
    %348 = vector.extract_strided_slice %347 {offsets = [0, 0], sizes = [24, 75], strides = [1, 1]} : vector<24x100xf32> to vector<24x75xf32>
    %349 = arith.negf %348 : vector<24x75xf32>
    %350 = math.exp %349 : vector<24x75xf32>
    %cst_42 = arith.constant 1.000000e+00 : f32
    %351 = vector.broadcast %cst_42 : f32 to vector<24x75xf32>
    %352 = arith.addf %351, %350 : vector<24x75xf32>
    %353 = arith.divf %351, %352 : vector<24x75xf32>
    %354 = vector.extract_strided_slice %347 {offsets = [0, 75], sizes = [24, 25], strides = [1, 1]} : vector<24x100xf32> to vector<24x25xf32>
    %355 = math.tanh %354 : vector<24x25xf32>
    %356 = vector.extract_strided_slice %353 {offsets = [0, 25], sizes = [24, 25], strides = [1, 1]} : vector<24x75xf32> to vector<24x25xf32>
    %357 = arith.mulf %356, %339 : vector<24x25xf32>
    %358 = vector.extract_strided_slice %353 {offsets = [0, 0], sizes = [24, 25], strides = [1, 1]} : vector<24x75xf32> to vector<24x25xf32>
    %359 = arith.mulf %358, %355 : vector<24x25xf32>
    %360 = arith.addf %357, %359 : vector<24x25xf32>
    %361 = vector.extract_strided_slice %353 {offsets = [0, 50], sizes = [24, 25], strides = [1, 1]} : vector<24x75xf32> to vector<24x25xf32>
    %362 = math.tanh %360 : vector<24x25xf32>
    %363 = arith.mulf %361, %362 : vector<24x25xf32>
    %364 = tpu.concatenate %363, %363, %363 in 1 : vector<24x25xf32>, vector<24x25xf32>, vector<24x25xf32> -> vector<24x75xf32>
    %365 = arith.mulf %364, %4 : vector<24x75xf32>
    %366 = vector.extract_strided_slice %2 {offsets = [408, 0], sizes = [24, 100], strides = [1, 1]} : vector<480x100xf32> to vector<24x100xf32>
    %cst_43 = arith.constant dense<0.000000e+00> : vector<24x100xf32>
    %367 = tpu.matmul %365, %3, %cst_43 {dimension_numbers = #tpu.dot_dimension_numbers<[1], [0], [0], [1], [0, 0, 1, 1], [], []>} : vector<24x75xf32>, vector<75x100xf32>, vector<24x100xf32> -> vector<24x100xf32>
    %368 = arith.addf %366, %367 : vector<24x100xf32>
    %369 = vector.extract_strided_slice %368 {offsets = [0, 0], sizes = [24, 75], strides = [1, 1]} : vector<24x100xf32> to vector<24x75xf32>
    %370 = arith.negf %369 : vector<24x75xf32>
    %371 = math.exp %370 : vector<24x75xf32>
    %cst_44 = arith.constant 1.000000e+00 : f32
    %372 = vector.broadcast %cst_44 : f32 to vector<24x75xf32>
    %373 = arith.addf %372, %371 : vector<24x75xf32>
    %374 = arith.divf %372, %373 : vector<24x75xf32>
    %375 = vector.extract_strided_slice %368 {offsets = [0, 75], sizes = [24, 25], strides = [1, 1]} : vector<24x100xf32> to vector<24x25xf32>
    %376 = math.tanh %375 : vector<24x25xf32>
    %377 = vector.extract_strided_slice %374 {offsets = [0, 25], sizes = [24, 25], strides = [1, 1]} : vector<24x75xf32> to vector<24x25xf32>
    %378 = arith.mulf %377, %360 : vector<24x25xf32>
    %379 = vector.extract_strided_slice %374 {offsets = [0, 0], sizes = [24, 25], strides = [1, 1]} : vector<24x75xf32> to vector<24x25xf32>
    %380 = arith.mulf %379, %376 : vector<24x25xf32>
    %381 = arith.addf %378, %380 : vector<24x25xf32>
    %382 = vector.extract_strided_slice %374 {offsets = [0, 50], sizes = [24, 25], strides = [1, 1]} : vector<24x75xf32> to vector<24x25xf32>
    %383 = math.tanh %381 : vector<24x25xf32>
    %384 = arith.mulf %382, %383 : vector<24x25xf32>
    %385 = tpu.concatenate %384, %384, %384 in 1 : vector<24x25xf32>, vector<24x25xf32>, vector<24x25xf32> -> vector<24x75xf32>
    %386 = arith.mulf %385, %4 : vector<24x75xf32>
    %387 = vector.extract_strided_slice %2 {offsets = [432, 0], sizes = [24, 100], strides = [1, 1]} : vector<480x100xf32> to vector<24x100xf32>
    %cst_45 = arith.constant dense<0.000000e+00> : vector<24x100xf32>
    %388 = tpu.matmul %386, %3, %cst_45 {dimension_numbers = #tpu.dot_dimension_numbers<[1], [0], [0], [1], [0, 0, 1, 1], [], []>} : vector<24x75xf32>, vector<75x100xf32>, vector<24x100xf32> -> vector<24x100xf32>
    %389 = arith.addf %387, %388 : vector<24x100xf32>
    %390 = vector.extract_strided_slice %389 {offsets = [0, 0], sizes = [24, 75], strides = [1, 1]} : vector<24x100xf32> to vector<24x75xf32>
    %391 = arith.negf %390 : vector<24x75xf32>
    %392 = math.exp %391 : vector<24x75xf32>
    %cst_46 = arith.constant 1.000000e+00 : f32
    %393 = vector.broadcast %cst_46 : f32 to vector<24x75xf32>
    %394 = arith.addf %393, %392 : vector<24x75xf32>
    %395 = arith.divf %393, %394 : vector<24x75xf32>
    %396 = vector.extract_strided_slice %389 {offsets = [0, 75], sizes = [24, 25], strides = [1, 1]} : vector<24x100xf32> to vector<24x25xf32>
    %397 = math.tanh %396 : vector<24x25xf32>
    %398 = vector.extract_strided_slice %395 {offsets = [0, 25], sizes = [24, 25], strides = [1, 1]} : vector<24x75xf32> to vector<24x25xf32>
    %399 = arith.mulf %398, %381 : vector<24x25xf32>
    %400 = vector.extract_strided_slice %395 {offsets = [0, 0], sizes = [24, 25], strides = [1, 1]} : vector<24x75xf32> to vector<24x25xf32>
    %401 = arith.mulf %400, %397 : vector<24x25xf32>
    %402 = arith.addf %399, %401 : vector<24x25xf32>
    %403 = vector.extract_strided_slice %395 {offsets = [0, 50], sizes = [24, 25], strides = [1, 1]} : vector<24x75xf32> to vector<24x25xf32>
    %404 = math.tanh %402 : vector<24x25xf32>
    %405 = arith.mulf %403, %404 : vector<24x25xf32>
    %406 = tpu.concatenate %405, %405, %405 in 1 : vector<24x25xf32>, vector<24x25xf32>, vector<24x25xf32> -> vector<24x75xf32>
    %407 = arith.mulf %406, %4 : vector<24x75xf32>
    %408 = vector.extract_strided_slice %2 {offsets = [456, 0], sizes = [24, 100], strides = [1, 1]} : vector<480x100xf32> to vector<24x100xf32>
    %cst_47 = arith.constant dense<0.000000e+00> : vector<24x100xf32>
    %409 = tpu.matmul %407, %3, %cst_47 {dimension_numbers = #tpu.dot_dimension_numbers<[1], [0], [0], [1], [0, 0, 1, 1], [], []>} : vector<24x75xf32>, vector<75x100xf32>, vector<24x100xf32> -> vector<24x100xf32>
    %410 = arith.addf %408, %409 : vector<24x100xf32>
    %411 = vector.extract_strided_slice %410 {offsets = [0, 0], sizes = [24, 75], strides = [1, 1]} : vector<24x100xf32> to vector<24x75xf32>
    %412 = arith.negf %411 : vector<24x75xf32>
    %413 = math.exp %412 : vector<24x75xf32>
    %cst_48 = arith.constant 1.000000e+00 : f32
    %414 = vector.broadcast %cst_48 : f32 to vector<24x75xf32>
    %415 = arith.addf %414, %413 : vector<24x75xf32>
    %416 = arith.divf %414, %415 : vector<24x75xf32>
    %417 = vector.extract_strided_slice %410 {offsets = [0, 75], sizes = [24, 25], strides = [1, 1]} : vector<24x100xf32> to vector<24x25xf32>
    %418 = math.tanh %417 : vector<24x25xf32>
    %419 = vector.extract_strided_slice %416 {offsets = [0, 25], sizes = [24, 25], strides = [1, 1]} : vector<24x75xf32> to vector<24x25xf32>
    %420 = arith.mulf %419, %402 : vector<24x25xf32>
    %421 = vector.extract_strided_slice %416 {offsets = [0, 0], sizes = [24, 25], strides = [1, 1]} : vector<24x75xf32> to vector<24x25xf32>
    %422 = arith.mulf %421, %418 : vector<24x25xf32>
    %423 = arith.addf %420, %422 : vector<24x25xf32>
    %424 = vector.extract_strided_slice %416 {offsets = [0, 50], sizes = [24, 25], strides = [1, 1]} : vector<24x75xf32> to vector<24x25xf32>
    %425 = math.tanh %423 : vector<24x25xf32>
    %426 = arith.mulf %424, %425 : vector<24x25xf32>
    %427 = vector.extract_strided_slice %426 {offsets = [0, 0], sizes = [2, 25], strides = [1, 1]} : vector<24x25xf32> to vector<2x25xf32>
    %428 = vector.extract_strided_slice %423 {offsets = [0, 0], sizes = [2, 25], strides = [1, 1]} : vector<24x25xf32> to vector<2x25xf32>
    %429 = vector.extract_strided_slice %423 {offsets = [2, 0], sizes = [8, 25], strides = [1, 1]} : vector<24x25xf32> to vector<8x25xf32>
    %430 = vector.extract_strided_slice %423 {offsets = [10, 0], sizes = [2, 25], strides = [1, 1]} : vector<24x25xf32> to vector<2x25xf32>
    %431 = vector.extract_strided_slice %423 {offsets = [12, 0], sizes = [6, 25], strides = [1, 1]} : vector<24x25xf32> to vector<6x25xf32>
    %432 = tpu.concatenate %430, %431, %429 in 0 : vector<2x25xf32>, vector<6x25xf32>, vector<8x25xf32> -> vector<16x25xf32>
    %433 = tpu.concatenate %432, %432, %432 in 1 : vector<16x25xf32>, vector<16x25xf32>, vector<16x25xf32> -> vector<16x75xf32>
    %c0_49 = arith.constant 0 : index
    %c0_50 = arith.constant 0 : index
    %434 = vector.load %arg11[%c0_49, %c0_50] : memref<16x75xf32, #tpu.memory_space<vmem>>, vector<16x75xf32>
    %435 = arith.mulf %433, %434 : vector<16x75xf32>
    %c0_51 = arith.constant 0 : index
    %c0_52 = arith.constant 0 : index
    %436 = vector.load %arg7[%c0_51, %c0_52] : memref<75x25xf32, #tpu.memory_space<vmem>>, vector<75x25xf32>
    %cst_53 = arith.constant dense<0.000000e+00> : vector<16x25xf32>
    %437 = tpu.matmul %435, %436, %cst_53 {dimension_numbers = #tpu.dot_dimension_numbers<[1], [0], [0], [1], [0, 0, 1, 1], [], []>} : vector<16x75xf32>, vector<75x25xf32>, vector<16x25xf32> -> vector<16x25xf32>
    %c0_54 = arith.constant 0 : index
    %c0_55 = arith.constant 0 : index
    %438 = vector.load %arg8[%c0_54, %c0_55] : memref<75x5xf32, #tpu.memory_space<vmem>>, vector<75x5xf32>
    %cst_56 = arith.constant dense<0.000000e+00> : vector<16x5xf32>
    %439 = tpu.matmul %435, %438, %cst_56 {dimension_numbers = #tpu.dot_dimension_numbers<[1], [0], [0], [1], [0, 0, 1, 1], [], []>} : vector<16x75xf32>, vector<75x5xf32>, vector<16x5xf32> -> vector<16x5xf32>
    %c0_57 = arith.constant 0 : index
    %c0_58 = arith.constant 0 : index
    %c0_59 = arith.constant 0 : index
    %440 = vector.load %arg9[%c0_57, %c0_58, %c0_59] : memref<3x25x5xf32, #tpu.memory_space<vmem>>, vector<1x25x5xf32>
    %441 = vector.shape_cast %440 : vector<1x25x5xf32> to vector<25x5xf32>
    %cst_60 = arith.constant dense<0.000000e+00> : vector<2x5xf32>
    %442 = tpu.matmul %428, %441, %cst_60 {dimension_numbers = #tpu.dot_dimension_numbers<[1], [0], [0], [1], [0, 0, 1, 1], [], []>} : vector<2x25xf32>, vector<25x5xf32>, vector<2x5xf32> -> vector<2x5xf32>
    %c1 = arith.constant 1 : index
    %c0_61 = arith.constant 0 : index
    %c0_62 = arith.constant 0 : index
    %443 = vector.load %arg9[%c1, %c0_61, %c0_62] : memref<3x25x5xf32, #tpu.memory_space<vmem>>, vector<1x25x5xf32>
    %444 = vector.shape_cast %443 : vector<1x25x5xf32> to vector<25x5xf32>
    %cst_63 = arith.constant dense<0.000000e+00> : vector<2x5xf32>
    %445 = tpu.matmul %428, %444, %cst_63 {dimension_numbers = #tpu.dot_dimension_numbers<[1], [0], [0], [1], [0, 0, 1, 1], [], []>} : vector<2x25xf32>, vector<25x5xf32>, vector<2x5xf32> -> vector<2x5xf32>
    %c2 = arith.constant 2 : index
    %c0_64 = arith.constant 0 : index
    %c0_65 = arith.constant 0 : index
    %446 = vector.load %arg9[%c2, %c0_64, %c0_65] : memref<3x25x5xf32, #tpu.memory_space<vmem>>, vector<1x25x5xf32>
    %447 = vector.shape_cast %446 : vector<1x25x5xf32> to vector<25x5xf32>
    %cst_66 = arith.constant dense<0.000000e+00> : vector<2x5xf32>
    %448 = tpu.matmul %428, %447, %cst_66 {dimension_numbers = #tpu.dot_dimension_numbers<[1], [0], [0], [1], [0, 0, 1, 1], [], []>} : vector<2x25xf32>, vector<25x5xf32>, vector<2x5xf32> -> vector<2x5xf32>
    %449 = tpu.concatenate %442, %445, %448 in 0 : vector<2x5xf32>, vector<2x5xf32>, vector<2x5xf32> -> vector<6x5xf32>
    %c0_67 = arith.constant 0 : index
    %c0_68 = arith.constant 0 : index
    %450 = vector.load %arg12[%c0_67, %c0_68] : memref<16x6xf32, #tpu.memory_space<vmem>>, vector<16x6xf32>
    %cst_69 = arith.constant dense<0.000000e+00> : vector<16x5xf32>
    %451 = tpu.matmul %450, %449, %cst_69 {dimension_numbers = #tpu.dot_dimension_numbers<[1], [0], [0], [1], [0, 0, 1, 1], [], []>} : vector<16x6xf32>, vector<6x5xf32>, vector<16x5xf32> -> vector<16x5xf32>
    %452 = arith.addf %439, %451 : vector<16x5xf32>
    %cst_70 = arith.constant 0.000000e+00 : f32
    %453 = vector.broadcast %cst_70 : f32 to vector<16x5xf32>
    %454 = arith.cmpf ogt, %452, %453 : vector<16x5xf32>
    %cst_71 = arith.constant 2.000000e-01 : f32
    %455 = vector.broadcast %cst_71 : f32 to vector<16x5xf32>
    %456 = arith.mulf %455, %452 : vector<16x5xf32>
    %457 = arith.select %454, %452, %456 : vector<16x5xi1>, vector<16x5xf32>
    %cst_72 = arith.constant dense<0xFF800000> : vector<5xf32>
    %458 = vector.multi_reduction <maximumf>, %457, %cst_72 [0] : vector<16x5xf32> to vector<5xf32>
    %459 = vector.shape_cast %458 : vector<5xf32> to vector<1x5xf32>
    %460 = vector.broadcast %459 : vector<1x5xf32> to vector<16x5xf32>
    %461 = arith.subf %457, %460 : vector<16x5xf32>
    %462 = math.exp %461 : vector<16x5xf32>
    %c0_73 = arith.constant 0 : index
    %c0_74 = arith.constant 0 : index
    %463 = vector.load %arg13[%c0_73, %c0_74] : memref<6x16xf32, #tpu.memory_space<vmem>>, vector<6x16xf32>
    %cst_75 = arith.constant dense<0.000000e+00> : vector<6x5xf32>
    %464 = tpu.matmul %463, %462, %cst_75 {dimension_numbers = #tpu.dot_dimension_numbers<[1], [0], [0], [1], [0, 0, 1, 1], [], []>} : vector<6x16xf32>, vector<16x5xf32>, vector<6x5xf32> -> vector<6x5xf32>
    %cst_76 = arith.constant 9.99999968E-21 : f32
    %465 = vector.broadcast %cst_76 : f32 to vector<6x5xf32>
    %466 = arith.maximumf %464, %465 : vector<6x5xf32>
    %467 = tpu.reciprocal %466 {approx = true} : vector<6x5xf32> -> vector<6x5xf32>
    %c0_77 = arith.constant 0 : index
    %c0_78 = arith.constant 0 : index
    %468 = vector.load %arg12[%c0_77, %c0_78] : memref<16x6xf32, #tpu.memory_space<vmem>>, vector<16x6xf32>
    %cst_79 = arith.constant dense<0.000000e+00> : vector<16x5xf32>
    %469 = tpu.matmul %468, %467, %cst_79 {dimension_numbers = #tpu.dot_dimension_numbers<[1], [0], [0], [1], [0, 0, 1, 1], [], []>} : vector<16x6xf32>, vector<6x5xf32>, vector<16x5xf32> -> vector<16x5xf32>
    %470 = arith.mulf %462, %469 : vector<16x5xf32>
    %c0_80 = arith.constant 0 : index
    %c0_81 = arith.constant 0 : index
    %471 = vector.load %arg15[%c0_80, %c0_81] : memref<5x25xf32, #tpu.memory_space<vmem>>, vector<5x25xf32>
    %cst_82 = arith.constant dense<0.000000e+00> : vector<16x25xf32>
    %472 = tpu.matmul %470, %471, %cst_82 {dimension_numbers = #tpu.dot_dimension_numbers<[1], [0], [0], [1], [0, 0, 1, 1], [], []>} : vector<16x5xf32>, vector<5x25xf32>, vector<16x25xf32> -> vector<16x25xf32>
    %c0_83 = arith.constant 0 : index
    %c0_84 = arith.constant 0 : index
    %473 = vector.load %arg14[%c0_83, %c0_84] : memref<2x16xf32, #tpu.memory_space<vmem>>, vector<2x16xf32>
    %474 = arith.mulf %472, %437 : vector<16x25xf32>
    %cst_85 = arith.constant dense<0.000000e+00> : vector<2x25xf32>
    %475 = tpu.matmul %473, %474, %cst_85 {dimension_numbers = #tpu.dot_dimension_numbers<[1], [0], [0], [1], [0, 0, 1, 1], [], []>} : vector<2x16xf32>, vector<16x25xf32>, vector<2x25xf32> -> vector<2x25xf32>
    %c0_86 = arith.constant 0 : index
    %c0_87 = arith.constant 0 : index
    %476 = vector.load %arg10[%c0_86, %c0_87] : memref<1x25xf32, #tpu.memory_space<vmem>>, vector<1x25xf32>
    %477 = vector.broadcast %476 : vector<1x25xf32> to vector<2x25xf32>
    %478 = arith.addf %475, %477 : vector<2x25xf32>
    %cst_88 = arith.constant 0.333333343 : f32
    %479 = vector.broadcast %cst_88 : f32 to vector<2x25xf32>
    %480 = arith.mulf %478, %479 : vector<2x25xf32>
    %c0_89 = arith.constant 0 : index
    %c0_90 = arith.constant 0 : index
    %481 = vector.load %arg5[%c0_89, %c0_90] : memref<25x100xf32, #tpu.memory_space<vmem>>, vector<25x100xf32>
    %482 = tpu.iota {dimensions = array<i32: 0>} : vector<30x1xi32>
    %483 = arith.sitofp %482 : vector<30x1xi32> to vector<30x1xf32>
    %cst_91 = arith.constant 1.000000e-01 : f32
    %484 = vector.broadcast %cst_91 : f32 to vector<30x1xf32>
    %485 = arith.mulf %483, %484 : vector<30x1xf32>
    %c0_92 = arith.constant 0 : index
    %c0_93 = arith.constant 0 : index
    %486 = vector.load %arg4[%c0_92, %c0_93] : memref<1x100xf32, #tpu.memory_space<vmem>>, vector<1x100xf32>
    %487 = vector.broadcast %485 : vector<30x1xf32> to vector<30x100xf32>
    %488 = vector.broadcast %486 : vector<1x100xf32> to vector<30x100xf32>
    %489 = arith.mulf %487, %488 : vector<30x100xf32>
    %c0_94 = arith.constant 0 : index
    %c0_95 = arith.constant 0 : index
    %490 = vector.load %arg6[%c0_94, %c0_95] : memref<1x100xf32, #tpu.memory_space<vmem>>, vector<1x100xf32>
    %491 = vector.broadcast %490 : vector<1x100xf32> to vector<30x100xf32>
    %492 = arith.addf %489, %491 : vector<30x100xf32>
    %493 = arith.addf %428, %480 : vector<2x25xf32>
    %494 = vector.extract_strided_slice %492 {offsets = [0, 0], sizes = [1, 100], strides = [1, 1]} : vector<30x100xf32> to vector<1x100xf32>
    %cst_96 = arith.constant dense<0.000000e+00> : vector<2x100xf32>
    %495 = tpu.matmul %427, %481, %cst_96 {dimension_numbers = #tpu.dot_dimension_numbers<[1], [0], [0], [1], [0, 0, 1, 1], [], []>} : vector<2x25xf32>, vector<25x100xf32>, vector<2x100xf32> -> vector<2x100xf32>
    %496 = vector.broadcast %494 : vector<1x100xf32> to vector<2x100xf32>
    %497 = arith.addf %496, %495 : vector<2x100xf32>
    %498 = vector.extract_strided_slice %497 {offsets = [0, 0], sizes = [2, 75], strides = [1, 1]} : vector<2x100xf32> to vector<2x75xf32>
    %499 = arith.negf %498 : vector<2x75xf32>
    %500 = math.exp %499 : vector<2x75xf32>
    %cst_97 = arith.constant 1.000000e+00 : f32
    %501 = vector.broadcast %cst_97 : f32 to vector<2x75xf32>
    %502 = arith.addf %501, %500 : vector<2x75xf32>
    %503 = arith.divf %501, %502 : vector<2x75xf32>
    %504 = vector.extract_strided_slice %497 {offsets = [0, 75], sizes = [2, 25], strides = [1, 1]} : vector<2x100xf32> to vector<2x25xf32>
    %505 = math.tanh %504 : vector<2x25xf32>
    %506 = vector.extract_strided_slice %503 {offsets = [0, 25], sizes = [2, 25], strides = [1, 1]} : vector<2x75xf32> to vector<2x25xf32>
    %507 = arith.mulf %506, %493 : vector<2x25xf32>
    %508 = vector.extract_strided_slice %503 {offsets = [0, 0], sizes = [2, 25], strides = [1, 1]} : vector<2x75xf32> to vector<2x25xf32>
    %509 = arith.mulf %508, %505 : vector<2x25xf32>
    %510 = arith.addf %507, %509 : vector<2x25xf32>
    %511 = vector.extract_strided_slice %503 {offsets = [0, 50], sizes = [2, 25], strides = [1, 1]} : vector<2x75xf32> to vector<2x25xf32>
    %512 = math.tanh %510 : vector<2x25xf32>
    %513 = arith.mulf %511, %512 : vector<2x25xf32>
    %c0_98 = arith.constant 0 : index
    %c0_99 = arith.constant 0 : index
    %514 = vector.load %arg19[%c0_98, %c0_99] : memref<60x25xf32, #tpu.memory_space<vmem>>, vector<2x25xf32>
    tpu.vector_store %arg19[%c0_98, %c0_99], %513 {strides = array<i32>} : memref<60x25xf32, #tpu.memory_space<vmem>>, vector<2x25xf32>,
    %515 = vector.extract_strided_slice %492 {offsets = [1, 0], sizes = [1, 100], strides = [1, 1]} : vector<30x100xf32> to vector<1x100xf32>
    %cst_100 = arith.constant dense<0.000000e+00> : vector<2x100xf32>
    %516 = tpu.matmul %513, %481, %cst_100 {dimension_numbers = #tpu.dot_dimension_numbers<[1], [0], [0], [1], [0, 0, 1, 1], [], []>} : vector<2x25xf32>, vector<25x100xf32>, vector<2x100xf32> -> vector<2x100xf32>
    %517 = vector.broadcast %515 : vector<1x100xf32> to vector<2x100xf32>
    %518 = arith.addf %517, %516 : vector<2x100xf32>
    %519 = vector.extract_strided_slice %518 {offsets = [0, 0], sizes = [2, 75], strides = [1, 1]} : vector<2x100xf32> to vector<2x75xf32>
    %520 = arith.negf %519 : vector<2x75xf32>
    %521 = math.exp %520 : vector<2x75xf32>
    %cst_101 = arith.constant 1.000000e+00 : f32
    %522 = vector.broadcast %cst_101 : f32 to vector<2x75xf32>
    %523 = arith.addf %522, %521 : vector<2x75xf32>
    %524 = arith.divf %522, %523 : vector<2x75xf32>
    %525 = vector.extract_strided_slice %518 {offsets = [0, 75], sizes = [2, 25], strides = [1, 1]} : vector<2x100xf32> to vector<2x25xf32>
    %526 = math.tanh %525 : vector<2x25xf32>
    %527 = vector.extract_strided_slice %524 {offsets = [0, 25], sizes = [2, 25], strides = [1, 1]} : vector<2x75xf32> to vector<2x25xf32>
    %528 = arith.mulf %527, %510 : vector<2x25xf32>
    %529 = vector.extract_strided_slice %524 {offsets = [0, 0], sizes = [2, 25], strides = [1, 1]} : vector<2x75xf32> to vector<2x25xf32>
    %530 = arith.mulf %529, %526 : vector<2x25xf32>
    %531 = arith.addf %528, %530 : vector<2x25xf32>
    %532 = vector.extract_strided_slice %524 {offsets = [0, 50], sizes = [2, 25], strides = [1, 1]} : vector<2x75xf32> to vector<2x25xf32>
    %533 = math.tanh %531 : vector<2x25xf32>
    %534 = arith.mulf %532, %533 : vector<2x25xf32>
    %c2_102 = arith.constant 2 : index
    %c0_103 = arith.constant 0 : index
    %535 = vector.load %arg19[%c2_102, %c0_103] : memref<60x25xf32, #tpu.memory_space<vmem>>, vector<2x25xf32>
    tpu.vector_store %arg19[%c2_102, %c0_103], %534 {strides = array<i32>} : memref<60x25xf32, #tpu.memory_space<vmem>>, vector<2x25xf32>,
    %536 = vector.extract_strided_slice %492 {offsets = [2, 0], sizes = [1, 100], strides = [1, 1]} : vector<30x100xf32> to vector<1x100xf32>
    %cst_104 = arith.constant dense<0.000000e+00> : vector<2x100xf32>
    %537 = tpu.matmul %534, %481, %cst_104 {dimension_numbers = #tpu.dot_dimension_numbers<[1], [0], [0], [1], [0, 0, 1, 1], [], []>} : vector<2x25xf32>, vector<25x100xf32>, vector<2x100xf32> -> vector<2x100xf32>
    %538 = vector.broadcast %536 : vector<1x100xf32> to vector<2x100xf32>
    %539 = arith.addf %538, %537 : vector<2x100xf32>
    %540 = vector.extract_strided_slice %539 {offsets = [0, 0], sizes = [2, 75], strides = [1, 1]} : vector<2x100xf32> to vector<2x75xf32>
    %541 = arith.negf %540 : vector<2x75xf32>
    %542 = math.exp %541 : vector<2x75xf32>
    %cst_105 = arith.constant 1.000000e+00 : f32
    %543 = vector.broadcast %cst_105 : f32 to vector<2x75xf32>
    %544 = arith.addf %543, %542 : vector<2x75xf32>
    %545 = arith.divf %543, %544 : vector<2x75xf32>
    %546 = vector.extract_strided_slice %539 {offsets = [0, 75], sizes = [2, 25], strides = [1, 1]} : vector<2x100xf32> to vector<2x25xf32>
    %547 = math.tanh %546 : vector<2x25xf32>
    %548 = vector.extract_strided_slice %545 {offsets = [0, 25], sizes = [2, 25], strides = [1, 1]} : vector<2x75xf32> to vector<2x25xf32>
    %549 = arith.mulf %548, %531 : vector<2x25xf32>
    %550 = vector.extract_strided_slice %545 {offsets = [0, 0], sizes = [2, 25], strides = [1, 1]} : vector<2x75xf32> to vector<2x25xf32>
    %551 = arith.mulf %550, %547 : vector<2x25xf32>
    %552 = arith.addf %549, %551 : vector<2x25xf32>
    %553 = vector.extract_strided_slice %545 {offsets = [0, 50], sizes = [2, 25], strides = [1, 1]} : vector<2x75xf32> to vector<2x25xf32>
    %554 = math.tanh %552 : vector<2x25xf32>
    %555 = arith.mulf %553, %554 : vector<2x25xf32>
    %c4 = arith.constant 4 : index
    %c0_106 = arith.constant 0 : index
    %556 = vector.load %arg19[%c4, %c0_106] : memref<60x25xf32, #tpu.memory_space<vmem>>, vector<2x25xf32>
    tpu.vector_store %arg19[%c4, %c0_106], %555 {strides = array<i32>} : memref<60x25xf32, #tpu.memory_space<vmem>>, vector<2x25xf32>,
    %557 = vector.extract_strided_slice %492 {offsets = [3, 0], sizes = [1, 100], strides = [1, 1]} : vector<30x100xf32> to vector<1x100xf32>
    %cst_107 = arith.constant dense<0.000000e+00> : vector<2x100xf32>
    %558 = tpu.matmul %555, %481, %cst_107 {dimension_numbers = #tpu.dot_dimension_numbers<[1], [0], [0], [1], [0, 0, 1, 1], [], []>} : vector<2x25xf32>, vector<25x100xf32>, vector<2x100xf32> -> vector<2x100xf32>
    %559 = vector.broadcast %557 : vector<1x100xf32> to vector<2x100xf32>
    %560 = arith.addf %559, %558 : vector<2x100xf32>
    %561 = vector.extract_strided_slice %560 {offsets = [0, 0], sizes = [2, 75], strides = [1, 1]} : vector<2x100xf32> to vector<2x75xf32>
    %562 = arith.negf %561 : vector<2x75xf32>
    %563 = math.exp %562 : vector<2x75xf32>
    %cst_108 = arith.constant 1.000000e+00 : f32
    %564 = vector.broadcast %cst_108 : f32 to vector<2x75xf32>
    %565 = arith.addf %564, %563 : vector<2x75xf32>
    %566 = arith.divf %564, %565 : vector<2x75xf32>
    %567 = vector.extract_strided_slice %560 {offsets = [0, 75], sizes = [2, 25], strides = [1, 1]} : vector<2x100xf32> to vector<2x25xf32>
    %568 = math.tanh %567 : vector<2x25xf32>
    %569 = vector.extract_strided_slice %566 {offsets = [0, 25], sizes = [2, 25], strides = [1, 1]} : vector<2x75xf32> to vector<2x25xf32>
    %570 = arith.mulf %569, %552 : vector<2x25xf32>
    %571 = vector.extract_strided_slice %566 {offsets = [0, 0], sizes = [2, 25], strides = [1, 1]} : vector<2x75xf32> to vector<2x25xf32>
    %572 = arith.mulf %571, %568 : vector<2x25xf32>
    %573 = arith.addf %570, %572 : vector<2x25xf32>
    %574 = vector.extract_strided_slice %566 {offsets = [0, 50], sizes = [2, 25], strides = [1, 1]} : vector<2x75xf32> to vector<2x25xf32>
    %575 = math.tanh %573 : vector<2x25xf32>
    %576 = arith.mulf %574, %575 : vector<2x25xf32>
    %c6 = arith.constant 6 : index
    %c0_109 = arith.constant 0 : index
    %577 = vector.load %arg19[%c6, %c0_109] : memref<60x25xf32, #tpu.memory_space<vmem>>, vector<2x25xf32>
    tpu.vector_store %arg19[%c6, %c0_109], %576 {strides = array<i32>} : memref<60x25xf32, #tpu.memory_space<vmem>>, vector<2x25xf32>,
    %578 = vector.extract_strided_slice %492 {offsets = [4, 0], sizes = [1, 100], strides = [1, 1]} : vector<30x100xf32> to vector<1x100xf32>
    %cst_110 = arith.constant dense<0.000000e+00> : vector<2x100xf32>
    %579 = tpu.matmul %576, %481, %cst_110 {dimension_numbers = #tpu.dot_dimension_numbers<[1], [0], [0], [1], [0, 0, 1, 1], [], []>} : vector<2x25xf32>, vector<25x100xf32>, vector<2x100xf32> -> vector<2x100xf32>
    %580 = vector.broadcast %578 : vector<1x100xf32> to vector<2x100xf32>
    %581 = arith.addf %580, %579 : vector<2x100xf32>
    %582 = vector.extract_strided_slice %581 {offsets = [0, 0], sizes = [2, 75], strides = [1, 1]} : vector<2x100xf32> to vector<2x75xf32>
    %583 = arith.negf %582 : vector<2x75xf32>
    %584 = math.exp %583 : vector<2x75xf32>
    %cst_111 = arith.constant 1.000000e+00 : f32
    %585 = vector.broadcast %cst_111 : f32 to vector<2x75xf32>
    %586 = arith.addf %585, %584 : vector<2x75xf32>
    %587 = arith.divf %585, %586 : vector<2x75xf32>
    %588 = vector.extract_strided_slice %581 {offsets = [0, 75], sizes = [2, 25], strides = [1, 1]} : vector<2x100xf32> to vector<2x25xf32>
    %589 = math.tanh %588 : vector<2x25xf32>
    %590 = vector.extract_strided_slice %587 {offsets = [0, 25], sizes = [2, 25], strides = [1, 1]} : vector<2x75xf32> to vector<2x25xf32>
    %591 = arith.mulf %590, %573 : vector<2x25xf32>
    %592 = vector.extract_strided_slice %587 {offsets = [0, 0], sizes = [2, 25], strides = [1, 1]} : vector<2x75xf32> to vector<2x25xf32>
    %593 = arith.mulf %592, %589 : vector<2x25xf32>
    %594 = arith.addf %591, %593 : vector<2x25xf32>
    %595 = vector.extract_strided_slice %587 {offsets = [0, 50], sizes = [2, 25], strides = [1, 1]} : vector<2x75xf32> to vector<2x25xf32>
    %596 = math.tanh %594 : vector<2x25xf32>
    %597 = arith.mulf %595, %596 : vector<2x25xf32>
    %c8 = arith.constant 8 : index
    %c0_112 = arith.constant 0 : index
    %598 = vector.load %arg19[%c8, %c0_112] : memref<60x25xf32, #tpu.memory_space<vmem>>, vector<2x25xf32>
    tpu.vector_store %arg19[%c8, %c0_112], %597 {strides = array<i32>} : memref<60x25xf32, #tpu.memory_space<vmem>>, vector<2x25xf32>,
    %599 = vector.extract_strided_slice %492 {offsets = [5, 0], sizes = [1, 100], strides = [1, 1]} : vector<30x100xf32> to vector<1x100xf32>
    %cst_113 = arith.constant dense<0.000000e+00> : vector<2x100xf32>
    %600 = tpu.matmul %597, %481, %cst_113 {dimension_numbers = #tpu.dot_dimension_numbers<[1], [0], [0], [1], [0, 0, 1, 1], [], []>} : vector<2x25xf32>, vector<25x100xf32>, vector<2x100xf32> -> vector<2x100xf32>
    %601 = vector.broadcast %599 : vector<1x100xf32> to vector<2x100xf32>
    %602 = arith.addf %601, %600 : vector<2x100xf32>
    %603 = vector.extract_strided_slice %602 {offsets = [0, 0], sizes = [2, 75], strides = [1, 1]} : vector<2x100xf32> to vector<2x75xf32>
    %604 = arith.negf %603 : vector<2x75xf32>
    %605 = math.exp %604 : vector<2x75xf32>
    %cst_114 = arith.constant 1.000000e+00 : f32
    %606 = vector.broadcast %cst_114 : f32 to vector<2x75xf32>
    %607 = arith.addf %606, %605 : vector<2x75xf32>
    %608 = arith.divf %606, %607 : vector<2x75xf32>
    %609 = vector.extract_strided_slice %602 {offsets = [0, 75], sizes = [2, 25], strides = [1, 1]} : vector<2x100xf32> to vector<2x25xf32>
    %610 = math.tanh %609 : vector<2x25xf32>
    %611 = vector.extract_strided_slice %608 {offsets = [0, 25], sizes = [2, 25], strides = [1, 1]} : vector<2x75xf32> to vector<2x25xf32>
    %612 = arith.mulf %611, %594 : vector<2x25xf32>
    %613 = vector.extract_strided_slice %608 {offsets = [0, 0], sizes = [2, 25], strides = [1, 1]} : vector<2x75xf32> to vector<2x25xf32>
    %614 = arith.mulf %613, %610 : vector<2x25xf32>
    %615 = arith.addf %612, %614 : vector<2x25xf32>
    %616 = vector.extract_strided_slice %608 {offsets = [0, 50], sizes = [2, 25], strides = [1, 1]} : vector<2x75xf32> to vector<2x25xf32>
    %617 = math.tanh %615 : vector<2x25xf32>
    %618 = arith.mulf %616, %617 : vector<2x25xf32>
    %c10 = arith.constant 10 : index
    %c0_115 = arith.constant 0 : index
    %619 = vector.load %arg19[%c10, %c0_115] : memref<60x25xf32, #tpu.memory_space<vmem>>, vector<2x25xf32>
    tpu.vector_store %arg19[%c10, %c0_115], %618 {strides = array<i32>} : memref<60x25xf32, #tpu.memory_space<vmem>>, vector<2x25xf32>,
    %620 = vector.extract_strided_slice %492 {offsets = [6, 0], sizes = [1, 100], strides = [1, 1]} : vector<30x100xf32> to vector<1x100xf32>
    %cst_116 = arith.constant dense<0.000000e+00> : vector<2x100xf32>
    %621 = tpu.matmul %618, %481, %cst_116 {dimension_numbers = #tpu.dot_dimension_numbers<[1], [0], [0], [1], [0, 0, 1, 1], [], []>} : vector<2x25xf32>, vector<25x100xf32>, vector<2x100xf32> -> vector<2x100xf32>
    %622 = vector.broadcast %620 : vector<1x100xf32> to vector<2x100xf32>
    %623 = arith.addf %622, %621 : vector<2x100xf32>
    %624 = vector.extract_strided_slice %623 {offsets = [0, 0], sizes = [2, 75], strides = [1, 1]} : vector<2x100xf32> to vector<2x75xf32>
    %625 = arith.negf %624 : vector<2x75xf32>
    %626 = math.exp %625 : vector<2x75xf32>
    %cst_117 = arith.constant 1.000000e+00 : f32
    %627 = vector.broadcast %cst_117 : f32 to vector<2x75xf32>
    %628 = arith.addf %627, %626 : vector<2x75xf32>
    %629 = arith.divf %627, %628 : vector<2x75xf32>
    %630 = vector.extract_strided_slice %623 {offsets = [0, 75], sizes = [2, 25], strides = [1, 1]} : vector<2x100xf32> to vector<2x25xf32>
    %631 = math.tanh %630 : vector<2x25xf32>
    %632 = vector.extract_strided_slice %629 {offsets = [0, 25], sizes = [2, 25], strides = [1, 1]} : vector<2x75xf32> to vector<2x25xf32>
    %633 = arith.mulf %632, %615 : vector<2x25xf32>
    %634 = vector.extract_strided_slice %629 {offsets = [0, 0], sizes = [2, 25], strides = [1, 1]} : vector<2x75xf32> to vector<2x25xf32>
    %635 = arith.mulf %634, %631 : vector<2x25xf32>
    %636 = arith.addf %633, %635 : vector<2x25xf32>
    %637 = vector.extract_strided_slice %629 {offsets = [0, 50], sizes = [2, 25], strides = [1, 1]} : vector<2x75xf32> to vector<2x25xf32>
    %638 = math.tanh %636 : vector<2x25xf32>
    %639 = arith.mulf %637, %638 : vector<2x25xf32>
    %c12 = arith.constant 12 : index
    %c0_118 = arith.constant 0 : index
    %640 = vector.load %arg19[%c12, %c0_118] : memref<60x25xf32, #tpu.memory_space<vmem>>, vector<2x25xf32>
    tpu.vector_store %arg19[%c12, %c0_118], %639 {strides = array<i32>} : memref<60x25xf32, #tpu.memory_space<vmem>>, vector<2x25xf32>,
    %641 = vector.extract_strided_slice %492 {offsets = [7, 0], sizes = [1, 100], strides = [1, 1]} : vector<30x100xf32> to vector<1x100xf32>
    %cst_119 = arith.constant dense<0.000000e+00> : vector<2x100xf32>
    %642 = tpu.matmul %639, %481, %cst_119 {dimension_numbers = #tpu.dot_dimension_numbers<[1], [0], [0], [1], [0, 0, 1, 1], [], []>} : vector<2x25xf32>, vector<25x100xf32>, vector<2x100xf32> -> vector<2x100xf32>
    %643 = vector.broadcast %641 : vector<1x100xf32> to vector<2x100xf32>
    %644 = arith.addf %643, %642 : vector<2x100xf32>
    %645 = vector.extract_strided_slice %644 {offsets = [0, 0], sizes = [2, 75], strides = [1, 1]} : vector<2x100xf32> to vector<2x75xf32>
    %646 = arith.negf %645 : vector<2x75xf32>
    %647 = math.exp %646 : vector<2x75xf32>
    %cst_120 = arith.constant 1.000000e+00 : f32
    %648 = vector.broadcast %cst_120 : f32 to vector<2x75xf32>
    %649 = arith.addf %648, %647 : vector<2x75xf32>
    %650 = arith.divf %648, %649 : vector<2x75xf32>
    %651 = vector.extract_strided_slice %644 {offsets = [0, 75], sizes = [2, 25], strides = [1, 1]} : vector<2x100xf32> to vector<2x25xf32>
    %652 = math.tanh %651 : vector<2x25xf32>
    %653 = vector.extract_strided_slice %650 {offsets = [0, 25], sizes = [2, 25], strides = [1, 1]} : vector<2x75xf32> to vector<2x25xf32>
    %654 = arith.mulf %653, %636 : vector<2x25xf32>
    %655 = vector.extract_strided_slice %650 {offsets = [0, 0], sizes = [2, 25], strides = [1, 1]} : vector<2x75xf32> to vector<2x25xf32>
    %656 = arith.mulf %655, %652 : vector<2x25xf32>
    %657 = arith.addf %654, %656 : vector<2x25xf32>
    %658 = vector.extract_strided_slice %650 {offsets = [0, 50], sizes = [2, 25], strides = [1, 1]} : vector<2x75xf32> to vector<2x25xf32>
    %659 = math.tanh %657 : vector<2x25xf32>
    %660 = arith.mulf %658, %659 : vector<2x25xf32>
    %c14 = arith.constant 14 : index
    %c0_121 = arith.constant 0 : index
    %661 = vector.load %arg19[%c14, %c0_121] : memref<60x25xf32, #tpu.memory_space<vmem>>, vector<2x25xf32>
    tpu.vector_store %arg19[%c14, %c0_121], %660 {strides = array<i32>} : memref<60x25xf32, #tpu.memory_space<vmem>>, vector<2x25xf32>,
    %662 = vector.extract_strided_slice %492 {offsets = [8, 0], sizes = [1, 100], strides = [1, 1]} : vector<30x100xf32> to vector<1x100xf32>
    %cst_122 = arith.constant dense<0.000000e+00> : vector<2x100xf32>
    %663 = tpu.matmul %660, %481, %cst_122 {dimension_numbers = #tpu.dot_dimension_numbers<[1], [0], [0], [1], [0, 0, 1, 1], [], []>} : vector<2x25xf32>, vector<25x100xf32>, vector<2x100xf32> -> vector<2x100xf32>
    %664 = vector.broadcast %662 : vector<1x100xf32> to vector<2x100xf32>
    %665 = arith.addf %664, %663 : vector<2x100xf32>
    %666 = vector.extract_strided_slice %665 {offsets = [0, 0], sizes = [2, 75], strides = [1, 1]} : vector<2x100xf32> to vector<2x75xf32>
    %667 = arith.negf %666 : vector<2x75xf32>
    %668 = math.exp %667 : vector<2x75xf32>
    %cst_123 = arith.constant 1.000000e+00 : f32
    %669 = vector.broadcast %cst_123 : f32 to vector<2x75xf32>
    %670 = arith.addf %669, %668 : vector<2x75xf32>
    %671 = arith.divf %669, %670 : vector<2x75xf32>
    %672 = vector.extract_strided_slice %665 {offsets = [0, 75], sizes = [2, 25], strides = [1, 1]} : vector<2x100xf32> to vector<2x25xf32>
    %673 = math.tanh %672 : vector<2x25xf32>
    %674 = vector.extract_strided_slice %671 {offsets = [0, 25], sizes = [2, 25], strides = [1, 1]} : vector<2x75xf32> to vector<2x25xf32>
    %675 = arith.mulf %674, %657 : vector<2x25xf32>
    %676 = vector.extract_strided_slice %671 {offsets = [0, 0], sizes = [2, 25], strides = [1, 1]} : vector<2x75xf32> to vector<2x25xf32>
    %677 = arith.mulf %676, %673 : vector<2x25xf32>
    %678 = arith.addf %675, %677 : vector<2x25xf32>
    %679 = vector.extract_strided_slice %671 {offsets = [0, 50], sizes = [2, 25], strides = [1, 1]} : vector<2x75xf32> to vector<2x25xf32>
    %680 = math.tanh %678 : vector<2x25xf32>
    %681 = arith.mulf %679, %680 : vector<2x25xf32>
    %c16 = arith.constant 16 : index
    %c0_124 = arith.constant 0 : index
    %682 = vector.load %arg19[%c16, %c0_124] : memref<60x25xf32, #tpu.memory_space<vmem>>, vector<2x25xf32>
    tpu.vector_store %arg19[%c16, %c0_124], %681 {strides = array<i32>} : memref<60x25xf32, #tpu.memory_space<vmem>>, vector<2x25xf32>,
    %683 = vector.extract_strided_slice %492 {offsets = [9, 0], sizes = [1, 100], strides = [1, 1]} : vector<30x100xf32> to vector<1x100xf32>
    %cst_125 = arith.constant dense<0.000000e+00> : vector<2x100xf32>
    %684 = tpu.matmul %681, %481, %cst_125 {dimension_numbers = #tpu.dot_dimension_numbers<[1], [0], [0], [1], [0, 0, 1, 1], [], []>} : vector<2x25xf32>, vector<25x100xf32>, vector<2x100xf32> -> vector<2x100xf32>
    %685 = vector.broadcast %683 : vector<1x100xf32> to vector<2x100xf32>
    %686 = arith.addf %685, %684 : vector<2x100xf32>
    %687 = vector.extract_strided_slice %686 {offsets = [0, 0], sizes = [2, 75], strides = [1, 1]} : vector<2x100xf32> to vector<2x75xf32>
    %688 = arith.negf %687 : vector<2x75xf32>
    %689 = math.exp %688 : vector<2x75xf32>
    %cst_126 = arith.constant 1.000000e+00 : f32
    %690 = vector.broadcast %cst_126 : f32 to vector<2x75xf32>
    %691 = arith.addf %690, %689 : vector<2x75xf32>
    %692 = arith.divf %690, %691 : vector<2x75xf32>
    %693 = vector.extract_strided_slice %686 {offsets = [0, 75], sizes = [2, 25], strides = [1, 1]} : vector<2x100xf32> to vector<2x25xf32>
    %694 = math.tanh %693 : vector<2x25xf32>
    %695 = vector.extract_strided_slice %692 {offsets = [0, 25], sizes = [2, 25], strides = [1, 1]} : vector<2x75xf32> to vector<2x25xf32>
    %696 = arith.mulf %695, %678 : vector<2x25xf32>
    %697 = vector.extract_strided_slice %692 {offsets = [0, 0], sizes = [2, 25], strides = [1, 1]} : vector<2x75xf32> to vector<2x25xf32>
    %698 = arith.mulf %697, %694 : vector<2x25xf32>
    %699 = arith.addf %696, %698 : vector<2x25xf32>
    %700 = vector.extract_strided_slice %692 {offsets = [0, 50], sizes = [2, 25], strides = [1, 1]} : vector<2x75xf32> to vector<2x25xf32>
    %701 = math.tanh %699 : vector<2x25xf32>
    %702 = arith.mulf %700, %701 : vector<2x25xf32>
    %c18 = arith.constant 18 : index
    %c0_127 = arith.constant 0 : index
    %703 = vector.load %arg19[%c18, %c0_127] : memref<60x25xf32, #tpu.memory_space<vmem>>, vector<2x25xf32>
    tpu.vector_store %arg19[%c18, %c0_127], %702 {strides = array<i32>} : memref<60x25xf32, #tpu.memory_space<vmem>>, vector<2x25xf32>,
    %704 = vector.extract_strided_slice %492 {offsets = [10, 0], sizes = [1, 100], strides = [1, 1]} : vector<30x100xf32> to vector<1x100xf32>
    %cst_128 = arith.constant dense<0.000000e+00> : vector<2x100xf32>
    %705 = tpu.matmul %702, %481, %cst_128 {dimension_numbers = #tpu.dot_dimension_numbers<[1], [0], [0], [1], [0, 0, 1, 1], [], []>} : vector<2x25xf32>, vector<25x100xf32>, vector<2x100xf32> -> vector<2x100xf32>
    %706 = vector.broadcast %704 : vector<1x100xf32> to vector<2x100xf32>
    %707 = arith.addf %706, %705 : vector<2x100xf32>
    %708 = vector.extract_strided_slice %707 {offsets = [0, 0], sizes = [2, 75], strides = [1, 1]} : vector<2x100xf32> to vector<2x75xf32>
    %709 = arith.negf %708 : vector<2x75xf32>
    %710 = math.exp %709 : vector<2x75xf32>
    %cst_129 = arith.constant 1.000000e+00 : f32
    %711 = vector.broadcast %cst_129 : f32 to vector<2x75xf32>
    %712 = arith.addf %711, %710 : vector<2x75xf32>
    %713 = arith.divf %711, %712 : vector<2x75xf32>
    %714 = vector.extract_strided_slice %707 {offsets = [0, 75], sizes = [2, 25], strides = [1, 1]} : vector<2x100xf32> to vector<2x25xf32>
    %715 = math.tanh %714 : vector<2x25xf32>
    %716 = vector.extract_strided_slice %713 {offsets = [0, 25], sizes = [2, 25], strides = [1, 1]} : vector<2x75xf32> to vector<2x25xf32>
    %717 = arith.mulf %716, %699 : vector<2x25xf32>
    %718 = vector.extract_strided_slice %713 {offsets = [0, 0], sizes = [2, 25], strides = [1, 1]} : vector<2x75xf32> to vector<2x25xf32>
    %719 = arith.mulf %718, %715 : vector<2x25xf32>
    %720 = arith.addf %717, %719 : vector<2x25xf32>
    %721 = vector.extract_strided_slice %713 {offsets = [0, 50], sizes = [2, 25], strides = [1, 1]} : vector<2x75xf32> to vector<2x25xf32>
    %722 = math.tanh %720 : vector<2x25xf32>
    %723 = arith.mulf %721, %722 : vector<2x25xf32>
    %c20 = arith.constant 20 : index
    %c0_130 = arith.constant 0 : index
    %724 = vector.load %arg19[%c20, %c0_130] : memref<60x25xf32, #tpu.memory_space<vmem>>, vector<2x25xf32>
    tpu.vector_store %arg19[%c20, %c0_130], %723 {strides = array<i32>} : memref<60x25xf32, #tpu.memory_space<vmem>>, vector<2x25xf32>,
    %725 = vector.extract_strided_slice %492 {offsets = [11, 0], sizes = [1, 100], strides = [1, 1]} : vector<30x100xf32> to vector<1x100xf32>
    %cst_131 = arith.constant dense<0.000000e+00> : vector<2x100xf32>
    %726 = tpu.matmul %723, %481, %cst_131 {dimension_numbers = #tpu.dot_dimension_numbers<[1], [0], [0], [1], [0, 0, 1, 1], [], []>} : vector<2x25xf32>, vector<25x100xf32>, vector<2x100xf32> -> vector<2x100xf32>
    %727 = vector.broadcast %725 : vector<1x100xf32> to vector<2x100xf32>
    %728 = arith.addf %727, %726 : vector<2x100xf32>
    %729 = vector.extract_strided_slice %728 {offsets = [0, 0], sizes = [2, 75], strides = [1, 1]} : vector<2x100xf32> to vector<2x75xf32>
    %730 = arith.negf %729 : vector<2x75xf32>
    %731 = math.exp %730 : vector<2x75xf32>
    %cst_132 = arith.constant 1.000000e+00 : f32
    %732 = vector.broadcast %cst_132 : f32 to vector<2x75xf32>
    %733 = arith.addf %732, %731 : vector<2x75xf32>
    %734 = arith.divf %732, %733 : vector<2x75xf32>
    %735 = vector.extract_strided_slice %728 {offsets = [0, 75], sizes = [2, 25], strides = [1, 1]} : vector<2x100xf32> to vector<2x25xf32>
    %736 = math.tanh %735 : vector<2x25xf32>
    %737 = vector.extract_strided_slice %734 {offsets = [0, 25], sizes = [2, 25], strides = [1, 1]} : vector<2x75xf32> to vector<2x25xf32>
    %738 = arith.mulf %737, %720 : vector<2x25xf32>
    %739 = vector.extract_strided_slice %734 {offsets = [0, 0], sizes = [2, 25], strides = [1, 1]} : vector<2x75xf32> to vector<2x25xf32>
    %740 = arith.mulf %739, %736 : vector<2x25xf32>
    %741 = arith.addf %738, %740 : vector<2x25xf32>
    %742 = vector.extract_strided_slice %734 {offsets = [0, 50], sizes = [2, 25], strides = [1, 1]} : vector<2x75xf32> to vector<2x25xf32>
    %743 = math.tanh %741 : vector<2x25xf32>
    %744 = arith.mulf %742, %743 : vector<2x25xf32>
    %c22 = arith.constant 22 : index
    %c0_133 = arith.constant 0 : index
    %745 = vector.load %arg19[%c22, %c0_133] : memref<60x25xf32, #tpu.memory_space<vmem>>, vector<2x25xf32>
    tpu.vector_store %arg19[%c22, %c0_133], %744 {strides = array<i32>} : memref<60x25xf32, #tpu.memory_space<vmem>>, vector<2x25xf32>,
    %746 = vector.extract_strided_slice %492 {offsets = [12, 0], sizes = [1, 100], strides = [1, 1]} : vector<30x100xf32> to vector<1x100xf32>
    %cst_134 = arith.constant dense<0.000000e+00> : vector<2x100xf32>
    %747 = tpu.matmul %744, %481, %cst_134 {dimension_numbers = #tpu.dot_dimension_numbers<[1], [0], [0], [1], [0, 0, 1, 1], [], []>} : vector<2x25xf32>, vector<25x100xf32>, vector<2x100xf32> -> vector<2x100xf32>
    %748 = vector.broadcast %746 : vector<1x100xf32> to vector<2x100xf32>
    %749 = arith.addf %748, %747 : vector<2x100xf32>
    %750 = vector.extract_strided_slice %749 {offsets = [0, 0], sizes = [2, 75], strides = [1, 1]} : vector<2x100xf32> to vector<2x75xf32>
    %751 = arith.negf %750 : vector<2x75xf32>
    %752 = math.exp %751 : vector<2x75xf32>
    %cst_135 = arith.constant 1.000000e+00 : f32
    %753 = vector.broadcast %cst_135 : f32 to vector<2x75xf32>
    %754 = arith.addf %753, %752 : vector<2x75xf32>
    %755 = arith.divf %753, %754 : vector<2x75xf32>
    %756 = vector.extract_strided_slice %749 {offsets = [0, 75], sizes = [2, 25], strides = [1, 1]} : vector<2x100xf32> to vector<2x25xf32>
    %757 = math.tanh %756 : vector<2x25xf32>
    %758 = vector.extract_strided_slice %755 {offsets = [0, 25], sizes = [2, 25], strides = [1, 1]} : vector<2x75xf32> to vector<2x25xf32>
    %759 = arith.mulf %758, %741 : vector<2x25xf32>
    %760 = vector.extract_strided_slice %755 {offsets = [0, 0], sizes = [2, 25], strides = [1, 1]} : vector<2x75xf32> to vector<2x25xf32>
    %761 = arith.mulf %760, %757 : vector<2x25xf32>
    %762 = arith.addf %759, %761 : vector<2x25xf32>
    %763 = vector.extract_strided_slice %755 {offsets = [0, 50], sizes = [2, 25], strides = [1, 1]} : vector<2x75xf32> to vector<2x25xf32>
    %764 = math.tanh %762 : vector<2x25xf32>
    %765 = arith.mulf %763, %764 : vector<2x25xf32>
    %c24 = arith.constant 24 : index
    %c0_136 = arith.constant 0 : index
    %766 = vector.load %arg19[%c24, %c0_136] : memref<60x25xf32, #tpu.memory_space<vmem>>, vector<2x25xf32>
    tpu.vector_store %arg19[%c24, %c0_136], %765 {strides = array<i32>} : memref<60x25xf32, #tpu.memory_space<vmem>>, vector<2x25xf32>,
    %767 = vector.extract_strided_slice %492 {offsets = [13, 0], sizes = [1, 100], strides = [1, 1]} : vector<30x100xf32> to vector<1x100xf32>
    %cst_137 = arith.constant dense<0.000000e+00> : vector<2x100xf32>
    %768 = tpu.matmul %765, %481, %cst_137 {dimension_numbers = #tpu.dot_dimension_numbers<[1], [0], [0], [1], [0, 0, 1, 1], [], []>} : vector<2x25xf32>, vector<25x100xf32>, vector<2x100xf32> -> vector<2x100xf32>
    %769 = vector.broadcast %767 : vector<1x100xf32> to vector<2x100xf32>
    %770 = arith.addf %769, %768 : vector<2x100xf32>
    %771 = vector.extract_strided_slice %770 {offsets = [0, 0], sizes = [2, 75], strides = [1, 1]} : vector<2x100xf32> to vector<2x75xf32>
    %772 = arith.negf %771 : vector<2x75xf32>
    %773 = math.exp %772 : vector<2x75xf32>
    %cst_138 = arith.constant 1.000000e+00 : f32
    %774 = vector.broadcast %cst_138 : f32 to vector<2x75xf32>
    %775 = arith.addf %774, %773 : vector<2x75xf32>
    %776 = arith.divf %774, %775 : vector<2x75xf32>
    %777 = vector.extract_strided_slice %770 {offsets = [0, 75], sizes = [2, 25], strides = [1, 1]} : vector<2x100xf32> to vector<2x25xf32>
    %778 = math.tanh %777 : vector<2x25xf32>
    %779 = vector.extract_strided_slice %776 {offsets = [0, 25], sizes = [2, 25], strides = [1, 1]} : vector<2x75xf32> to vector<2x25xf32>
    %780 = arith.mulf %779, %762 : vector<2x25xf32>
    %781 = vector.extract_strided_slice %776 {offsets = [0, 0], sizes = [2, 25], strides = [1, 1]} : vector<2x75xf32> to vector<2x25xf32>
    %782 = arith.mulf %781, %778 : vector<2x25xf32>
    %783 = arith.addf %780, %782 : vector<2x25xf32>
    %784 = vector.extract_strided_slice %776 {offsets = [0, 50], sizes = [2, 25], strides = [1, 1]} : vector<2x75xf32> to vector<2x25xf32>
    %785 = math.tanh %783 : vector<2x25xf32>
    %786 = arith.mulf %784, %785 : vector<2x25xf32>
    %c26 = arith.constant 26 : index
    %c0_139 = arith.constant 0 : index
    %787 = vector.load %arg19[%c26, %c0_139] : memref<60x25xf32, #tpu.memory_space<vmem>>, vector<2x25xf32>
    tpu.vector_store %arg19[%c26, %c0_139], %786 {strides = array<i32>} : memref<60x25xf32, #tpu.memory_space<vmem>>, vector<2x25xf32>,
    %788 = vector.extract_strided_slice %492 {offsets = [14, 0], sizes = [1, 100], strides = [1, 1]} : vector<30x100xf32> to vector<1x100xf32>
    %cst_140 = arith.constant dense<0.000000e+00> : vector<2x100xf32>
    %789 = tpu.matmul %786, %481, %cst_140 {dimension_numbers = #tpu.dot_dimension_numbers<[1], [0], [0], [1], [0, 0, 1, 1], [], []>} : vector<2x25xf32>, vector<25x100xf32>, vector<2x100xf32> -> vector<2x100xf32>
    %790 = vector.broadcast %788 : vector<1x100xf32> to vector<2x100xf32>
    %791 = arith.addf %790, %789 : vector<2x100xf32>
    %792 = vector.extract_strided_slice %791 {offsets = [0, 0], sizes = [2, 75], strides = [1, 1]} : vector<2x100xf32> to vector<2x75xf32>
    %793 = arith.negf %792 : vector<2x75xf32>
    %794 = math.exp %793 : vector<2x75xf32>
    %cst_141 = arith.constant 1.000000e+00 : f32
    %795 = vector.broadcast %cst_141 : f32 to vector<2x75xf32>
    %796 = arith.addf %795, %794 : vector<2x75xf32>
    %797 = arith.divf %795, %796 : vector<2x75xf32>
    %798 = vector.extract_strided_slice %791 {offsets = [0, 75], sizes = [2, 25], strides = [1, 1]} : vector<2x100xf32> to vector<2x25xf32>
    %799 = math.tanh %798 : vector<2x25xf32>
    %800 = vector.extract_strided_slice %797 {offsets = [0, 25], sizes = [2, 25], strides = [1, 1]} : vector<2x75xf32> to vector<2x25xf32>
    %801 = arith.mulf %800, %783 : vector<2x25xf32>
    %802 = vector.extract_strided_slice %797 {offsets = [0, 0], sizes = [2, 25], strides = [1, 1]} : vector<2x75xf32> to vector<2x25xf32>
    %803 = arith.mulf %802, %799 : vector<2x25xf32>
    %804 = arith.addf %801, %803 : vector<2x25xf32>
    %805 = vector.extract_strided_slice %797 {offsets = [0, 50], sizes = [2, 25], strides = [1, 1]} : vector<2x75xf32> to vector<2x25xf32>
    %806 = math.tanh %804 : vector<2x25xf32>
    %807 = arith.mulf %805, %806 : vector<2x25xf32>
    %c28 = arith.constant 28 : index
    %c0_142 = arith.constant 0 : index
    %808 = vector.load %arg19[%c28, %c0_142] : memref<60x25xf32, #tpu.memory_space<vmem>>, vector<2x25xf32>
    tpu.vector_store %arg19[%c28, %c0_142], %807 {strides = array<i32>} : memref<60x25xf32, #tpu.memory_space<vmem>>, vector<2x25xf32>,
    %809 = vector.extract_strided_slice %492 {offsets = [15, 0], sizes = [1, 100], strides = [1, 1]} : vector<30x100xf32> to vector<1x100xf32>
    %cst_143 = arith.constant dense<0.000000e+00> : vector<2x100xf32>
    %810 = tpu.matmul %807, %481, %cst_143 {dimension_numbers = #tpu.dot_dimension_numbers<[1], [0], [0], [1], [0, 0, 1, 1], [], []>} : vector<2x25xf32>, vector<25x100xf32>, vector<2x100xf32> -> vector<2x100xf32>
    %811 = vector.broadcast %809 : vector<1x100xf32> to vector<2x100xf32>
    %812 = arith.addf %811, %810 : vector<2x100xf32>
    %813 = vector.extract_strided_slice %812 {offsets = [0, 0], sizes = [2, 75], strides = [1, 1]} : vector<2x100xf32> to vector<2x75xf32>
    %814 = arith.negf %813 : vector<2x75xf32>
    %815 = math.exp %814 : vector<2x75xf32>
    %cst_144 = arith.constant 1.000000e+00 : f32
    %816 = vector.broadcast %cst_144 : f32 to vector<2x75xf32>
    %817 = arith.addf %816, %815 : vector<2x75xf32>
    %818 = arith.divf %816, %817 : vector<2x75xf32>
    %819 = vector.extract_strided_slice %812 {offsets = [0, 75], sizes = [2, 25], strides = [1, 1]} : vector<2x100xf32> to vector<2x25xf32>
    %820 = math.tanh %819 : vector<2x25xf32>
    %821 = vector.extract_strided_slice %818 {offsets = [0, 25], sizes = [2, 25], strides = [1, 1]} : vector<2x75xf32> to vector<2x25xf32>
    %822 = arith.mulf %821, %804 : vector<2x25xf32>
    %823 = vector.extract_strided_slice %818 {offsets = [0, 0], sizes = [2, 25], strides = [1, 1]} : vector<2x75xf32> to vector<2x25xf32>
    %824 = arith.mulf %823, %820 : vector<2x25xf32>
    %825 = arith.addf %822, %824 : vector<2x25xf32>
    %826 = vector.extract_strided_slice %818 {offsets = [0, 50], sizes = [2, 25], strides = [1, 1]} : vector<2x75xf32> to vector<2x25xf32>
    %827 = math.tanh %825 : vector<2x25xf32>
    %828 = arith.mulf %826, %827 : vector<2x25xf32>
    %c30 = arith.constant 30 : index
    %c0_145 = arith.constant 0 : index
    %829 = vector.load %arg19[%c30, %c0_145] : memref<60x25xf32, #tpu.memory_space<vmem>>, vector<2x25xf32>
    tpu.vector_store %arg19[%c30, %c0_145], %828 {strides = array<i32>} : memref<60x25xf32, #tpu.memory_space<vmem>>, vector<2x25xf32>,
    %830 = vector.extract_strided_slice %492 {offsets = [16, 0], sizes = [1, 100], strides = [1, 1]} : vector<30x100xf32> to vector<1x100xf32>
    %cst_146 = arith.constant dense<0.000000e+00> : vector<2x100xf32>
    %831 = tpu.matmul %828, %481, %cst_146 {dimension_numbers = #tpu.dot_dimension_numbers<[1], [0], [0], [1], [0, 0, 1, 1], [], []>} : vector<2x25xf32>, vector<25x100xf32>, vector<2x100xf32> -> vector<2x100xf32>
    %832 = vector.broadcast %830 : vector<1x100xf32> to vector<2x100xf32>
    %833 = arith.addf %832, %831 : vector<2x100xf32>
    %834 = vector.extract_strided_slice %833 {offsets = [0, 0], sizes = [2, 75], strides = [1, 1]} : vector<2x100xf32> to vector<2x75xf32>
    %835 = arith.negf %834 : vector<2x75xf32>
    %836 = math.exp %835 : vector<2x75xf32>
    %cst_147 = arith.constant 1.000000e+00 : f32
    %837 = vector.broadcast %cst_147 : f32 to vector<2x75xf32>
    %838 = arith.addf %837, %836 : vector<2x75xf32>
    %839 = arith.divf %837, %838 : vector<2x75xf32>
    %840 = vector.extract_strided_slice %833 {offsets = [0, 75], sizes = [2, 25], strides = [1, 1]} : vector<2x100xf32> to vector<2x25xf32>
    %841 = math.tanh %840 : vector<2x25xf32>
    %842 = vector.extract_strided_slice %839 {offsets = [0, 25], sizes = [2, 25], strides = [1, 1]} : vector<2x75xf32> to vector<2x25xf32>
    %843 = arith.mulf %842, %825 : vector<2x25xf32>
    %844 = vector.extract_strided_slice %839 {offsets = [0, 0], sizes = [2, 25], strides = [1, 1]} : vector<2x75xf32> to vector<2x25xf32>
    %845 = arith.mulf %844, %841 : vector<2x25xf32>
    %846 = arith.addf %843, %845 : vector<2x25xf32>
    %847 = vector.extract_strided_slice %839 {offsets = [0, 50], sizes = [2, 25], strides = [1, 1]} : vector<2x75xf32> to vector<2x25xf32>
    %848 = math.tanh %846 : vector<2x25xf32>
    %849 = arith.mulf %847, %848 : vector<2x25xf32>
    %c32 = arith.constant 32 : index
    %c0_148 = arith.constant 0 : index
    %850 = vector.load %arg19[%c32, %c0_148] : memref<60x25xf32, #tpu.memory_space<vmem>>, vector<2x25xf32>
    tpu.vector_store %arg19[%c32, %c0_148], %849 {strides = array<i32>} : memref<60x25xf32, #tpu.memory_space<vmem>>, vector<2x25xf32>,
    %851 = vector.extract_strided_slice %492 {offsets = [17, 0], sizes = [1, 100], strides = [1, 1]} : vector<30x100xf32> to vector<1x100xf32>
    %cst_149 = arith.constant dense<0.000000e+00> : vector<2x100xf32>
    %852 = tpu.matmul %849, %481, %cst_149 {dimension_numbers = #tpu.dot_dimension_numbers<[1], [0], [0], [1], [0, 0, 1, 1], [], []>} : vector<2x25xf32>, vector<25x100xf32>, vector<2x100xf32> -> vector<2x100xf32>
    %853 = vector.broadcast %851 : vector<1x100xf32> to vector<2x100xf32>
    %854 = arith.addf %853, %852 : vector<2x100xf32>
    %855 = vector.extract_strided_slice %854 {offsets = [0, 0], sizes = [2, 75], strides = [1, 1]} : vector<2x100xf32> to vector<2x75xf32>
    %856 = arith.negf %855 : vector<2x75xf32>
    %857 = math.exp %856 : vector<2x75xf32>
    %cst_150 = arith.constant 1.000000e+00 : f32
    %858 = vector.broadcast %cst_150 : f32 to vector<2x75xf32>
    %859 = arith.addf %858, %857 : vector<2x75xf32>
    %860 = arith.divf %858, %859 : vector<2x75xf32>
    %861 = vector.extract_strided_slice %854 {offsets = [0, 75], sizes = [2, 25], strides = [1, 1]} : vector<2x100xf32> to vector<2x25xf32>
    %862 = math.tanh %861 : vector<2x25xf32>
    %863 = vector.extract_strided_slice %860 {offsets = [0, 25], sizes = [2, 25], strides = [1, 1]} : vector<2x75xf32> to vector<2x25xf32>
    %864 = arith.mulf %863, %846 : vector<2x25xf32>
    %865 = vector.extract_strided_slice %860 {offsets = [0, 0], sizes = [2, 25], strides = [1, 1]} : vector<2x75xf32> to vector<2x25xf32>
    %866 = arith.mulf %865, %862 : vector<2x25xf32>
    %867 = arith.addf %864, %866 : vector<2x25xf32>
    %868 = vector.extract_strided_slice %860 {offsets = [0, 50], sizes = [2, 25], strides = [1, 1]} : vector<2x75xf32> to vector<2x25xf32>
    %869 = math.tanh %867 : vector<2x25xf32>
    %870 = arith.mulf %868, %869 : vector<2x25xf32>
    %c34 = arith.constant 34 : index
    %c0_151 = arith.constant 0 : index
    %871 = vector.load %arg19[%c34, %c0_151] : memref<60x25xf32, #tpu.memory_space<vmem>>, vector<2x25xf32>
    tpu.vector_store %arg19[%c34, %c0_151], %870 {strides = array<i32>} : memref<60x25xf32, #tpu.memory_space<vmem>>, vector<2x25xf32>,
    %872 = vector.extract_strided_slice %492 {offsets = [18, 0], sizes = [1, 100], strides = [1, 1]} : vector<30x100xf32> to vector<1x100xf32>
    %cst_152 = arith.constant dense<0.000000e+00> : vector<2x100xf32>
    %873 = tpu.matmul %870, %481, %cst_152 {dimension_numbers = #tpu.dot_dimension_numbers<[1], [0], [0], [1], [0, 0, 1, 1], [], []>} : vector<2x25xf32>, vector<25x100xf32>, vector<2x100xf32> -> vector<2x100xf32>
    %874 = vector.broadcast %872 : vector<1x100xf32> to vector<2x100xf32>
    %875 = arith.addf %874, %873 : vector<2x100xf32>
    %876 = vector.extract_strided_slice %875 {offsets = [0, 0], sizes = [2, 75], strides = [1, 1]} : vector<2x100xf32> to vector<2x75xf32>
    %877 = arith.negf %876 : vector<2x75xf32>
    %878 = math.exp %877 : vector<2x75xf32>
    %cst_153 = arith.constant 1.000000e+00 : f32
    %879 = vector.broadcast %cst_153 : f32 to vector<2x75xf32>
    %880 = arith.addf %879, %878 : vector<2x75xf32>
    %881 = arith.divf %879, %880 : vector<2x75xf32>
    %882 = vector.extract_strided_slice %875 {offsets = [0, 75], sizes = [2, 25], strides = [1, 1]} : vector<2x100xf32> to vector<2x25xf32>
    %883 = math.tanh %882 : vector<2x25xf32>
    %884 = vector.extract_strided_slice %881 {offsets = [0, 25], sizes = [2, 25], strides = [1, 1]} : vector<2x75xf32> to vector<2x25xf32>
    %885 = arith.mulf %884, %867 : vector<2x25xf32>
    %886 = vector.extract_strided_slice %881 {offsets = [0, 0], sizes = [2, 25], strides = [1, 1]} : vector<2x75xf32> to vector<2x25xf32>
    %887 = arith.mulf %886, %883 : vector<2x25xf32>
    %888 = arith.addf %885, %887 : vector<2x25xf32>
    %889 = vector.extract_strided_slice %881 {offsets = [0, 50], sizes = [2, 25], strides = [1, 1]} : vector<2x75xf32> to vector<2x25xf32>
    %890 = math.tanh %888 : vector<2x25xf32>
    %891 = arith.mulf %889, %890 : vector<2x25xf32>
    %c36 = arith.constant 36 : index
    %c0_154 = arith.constant 0 : index
    %892 = vector.load %arg19[%c36, %c0_154] : memref<60x25xf32, #tpu.memory_space<vmem>>, vector<2x25xf32>
    tpu.vector_store %arg19[%c36, %c0_154], %891 {strides = array<i32>} : memref<60x25xf32, #tpu.memory_space<vmem>>, vector<2x25xf32>,
    %893 = vector.extract_strided_slice %492 {offsets = [19, 0], sizes = [1, 100], strides = [1, 1]} : vector<30x100xf32> to vector<1x100xf32>
    %cst_155 = arith.constant dense<0.000000e+00> : vector<2x100xf32>
    %894 = tpu.matmul %891, %481, %cst_155 {dimension_numbers = #tpu.dot_dimension_numbers<[1], [0], [0], [1], [0, 0, 1, 1], [], []>} : vector<2x25xf32>, vector<25x100xf32>, vector<2x100xf32> -> vector<2x100xf32>
    %895 = vector.broadcast %893 : vector<1x100xf32> to vector<2x100xf32>
    %896 = arith.addf %895, %894 : vector<2x100xf32>
    %897 = vector.extract_strided_slice %896 {offsets = [0, 0], sizes = [2, 75], strides = [1, 1]} : vector<2x100xf32> to vector<2x75xf32>
    %898 = arith.negf %897 : vector<2x75xf32>
    %899 = math.exp %898 : vector<2x75xf32>
    %cst_156 = arith.constant 1.000000e+00 : f32
    %900 = vector.broadcast %cst_156 : f32 to vector<2x75xf32>
    %901 = arith.addf %900, %899 : vector<2x75xf32>
    %902 = arith.divf %900, %901 : vector<2x75xf32>
    %903 = vector.extract_strided_slice %896 {offsets = [0, 75], sizes = [2, 25], strides = [1, 1]} : vector<2x100xf32> to vector<2x25xf32>
    %904 = math.tanh %903 : vector<2x25xf32>
    %905 = vector.extract_strided_slice %902 {offsets = [0, 25], sizes = [2, 25], strides = [1, 1]} : vector<2x75xf32> to vector<2x25xf32>
    %906 = arith.mulf %905, %888 : vector<2x25xf32>
    %907 = vector.extract_strided_slice %902 {offsets = [0, 0], sizes = [2, 25], strides = [1, 1]} : vector<2x75xf32> to vector<2x25xf32>
    %908 = arith.mulf %907, %904 : vector<2x25xf32>
    %909 = arith.addf %906, %908 : vector<2x25xf32>
    %910 = vector.extract_strided_slice %902 {offsets = [0, 50], sizes = [2, 25], strides = [1, 1]} : vector<2x75xf32> to vector<2x25xf32>
    %911 = math.tanh %909 : vector<2x25xf32>
    %912 = arith.mulf %910, %911 : vector<2x25xf32>
    %c38 = arith.constant 38 : index
    %c0_157 = arith.constant 0 : index
    %913 = vector.load %arg19[%c38, %c0_157] : memref<60x25xf32, #tpu.memory_space<vmem>>, vector<2x25xf32>
    tpu.vector_store %arg19[%c38, %c0_157], %912 {strides = array<i32>} : memref<60x25xf32, #tpu.memory_space<vmem>>, vector<2x25xf32>,
    %914 = vector.extract_strided_slice %492 {offsets = [20, 0], sizes = [1, 100], strides = [1, 1]} : vector<30x100xf32> to vector<1x100xf32>
    %cst_158 = arith.constant dense<0.000000e+00> : vector<2x100xf32>
    %915 = tpu.matmul %912, %481, %cst_158 {dimension_numbers = #tpu.dot_dimension_numbers<[1], [0], [0], [1], [0, 0, 1, 1], [], []>} : vector<2x25xf32>, vector<25x100xf32>, vector<2x100xf32> -> vector<2x100xf32>
    %916 = vector.broadcast %914 : vector<1x100xf32> to vector<2x100xf32>
    %917 = arith.addf %916, %915 : vector<2x100xf32>
    %918 = vector.extract_strided_slice %917 {offsets = [0, 0], sizes = [2, 75], strides = [1, 1]} : vector<2x100xf32> to vector<2x75xf32>
    %919 = arith.negf %918 : vector<2x75xf32>
    %920 = math.exp %919 : vector<2x75xf32>
    %cst_159 = arith.constant 1.000000e+00 : f32
    %921 = vector.broadcast %cst_159 : f32 to vector<2x75xf32>
    %922 = arith.addf %921, %920 : vector<2x75xf32>
    %923 = arith.divf %921, %922 : vector<2x75xf32>
    %924 = vector.extract_strided_slice %917 {offsets = [0, 75], sizes = [2, 25], strides = [1, 1]} : vector<2x100xf32> to vector<2x25xf32>
    %925 = math.tanh %924 : vector<2x25xf32>
    %926 = vector.extract_strided_slice %923 {offsets = [0, 25], sizes = [2, 25], strides = [1, 1]} : vector<2x75xf32> to vector<2x25xf32>
    %927 = arith.mulf %926, %909 : vector<2x25xf32>
    %928 = vector.extract_strided_slice %923 {offsets = [0, 0], sizes = [2, 25], strides = [1, 1]} : vector<2x75xf32> to vector<2x25xf32>
    %929 = arith.mulf %928, %925 : vector<2x25xf32>
    %930 = arith.addf %927, %929 : vector<2x25xf32>
    %931 = vector.extract_strided_slice %923 {offsets = [0, 50], sizes = [2, 25], strides = [1, 1]} : vector<2x75xf32> to vector<2x25xf32>
    %932 = math.tanh %930 : vector<2x25xf32>
    %933 = arith.mulf %931, %932 : vector<2x25xf32>
    %c40 = arith.constant 40 : index
    %c0_160 = arith.constant 0 : index
    %934 = vector.load %arg19[%c40, %c0_160] : memref<60x25xf32, #tpu.memory_space<vmem>>, vector<2x25xf32>
    tpu.vector_store %arg19[%c40, %c0_160], %933 {strides = array<i32>} : memref<60x25xf32, #tpu.memory_space<vmem>>, vector<2x25xf32>,
    %935 = vector.extract_strided_slice %492 {offsets = [21, 0], sizes = [1, 100], strides = [1, 1]} : vector<30x100xf32> to vector<1x100xf32>
    %cst_161 = arith.constant dense<0.000000e+00> : vector<2x100xf32>
    %936 = tpu.matmul %933, %481, %cst_161 {dimension_numbers = #tpu.dot_dimension_numbers<[1], [0], [0], [1], [0, 0, 1, 1], [], []>} : vector<2x25xf32>, vector<25x100xf32>, vector<2x100xf32> -> vector<2x100xf32>
    %937 = vector.broadcast %935 : vector<1x100xf32> to vector<2x100xf32>
    %938 = arith.addf %937, %936 : vector<2x100xf32>
    %939 = vector.extract_strided_slice %938 {offsets = [0, 0], sizes = [2, 75], strides = [1, 1]} : vector<2x100xf32> to vector<2x75xf32>
    %940 = arith.negf %939 : vector<2x75xf32>
    %941 = math.exp %940 : vector<2x75xf32>
    %cst_162 = arith.constant 1.000000e+00 : f32
    %942 = vector.broadcast %cst_162 : f32 to vector<2x75xf32>
    %943 = arith.addf %942, %941 : vector<2x75xf32>
    %944 = arith.divf %942, %943 : vector<2x75xf32>
    %945 = vector.extract_strided_slice %938 {offsets = [0, 75], sizes = [2, 25], strides = [1, 1]} : vector<2x100xf32> to vector<2x25xf32>
    %946 = math.tanh %945 : vector<2x25xf32>
    %947 = vector.extract_strided_slice %944 {offsets = [0, 25], sizes = [2, 25], strides = [1, 1]} : vector<2x75xf32> to vector<2x25xf32>
    %948 = arith.mulf %947, %930 : vector<2x25xf32>
    %949 = vector.extract_strided_slice %944 {offsets = [0, 0], sizes = [2, 25], strides = [1, 1]} : vector<2x75xf32> to vector<2x25xf32>
    %950 = arith.mulf %949, %946 : vector<2x25xf32>
    %951 = arith.addf %948, %950 : vector<2x25xf32>
    %952 = vector.extract_strided_slice %944 {offsets = [0, 50], sizes = [2, 25], strides = [1, 1]} : vector<2x75xf32> to vector<2x25xf32>
    %953 = math.tanh %951 : vector<2x25xf32>
    %954 = arith.mulf %952, %953 : vector<2x25xf32>
    %c42 = arith.constant 42 : index
    %c0_163 = arith.constant 0 : index
    %955 = vector.load %arg19[%c42, %c0_163] : memref<60x25xf32, #tpu.memory_space<vmem>>, vector<2x25xf32>
    tpu.vector_store %arg19[%c42, %c0_163], %954 {strides = array<i32>} : memref<60x25xf32, #tpu.memory_space<vmem>>, vector<2x25xf32>,
    %956 = vector.extract_strided_slice %492 {offsets = [22, 0], sizes = [1, 100], strides = [1, 1]} : vector<30x100xf32> to vector<1x100xf32>
    %cst_164 = arith.constant dense<0.000000e+00> : vector<2x100xf32>
    %957 = tpu.matmul %954, %481, %cst_164 {dimension_numbers = #tpu.dot_dimension_numbers<[1], [0], [0], [1], [0, 0, 1, 1], [], []>} : vector<2x25xf32>, vector<25x100xf32>, vector<2x100xf32> -> vector<2x100xf32>
    %958 = vector.broadcast %956 : vector<1x100xf32> to vector<2x100xf32>
    %959 = arith.addf %958, %957 : vector<2x100xf32>
    %960 = vector.extract_strided_slice %959 {offsets = [0, 0], sizes = [2, 75], strides = [1, 1]} : vector<2x100xf32> to vector<2x75xf32>
    %961 = arith.negf %960 : vector<2x75xf32>
    %962 = math.exp %961 : vector<2x75xf32>
    %cst_165 = arith.constant 1.000000e+00 : f32
    %963 = vector.broadcast %cst_165 : f32 to vector<2x75xf32>
    %964 = arith.addf %963, %962 : vector<2x75xf32>
    %965 = arith.divf %963, %964 : vector<2x75xf32>
    %966 = vector.extract_strided_slice %959 {offsets = [0, 75], sizes = [2, 25], strides = [1, 1]} : vector<2x100xf32> to vector<2x25xf32>
    %967 = math.tanh %966 : vector<2x25xf32>
    %968 = vector.extract_strided_slice %965 {offsets = [0, 25], sizes = [2, 25], strides = [1, 1]} : vector<2x75xf32> to vector<2x25xf32>
    %969 = arith.mulf %968, %951 : vector<2x25xf32>
    %970 = vector.extract_strided_slice %965 {offsets = [0, 0], sizes = [2, 25], strides = [1, 1]} : vector<2x75xf32> to vector<2x25xf32>
    %971 = arith.mulf %970, %967 : vector<2x25xf32>
    %972 = arith.addf %969, %971 : vector<2x25xf32>
    %973 = vector.extract_strided_slice %965 {offsets = [0, 50], sizes = [2, 25], strides = [1, 1]} : vector<2x75xf32> to vector<2x25xf32>
    %974 = math.tanh %972 : vector<2x25xf32>
    %975 = arith.mulf %973, %974 : vector<2x25xf32>
    %c44 = arith.constant 44 : index
    %c0_166 = arith.constant 0 : index
    %976 = vector.load %arg19[%c44, %c0_166] : memref<60x25xf32, #tpu.memory_space<vmem>>, vector<2x25xf32>
    tpu.vector_store %arg19[%c44, %c0_166], %975 {strides = array<i32>} : memref<60x25xf32, #tpu.memory_space<vmem>>, vector<2x25xf32>,
    %977 = vector.extract_strided_slice %492 {offsets = [23, 0], sizes = [1, 100], strides = [1, 1]} : vector<30x100xf32> to vector<1x100xf32>
    %cst_167 = arith.constant dense<0.000000e+00> : vector<2x100xf32>
    %978 = tpu.matmul %975, %481, %cst_167 {dimension_numbers = #tpu.dot_dimension_numbers<[1], [0], [0], [1], [0, 0, 1, 1], [], []>} : vector<2x25xf32>, vector<25x100xf32>, vector<2x100xf32> -> vector<2x100xf32>
    %979 = vector.broadcast %977 : vector<1x100xf32> to vector<2x100xf32>
    %980 = arith.addf %979, %978 : vector<2x100xf32>
    %981 = vector.extract_strided_slice %980 {offsets = [0, 0], sizes = [2, 75], strides = [1, 1]} : vector<2x100xf32> to vector<2x75xf32>
    %982 = arith.negf %981 : vector<2x75xf32>
    %983 = math.exp %982 : vector<2x75xf32>
    %cst_168 = arith.constant 1.000000e+00 : f32
    %984 = vector.broadcast %cst_168 : f32 to vector<2x75xf32>
    %985 = arith.addf %984, %983 : vector<2x75xf32>
    %986 = arith.divf %984, %985 : vector<2x75xf32>
    %987 = vector.extract_strided_slice %980 {offsets = [0, 75], sizes = [2, 25], strides = [1, 1]} : vector<2x100xf32> to vector<2x25xf32>
    %988 = math.tanh %987 : vector<2x25xf32>
    %989 = vector.extract_strided_slice %986 {offsets = [0, 25], sizes = [2, 25], strides = [1, 1]} : vector<2x75xf32> to vector<2x25xf32>
    %990 = arith.mulf %989, %972 : vector<2x25xf32>
    %991 = vector.extract_strided_slice %986 {offsets = [0, 0], sizes = [2, 25], strides = [1, 1]} : vector<2x75xf32> to vector<2x25xf32>
    %992 = arith.mulf %991, %988 : vector<2x25xf32>
    %993 = arith.addf %990, %992 : vector<2x25xf32>
    %994 = vector.extract_strided_slice %986 {offsets = [0, 50], sizes = [2, 25], strides = [1, 1]} : vector<2x75xf32> to vector<2x25xf32>
    %995 = math.tanh %993 : vector<2x25xf32>
    %996 = arith.mulf %994, %995 : vector<2x25xf32>
    %c46 = arith.constant 46 : index
    %c0_169 = arith.constant 0 : index
    %997 = vector.load %arg19[%c46, %c0_169] : memref<60x25xf32, #tpu.memory_space<vmem>>, vector<2x25xf32>
    tpu.vector_store %arg19[%c46, %c0_169], %996 {strides = array<i32>} : memref<60x25xf32, #tpu.memory_space<vmem>>, vector<2x25xf32>,
    %998 = vector.extract_strided_slice %492 {offsets = [24, 0], sizes = [1, 100], strides = [1, 1]} : vector<30x100xf32> to vector<1x100xf32>
    %cst_170 = arith.constant dense<0.000000e+00> : vector<2x100xf32>
    %999 = tpu.matmul %996, %481, %cst_170 {dimension_numbers = #tpu.dot_dimension_numbers<[1], [0], [0], [1], [0, 0, 1, 1], [], []>} : vector<2x25xf32>, vector<25x100xf32>, vector<2x100xf32> -> vector<2x100xf32>
    %1000 = vector.broadcast %998 : vector<1x100xf32> to vector<2x100xf32>
    %1001 = arith.addf %1000, %999 : vector<2x100xf32>
    %1002 = vector.extract_strided_slice %1001 {offsets = [0, 0], sizes = [2, 75], strides = [1, 1]} : vector<2x100xf32> to vector<2x75xf32>
    %1003 = arith.negf %1002 : vector<2x75xf32>
    %1004 = math.exp %1003 : vector<2x75xf32>
    %cst_171 = arith.constant 1.000000e+00 : f32
    %1005 = vector.broadcast %cst_171 : f32 to vector<2x75xf32>
    %1006 = arith.addf %1005, %1004 : vector<2x75xf32>
    %1007 = arith.divf %1005, %1006 : vector<2x75xf32>
    %1008 = vector.extract_strided_slice %1001 {offsets = [0, 75], sizes = [2, 25], strides = [1, 1]} : vector<2x100xf32> to vector<2x25xf32>
    %1009 = math.tanh %1008 : vector<2x25xf32>
    %1010 = vector.extract_strided_slice %1007 {offsets = [0, 25], sizes = [2, 25], strides = [1, 1]} : vector<2x75xf32> to vector<2x25xf32>
    %1011 = arith.mulf %1010, %993 : vector<2x25xf32>
    %1012 = vector.extract_strided_slice %1007 {offsets = [0, 0], sizes = [2, 25], strides = [1, 1]} : vector<2x75xf32> to vector<2x25xf32>
    %1013 = arith.mulf %1012, %1009 : vector<2x25xf32>
    %1014 = arith.addf %1011, %1013 : vector<2x25xf32>
    %1015 = vector.extract_strided_slice %1007 {offsets = [0, 50], sizes = [2, 25], strides = [1, 1]} : vector<2x75xf32> to vector<2x25xf32>
    %1016 = math.tanh %1014 : vector<2x25xf32>
    %1017 = arith.mulf %1015, %1016 : vector<2x25xf32>
    %c48 = arith.constant 48 : index
    %c0_172 = arith.constant 0 : index
    %1018 = vector.load %arg19[%c48, %c0_172] : memref<60x25xf32, #tpu.memory_space<vmem>>, vector<2x25xf32>
    tpu.vector_store %arg19[%c48, %c0_172], %1017 {strides = array<i32>} : memref<60x25xf32, #tpu.memory_space<vmem>>, vector<2x25xf32>,
    %1019 = vector.extract_strided_slice %492 {offsets = [25, 0], sizes = [1, 100], strides = [1, 1]} : vector<30x100xf32> to vector<1x100xf32>
    %cst_173 = arith.constant dense<0.000000e+00> : vector<2x100xf32>
    %1020 = tpu.matmul %1017, %481, %cst_173 {dimension_numbers = #tpu.dot_dimension_numbers<[1], [0], [0], [1], [0, 0, 1, 1], [], []>} : vector<2x25xf32>, vector<25x100xf32>, vector<2x100xf32> -> vector<2x100xf32>
    %1021 = vector.broadcast %1019 : vector<1x100xf32> to vector<2x100xf32>
    %1022 = arith.addf %1021, %1020 : vector<2x100xf32>
    %1023 = vector.extract_strided_slice %1022 {offsets = [0, 0], sizes = [2, 75], strides = [1, 1]} : vector<2x100xf32> to vector<2x75xf32>
    %1024 = arith.negf %1023 : vector<2x75xf32>
    %1025 = math.exp %1024 : vector<2x75xf32>
    %cst_174 = arith.constant 1.000000e+00 : f32
    %1026 = vector.broadcast %cst_174 : f32 to vector<2x75xf32>
    %1027 = arith.addf %1026, %1025 : vector<2x75xf32>
    %1028 = arith.divf %1026, %1027 : vector<2x75xf32>
    %1029 = vector.extract_strided_slice %1022 {offsets = [0, 75], sizes = [2, 25], strides = [1, 1]} : vector<2x100xf32> to vector<2x25xf32>
    %1030 = math.tanh %1029 : vector<2x25xf32>
    %1031 = vector.extract_strided_slice %1028 {offsets = [0, 25], sizes = [2, 25], strides = [1, 1]} : vector<2x75xf32> to vector<2x25xf32>
    %1032 = arith.mulf %1031, %1014 : vector<2x25xf32>
    %1033 = vector.extract_strided_slice %1028 {offsets = [0, 0], sizes = [2, 25], strides = [1, 1]} : vector<2x75xf32> to vector<2x25xf32>
    %1034 = arith.mulf %1033, %1030 : vector<2x25xf32>
    %1035 = arith.addf %1032, %1034 : vector<2x25xf32>
    %1036 = vector.extract_strided_slice %1028 {offsets = [0, 50], sizes = [2, 25], strides = [1, 1]} : vector<2x75xf32> to vector<2x25xf32>
    %1037 = math.tanh %1035 : vector<2x25xf32>
    %1038 = arith.mulf %1036, %1037 : vector<2x25xf32>
    %c50 = arith.constant 50 : index
    %c0_175 = arith.constant 0 : index
    %1039 = vector.load %arg19[%c50, %c0_175] : memref<60x25xf32, #tpu.memory_space<vmem>>, vector<2x25xf32>
    tpu.vector_store %arg19[%c50, %c0_175], %1038 {strides = array<i32>} : memref<60x25xf32, #tpu.memory_space<vmem>>, vector<2x25xf32>,
    %1040 = vector.extract_strided_slice %492 {offsets = [26, 0], sizes = [1, 100], strides = [1, 1]} : vector<30x100xf32> to vector<1x100xf32>
    %cst_176 = arith.constant dense<0.000000e+00> : vector<2x100xf32>
    %1041 = tpu.matmul %1038, %481, %cst_176 {dimension_numbers = #tpu.dot_dimension_numbers<[1], [0], [0], [1], [0, 0, 1, 1], [], []>} : vector<2x25xf32>, vector<25x100xf32>, vector<2x100xf32> -> vector<2x100xf32>
    %1042 = vector.broadcast %1040 : vector<1x100xf32> to vector<2x100xf32>
    %1043 = arith.addf %1042, %1041 : vector<2x100xf32>
    %1044 = vector.extract_strided_slice %1043 {offsets = [0, 0], sizes = [2, 75], strides = [1, 1]} : vector<2x100xf32> to vector<2x75xf32>
    %1045 = arith.negf %1044 : vector<2x75xf32>
    %1046 = math.exp %1045 : vector<2x75xf32>
    %cst_177 = arith.constant 1.000000e+00 : f32
    %1047 = vector.broadcast %cst_177 : f32 to vector<2x75xf32>
    %1048 = arith.addf %1047, %1046 : vector<2x75xf32>
    %1049 = arith.divf %1047, %1048 : vector<2x75xf32>
    %1050 = vector.extract_strided_slice %1043 {offsets = [0, 75], sizes = [2, 25], strides = [1, 1]} : vector<2x100xf32> to vector<2x25xf32>
    %1051 = math.tanh %1050 : vector<2x25xf32>
    %1052 = vector.extract_strided_slice %1049 {offsets = [0, 25], sizes = [2, 25], strides = [1, 1]} : vector<2x75xf32> to vector<2x25xf32>
    %1053 = arith.mulf %1052, %1035 : vector<2x25xf32>
    %1054 = vector.extract_strided_slice %1049 {offsets = [0, 0], sizes = [2, 25], strides = [1, 1]} : vector<2x75xf32> to vector<2x25xf32>
    %1055 = arith.mulf %1054, %1051 : vector<2x25xf32>
    %1056 = arith.addf %1053, %1055 : vector<2x25xf32>
    %1057 = vector.extract_strided_slice %1049 {offsets = [0, 50], sizes = [2, 25], strides = [1, 1]} : vector<2x75xf32> to vector<2x25xf32>
    %1058 = math.tanh %1056 : vector<2x25xf32>
    %1059 = arith.mulf %1057, %1058 : vector<2x25xf32>
    %c52 = arith.constant 52 : index
    %c0_178 = arith.constant 0 : index
    %1060 = vector.load %arg19[%c52, %c0_178] : memref<60x25xf32, #tpu.memory_space<vmem>>, vector<2x25xf32>
    tpu.vector_store %arg19[%c52, %c0_178], %1059 {strides = array<i32>} : memref<60x25xf32, #tpu.memory_space<vmem>>, vector<2x25xf32>,
    %1061 = vector.extract_strided_slice %492 {offsets = [27, 0], sizes = [1, 100], strides = [1, 1]} : vector<30x100xf32> to vector<1x100xf32>
    %cst_179 = arith.constant dense<0.000000e+00> : vector<2x100xf32>
    %1062 = tpu.matmul %1059, %481, %cst_179 {dimension_numbers = #tpu.dot_dimension_numbers<[1], [0], [0], [1], [0, 0, 1, 1], [], []>} : vector<2x25xf32>, vector<25x100xf32>, vector<2x100xf32> -> vector<2x100xf32>
    %1063 = vector.broadcast %1061 : vector<1x100xf32> to vector<2x100xf32>
    %1064 = arith.addf %1063, %1062 : vector<2x100xf32>
    %1065 = vector.extract_strided_slice %1064 {offsets = [0, 0], sizes = [2, 75], strides = [1, 1]} : vector<2x100xf32> to vector<2x75xf32>
    %1066 = arith.negf %1065 : vector<2x75xf32>
    %1067 = math.exp %1066 : vector<2x75xf32>
    %cst_180 = arith.constant 1.000000e+00 : f32
    %1068 = vector.broadcast %cst_180 : f32 to vector<2x75xf32>
    %1069 = arith.addf %1068, %1067 : vector<2x75xf32>
    %1070 = arith.divf %1068, %1069 : vector<2x75xf32>
    %1071 = vector.extract_strided_slice %1064 {offsets = [0, 75], sizes = [2, 25], strides = [1, 1]} : vector<2x100xf32> to vector<2x25xf32>
    %1072 = math.tanh %1071 : vector<2x25xf32>
    %1073 = vector.extract_strided_slice %1070 {offsets = [0, 25], sizes = [2, 25], strides = [1, 1]} : vector<2x75xf32> to vector<2x25xf32>
    %1074 = arith.mulf %1073, %1056 : vector<2x25xf32>
    %1075 = vector.extract_strided_slice %1070 {offsets = [0, 0], sizes = [2, 25], strides = [1, 1]} : vector<2x75xf32> to vector<2x25xf32>
    %1076 = arith.mulf %1075, %1072 : vector<2x25xf32>
    %1077 = arith.addf %1074, %1076 : vector<2x25xf32>
    %1078 = vector.extract_strided_slice %1070 {offsets = [0, 50], sizes = [2, 25], strides = [1, 1]} : vector<2x75xf32> to vector<2x25xf32>
    %1079 = math.tanh %1077 : vector<2x25xf32>
    %1080 = arith.mulf %1078, %1079 : vector<2x25xf32>
    %c54 = arith.constant 54 : index
    %c0_181 = arith.constant 0 : index
    %1081 = vector.load %arg19[%c54, %c0_181] : memref<60x25xf32, #tpu.memory_space<vmem>>, vector<2x25xf32>
    tpu.vector_store %arg19[%c54, %c0_181], %1080 {strides = array<i32>} : memref<60x25xf32, #tpu.memory_space<vmem>>, vector<2x25xf32>,
    %1082 = vector.extract_strided_slice %492 {offsets = [28, 0], sizes = [1, 100], strides = [1, 1]} : vector<30x100xf32> to vector<1x100xf32>
    %cst_182 = arith.constant dense<0.000000e+00> : vector<2x100xf32>
    %1083 = tpu.matmul %1080, %481, %cst_182 {dimension_numbers = #tpu.dot_dimension_numbers<[1], [0], [0], [1], [0, 0, 1, 1], [], []>} : vector<2x25xf32>, vector<25x100xf32>, vector<2x100xf32> -> vector<2x100xf32>
    %1084 = vector.broadcast %1082 : vector<1x100xf32> to vector<2x100xf32>
    %1085 = arith.addf %1084, %1083 : vector<2x100xf32>
    %1086 = vector.extract_strided_slice %1085 {offsets = [0, 0], sizes = [2, 75], strides = [1, 1]} : vector<2x100xf32> to vector<2x75xf32>
    %1087 = arith.negf %1086 : vector<2x75xf32>
    %1088 = math.exp %1087 : vector<2x75xf32>
    %cst_183 = arith.constant 1.000000e+00 : f32
    %1089 = vector.broadcast %cst_183 : f32 to vector<2x75xf32>
    %1090 = arith.addf %1089, %1088 : vector<2x75xf32>
    %1091 = arith.divf %1089, %1090 : vector<2x75xf32>
    %1092 = vector.extract_strided_slice %1085 {offsets = [0, 75], sizes = [2, 25], strides = [1, 1]} : vector<2x100xf32> to vector<2x25xf32>
    %1093 = math.tanh %1092 : vector<2x25xf32>
    %1094 = vector.extract_strided_slice %1091 {offsets = [0, 25], sizes = [2, 25], strides = [1, 1]} : vector<2x75xf32> to vector<2x25xf32>
    %1095 = arith.mulf %1094, %1077 : vector<2x25xf32>
    %1096 = vector.extract_strided_slice %1091 {offsets = [0, 0], sizes = [2, 25], strides = [1, 1]} : vector<2x75xf32> to vector<2x25xf32>
    %1097 = arith.mulf %1096, %1093 : vector<2x25xf32>
    %1098 = arith.addf %1095, %1097 : vector<2x25xf32>
    %1099 = vector.extract_strided_slice %1091 {offsets = [0, 50], sizes = [2, 25], strides = [1, 1]} : vector<2x75xf32> to vector<2x25xf32>
    %1100 = math.tanh %1098 : vector<2x25xf32>
    %1101 = arith.mulf %1099, %1100 : vector<2x25xf32>
    %c56 = arith.constant 56 : index
    %c0_184 = arith.constant 0 : index
    %1102 = vector.load %arg19[%c56, %c0_184] : memref<60x25xf32, #tpu.memory_space<vmem>>, vector<2x25xf32>
    tpu.vector_store %arg19[%c56, %c0_184], %1101 {strides = array<i32>} : memref<60x25xf32, #tpu.memory_space<vmem>>, vector<2x25xf32>,
    %1103 = vector.extract_strided_slice %492 {offsets = [29, 0], sizes = [1, 100], strides = [1, 1]} : vector<30x100xf32> to vector<1x100xf32>
    %cst_185 = arith.constant dense<0.000000e+00> : vector<2x100xf32>
    %1104 = tpu.matmul %1101, %481, %cst_185 {dimension_numbers = #tpu.dot_dimension_numbers<[1], [0], [0], [1], [0, 0, 1, 1], [], []>} : vector<2x25xf32>, vector<25x100xf32>, vector<2x100xf32> -> vector<2x100xf32>
    %1105 = vector.broadcast %1103 : vector<1x100xf32> to vector<2x100xf32>
    %1106 = arith.addf %1105, %1104 : vector<2x100xf32>
    %1107 = vector.extract_strided_slice %1106 {offsets = [0, 0], sizes = [2, 75], strides = [1, 1]} : vector<2x100xf32> to vector<2x75xf32>
    %1108 = arith.negf %1107 : vector<2x75xf32>
    %1109 = math.exp %1108 : vector<2x75xf32>
    %cst_186 = arith.constant 1.000000e+00 : f32
    %1110 = vector.broadcast %cst_186 : f32 to vector<2x75xf32>
    %1111 = arith.addf %1110, %1109 : vector<2x75xf32>
    %1112 = arith.divf %1110, %1111 : vector<2x75xf32>
    %1113 = vector.extract_strided_slice %1106 {offsets = [0, 75], sizes = [2, 25], strides = [1, 1]} : vector<2x100xf32> to vector<2x25xf32>
    %1114 = math.tanh %1113 : vector<2x25xf32>
    %1115 = vector.extract_strided_slice %1112 {offsets = [0, 25], sizes = [2, 25], strides = [1, 1]} : vector<2x75xf32> to vector<2x25xf32>
    %1116 = arith.mulf %1115, %1098 : vector<2x25xf32>
    %1117 = vector.extract_strided_slice %1112 {offsets = [0, 0], sizes = [2, 25], strides = [1, 1]} : vector<2x75xf32> to vector<2x25xf32>
    %1118 = arith.mulf %1117, %1114 : vector<2x25xf32>
    %1119 = arith.addf %1116, %1118 : vector<2x25xf32>
    %1120 = vector.extract_strided_slice %1112 {offsets = [0, 50], sizes = [2, 25], strides = [1, 1]} : vector<2x75xf32> to vector<2x25xf32>
    %1121 = math.tanh %1119 : vector<2x25xf32>
    %1122 = arith.mulf %1120, %1121 : vector<2x25xf32>
    %c58 = arith.constant 58 : index
    %c0_187 = arith.constant 0 : index
    %1123 = vector.load %arg19[%c58, %c0_187] : memref<60x25xf32, #tpu.memory_space<vmem>>, vector<2x25xf32>
    tpu.vector_store %arg19[%c58, %c0_187], %1122 {strides = array<i32>} : memref<60x25xf32, #tpu.memory_space<vmem>>, vector<2x25xf32>,
    %c0_188 = arith.constant 0 : index
    %c0_189 = arith.constant 0 : index
    %1124 = vector.load %arg19[%c0_188, %c0_189] : memref<60x25xf32, #tpu.memory_space<vmem>>, vector<60x25xf32>
    %c0_190 = arith.constant 0 : index
    %c0_191 = arith.constant 0 : index
    %1125 = vector.load %arg16[%c0_190, %c0_191] : memref<25x2xf32, #tpu.memory_space<vmem>>, vector<25x2xf32>
    %cst_192 = arith.constant dense<0.000000e+00> : vector<60x2xf32>
    %1126 = tpu.matmul %1124, %1125, %cst_192 {dimension_numbers = #tpu.dot_dimension_numbers<[1], [0], [0], [1], [0, 0, 1, 1], [], []>} : vector<60x25xf32>, vector<25x2xf32>, vector<60x2xf32> -> vector<60x2xf32>
    %c0_193 = arith.constant 0 : index
    %c0_194 = arith.constant 0 : index
    %1127 = vector.load %arg17[%c0_193, %c0_194] : memref<1x2xf32, #tpu.memory_space<vmem>>, vector<1x2xf32>
    %1128 = vector.broadcast %1127 : vector<1x2xf32> to vector<60x2xf32>
    %1129 = arith.addf %1126, %1128 : vector<60x2xf32>
    %c0_195 = arith.constant 0 : index
    %c0_196 = arith.constant 0 : index
    %1130 = vector.load %arg18[%c0_195, %c0_196] : memref<60x2xf32, #tpu.memory_space<vmem>>, vector<60x2xf32>
    tpu.vector_store %arg18[%c0_195, %c0_196], %1129 {strides = array<i32>} : memref<60x2xf32, #tpu.memory_space<vmem>>, vector<60x2xf32>,
    return
  }
}

</mosaic_0001>

<llo_original>
// kernel: mul.1
$region0: #{mul.1}
  #allocation0 [shape = 's32[1]{0}', space=sflag, size = 0x4, scoped, tag = 'scoped memory for mul.1']
  %s0 = inlined_call_operand.vmem [shape: f32[480,6], index: 0, kind: input, shape index: {}]
  %s1 = inlined_call_operand.vmem [shape: f32[480,6], index: 1, kind: input, shape index: {}]
  %s2 = inlined_call_operand.vmem [shape: f32[480,6], index: 2, kind: output, shape index: {}]
  %v3 = vld [vmem:[%s0] sm:$0x3f]
  %v4 = vld [vmem:[%s1] sm:$0x3f]
  %5 = xla_tuple %v3, %v4
  %6 = xla_tuple %5
  %v7 = vmul.f32 %v3, %v4
  %8 = xla_tuple %v7
  %9 = vst [vmem:[%s2] sm:$0xff] %v7
  %s10 = scalar_lea.vmem %s0, 8
  %v11 = vld [vmem:[%s10] sm:$0x3f]
  %s12 = scalar_lea.vmem %s1, 8
  %v13 = vld [vmem:[%s12] sm:$0x3f]
  %14 = xla_tuple %v11, %v13
  %15 = xla_tuple %14
  %v16 = vmul.f32 %v11, %v13
  %17 = xla_tuple %v16
  %s18 = scalar_lea.vmem %s2, 8
  %19 = vst [vmem:[%s18] sm:$0xff] %v16
  %s20 = scalar_lea.vmem %s0, 16
  %v21 = vld [vmem:[%s20] sm:$0x3f]
  %s22 = scalar_lea.vmem %s1, 16
  %v23 = vld [vmem:[%s22] sm:$0x3f]
  %24 = xla_tuple %v21, %v23
  %25 = xla_tuple %24
  %v26 = vmul.f32 %v21, %v23
  %27 = xla_tuple %v26
  %s28 = scalar_lea.vmem %s2, 16
  %29 = vst [vmem:[%s28] sm:$0xff] %v26
  %s30 = scalar_lea.vmem %s0, 24
  %v31 = vld [vmem:[%s30] sm:$0x3f]
  %s32 = scalar_lea.vmem %s1, 24
  %v33 = vld [vmem:[%s32] sm:$0x3f]
  %34 = xla_tuple %v31, %v33
  %35 = xla_tuple %34
  %v36 = vmul.f32 %v31, %v33
  %37 = xla_tuple %v36
  %s38 = scalar_lea.vmem %s2, 24
  %39 = vst [vmem:[%s38] sm:$0xff] %v36

// kernel: my_model_forward.1
$region0: #{my_model_forward.1}
  #allocation0 [shape = 'u32[]', space=smem, size = 0x4, offset = 0x4, fixed_abs, tag = 'smem constant byte address 0x4 - core index']
  #allocation1 [shape = 'u32[144,128]{1,0:T(1,128)}', space=vmem, size = 0x12000, scoped, tag = 'internal scratch']
  #allocation2 [shape = 'f32[60,25]{1,0:T(8,128)}', space=vmem, size = 0x8000, scoped, tag = 'scratch operand']
  %s0 = inlined_call_operand.vmem [shape: f32[480,9], index: 0, kind: input, shape index: {}]
  %s1 = inlined_call_operand.vmem [shape: f32[9,100], index: 1, kind: input, shape index: {}]
  %s2 = inlined_call_operand.vmem [shape: f32[75,100], index: 2, kind: input, shape index: {}]
  %s3 = inlined_call_operand.vmem [shape: f32[24,75], index: 3, kind: input, shape index: {}]
  %s4 = inlined_call_operand.vmem [shape: f32[1,100], index: 4, kind: input, shape index: {}]
  %s5 = inlined_call_operand.vmem [shape: f32[25,100], index: 5, kind: input, shape index: {}]
  %s6 = inlined_call_operand.vmem [shape: f32[1,100], index: 6, kind: input, shape index: {}]
  %s7 = inlined_call_operand.vmem [shape: f32[75,25], index: 7, kind: input, shape index: {}]
  %s8 = inlined_call_operand.vmem [shape: f32[75,5], index: 8, kind: input, shape index: {}]
  %s9 = inlined_call_operand.vmem [shape: f32[3,25,5], index: 9, kind: input, shape index: {}]
  %s10 = inlined_call_operand.vmem [shape: f32[1,25], index: 10, kind: input, shape index: {}]
  %s11 = inlined_call_operand.vmem [shape: f32[16,75], index: 11, kind: input, shape index: {}]
  %s12 = inlined_call_operand.vmem [shape: f32[16,6], index: 12, kind: input, shape index: {}]
  %s13 = inlined_call_operand.vmem [shape: f32[6,16], index: 13, kind: input, shape index: {}]
  %s14 = inlined_call_operand.vmem [shape: f32[2,16], index: 14, kind: input, shape index: {}]
  %s15 = inlined_call_operand.vmem [shape: f32[5,25], index: 15, kind: input, shape index: {}]
  %s16 = inlined_call_operand.vmem [shape: f32[25,2], index: 16, kind: input, shape index: {}]
  %s17 = inlined_call_operand.vmem [shape: f32[1,2], index: 17, kind: input, shape index: {}]
  %s18 = inlined_call_operand.vmem [shape: f32[60,2], index: 18, kind: output, shape index: {}]
  %s19 = sld [smem:[#allocation0]]
  $region82: #{my_model_forward.1} parent=0
    _
  %s21 = ssub.s32 1, %s19
  %s22 = scalar_select 0, %s21, %s19
  // Predicated region
  $region2: #{my_model_forward.1} parent=0 // pred_check
    _
  $region3: #{my_model_forward.1} parent=0 // pred_check_branch
    %24 = sbr.rel (0) target = $region5
  $region4: #{my_model_forward.1} parent=0 // pred_region
    _
  $region5: #{my_model_forward.1} parent=0 // pred_fallthru
    _
  // Predicated region
  $region6: #{my_model_forward.1} parent=0 // pred_check
    _
  $region7: #{my_model_forward.1} parent=0 // pred_check_branch
    %26 = sbr.rel (0) target = $region9
  $region8: #{my_model_forward.1} parent=0 // pred_region
    _
  $region9: #{my_model_forward.1} parent=0 // pred_fallthru
    _
  // Predicated region
  $region10: #{my_model_forward.1} parent=0 // pred_check
    _
  $region11: #{my_model_forward.1} parent=0 // pred_check_branch
    %28 = sbr.rel (0) target = $region13
  $region12: #{my_model_forward.1} parent=0 // pred_region
    _
  $region13: #{my_model_forward.1} parent=0 // pred_fallthru
    _
  // Predicated region
  $region14: #{my_model_forward.1} parent=0 // pred_check
    _
  $region15: #{my_model_forward.1} parent=0 // pred_check_branch
    %30 = sbr.rel (0) target = $region17
  $region16: #{my_model_forward.1} parent=0 // pred_region
    _
  $region17: #{my_model_forward.1} parent=0 // pred_fallthru
    _
  // Predicated region
  $region18: #{my_model_forward.1} parent=0 // pred_check
    _
  $region19: #{my_model_forward.1} parent=0 // pred_check_branch
    %32 = sbr.rel (0) target = $region21
  $region20: #{my_model_forward.1} parent=0 // pred_region
    _
  $region21: #{my_model_forward.1} parent=0 // pred_fallthru
    _
  // Predicated region
  $region22: #{my_model_forward.1} parent=0 // pred_check
    _
  $region23: #{my_model_forward.1} parent=0 // pred_check_branch
    %34 = sbr.rel (0) target = $region25
  $region24: #{my_model_forward.1} parent=0 // pred_region
    _
  $region25: #{my_model_forward.1} parent=0 // pred_fallthru
    _
  // Predicated region
  $region26: #{my_model_forward.1} parent=0 // pred_check
    _
  $region27: #{my_model_forward.1} parent=0 // pred_check_branch
    %36 = sbr.rel (0) target = $region29
  $region28: #{my_model_forward.1} parent=0 // pred_region
    _
  $region29: #{my_model_forward.1} parent=0 // pred_fallthru
    _
  // Predicated region
  $region30: #{my_model_forward.1} parent=0 // pred_check
    _
  $region31: #{my_model_forward.1} parent=0 // pred_check_branch
    %38 = sbr.rel (0) target = $region33
  $region32: #{my_model_forward.1} parent=0 // pred_region
    _
  $region33: #{my_model_forward.1} parent=0 // pred_fallthru
    _
  // Predicated region
  $region34: #{my_model_forward.1} parent=0 // pred_check
    _
  $region35: #{my_model_forward.1} parent=0 // pred_check_branch
    %40 = sbr.rel (0) target = $region37
  $region36: #{my_model_forward.1} parent=0 // pred_region
    _
  $region37: #{my_model_forward.1} parent=0 // pred_fallthru
    _
  // Predicated region
  $region38: #{my_model_forward.1} parent=0 // pred_check
    _
  $region39: #{my_model_forward.1} parent=0 // pred_check_branch
    %42 = sbr.rel (0) target = $region41
  $region40: #{my_model_forward.1} parent=0 // pred_region
    _
  $region41: #{my_model_forward.1} parent=0 // pred_fallthru
    _
  // Predicated region
  $region42: #{my_model_forward.1} parent=0 // pred_check
    _
  $region43: #{my_model_forward.1} parent=0 // pred_check_branch
    %44 = sbr.rel (0) target = $region45
  $region44: #{my_model_forward.1} parent=0 // pred_region
    _
  $region45: #{my_model_forward.1} parent=0 // pred_fallthru
    _
  // Predicated region
  $region46: #{my_model_forward.1} parent=0 // pred_check
    _
  $region47: #{my_model_forward.1} parent=0 // pred_check_branch
    %46 = sbr.rel (0) target = $region49
  $region48: #{my_model_forward.1} parent=0 // pred_region
    _
  $region49: #{my_model_forward.1} parent=0 // pred_fallthru
    _
  // Predicated region
  $region50: #{my_model_forward.1} parent=0 // pred_check
    _
  $region51: #{my_model_forward.1} parent=0 // pred_check_branch
    %48 = sbr.rel (0) target = $region53
  $region52: #{my_model_forward.1} parent=0 // pred_region
    _
  $region53: #{my_model_forward.1} parent=0 // pred_fallthru
    _
  // Predicated region
  $region54: #{my_model_forward.1} parent=0 // pred_check
    _
  $region55: #{my_model_forward.1} parent=0 // pred_check_branch
    %50 = sbr.rel (0) target = $region57
  $region56: #{my_model_forward.1} parent=0 // pred_region
    _
  $region57: #{my_model_forward.1} parent=0 // pred_fallthru
    _
  // Predicated region
  $region58: #{my_model_forward.1} parent=0 // pred_check
    _
  $region59: #{my_model_forward.1} parent=0 // pred_check_branch
    %52 = sbr.rel (0) target = $region61
  $region60: #{my_model_forward.1} parent=0 // pred_region
    _
  $region61: #{my_model_forward.1} parent=0 // pred_fallthru
    _
  // Predicated region
  $region62: #{my_model_forward.1} parent=0 // pred_check
    _
  $region63: #{my_model_forward.1} parent=0 // pred_check_branch
    %54 = sbr.rel (0) target = $region65
  $region64: #{my_model_forward.1} parent=0 // pred_region
    _
  $region65: #{my_model_forward.1} parent=0 // pred_fallthru
    _
  // Predicated region
  $region66: #{my_model_forward.1} parent=0 // pred_check
    _
  $region67: #{my_model_forward.1} parent=0 // pred_check_branch
    %56 = sbr.rel (0) target = $region69
  $region68: #{my_model_forward.1} parent=0 // pred_region
    _
  $region69: #{my_model_forward.1} parent=0 // pred_fallthru
    _
  // Predicated region
  $region70: #{my_model_forward.1} parent=0 // pred_check
    _
  $region71: #{my_model_forward.1} parent=0 // pred_check_branch
    %58 = sbr.rel (0) target = $region73
  $region72: #{my_model_forward.1} parent=0 // pred_region
    _
  $region73: #{my_model_forward.1} parent=0 // pred_fallthru
    _
  %v59 = vld [vmem:[%s0] sm:$0xff]
  %v60 = vld [vmem:[%s0 + $0x8] sm:$0xff]
  %v61 = vld [vmem:[%s0 + $0x10] sm:$0xff]
  %v62 = vld [vmem:[%s0 + $0x18] sm:$0xff]
  %v63 = vld [vmem:[%s0 + $0x20] sm:$0xff]
  %v64 = vld [vmem:[%s0 + $0x28] sm:$0xff]
  %v65 = vld [vmem:[%s0 + $0x30] sm:$0xff]
  %v66 = vld [vmem:[%s0 + $0x38] sm:$0xff]
  %v67 = vld [vmem:[%s0 + $0x40] sm:$0xff]
  %v68 = vld [vmem:[%s0 + $0x48] sm:$0xff]
  %v69 = vld [vmem:[%s0 + $0x50] sm:$0xff]
  %v70 = vld [vmem:[%s0 + $0x58] sm:$0xff]
  %v71 = vld [vmem:[%s0 + $0x60] sm:$0xff]
  %v72 = vld [vmem:[%s0 + $0x68] sm:$0xff]
  %v73 = vld [vmem:[%s0 + $0x70] sm:$0xff]
  %v74 = vld [vmem:[%s0 + $0x78] sm:$0xff]
  %v75 = vld [vmem:[%s0 + $0x80] sm:$0xff]
  %v76 = vld [vmem:[%s0 + $0x88] sm:$0xff]
  %v77 = vld [vmem:[%s0 + $0x90] sm:$0xff]
  %v78 = vld [vmem:[%s0 + $0x98] sm:$0xff]
  %v79 = vld [vmem:[%s0 + $0xa0] sm:$0xff]
  %v80 = vld [vmem:[%s0 + $0xa8] sm:$0xff]
  %v81 = vld [vmem:[%s0 + $0xb0] sm:$0xff]
  %v82 = vld [vmem:[%s0 + $0xb8] sm:$0xff]
  %v83 = vld [vmem:[%s0 + $0xc0] sm:$0xff]
  %v84 = vld [vmem:[%s0 + $0xc8] sm:$0xff]
  %v85 = vld [vmem:[%s0 + $0xd0] sm:$0xff]
  %v86 = vld [vmem:[%s0 + $0xd8] sm:$0xff]
  %v87 = vld [vmem:[%s0 + $0xe0] sm:$0xff]
  %v88 = vld [vmem:[%s0 + $0xe8] sm:$0xff]
  %v89 = vld [vmem:[%s0 + $0xf0] sm:$0xff]
  %v90 = vld [vmem:[%s0 + $0xf8] sm:$0xff]
  %v91 = vld [vmem:[%s0 + $0x100] sm:$0xff]
  %v92 = vld [vmem:[%s0 + $0x108] sm:$0xff]
  %v93 = vld [vmem:[%s0 + $0x110] sm:$0xff]
  %v94 = vld [vmem:[%s0 + $0x118] sm:$0xff]
  %v95 = vld [vmem:[%s0 + $0x120] sm:$0xff]
  %v96 = vld [vmem:[%s0 + $0x128] sm:$0xff]
  %v97 = vld [vmem:[%s0 + $0x130] sm:$0xff]
  %v98 = vld [vmem:[%s0 + $0x138] sm:$0xff]
  %v99 = vld [vmem:[%s0 + $0x140] sm:$0xff]
  %v100 = vld [vmem:[%s0 + $0x148] sm:$0xff]
  %v101 = vld [vmem:[%s0 + $0x150] sm:$0xff]
  %v102 = vld [vmem:[%s0 + $0x158] sm:$0xff]
  %v103 = vld [vmem:[%s0 + $0x160] sm:$0xff]
  %v104 = vld [vmem:[%s0 + $0x168] sm:$0xff]
  %v105 = vld [vmem:[%s0 + $0x170] sm:$0xff]
  %v106 = vld [vmem:[%s0 + $0x178] sm:$0xff]
  %v107 = vld [vmem:[%s0 + $0x180] sm:$0xff]
  %v108 = vld [vmem:[%s0 + $0x188] sm:$0xff]
  %v109 = vld [vmem:[%s0 + $0x190] sm:$0xff]
  %v110 = vld [vmem:[%s0 + $0x198] sm:$0xff]
  %v111 = vld [vmem:[%s0 + $0x1a0] sm:$0xff]
  %v112 = vld [vmem:[%s0 + $0x1a8] sm:$0xff]
  %v113 = vld [vmem:[%s0 + $0x1b0] sm:$0xff]
  %v114 = vld [vmem:[%s0 + $0x1b8] sm:$0xff]
  %v115 = vld [vmem:[%s0 + $0x1c0] sm:$0xff]
  %v116 = vld [vmem:[%s0 + $0x1c8] sm:$0xff]
  %v117 = vld [vmem:[%s0 + $0x1d0] sm:$0xff]
  %v118 = vld [vmem:[%s0 + $0x1d8] sm:$0xff]
  %v119 = vld [vmem:[%s1] sm:$0xff]
  %v120 = vld [vmem:[%s1 + $0x8] sm:$0x1]
  %vm121 = vcmask 72704
  %v123 = vsel %vm121, %v59, 0
  %v126 = vsel %vm121, %v60, 0
  %v129 = vsel %vm121, %v61, 0
  %v132 = vsel %vm121, %v62, 0
  %v135 = vsel %vm121, %v63, 0
  %v138 = vsel %vm121, %v64, 0
  %v141 = vsel %vm121, %v65, 0
  %v144 = vsel %vm121, %v66, 0
  %v147 = vsel %vm121, %v67, 0
  %v150 = vsel %vm121, %v68, 0
  %v153 = vsel %vm121, %v69, 0
  %v156 = vsel %vm121, %v70, 0
  %v159 = vsel %vm121, %v71, 0
  %v162 = vsel %vm121, %v72, 0
  %v165 = vsel %vm121, %v73, 0
  %v168 = vsel %vm121, %v74, 0
  %v171 = vsel %vm121, %v75, 0
  %v174 = vsel %vm121, %v76, 0
  %v177 = vsel %vm121, %v77, 0
  %v180 = vsel %vm121, %v78, 0
  %v183 = vsel %vm121, %v79, 0
  %v186 = vsel %vm121, %v80, 0
  %v189 = vsel %vm121, %v81, 0
  %v192 = vsel %vm121, %v82, 0
  %v195 = vsel %vm121, %v83, 0
  %v198 = vsel %vm121, %v84, 0
  %v201 = vsel %vm121, %v85, 0
  %v204 = vsel %vm121, %v86, 0
  %v207 = vsel %vm121, %v87, 0
  %v210 = vsel %vm121, %v88, 0
  %v213 = vsel %vm121, %v89, 0
  %v216 = vsel %vm121, %v90, 0
  %v219 = vsel %vm121, %v91, 0
  %v222 = vsel %vm121, %v92, 0
  %v225 = vsel %vm121, %v93, 0
  %v228 = vsel %vm121, %v94, 0
  %v231 = vsel %vm121, %v95, 0
  %v234 = vsel %vm121, %v96, 0
  %v237 = vsel %vm121, %v97, 0
  %v240 = vsel %vm121, %v98, 0
  %v243 = vsel %vm121, %v99, 0
  %v246 = vsel %vm121, %v100, 0
  %v249 = vsel %vm121, %v101, 0
  %v252 = vsel %vm121, %v102, 0
  %v255 = vsel %vm121, %v103, 0
  %v258 = vsel %vm121, %v104, 0
  %v261 = vsel %vm121, %v105, 0
  %v264 = vsel %vm121, %v106, 0
  %v267 = vsel %vm121, %v107, 0
  %v270 = vsel %vm121, %v108, 0
  %v273 = vsel %vm121, %v109, 0
  %v276 = vsel %vm121, %v110, 0
  %v279 = vsel %vm121, %v111, 0
  %v282 = vsel %vm121, %v112, 0
  %v285 = vsel %vm121, %v113, 0
  %v288 = vsel %vm121, %v114, 0
  %v291 = vsel %vm121, %v115, 0
  %v294 = vsel %vm121, %v116, 0
  %v297 = vsel %vm121, %v117, 0
  %v300 = vsel %vm121, %v118, 0
  %vm302 = vcmask 1040384
  %v304 = vsel %vm302, %v120, 0
  %306 = vmatprep.subr.mxu0 0.0
  %307 = vmatpush1.msra.mxu0 %v119
  %308 = vmatprep.subr.mxu0 0.0
  %309 = vmatpush1.msra.mxu0 %v304
  %310 = vmatprep.subr.mxu0 0.0
  %311 = vmatpush1.msra.mxu0 0.0
  %312 = vmatprep.subr.mxu0 0.0
  %313 = vmatpush1.msra.mxu0 0.0
  %314 = vmatprep.subr.mxu0 0.0
  %315 = vmatpush1.msra.mxu0 0.0
  %316 = vmatprep.subr.mxu0 0.0
  %317 = vmatpush1.msra.mxu0 0.0
  %318 = vmatprep.subr.mxu0 0.0
  %319 = vmatpush1.msra.mxu0 0.0
  %320 = vmatprep.subr.mxu0 0.0
  %321 = vmatpush1.msra.mxu0 0.0
  %322 = vmatprep.subr.mxu0 0.0
  %323 = vmatpush1.msra.mxu0 0.0
  %324 = vmatprep.subr.mxu0 0.0
  %325 = vmatpush1.msra.mxu0 0.0
  %326 = vmatprep.subr.mxu0 0.0
  %327 = vmatpush1.msra.mxu0 0.0
  %328 = vmatprep.subr.mxu0 0.0
  %329 = vmatpush1.msra.mxu0 0.0
  %330 = vmatprep.subr.mxu0 0.0
  %331 = vmatpush1.msra.mxu0 0.0
  %332 = vmatprep.subr.mxu0 0.0
  %333 = vmatpush1.msra.mxu0 0.0
  %334 = vmatprep.subr.mxu0 0.0
  %335 = vmatpush1.msra.mxu0 0.0
  %336 = vmatprep.subr.mxu0 0.0
  %337 = vmatpush1.msra.mxu0 0.0
  %338 = vmatprep.subr.mxu0 0.0
  %339 = vmatpush1.msra.mxu0 0.0
  %340 = vmatprep.subr.mxu0 0.0
  %341 = vmatpush1.msra.mxu0 0.0
  %342 = vmatprep.subr.mxu0 0.0
  %343 = vmatpush1.msra.mxu0 0.0
  %344 = vmatprep.subr.mxu0 0.0
  %345 = vmatpush1.msra.mxu0 0.0
  %346 = vmatprep.subr.mxu0 0.0
  %347 = vmatpush1.msra.mxu0 0.0
  %348 = vmatprep.subr.mxu0 0.0
  %349 = vmatpush1.msra.mxu0 0.0
  %350 = vmatprep.subr.mxu0 0.0
  %351 = vmatpush1.msra.mxu0 0.0
  %352 = vmatprep.subr.mxu0 0.0
  %353 = vmatpush1.msra.mxu0 0.0
  %354 = vmatprep.subr.mxu0 0.0
  %355 = vmatpush1.msra.mxu0 0.0
  %356 = vmatprep.subr.mxu0 0.0
  %357 = vmatpush1.msra.mxu0 0.0
  %358 = vmatprep.subr.mxu0 0.0
  %359 = vmatpush1.msra.mxu0 0.0
  %360 = vmatprep.subr.mxu0 0.0
  %361 = vmatpush1.msra.mxu0 0.0
  %362 = vmatprep.subr.mxu0 0.0
  %363 = vmatpush1.msra.mxu0 0.0
  %364 = vmatprep.subr.mxu0 0.0
  %365 = vmatpush1.msra.mxu0 0.0
  %366 = vmatprep.subr.mxu0 0.0
  %367 = vmatpush1.msra.mxu0 0.0
  %368 = vmatprep.subr.mxu0 0.0
  %369 = vmatpush1.msra.mxu0 0.0
  %370 = vmatprep.mubr.f32.mxu0 0.0
  %371 = vmatmul.mubr.f32.gmra.mrb[0].mxu0 %v123
  %v372 = vpop.f32.mrb[0].mxu0
  %v373 = vadd.f32 0.0, %v372
  %v374 = vpop.f32.mrb[0].mxu0
  %375 = vmatprep.mubr.f32.mxu0 0.0
  %376 = vmatmul.mubr.f32.gmra.mrb[0].mxu0 %v126
  %v377 = vpop.f32.mrb[0].mxu0
  %v378 = vadd.f32 0.0, %v377
  %v379 = vpop.f32.mrb[0].mxu0
  %380 = vmatprep.mubr.f32.mxu0 0.0
  %381 = vmatmul.mubr.f32.gmra.mrb[0].mxu0 %v129
  %v382 = vpop.f32.mrb[0].mxu0
  %v383 = vadd.f32 0.0, %v382
  %v384 = vpop.f32.mrb[0].mxu0
  %385 = vmatprep.mubr.f32.mxu0 0.0
  %386 = vmatmul.mubr.f32.gmra.mrb[0].mxu0 %v132
  %v387 = vpop.f32.mrb[0].mxu0
  %v388 = vadd.f32 0.0, %v387
  %v389 = vpop.f32.mrb[0].mxu0
  %390 = vmatprep.mubr.f32.mxu0 0.0
  %391 = vmatmul.mubr.f32.gmra.mrb[0].mxu0 %v135
  %v392 = vpop.f32.mrb[0].mxu0
  %v393 = vadd.f32 0.0, %v392
  %v394 = vpop.f32.mrb[0].mxu0
  %395 = vmatprep.mubr.f32.mxu0 0.0
  %396 = vmatmul.mubr.f32.gmra.mrb[0].mxu0 %v138
  %v397 = vpop.f32.mrb[0].mxu0
  %v398 = vadd.f32 0.0, %v397
  %v399 = vpop.f32.mrb[0].mxu0
  %400 = vmatprep.mubr.f32.mxu0 0.0
  %401 = vmatmul.mubr.f32.gmra.mrb[0].mxu0 %v141
  %v402 = vpop.f32.mrb[0].mxu0
  %v403 = vadd.f32 0.0, %v402
  %v404 = vpop.f32.mrb[0].mxu0
  %405 = vmatprep.mubr.f32.mxu0 0.0
  %406 = vmatmul.mubr.f32.gmra.mrb[0].mxu0 %v144
  %v407 = vpop.f32.mrb[0].mxu0
  %v408 = vadd.f32 0.0, %v407
  %v409 = vpop.f32.mrb[0].mxu0
  %410 = vmatprep.mubr.f32.mxu0 0.0
  %411 = vmatmul.mubr.f32.gmra.mrb[0].mxu0 %v147
  %v412 = vpop.f32.mrb[0].mxu0
  %v413 = vadd.f32 0.0, %v412
  %v414 = vpop.f32.mrb[0].mxu0
  %415 = vmatprep.mubr.f32.mxu0 0.0
  %416 = vmatmul.mubr.f32.gmra.mrb[0].mxu0 %v150
  %v417 = vpop.f32.mrb[0].mxu0
  %v418 = vadd.f32 0.0, %v417
  %v419 = vpop.f32.mrb[0].mxu0
  %420 = vmatprep.mubr.f32.mxu0 0.0
  %421 = vmatmul.mubr.f32.gmra.mrb[0].mxu0 %v153
  %v422 = vpop.f32.mrb[0].mxu0
  %v423 = vadd.f32 0.0, %v422
  %v424 = vpop.f32.mrb[0].mxu0
  %425 = vmatprep.mubr.f32.mxu0 0.0
  %426 = vmatmul.mubr.f32.gmra.mrb[0].mxu0 %v156
  %v427 = vpop.f32.mrb[0].mxu0
  %v428 = vadd.f32 0.0, %v427
  %v429 = vpop.f32.mrb[0].mxu0
  %430 = vmatprep.mubr.f32.mxu0 0.0
  %431 = vmatmul.mubr.f32.gmra.mrb[0].mxu0 %v159
  %v432 = vpop.f32.mrb[0].mxu0
  %v433 = vadd.f32 0.0, %v432
  %v434 = vpop.f32.mrb[0].mxu0
  %435 = vmatprep.mubr.f32.mxu0 0.0
  %436 = vmatmul.mubr.f32.gmra.mrb[0].mxu0 %v162
  %v437 = vpop.f32.mrb[0].mxu0
  %v438 = vadd.f32 0.0, %v437
  %v439 = vpop.f32.mrb[0].mxu0
  %440 = vmatprep.mubr.f32.mxu0 0.0
  %441 = vmatmul.mubr.f32.gmra.mrb[0].mxu0 %v165
  %v442 = vpop.f32.mrb[0].mxu0
  %v443 = vadd.f32 0.0, %v442
  %v444 = vpop.f32.mrb[0].mxu0
  %445 = vmatprep.mubr.f32.mxu0 0.0
  %446 = vmatmul.mubr.f32.gmra.mrb[0].mxu0 %v168
  %v447 = vpop.f32.mrb[0].mxu0
  %v448 = vadd.f32 0.0, %v447
  %v449 = vpop.f32.mrb[0].mxu0
  %450 = vmatprep.mubr.f32.mxu0 0.0
  %451 = vmatmul.mubr.f32.gmra.mrb[0].mxu0 %v171
  %v452 = vpop.f32.mrb[0].mxu0
  %v453 = vadd.f32 0.0, %v452
  %v454 = vpop.f32.mrb[0].mxu0
  %455 = vmatprep.mubr.f32.mxu0 0.0
  %456 = vmatmul.mubr.f32.gmra.mrb[0].mxu0 %v174
  %v457 = vpop.f32.mrb[0].mxu0
  %v458 = vadd.f32 0.0, %v457
  %v459 = vpop.f32.mrb[0].mxu0
  %460 = vmatprep.mubr.f32.mxu0 0.0
  %461 = vmatmul.mubr.f32.gmra.mrb[0].mxu0 %v177
  %v462 = vpop.f32.mrb[0].mxu0
  %v463 = vadd.f32 0.0, %v462
  %v464 = vpop.f32.mrb[0].mxu0
  %465 = vmatprep.mubr.f32.mxu0 0.0
  %466 = vmatmul.mubr.f32.gmra.mrb[0].mxu0 %v180
  %v467 = vpop.f32.mrb[0].mxu0
  %v468 = vadd.f32 0.0, %v467
  %v469 = vpop.f32.mrb[0].mxu0
  %470 = vmatprep.mubr.f32.mxu0 0.0
  %471 = vmatmul.mubr.f32.gmra.mrb[0].mxu0 %v183
  %v472 = vpop.f32.mrb[0].mxu0
  %v473 = vadd.f32 0.0, %v472
  %v474 = vpop.f32.mrb[0].mxu0
  %475 = vmatprep.mubr.f32.mxu0 0.0
  %476 = vmatmul.mubr.f32.gmra.mrb[0].mxu0 %v186
  %v477 = vpop.f32.mrb[0].mxu0
  %v478 = vadd.f32 0.0, %v477
  %v479 = vpop.f32.mrb[0].mxu0
  %480 = vmatprep.mubr.f32.mxu0 0.0
  %481 = vmatmul.mubr.f32.gmra.mrb[0].mxu0 %v189
  %v482 = vpop.f32.mrb[0].mxu0
  %v483 = vadd.f32 0.0, %v482
  %v484 = vpop.f32.mrb[0].mxu0
  %485 = vmatprep.mubr.f32.mxu0 0.0
  %486 = vmatmul.mubr.f32.gmra.mrb[0].mxu0 %v192
  %v487 = vpop.f32.mrb[0].mxu0
  %v488 = vadd.f32 0.0, %v487
  %v489 = vpop.f32.mrb[0].mxu0
  %490 = vmatprep.mubr.f32.mxu0 0.0
  %491 = vmatmul.mubr.f32.gmra.mrb[0].mxu0 %v195
  %v492 = vpop.f32.mrb[0].mxu0
  %v493 = vadd.f32 0.0, %v492
  %v494 = vpop.f32.mrb[0].mxu0
  %495 = vmatprep.mubr.f32.mxu0 0.0
  %496 = vmatmul.mubr.f32.gmra.mrb[0].mxu0 %v198
  %v497 = vpop.f32.mrb[0].mxu0
  %v498 = vadd.f32 0.0, %v497
  %v499 = vpop.f32.mrb[0].mxu0
  %500 = vmatprep.mubr.f32.mxu0 0.0
  %501 = vmatmul.mubr.f32.gmra.mrb[0].mxu0 %v201
  %v502 = vpop.f32.mrb[0].mxu0
  %v503 = vadd.f32 0.0, %v502
  %v504 = vpop.f32.mrb[0].mxu0
  %505 = vmatprep.mubr.f32.mxu0 0.0
  %506 = vmatmul.mubr.f32.gmra.mrb[0].mxu0 %v204
  %v507 = vpop.f32.mrb[0].mxu0
  %v508 = vadd.f32 0.0, %v507
  %v509 = vpop.f32.mrb[0].mxu0
  %510 = vmatprep.mubr.f32.mxu0 0.0
  %511 = vmatmul.mubr.f32.gmra.mrb[0].mxu0 %v207
  %v512 = vpop.f32.mrb[0].mxu0
  %v513 = vadd.f32 0.0, %v512
  %v514 = vpop.f32.mrb[0].mxu0
  %515 = vmatprep.mubr.f32.mxu0 0.0
  %516 = vmatmul.mubr.f32.gmra.mrb[0].mxu0 %v210
  %v517 = vpop.f32.mrb[0].mxu0
  %v518 = vadd.f32 0.0, %v517
  %v519 = vpop.f32.mrb[0].mxu0
  %520 = vmatprep.mubr.f32.mxu0 0.0
  %521 = vmatmul.mubr.f32.gmra.mrb[0].mxu0 %v213
  %v522 = vpop.f32.mrb[0].mxu0
  %v523 = vadd.f32 0.0, %v522
  %v524 = vpop.f32.mrb[0].mxu0
  %525 = vmatprep.mubr.f32.mxu0 0.0
  %526 = vmatmul.mubr.f32.gmra.mrb[0].mxu0 %v216
  %v527 = vpop.f32.mrb[0].mxu0
  %v528 = vadd.f32 0.0, %v527
  %v529 = vpop.f32.mrb[0].mxu0
  %530 = vmatprep.mubr.f32.mxu0 0.0
  %531 = vmatmul.mubr.f32.gmra.mrb[0].mxu0 %v219
  %v532 = vpop.f32.mrb[0].mxu0
  %v533 = vadd.f32 0.0, %v532
  %v534 = vpop.f32.mrb[0].mxu0
  %535 = vmatprep.mubr.f32.mxu0 0.0
  %536 = vmatmul.mubr.f32.gmra.mrb[0].mxu0 %v222
  %v537 = vpop.f32.mrb[0].mxu0
  %v538 = vadd.f32 0.0, %v537
  %v539 = vpop.f32.mrb[0].mxu0
  %540 = vmatprep.mubr.f32.mxu0 0.0
  %541 = vmatmul.mubr.f32.gmra.mrb[0].mxu0 %v225
  %v542 = vpop.f32.mrb[0].mxu0
  %v543 = vadd.f32 0.0, %v542
  %v544 = vpop.f32.mrb[0].mxu0
  %545 = vmatprep.mubr.f32.mxu0 0.0
  %546 = vmatmul.mubr.f32.gmra.mrb[0].mxu0 %v228
  %v547 = vpop.f32.mrb[0].mxu0
  %v548 = vadd.f32 0.0, %v547
  %v549 = vpop.f32.mrb[0].mxu0
  %550 = vmatprep.mubr.f32.mxu0 0.0
  %551 = vmatmul.mubr.f32.gmra.mrb[0].mxu0 %v231
  %v552 = vpop.f32.mrb[0].mxu0
  %v553 = vadd.f32 0.0, %v552
  %v554 = vpop.f32.mrb[0].mxu0
  %555 = vmatprep.mubr.f32.mxu0 0.0
  %556 = vmatmul.mubr.f32.gmra.mrb[0].mxu0 %v234
  %v557 = vpop.f32.mrb[0].mxu0
  %v558 = vadd.f32 0.0, %v557
  %v559 = vpop.f32.mrb[0].mxu0
  %560 = vmatprep.mubr.f32.mxu0 0.0
  %561 = vmatmul.mubr.f32.gmra.mrb[0].mxu0 %v237
  %v562 = vpop.f32.mrb[0].mxu0
  %v563 = vadd.f32 0.0, %v562
  %v564 = vpop.f32.mrb[0].mxu0
  %565 = vmatprep.mubr.f32.mxu0 0.0
  %566 = vmatmul.mubr.f32.gmra.mrb[0].mxu0 %v240
  %v567 = vpop.f32.mrb[0].mxu0
  %v568 = vadd.f32 0.0, %v567
  %v569 = vpop.f32.mrb[0].mxu0
  %570 = vmatprep.mubr.f32.mxu0 0.0
  %571 = vmatmul.mubr.f32.gmra.mrb[0].mxu0 %v243
  %v572 = vpop.f32.mrb[0].mxu0
  %v573 = vadd.f32 0.0, %v572
  %v574 = vpop.f32.mrb[0].mxu0
  %575 = vmatprep.mubr.f32.mxu0 0.0
  %576 = vmatmul.mubr.f32.gmra.mrb[0].mxu0 %v246
  %v577 = vpop.f32.mrb[0].mxu0
  %v578 = vadd.f32 0.0, %v577
  %v579 = vpop.f32.mrb[0].mxu0
  %580 = vmatprep.mubr.f32.mxu0 0.0
  %581 = vmatmul.mubr.f32.gmra.mrb[0].mxu0 %v249
  %v582 = vpop.f32.mrb[0].mxu0
  %v583 = vadd.f32 0.0, %v582
  %v584 = vpop.f32.mrb[0].mxu0
  %585 = vmatprep.mubr.f32.mxu0 0.0
  %586 = vmatmul.mubr.f32.gmra.mrb[0].mxu0 %v252
  %v587 = vpop.f32.mrb[0].mxu0
  %v588 = vadd.f32 0.0, %v587
  %v589 = vpop.f32.mrb[0].mxu0
  %590 = vmatprep.mubr.f32.mxu0 0.0
  %591 = vmatmul.mubr.f32.gmra.mrb[0].mxu0 %v255
  %v592 = vpop.f32.mrb[0].mxu0
  %v593 = vadd.f32 0.0, %v592
  %v594 = vpop.f32.mrb[0].mxu0
  %595 = vmatprep.mubr.f32.mxu0 0.0
  %596 = vmatmul.mubr.f32.gmra.mrb[0].mxu0 %v258
  %v597 = vpop.f32.mrb[0].mxu0
  %v598 = vadd.f32 0.0, %v597
  %v599 = vpop.f32.mrb[0].mxu0
  %600 = vmatprep.mubr.f32.mxu0 0.0
  %601 = vmatmul.mubr.f32.gmra.mrb[0].mxu0 %v261
  %v602 = vpop.f32.mrb[0].mxu0
  %v603 = vadd.f32 0.0, %v602
  %v604 = vpop.f32.mrb[0].mxu0
  %605 = vmatprep.mubr.f32.mxu0 0.0
  %606 = vmatmul.mubr.f32.gmra.mrb[0].mxu0 %v264
  %v607 = vpop.f32.mrb[0].mxu0
  %v608 = vadd.f32 0.0, %v607
  %v609 = vpop.f32.mrb[0].mxu0
  %610 = vmatprep.mubr.f32.mxu0 0.0
  %611 = vmatmul.mubr.f32.gmra.mrb[0].mxu0 %v267
  %v612 = vpop.f32.mrb[0].mxu0
  %v613 = vadd.f32 0.0, %v612
  %v614 = vpop.f32.mrb[0].mxu0
  %615 = vmatprep.mubr.f32.mxu0 0.0
  %616 = vmatmul.mubr.f32.gmra.mrb[0].mxu0 %v270
  %v617 = vpop.f32.mrb[0].mxu0
  %v618 = vadd.f32 0.0, %v617
  %v619 = vpop.f32.mrb[0].mxu0
  %620 = vmatprep.mubr.f32.mxu0 0.0
  %621 = vmatmul.mubr.f32.gmra.mrb[0].mxu0 %v273
  %v622 = vpop.f32.mrb[0].mxu0
  %v623 = vadd.f32 0.0, %v622
  %v624 = vpop.f32.mrb[0].mxu0
  %625 = vmatprep.mubr.f32.mxu0 0.0
  %626 = vmatmul.mubr.f32.gmra.mrb[0].mxu0 %v276
  %v627 = vpop.f32.mrb[0].mxu0
  %v628 = vadd.f32 0.0, %v627
  %v629 = vpop.f32.mrb[0].mxu0
  %630 = vmatprep.mubr.f32.mxu0 0.0
  %631 = vmatmul.mubr.f32.gmra.mrb[0].mxu0 %v279
  %v632 = vpop.f32.mrb[0].mxu0
  %v633 = vadd.f32 0.0, %v632
  %v634 = vpop.f32.mrb[0].mxu0
  %635 = vmatprep.mubr.f32.mxu0 0.0
  %636 = vmatmul.mubr.f32.gmra.mrb[0].mxu0 %v282
  %v637 = vpop.f32.mrb[0].mxu0
  %v638 = vadd.f32 0.0, %v637
  %v639 = vpop.f32.mrb[0].mxu0
  %640 = vmatprep.mubr.f32.mxu0 0.0
  %641 = vmatmul.mubr.f32.gmra.mrb[0].mxu0 %v285
  %v642 = vpop.f32.mrb[0].mxu0
  %v643 = vadd.f32 0.0, %v642
  %v644 = vpop.f32.mrb[0].mxu0
  %645 = vmatprep.mubr.f32.mxu0 0.0
  %646 = vmatmul.mubr.f32.gmra.mrb[0].mxu0 %v288
  %v647 = vpop.f32.mrb[0].mxu0
  %v648 = vadd.f32 0.0, %v647
  %v649 = vpop.f32.mrb[0].mxu0
  %650 = vmatprep.mubr.f32.mxu0 0.0
  %651 = vmatmul.mubr.f32.gmra.mrb[0].mxu0 %v291
  %v652 = vpop.f32.mrb[0].mxu0
  %v653 = vadd.f32 0.0, %v652
  %v654 = vpop.f32.mrb[0].mxu0
  %655 = vmatprep.mubr.f32.mxu0 0.0
  %656 = vmatmul.mubr.f32.gmra.mrb[0].mxu0 %v294
  %v657 = vpop.f32.mrb[0].mxu0
  %v658 = vadd.f32 0.0, %v657
  %v659 = vpop.f32.mrb[0].mxu0
  %660 = vmatprep.mubr.f32.mxu0 0.0
  %661 = vmatmul.mubr.f32.gmra.mrb[0].mxu0 %v297
  %v662 = vpop.f32.mrb[0].mxu0
  %v663 = vadd.f32 0.0, %v662
  %v664 = vpop.f32.mrb[0].mxu0
  %665 = vmatprep.mubr.f32.mxu0 0.0
  %666 = vmatmul.mubr.f32.gmra.mrb[0].mxu0 %v300
  %v667 = vpop.f32.mrb[0].mxu0
  %v668 = vadd.f32 0.0, %v667
  %v669 = vpop.f32.mrb[0].mxu0
  %670 = vdwg.mxu0
  %v671 = vld [vmem:[%s2] sm:$0xff]
  %v672 = vld [vmem:[%s2 + $0x8] sm:$0xff]
  %v673 = vld [vmem:[%s2 + $0x10] sm:$0xff]
  %v674 = vld [vmem:[%s2 + $0x18] sm:$0xff]
  %v675 = vld [vmem:[%s2 + $0x20] sm:$0xff]
  %v676 = vld [vmem:[%s2 + $0x28] sm:$0xff]
  %v677 = vld [vmem:[%s2 + $0x30] sm:$0xff]
  %v678 = vld [vmem:[%s2 + $0x38] sm:$0xff]
  %v679 = vld [vmem:[%s2 + $0x40] sm:$0xff]
  %v680 = vld [vmem:[%s2 + $0x48] sm:$0x7]
  %v681 = vld [vmem:[%s3] sm:$0xff]
  %v682 = vld [vmem:[%s3 + $0x8] sm:$0xff]
  %v683 = vld [vmem:[%s3 + $0x10] sm:$0xff]
  %v684 = vmul.f32 %v681, 0.0
  %v685 = vmul.f32 %v682, 0.0
  %v686 = vmul.f32 %v683, 0.0
  %vm687 = vcmask 613376
  %v689 = vsel %vm687, %v684, 0
  %v692 = vsel %vm687, %v685, 0
  %v695 = vsel %vm687, %v686, 0
  %vm697 = vcmask 1042432
  %v699 = vsel %vm697, %v680, 0
  %701 = vmatprep.subr.mxu0 0.0
  %702 = vmatpush1.msra.mxu0 %v671
  %703 = vmatprep.subr.mxu0 0.0
  %704 = vmatpush1.msra.mxu0 %v672
  %705 = vmatprep.subr.mxu0 0.0
  %706 = vmatpush1.msra.mxu0 %v673
  %707 = vmatprep.subr.mxu0 0.0
  %708 = vmatpush1.msra.mxu0 %v674
  %709 = vmatprep.subr.mxu0 0.0
  %710 = vmatpush1.msra.mxu0 %v675
  %711 = vmatprep.subr.mxu0 0.0
  %712 = vmatpush1.msra.mxu0 %v676
  %713 = vmatprep.subr.mxu0 0.0
  %714 = vmatpush1.msra.mxu0 %v677
  %715 = vmatprep.subr.mxu0 0.0
  %716 = vmatpush1.msra.mxu0 %v678
  %717 = vmatprep.subr.mxu0 0.0
  %718 = vmatpush1.msra.mxu0 %v679
  %719 = vmatprep.subr.mxu0 0.0
  %720 = vmatpush1.msra.mxu0 %v699
  %721 = vmatprep.subr.mxu0 0.0
  %722 = vmatpush1.msra.mxu0 0.0
  %723 = vmatprep.subr.mxu0 0.0
  %724 = vmatpush1.msra.mxu0 0.0
  %725 = vmatprep.subr.mxu0 0.0
  %726 = vmatpush1.msra.mxu0 0.0
  %727 = vmatprep.subr.mxu0 0.0
  %728 = vmatpush1.msra.mxu0 0.0
  %729 = vmatprep.subr.mxu0 0.0
  %730 = vmatpush1.msra.mxu0 0.0
  %731 = vmatprep.subr.mxu0 0.0
  %732 = vmatpush1.msra.mxu0 0.0
  %733 = vmatprep.subr.mxu0 0.0
  %734 = vmatpush1.msra.mxu0 0.0
  %735 = vmatprep.subr.mxu0 0.0
  %736 = vmatpush1.msra.mxu0 0.0
  %737 = vmatprep.subr.mxu0 0.0
  %738 = vmatpush1.msra.mxu0 0.0
  %739 = vmatprep.subr.mxu0 0.0
  %740 = vmatpush1.msra.mxu0 0.0
  %741 = vmatprep.subr.mxu0 0.0
  %742 = vmatpush1.msra.mxu0 0.0
  %743 = vmatprep.subr.mxu0 0.0
  %744 = vmatpush1.msra.mxu0 0.0
  %745 = vmatprep.subr.mxu0 0.0
  %746 = vmatpush1.msra.mxu0 0.0
  %747 = vmatprep.subr.mxu0 0.0
  %748 = vmatpush1.msra.mxu0 0.0
  %749 = vmatprep.subr.mxu0 0.0
  %750 = vmatpush1.msra.mxu0 0.0
  %751 = vmatprep.subr.mxu0 0.0
  %752 = vmatpush1.msra.mxu0 0.0
  %753 = vmatprep.subr.mxu0 0.0
  %754 = vmatpush1.msra.mxu0 0.0
  %755 = vmatprep.subr.mxu0 0.0
  %756 = vmatpush1.msra.mxu0 0.0
  %757 = vmatprep.subr.mxu0 0.0
  %758 = vmatpush1.msra.mxu0 0.0
  %759 = vmatprep.subr.mxu0 0.0
  %760 = vmatpush1.msra.mxu0 0.0
  %761 = vmatprep.subr.mxu0 0.0
  %762 = vmatpush1.msra.mxu0 0.0
  %763 = vmatprep.subr.mxu0 0.0
  %764 = vmatpush1.msra.mxu0 0.0
  %765 = vmatprep.mubr.f32.mxu0 0.0
  %766 = vmatmul.mubr.f32.gmra.mrb[0].mxu0 %v689
  %v767 = vpop.f32.mrb[0].mxu0
  %v768 = vadd.f32 0.0, %v767
  %v769 = vpop.f32.mrb[0].mxu0
  %770 = vmatprep.mubr.f32.mxu0 0.0
  %771 = vmatmul.mubr.f32.gmra.mrb[0].mxu0 %v692
  %v772 = vpop.f32.mrb[0].mxu0
  %v773 = vadd.f32 0.0, %v772
  %v774 = vpop.f32.mrb[0].mxu0
  %775 = vmatprep.mubr.f32.mxu0 0.0
  %776 = vmatmul.mubr.f32.gmra.mrb[0].mxu0 %v695
  %v777 = vpop.f32.mrb[0].mxu0
  %v778 = vadd.f32 0.0, %v777
  %v779 = vpop.f32.mrb[0].mxu0
  %780 = vdwg.mxu0
  %v781 = vadd.f32 %v373, %v768
  %v782 = vadd.f32 %v378, %v773
  %v783 = vadd.f32 %v383, %v778
  %v784 = vxor.u32 %v781, 2147483648
  %v785 = vxor.u32 %v782, 2147483648
  %v786 = vxor.u32 %v783, 2147483648
  %v787 = vmul.f32 %v784, 1.442695
  %v788 = vpow.pop %v787
  %v789 = vmul.f32 %v785, 1.442695
  %v790 = vpow.pop %v789
  %v791 = vmul.f32 %v786, 1.442695
  %v792 = vpow.pop %v791
  %v793 = vadd.f32 %v788, 1.0
  %v794 = vadd.f32 %v790, 1.0
  %v795 = vadd.f32 %v792, 1.0
  %v796 = vrcp.pop %v793
  %v797 = vmul.f32 1.0, %v796
  %v798 = vrcp.pop %v794
  %v799 = vmul.f32 1.0, %v798
  %v800 = vrcp.pop %v795
  %v801 = vmul.f32 1.0, %v800
  %v802 = vtanh.pop %v781
  %v803 = vtanh.pop %v782
  %v804 = vtanh.pop %v783
  %v805 = vmul.f32 %v797, 0.0
  %v806 = vmul.f32 %v799, 0.0
  %v807 = vmul.f32 %v801, 0.0
  %811 = vrot.lane.b32.xlu0 %v802, 53
  %v812 = vpop.permute.xlu0 %811
  %813 = vrot.lane.b32.xlu0 %v803, 53
  %v814 = vpop.permute.xlu0 %813
  %815 = vrot.lane.b32.xlu0 %v804, 53
  %v816 = vpop.permute.xlu0 %815
  %v820 = vmul.f32 %v797, %v812
  %v821 = vmul.f32 %v799, %v814
  %v822 = vmul.f32 %v801, %v816
  %826 = vrot.lane.b32.xlu0 %v820, 25
  %v827 = vpop.permute.xlu0 %826
  %828 = vrot.lane.b32.xlu0 %v821, 25
  %v829 = vpop.permute.xlu0 %828
  %830 = vrot.lane.b32.xlu0 %v822, 25
  %v831 = vpop.permute.xlu0 %830
  %v835 = vadd.f32 %v805, %v827
  %v836 = vadd.f32 %v806, %v829
  %v837 = vadd.f32 %v807, %v831
  %v838 = vtanh.pop %v835
  %v839 = vtanh.pop %v836
  %v840 = vtanh.pop %v837
  %844 = vrot.lane.b32.xlu0 %v838, 25
  %v845 = vpop.permute.xlu0 %844
  %846 = vrot.lane.b32.xlu0 %v839, 25
  %v847 = vpop.permute.xlu0 %846
  %848 = vrot.lane.b32.xlu0 %v840, 25
  %v849 = vpop.permute.xlu0 %848
  %v853 = vmul.f32 %v797, %v845
  %v854 = vmul.f32 %v799, %v847
  %v855 = vmul.f32 %v801, %v849
  %859 = vrot.lane.b32.xlu0 %v853, 78
  %v860 = vpop.permute.xlu0 %859
  %861 = vrot.lane.b32.xlu0 %v854, 78
  %v862 = vpop.permute.xlu0 %861
  %863 = vrot.lane.b32.xlu0 %v855, 78
  %v864 = vpop.permute.xlu0 %863
  %868 = vrot.lane.b32.xlu0 %v853, 103
  %v869 = vpop.permute.xlu0 %868
  %870 = vrot.lane.b32.xlu0 %v854, 103
  %v871 = vpop.permute.xlu0 %870
  %872 = vrot.lane.b32.xlu0 %v855, 103
  %v873 = vpop.permute.xlu0 %872
  %vm877 = vcmask 203776
  %v878 = vsel %vm877, %v860, %v869
  %v879 = vsel %vm877, %v862, %v871
  %v880 = vsel %vm877, %v864, %v873
  %vm881 = vcmask 408576
  %v882 = vsel %vm881, %v878, %v853
  %v883 = vsel %vm881, %v879, %v854
  %v884 = vsel %vm881, %v880, %v855
  %v885 = vmul.f32 %v882, %v681
  %v886 = vmul.f32 %v883, %v682
  %v887 = vmul.f32 %v884, %v683
  %v889 = vsel %vm687, %v885, 0
  %v892 = vsel %vm687, %v886, 0
  %v895 = vsel %vm687, %v887, 0
  %897 = vmatprep.subr.mxu0 0.0
  %898 = vmatpush1.msra.mxu0 %v671
  %899 = vmatprep.subr.mxu0 0.0
  %900 = vmatpush1.msra.mxu0 %v672
  %901 = vmatprep.subr.mxu0 0.0
  %902 = vmatpush1.msra.mxu0 %v673
  %903 = vmatprep.subr.mxu0 0.0
  %904 = vmatpush1.msra.mxu0 %v674
  %905 = vmatprep.subr.mxu0 0.0
  %906 = vmatpush1.msra.mxu0 %v675
  %907 = vmatprep.subr.mxu0 0.0
  %908 = vmatpush1.msra.mxu0 %v676
  %909 = vmatprep.subr.mxu0 0.0
  %910 = vmatpush1.msra.mxu0 %v677
  %911 = vmatprep.subr.mxu0 0.0
  %912 = vmatpush1.msra.mxu0 %v678
  %913 = vmatprep.subr.mxu0 0.0
  %914 = vmatpush1.msra.mxu0 %v679
  %915 = vmatprep.subr.mxu0 0.0
  %916 = vmatpush1.msra.mxu0 %v699
  %917 = vmatprep.subr.mxu0 0.0
  %918 = vmatpush1.msra.mxu0 0.0
  %919 = vmatprep.subr.mxu0 0.0
  %920 = vmatpush1.msra.mxu0 0.0
  %921 = vmatprep.subr.mxu0 0.0
  %922 = vmatpush1.msra.mxu0 0.0
  %923 = vmatprep.subr.mxu0 0.0
  %924 = vmatpush1.msra.mxu0 0.0
  %925 = vmatprep.subr.mxu0 0.0
  %926 = vmatpush1.msra.mxu0 0.0
  %927 = vmatprep.subr.mxu0 0.0
  %928 = vmatpush1.msra.mxu0 0.0
  %929 = vmatprep.subr.mxu0 0.0
  %930 = vmatpush1.msra.mxu0 0.0
  %931 = vmatprep.subr.mxu0 0.0
  %932 = vmatpush1.msra.mxu0 0.0
  %933 = vmatprep.subr.mxu0 0.0
  %934 = vmatpush1.msra.mxu0 0.0
  %935 = vmatprep.subr.mxu0 0.0
  %936 = vmatpush1.msra.mxu0 0.0
  %937 = vmatprep.subr.mxu0 0.0
  %938 = vmatpush1.msra.mxu0 0.0
  %939 = vmatprep.subr.mxu0 0.0
  %940 = vmatpush1.msra.mxu0 0.0
  %941 = vmatprep.subr.mxu0 0.0
  %942 = vmatpush1.msra.mxu0 0.0
  %943 = vmatprep.subr.mxu0 0.0
  %944 = vmatpush1.msra.mxu0 0.0
  %945 = vmatprep.subr.mxu0 0.0
  %946 = vmatpush1.msra.mxu0 0.0
  %947 = vmatprep.subr.mxu0 0.0
  %948 = vmatpush1.msra.mxu0 0.0
  %949 = vmatprep.subr.mxu0 0.0
  %950 = vmatpush1.msra.mxu0 0.0
  %951 = vmatprep.subr.mxu0 0.0
  %952 = vmatpush1.msra.mxu0 0.0
  %953 = vmatprep.subr.mxu0 0.0
  %954 = vmatpush1.msra.mxu0 0.0
  %955 = vmatprep.subr.mxu0 0.0
  %956 = vmatpush1.msra.mxu0 0.0
  %957 = vmatprep.subr.mxu0 0.0
  %958 = vmatpush1.msra.mxu0 0.0
  %959 = vmatprep.subr.mxu0 0.0
  %960 = vmatpush1.msra.mxu0 0.0
  %961 = vmatprep.mubr.f32.mxu0 0.0
  %962 = vmatmul.mubr.f32.gmra.mrb[0].mxu0 %v889
  %v963 = vpop.f32.mrb[0].mxu0
  %v964 = vadd.f32 0.0, %v963
  %v965 = vpop.f32.mrb[0].mxu0
  %966 = vmatprep.mubr.f32.mxu0 0.0
  %967 = vmatmul.mubr.f32.gmra.mrb[0].mxu0 %v892
  %v968 = vpop.f32.mrb[0].mxu0
  %v969 = vadd.f32 0.0, %v968
  %v970 = vpop.f32.mrb[0].mxu0
  %971 = vmatprep.mubr.f32.mxu0 0.0
  %972 = vmatmul.mubr.f32.gmra.mrb[0].mxu0 %v895
  %v973 = vpop.f32.mrb[0].mxu0
  %v974 = vadd.f32 0.0, %v973
  %v975 = vpop.f32.mrb[0].mxu0
  %976 = vdwg.mxu0
  %v977 = vadd.f32 %v388, %v964
  %v978 = vadd.f32 %v393, %v969
  %v979 = vadd.f32 %v398, %v974
  %v980 = vxor.u32 %v977, 2147483648
  %v981 = vxor.u32 %v978, 2147483648
  %v982 = vxor.u32 %v979, 2147483648
  %v983 = vmul.f32 %v980, 1.442695
  %v984 = vpow.pop %v983
  %v985 = vmul.f32 %v981, 1.442695
  %v986 = vpow.pop %v985
  %v987 = vmul.f32 %v982, 1.442695
  %v988 = vpow.pop %v987
  %v989 = vadd.f32 %v984, 1.0
  %v990 = vadd.f32 %v986, 1.0
  %v991 = vadd.f32 %v988, 1.0
  %v992 = vrcp.pop %v989
  %v993 = vmul.f32 1.0, %v992
  %v994 = vrcp.pop %v990
  %v995 = vmul.f32 1.0, %v994
  %v996 = vrcp.pop %v991
  %v997 = vmul.f32 1.0, %v996
  %v998 = vtanh.pop %v977
  %v999 = vtanh.pop %v978
  %v1000 = vtanh.pop %v979
  %v1001 = vmul.f32 %v993, %v835
  %v1002 = vmul.f32 %v995, %v836
  %v1003 = vmul.f32 %v997, %v837
  %1007 = vrot.lane.b32.xlu0 %v998, 53
  %v1008 = vpop.permute.xlu0 %1007
  %1009 = vrot.lane.b32.xlu0 %v999, 53
  %v1010 = vpop.permute.xlu0 %1009
  %1011 = vrot.lane.b32.xlu0 %v1000, 53
  %v1012 = vpop.permute.xlu0 %1011
  %v1016 = vmul.f32 %v993, %v1008
  %v1017 = vmul.f32 %v995, %v1010
  %v1018 = vmul.f32 %v997, %v1012
  %1022 = vrot.lane.b32.xlu0 %v1016, 25
  %v1023 = vpop.permute.xlu0 %1022
  %1024 = vrot.lane.b32.xlu0 %v1017, 25
  %v1025 = vpop.permute.xlu0 %1024
  %1026 = vrot.lane.b32.xlu0 %v1018, 25
  %v1027 = vpop.permute.xlu0 %1026
  %v1031 = vadd.f32 %v1001, %v1023
  %v1032 = vadd.f32 %v1002, %v1025
  %v1033 = vadd.f32 %v1003, %v1027
  %v1034 = vtanh.pop %v1031
  %v1035 = vtanh.pop %v1032
  %v1036 = vtanh.pop %v1033
  %1040 = vrot.lane.b32.xlu0 %v1034, 25
  %v1041 = vpop.permute.xlu0 %1040
  %1042 = vrot.lane.b32.xlu0 %v1035, 25
  %v1043 = vpop.permute.xlu0 %1042
  %1044 = vrot.lane.b32.xlu0 %v1036, 25
  %v1045 = vpop.permute.xlu0 %1044
  %v1049 = vmul.f32 %v993, %v1041
  %v1050 = vmul.f32 %v995, %v1043
  %v1051 = vmul.f32 %v997, %v1045
  %1055 = vrot.lane.b32.xlu0 %v1049, 78
  %v1056 = vpop.permute.xlu0 %1055
  %1057 = vrot.lane.b32.xlu0 %v1050, 78
  %v1058 = vpop.permute.xlu0 %1057
  %1059 = vrot.lane.b32.xlu0 %v1051, 78
  %v1060 = vpop.permute.xlu0 %1059
  %1064 = vrot.lane.b32.xlu0 %v1049, 103
  %v1065 = vpop.permute.xlu0 %1064
  %1066 = vrot.lane.b32.xlu0 %v1050, 103
  %v1067 = vpop.permute.xlu0 %1066
  %1068 = vrot.lane.b32.xlu0 %v1051, 103
  %v1069 = vpop.permute.xlu0 %1068
  %v1073 = vsel %vm877, %v1056, %v1065
  %v1074 = vsel %vm877, %v1058, %v1067
  %v1075 = vsel %vm877, %v1060, %v1069
  %v1076 = vsel %vm881, %v1073, %v1049
  %v1077 = vsel %vm881, %v1074, %v1050
  %v1078 = vsel %vm881, %v1075, %v1051
  %v1079 = vmul.f32 %v1076, %v681
  %v1080 = vmul.f32 %v1077, %v682
  %v1081 = vmul.f32 %v1078, %v683
  %v1083 = vsel %vm687, %v1079, 0
  %v1086 = vsel %vm687, %v1080, 0
  %v1089 = vsel %vm687, %v1081, 0
  %1091 = vmatprep.subr.mxu0 0.0
  %1092 = vmatpush1.msra.mxu0 %v671
  %1093 = vmatprep.subr.mxu0 0.0
  %1094 = vmatpush1.msra.mxu0 %v672
  %1095 = vmatprep.subr.mxu0 0.0
  %1096 = vmatpush1.msra.mxu0 %v673
  %1097 = vmatprep.subr.mxu0 0.0
  %1098 = vmatpush1.msra.mxu0 %v674
  %1099 = vmatprep.subr.mxu0 0.0
  %1100 = vmatpush1.msra.mxu0 %v675
  %1101 = vmatprep.subr.mxu0 0.0
  %1102 = vmatpush1.msra.mxu0 %v676
  %1103 = vmatprep.subr.mxu0 0.0
  %1104 = vmatpush1.msra.mxu0 %v677
  %1105 = vmatprep.subr.mxu0 0.0
  %1106 = vmatpush1.msra.mxu0 %v678
  %1107 = vmatprep.subr.mxu0 0.0
  %1108 = vmatpush1.msra.mxu0 %v679
  %1109 = vmatprep.subr.mxu0 0.0
  %1110 = vmatpush1.msra.mxu0 %v699
  %1111 = vmatprep.subr.mxu0 0.0
  %1112 = vmatpush1.msra.mxu0 0.0
  %1113 = vmatprep.subr.mxu0 0.0
  %1114 = vmatpush1.msra.mxu0 0.0
  %1115 = vmatprep.subr.mxu0 0.0
  %1116 = vmatpush1.msra.mxu0 0.0
  %1117 = vmatprep.subr.mxu0 0.0
  %1118 = vmatpush1.msra.mxu0 0.0
  %1119 = vmatprep.subr.mxu0 0.0
  %1120 = vmatpush1.msra.mxu0 0.0
  %1121 = vmatprep.subr.mxu0 0.0
  %1122 = vmatpush1.msra.mxu0 0.0
  %1123 = vmatprep.subr.mxu0 0.0
  %1124 = vmatpush1.msra.mxu0 0.0
  %1125 = vmatprep.subr.mxu0 0.0
  %1126 = vmatpush1.msra.mxu0 0.0
  %1127 = vmatprep.subr.mxu0 0.0
  %1128 = vmatpush1.msra.mxu0 0.0
  %1129 = vmatprep.subr.mxu0 0.0
  %1130 = vmatpush1.msra.mxu0 0.0
  %1131 = vmatprep.subr.mxu0 0.0
  %1132 = vmatpush1.msra.mxu0 0.0
  %1133 = vmatprep.subr.mxu0 0.0
  %1134 = vmatpush1.msra.mxu0 0.0
  %1135 = vmatprep.subr.mxu0 0.0
  %1136 = vmatpush1.msra.mxu0 0.0
  %1137 = vmatprep.subr.mxu0 0.0
  %1138 = vmatpush1.msra.mxu0 0.0
  %1139 = vmatprep.subr.mxu0 0.0
  %1140 = vmatpush1.msra.mxu0 0.0
  %1141 = vmatprep.subr.mxu0 0.0
  %1142 = vmatpush1.msra.mxu0 0.0
  %1143 = vmatprep.subr.mxu0 0.0
  %1144 = vmatpush1.msra.mxu0 0.0
  %1145 = vmatprep.subr.mxu0 0.0
  %1146 = vmatpush1.msra.mxu0 0.0
  %1147 = vmatprep.subr.mxu0 0.0
  %1148 = vmatpush1.msra.mxu0 0.0
  %1149 = vmatprep.subr.mxu0 0.0
  %1150 = vmatpush1.msra.mxu0 0.0
  %1151 = vmatprep.subr.mxu0 0.0
  %1152 = vmatpush1.msra.mxu0 0.0
  %1153 = vmatprep.subr.mxu0 0.0
  %1154 = vmatpush1.msra.mxu0 0.0
  %1155 = vmatprep.mubr.f32.mxu0 0.0
  %1156 = vmatmul.mubr.f32.gmra.mrb[0].mxu0 %v1083
  %v1157 = vpop.f32.mrb[0].mxu0
  %v1158 = vadd.f32 0.0, %v1157
  %v1159 = vpop.f32.mrb[0].mxu0
  %1160 = vmatprep.mubr.f32.mxu0 0.0
  %1161 = vmatmul.mubr.f32.gmra.mrb[0].mxu0 %v1086
  %v1162 = vpop.f32.mrb[0].mxu0
  %v1163 = vadd.f32 0.0, %v1162
  %v1164 = vpop.f32.mrb[0].mxu0
  %1165 = vmatprep.mubr.f32.mxu0 0.0
  %1166 = vmatmul.mubr.f32.gmra.mrb[0].mxu0 %v1089
  %v1167 = vpop.f32.mrb[0].mxu0
  %v1168 = vadd.f32 0.0, %v1167
  %v1169 = vpop.f32.mrb[0].mxu0
  %1170 = vdwg.mxu0
  %v1171 = vadd.f32 %v403, %v1158
  %v1172 = vadd.f32 %v408, %v1163
  %v1173 = vadd.f32 %v413, %v1168
  %v1174 = vxor.u32 %v1171, 2147483648
  %v1175 = vxor.u32 %v1172, 2147483648
  %v1176 = vxor.u32 %v1173, 2147483648
  %v1177 = vmul.f32 %v1174, 1.442695
  %v1178 = vpow.pop %v1177
  %v1179 = vmul.f32 %v1175, 1.442695
  %v1180 = vpow.pop %v1179
  %v1181 = vmul.f32 %v1176, 1.442695
  %v1182 = vpow.pop %v1181
  %v1183 = vadd.f32 %v1178, 1.0
  %v1184 = vadd.f32 %v1180, 1.0
  %v1185 = vadd.f32 %v1182, 1.0
  %v1186 = vrcp.pop %v1183
  %v1187 = vmul.f32 1.0, %v1186
  %v1188 = vrcp.pop %v1184
  %v1189 = vmul.f32 1.0, %v1188
  %v1190 = vrcp.pop %v1185
  %v1191 = vmul.f32 1.0, %v1190
  %v1192 = vtanh.pop %v1171
  %v1193 = vtanh.pop %v1172
  %v1194 = vtanh.pop %v1173
  %v1195 = vmul.f32 %v1187, %v1031
  %v1196 = vmul.f32 %v1189, %v1032
  %v1197 = vmul.f32 %v1191, %v1033
  %1201 = vrot.lane.b32.xlu0 %v1192, 53
  %v1202 = vpop.permute.xlu0 %1201
  %1203 = vrot.lane.b32.xlu0 %v1193, 53
  %v1204 = vpop.permute.xlu0 %1203
  %1205 = vrot.lane.b32.xlu0 %v1194, 53
  %v1206 = vpop.permute.xlu0 %1205
  %v1210 = vmul.f32 %v1187, %v1202
  %v1211 = vmul.f32 %v1189, %v1204
  %v1212 = vmul.f32 %v1191, %v1206
  %1216 = vrot.lane.b32.xlu0 %v1210, 25
  %v1217 = vpop.permute.xlu0 %1216
  %1218 = vrot.lane.b32.xlu0 %v1211, 25
  %v1219 = vpop.permute.xlu0 %1218
  %1220 = vrot.lane.b32.xlu0 %v1212, 25
  %v1221 = vpop.permute.xlu0 %1220
  %v1225 = vadd.f32 %v1195, %v1217
  %v1226 = vadd.f32 %v1196, %v1219
  %v1227 = vadd.f32 %v1197, %v1221
  %v1228 = vtanh.pop %v1225
  %v1229 = vtanh.pop %v1226
  %v1230 = vtanh.pop %v1227
  %1234 = vrot.lane.b32.xlu0 %v1228, 25
  %v1235 = vpop.permute.xlu0 %1234
  %1236 = vrot.lane.b32.xlu0 %v1229, 25
  %v1237 = vpop.permute.xlu0 %1236
  %1238 = vrot.lane.b32.xlu0 %v1230, 25
  %v1239 = vpop.permute.xlu0 %1238
  %v1243 = vmul.f32 %v1187, %v1235
  %v1244 = vmul.f32 %v1189, %v1237
  %v1245 = vmul.f32 %v1191, %v1239
  %1249 = vrot.lane.b32.xlu0 %v1243, 78
  %v1250 = vpop.permute.xlu0 %1249
  %1251 = vrot.lane.b32.xlu0 %v1244, 78
  %v1252 = vpop.permute.xlu0 %1251
  %1253 = vrot.lane.b32.xlu0 %v1245, 78
  %v1254 = vpop.permute.xlu0 %1253
  %1258 = vrot.lane.b32.xlu0 %v1243, 103
  %v1259 = vpop.permute.xlu0 %1258
  %1260 = vrot.lane.b32.xlu0 %v1244, 103
  %v1261 = vpop.permute.xlu0 %1260
  %1262 = vrot.lane.b32.xlu0 %v1245, 103
  %v1263 = vpop.permute.xlu0 %1262
  %v1267 = vsel %vm877, %v1250, %v1259
  %v1268 = vsel %vm877, %v1252, %v1261
  %v1269 = vsel %vm877, %v1254, %v1263
  %v1270 = vsel %vm881, %v1267, %v1243
  %v1271 = vsel %vm881, %v1268, %v1244
  %v1272 = vsel %vm881, %v1269, %v1245
  %v1273 = vmul.f32 %v1270, %v681
  %v1274 = vmul.f32 %v1271, %v682
  %v1275 = vmul.f32 %v1272, %v683
  %v1277 = vsel %vm687, %v1273, 0
  %v1280 = vsel %vm687, %v1274, 0
  %v1283 = vsel %vm687, %v1275, 0
  %1285 = vmatprep.subr.mxu0 0.0
  %1286 = vmatpush1.msra.mxu0 %v671
  %1287 = vmatprep.subr.mxu0 0.0
  %1288 = vmatpush1.msra.mxu0 %v672
  %1289 = vmatprep.subr.mxu0 0.0
  %1290 = vmatpush1.msra.mxu0 %v673
  %1291 = vmatprep.subr.mxu0 0.0
  %1292 = vmatpush1.msra.mxu0 %v674
  %1293 = vmatprep.subr.mxu0 0.0
  %1294 = vmatpush1.msra.mxu0 %v675
  %1295 = vmatprep.subr.mxu0 0.0
  %1296 = vmatpush1.msra.mxu0 %v676
  %1297 = vmatprep.subr.mxu0 0.0
  %1298 = vmatpush1.msra.mxu0 %v677
  %1299 = vmatprep.subr.mxu0 0.0
  %1300 = vmatpush1.msra.mxu0 %v678
  %1301 = vmatprep.subr.mxu0 0.0
  %1302 = vmatpush1.msra.mxu0 %v679
  %1303 = vmatprep.subr.mxu0 0.0
  %1304 = vmatpush1.msra.mxu0 %v699
  %1305 = vmatprep.subr.mxu0 0.0
  %1306 = vmatpush1.msra.mxu0 0.0
  %1307 = vmatprep.subr.mxu0 0.0
  %1308 = vmatpush1.msra.mxu0 0.0
  %1309 = vmatprep.subr.mxu0 0.0
  %1310 = vmatpush1.msra.mxu0 0.0
  %1311 = vmatprep.subr.mxu0 0.0
  %1312 = vmatpush1.msra.mxu0 0.0
  %1313 = vmatprep.subr.mxu0 0.0
  %1314 = vmatpush1.msra.mxu0 0.0
  %1315 = vmatprep.subr.mxu0 0.0
  %1316 = vmatpush1.msra.mxu0 0.0
  %1317 = vmatprep.subr.mxu0 0.0
  %1318 = vmatpush1.msra.mxu0 0.0
  %1319 = vmatprep.subr.mxu0 0.0
  %1320 = vmatpush1.msra.mxu0 0.0
  %1321 = vmatprep.subr.mxu0 0.0
  %1322 = vmatpush1.msra.mxu0 0.0
  %1323 = vmatprep.subr.mxu0 0.0
  %1324 = vmatpush1.msra.mxu0 0.0
  %1325 = vmatprep.subr.mxu0 0.0
  %1326 = vmatpush1.msra.mxu0 0.0
  %1327 = vmatprep.subr.mxu0 0.0
  %1328 = vmatpush1.msra.mxu0 0.0
  %1329 = vmatprep.subr.mxu0 0.0
  %1330 = vmatpush1.msra.mxu0 0.0
  %1331 = vmatprep.subr.mxu0 0.0
  %1332 = vmatpush1.msra.mxu0 0.0
  %1333 = vmatprep.subr.mxu0 0.0
  %1334 = vmatpush1.msra.mxu0 0.0
  %1335 = vmatprep.subr.mxu0 0.0
  %1336 = vmatpush1.msra.mxu0 0.0
  %1337 = vmatprep.subr.mxu0 0.0
  %1338 = vmatpush1.msra.mxu0 0.0
  %1339 = vmatprep.subr.mxu0 0.0
  %1340 = vmatpush1.msra.mxu0 0.0
  %1341 = vmatprep.subr.mxu0 0.0
  %1342 = vmatpush1.msra.mxu0 0.0
  %1343 = vmatprep.subr.mxu0 0.0
  %1344 = vmatpush1.msra.mxu0 0.0
  %1345 = vmatprep.subr.mxu0 0.0
  %1346 = vmatpush1.msra.mxu0 0.0
  %1347 = vmatprep.subr.mxu0 0.0
  %1348 = vmatpush1.msra.mxu0 0.0
  %1349 = vmatprep.mubr.f32.mxu0 0.0
  %1350 = vmatmul.mubr.f32.gmra.mrb[0].mxu0 %v1277
  %v1351 = vpop.f32.mrb[0].mxu0
  %v1352 = vadd.f32 0.0, %v1351
  %v1353 = vpop.f32.mrb[0].mxu0
  %1354 = vmatprep.mubr.f32.mxu0 0.0
  %1355 = vmatmul.mubr.f32.gmra.mrb[0].mxu0 %v1280
  %v1356 = vpop.f32.mrb[0].mxu0
  %v1357 = vadd.f32 0.0, %v1356
  %v1358 = vpop.f32.mrb[0].mxu0
  %1359 = vmatprep.mubr.f32.mxu0 0.0
  %1360 = vmatmul.mubr.f32.gmra.mrb[0].mxu0 %v1283
  %v1361 = vpop.f32.mrb[0].mxu0
  %v1362 = vadd.f32 0.0, %v1361
  %v1363 = vpop.f32.mrb[0].mxu0
  %1364 = vdwg.mxu0
  %v1365 = vadd.f32 %v418, %v1352
  %v1366 = vadd.f32 %v423, %v1357
  %v1367 = vadd.f32 %v428, %v1362
  %v1368 = vxor.u32 %v1365, 2147483648
  %v1369 = vxor.u32 %v1366, 2147483648
  %v1370 = vxor.u32 %v1367, 2147483648
  %v1371 = vmul.f32 %v1368, 1.442695
  %v1372 = vpow.pop %v1371
  %v1373 = vmul.f32 %v1369, 1.442695
  %v1374 = vpow.pop %v1373
  %v1375 = vmul.f32 %v1370, 1.442695
  %v1376 = vpow.pop %v1375
  %v1377 = vadd.f32 %v1372, 1.0
  %v1378 = vadd.f32 %v1374, 1.0
  %v1379 = vadd.f32 %v1376, 1.0
  %v1380 = vrcp.pop %v1377
  %v1381 = vmul.f32 1.0, %v1380
  %v1382 = vrcp.pop %v1378
  %v1383 = vmul.f32 1.0, %v1382
  %v1384 = vrcp.pop %v1379
  %v1385 = vmul.f32 1.0, %v1384
  %v1386 = vtanh.pop %v1365
  %v1387 = vtanh.pop %v1366
  %v1388 = vtanh.pop %v1367
  %v1389 = vmul.f32 %v1381, %v1225
  %v1390 = vmul.f32 %v1383, %v1226
  %v1391 = vmul.f32 %v1385, %v1227
  %1395 = vrot.lane.b32.xlu0 %v1386, 53
  %v1396 = vpop.permute.xlu0 %1395
  %1397 = vrot.lane.b32.xlu0 %v1387, 53
  %v1398 = vpop.permute.xlu0 %1397
  %1399 = vrot.lane.b32.xlu0 %v1388, 53
  %v1400 = vpop.permute.xlu0 %1399
  %v1404 = vmul.f32 %v1381, %v1396
  %v1405 = vmul.f32 %v1383, %v1398
  %v1406 = vmul.f32 %v1385, %v1400
  %1410 = vrot.lane.b32.xlu0 %v1404, 25
  %v1411 = vpop.permute.xlu0 %1410
  %1412 = vrot.lane.b32.xlu0 %v1405, 25
  %v1413 = vpop.permute.xlu0 %1412
  %1414 = vrot.lane.b32.xlu0 %v1406, 25
  %v1415 = vpop.permute.xlu0 %1414
  %v1419 = vadd.f32 %v1389, %v1411
  %v1420 = vadd.f32 %v1390, %v1413
  %v1421 = vadd.f32 %v1391, %v1415
  %v1422 = vtanh.pop %v1419
  %v1423 = vtanh.pop %v1420
  %v1424 = vtanh.pop %v1421
  %1428 = vrot.lane.b32.xlu0 %v1422, 25
  %v1429 = vpop.permute.xlu0 %1428
  %1430 = vrot.lane.b32.xlu0 %v1423, 25
  %v1431 = vpop.permute.xlu0 %1430
  %1432 = vrot.lane.b32.xlu0 %v1424, 25
  %v1433 = vpop.permute.xlu0 %1432
  %v1437 = vmul.f32 %v1381, %v1429
  %v1438 = vmul.f32 %v1383, %v1431
  %v1439 = vmul.f32 %v1385, %v1433
  %1443 = vrot.lane.b32.xlu0 %v1437, 78
  %v1444 = vpop.permute.xlu0 %1443
  %1445 = vrot.lane.b32.xlu0 %v1438, 78
  %v1446 = vpop.permute.xlu0 %1445
  %1447 = vrot.lane.b32.xlu0 %v1439, 78
  %v1448 = vpop.permute.xlu0 %1447
  %1452 = vrot.lane.b32.xlu0 %v1437, 103
  %v1453 = vpop.permute.xlu0 %1452
  %1454 = vrot.lane.b32.xlu0 %v1438, 103
  %v1455 = vpop.permute.xlu0 %1454
  %1456 = vrot.lane.b32.xlu0 %v1439, 103
  %v1457 = vpop.permute.xlu0 %1456
  %v1461 = vsel %vm877, %v1444, %v1453
  %v1462 = vsel %vm877, %v1446, %v1455
  %v1463 = vsel %vm877, %v1448, %v1457
  %v1464 = vsel %vm881, %v1461, %v1437
  %v1465 = vsel %vm881, %v1462, %v1438
  %v1466 = vsel %vm881, %v1463, %v1439
  %v1467 = vmul.f32 %v1464, %v681
  %v1468 = vmul.f32 %v1465, %v682
  %v1469 = vmul.f32 %v1466, %v683
  %v1471 = vsel %vm687, %v1467, 0
  %v1474 = vsel %vm687, %v1468, 0
  %v1477 = vsel %vm687, %v1469, 0
  %1479 = vmatprep.subr.mxu0 0.0
  %1480 = vmatpush1.msra.mxu0 %v671
  %1481 = vmatprep.subr.mxu0 0.0
  %1482 = vmatpush1.msra.mxu0 %v672
  %1483 = vmatprep.subr.mxu0 0.0
  %1484 = vmatpush1.msra.mxu0 %v673
  %1485 = vmatprep.subr.mxu0 0.0
  %1486 = vmatpush1.msra.mxu0 %v674
  %1487 = vmatprep.subr.mxu0 0.0
  %1488 = vmatpush1.msra.mxu0 %v675
  %1489 = vmatprep.subr.mxu0 0.0
  %1490 = vmatpush1.msra.mxu0 %v676
  %1491 = vmatprep.subr.mxu0 0.0
  %1492 = vmatpush1.msra.mxu0 %v677
  %1493 = vmatprep.subr.mxu0 0.0
  %1494 = vmatpush1.msra.mxu0 %v678
  %1495 = vmatprep.subr.mxu0 0.0
  %1496 = vmatpush1.msra.mxu0 %v679
  %1497 = vmatprep.subr.mxu0 0.0
  %1498 = vmatpush1.msra.mxu0 %v699
  %1499 = vmatprep.subr.mxu0 0.0
  %1500 = vmatpush1.msra.mxu0 0.0
  %1501 = vmatprep.subr.mxu0 0.0
  %1502 = vmatpush1.msra.mxu0 0.0
  %1503 = vmatprep.subr.mxu0 0.0
  %1504 = vmatpush1.msra.mxu0 0.0
  %1505 = vmatprep.subr.mxu0 0.0
  %1506 = vmatpush1.msra.mxu0 0.0
  %1507 = vmatprep.subr.mxu0 0.0
  %1508 = vmatpush1.msra.mxu0 0.0
  %1509 = vmatprep.subr.mxu0 0.0
  %1510 = vmatpush1.msra.mxu0 0.0
  %1511 = vmatprep.subr.mxu0 0.0
  %1512 = vmatpush1.msra.mxu0 0.0
  %1513 = vmatprep.subr.mxu0 0.0
  %1514 = vmatpush1.msra.mxu0 0.0
  %1515 = vmatprep.subr.mxu0 0.0
  %1516 = vmatpush1.msra.mxu0 0.0
  %1517 = vmatprep.subr.mxu0 0.0
  %1518 = vmatpush1.msra.mxu0 0.0
  %1519 = vmatprep.subr.mxu0 0.0
  %1520 = vmatpush1.msra.mxu0 0.0
  %1521 = vmatprep.subr.mxu0 0.0
  %1522 = vmatpush1.msra.mxu0 0.0
  %1523 = vmatprep.subr.mxu0 0.0
  %1524 = vmatpush1.msra.mxu0 0.0
  %1525 = vmatprep.subr.mxu0 0.0
  %1526 = vmatpush1.msra.mxu0 0.0
  %1527 = vmatprep.subr.mxu0 0.0
  %1528 = vmatpush1.msra.mxu0 0.0
  %1529 = vmatprep.subr.mxu0 0.0
  %1530 = vmatpush1.msra.mxu0 0.0
  %1531 = vmatprep.subr.mxu0 0.0
  %1532 = vmatpush1.msra.mxu0 0.0
  %1533 = vmatprep.subr.mxu0 0.0
  %1534 = vmatpush1.msra.mxu0 0.0
  %1535 = vmatprep.subr.mxu0 0.0
  %1536 = vmatpush1.msra.mxu0 0.0
  %1537 = vmatprep.subr.mxu0 0.0
  %1538 = vmatpush1.msra.mxu0 0.0
  %1539 = vmatprep.subr.mxu0 0.0
  %1540 = vmatpush1.msra.mxu0 0.0
  %1541 = vmatprep.subr.mxu0 0.0
  %1542 = vmatpush1.msra.mxu0 0.0
  %1543 = vmatprep.mubr.f32.mxu0 0.0
  %1544 = vmatmul.mubr.f32.gmra.mrb[0].mxu0 %v1471
  %v1545 = vpop.f32.mrb[0].mxu0
  %v1546 = vadd.f32 0.0, %v1545
  %v1547 = vpop.f32.mrb[0].mxu0
  %1548 = vmatprep.mubr.f32.mxu0 0.0
  %1549 = vmatmul.mubr.f32.gmra.mrb[0].mxu0 %v1474
  %v1550 = vpop.f32.mrb[0].mxu0
  %v1551 = vadd.f32 0.0, %v1550
  %v1552 = vpop.f32.mrb[0].mxu0
  %1553 = vmatprep.mubr.f32.mxu0 0.0
  %1554 = vmatmul.mubr.f32.gmra.mrb[0].mxu0 %v1477
  %v1555 = vpop.f32.mrb[0].mxu0
  %v1556 = vadd.f32 0.0, %v1555
  %v1557 = vpop.f32.mrb[0].mxu0
  %1558 = vdwg.mxu0
  %v1559 = vadd.f32 %v433, %v1546
  %v1560 = vadd.f32 %v438, %v1551
  %v1561 = vadd.f32 %v443, %v1556
  %v1562 = vxor.u32 %v1559, 2147483648
  %v1563 = vxor.u32 %v1560, 2147483648
  %v1564 = vxor.u32 %v1561, 2147483648
  %v1565 = vmul.f32 %v1562, 1.442695
  %v1566 = vpow.pop %v1565
  %v1567 = vmul.f32 %v1563, 1.442695
  %v1568 = vpow.pop %v1567
  %v1569 = vmul.f32 %v1564, 1.442695
  %v1570 = vpow.pop %v1569
  %v1571 = vadd.f32 %v1566, 1.0
  %v1572 = vadd.f32 %v1568, 1.0
  %v1573 = vadd.f32 %v1570, 1.0
  %v1574 = vrcp.pop %v1571
  %v1575 = vmul.f32 1.0, %v1574
  %v1576 = vrcp.pop %v1572
  %v1577 = vmul.f32 1.0, %v1576
  %v1578 = vrcp.pop %v1573
  %v1579 = vmul.f32 1.0, %v1578
  %v1580 = vtanh.pop %v1559
  %v1581 = vtanh.pop %v1560
  %v1582 = vtanh.pop %v1561
  %v1583 = vmul.f32 %v1575, %v1419
  %v1584 = vmul.f32 %v1577, %v1420
  %v1585 = vmul.f32 %v1579, %v1421
  %1589 = vrot.lane.b32.xlu0 %v1580, 53
  %v1590 = vpop.permute.xlu0 %1589
  %1591 = vrot.lane.b32.xlu0 %v1581, 53
  %v1592 = vpop.permute.xlu0 %1591
  %1593 = vrot.lane.b32.xlu0 %v1582, 53
  %v1594 = vpop.permute.xlu0 %1593
  %v1598 = vmul.f32 %v1575, %v1590
  %v1599 = vmul.f32 %v1577, %v1592
  %v1600 = vmul.f32 %v1579, %v1594
  %1604 = vrot.lane.b32.xlu0 %v1598, 25
  %v1605 = vpop.permute.xlu0 %1604
  %1606 = vrot.lane.b32.xlu0 %v1599, 25
  %v1607 = vpop.permute.xlu0 %1606
  %1608 = vrot.lane.b32.xlu0 %v1600, 25
  %v1609 = vpop.permute.xlu0 %1608
  %v1613 = vadd.f32 %v1583, %v1605
  %v1614 = vadd.f32 %v1584, %v1607
  %v1615 = vadd.f32 %v1585, %v1609
  %v1616 = vtanh.pop %v1613
  %v1617 = vtanh.pop %v1614
  %v1618 = vtanh.pop %v1615
  %1622 = vrot.lane.b32.xlu0 %v1616, 25
  %v1623 = vpop.permute.xlu0 %1622
  %1624 = vrot.lane.b32.xlu0 %v1617, 25
  %v1625 = vpop.permute.xlu0 %1624
  %1626 = vrot.lane.b32.xlu0 %v1618, 25
  %v1627 = vpop.permute.xlu0 %1626
  %v1631 = vmul.f32 %v1575, %v1623
  %v1632 = vmul.f32 %v1577, %v1625
  %v1633 = vmul.f32 %v1579, %v1627
  %1637 = vrot.lane.b32.xlu0 %v1631, 78
  %v1638 = vpop.permute.xlu0 %1637
  %1639 = vrot.lane.b32.xlu0 %v1632, 78
  %v1640 = vpop.permute.xlu0 %1639
  %1641 = vrot.lane.b32.xlu0 %v1633, 78
  %v1642 = vpop.permute.xlu0 %1641
  %1646 = vrot.lane.b32.xlu0 %v1631, 103
  %v1647 = vpop.permute.xlu0 %1646
  %1648 = vrot.lane.b32.xlu0 %v1632, 103
  %v1649 = vpop.permute.xlu0 %1648
  %1650 = vrot.lane.b32.xlu0 %v1633, 103
  %v1651 = vpop.permute.xlu0 %1650
  %v1655 = vsel %vm877, %v1638, %v1647
  %v1656 = vsel %vm877, %v1640, %v1649
  %v1657 = vsel %vm877, %v1642, %v1651
  %v1658 = vsel %vm881, %v1655, %v1631
  %v1659 = vsel %vm881, %v1656, %v1632
  %v1660 = vsel %vm881, %v1657, %v1633
  %v1661 = vmul.f32 %v1658, %v681
  %v1662 = vmul.f32 %v1659, %v682
  %v1663 = vmul.f32 %v1660, %v683
  %v1665 = vsel %vm687, %v1661, 0
  %v1668 = vsel %vm687, %v1662, 0
  %v1671 = vsel %vm687, %v1663, 0
  %1673 = vmatprep.subr.mxu0 0.0
  %1674 = vmatpush1.msra.mxu0 %v671
  %1675 = vmatprep.subr.mxu0 0.0
  %1676 = vmatpush1.msra.mxu0 %v672
  %1677 = vmatprep.subr.mxu0 0.0
  %1678 = vmatpush1.msra.mxu0 %v673
  %1679 = vmatprep.subr.mxu0 0.0
  %1680 = vmatpush1.msra.mxu0 %v674
  %1681 = vmatprep.subr.mxu0 0.0
  %1682 = vmatpush1.msra.mxu0 %v675
  %1683 = vmatprep.subr.mxu0 0.0
  %1684 = vmatpush1.msra.mxu0 %v676
  %1685 = vmatprep.subr.mxu0 0.0
  %1686 = vmatpush1.msra.mxu0 %v677
  %1687 = vmatprep.subr.mxu0 0.0
  %1688 = vmatpush1.msra.mxu0 %v678
  %1689 = vmatprep.subr.mxu0 0.0
  %1690 = vmatpush1.msra.mxu0 %v679
  %1691 = vmatprep.subr.mxu0 0.0
  %1692 = vmatpush1.msra.mxu0 %v699
  %1693 = vmatprep.subr.mxu0 0.0
  %1694 = vmatpush1.msra.mxu0 0.0
  %1695 = vmatprep.subr.mxu0 0.0
  %1696 = vmatpush1.msra.mxu0 0.0
  %1697 = vmatprep.subr.mxu0 0.0
  %1698 = vmatpush1.msra.mxu0 0.0
  %1699 = vmatprep.subr.mxu0 0.0
  %1700 = vmatpush1.msra.mxu0 0.0
  %1701 = vmatprep.subr.mxu0 0.0
  %1702 = vmatpush1.msra.mxu0 0.0
  %1703 = vmatprep.subr.mxu0 0.0
  %1704 = vmatpush1.msra.mxu0 0.0
  %1705 = vmatprep.subr.mxu0 0.0
  %1706 = vmatpush1.msra.mxu0 0.0
  %1707 = vmatprep.subr.mxu0 0.0
  %1708 = vmatpush1.msra.mxu0 0.0
  %1709 = vmatprep.subr.mxu0 0.0
  %1710 = vmatpush1.msra.mxu0 0.0
  %1711 = vmatprep.subr.mxu0 0.0
  %1712 = vmatpush1.msra.mxu0 0.0
  %1713 = vmatprep.subr.mxu0 0.0
  %1714 = vmatpush1.msra.mxu0 0.0
  %1715 = vmatprep.subr.mxu0 0.0
  %1716 = vmatpush1.msra.mxu0 0.0
  %1717 = vmatprep.subr.mxu0 0.0
  %1718 = vmatpush1.msra.mxu0 0.0
  %1719 = vmatprep.subr.mxu0 0.0
  %1720 = vmatpush1.msra.mxu0 0.0
  %1721 = vmatprep.subr.mxu0 0.0
  %1722 = vmatpush1.msra.mxu0 0.0
  %1723 = vmatprep.subr.mxu0 0.0
  %1724 = vmatpush1.msra.mxu0 0.0
  %1725 = vmatprep.subr.mxu0 0.0
  %1726 = vmatpush1.msra.mxu0 0.0
  %1727 = vmatprep.subr.mxu0 0.0
  %1728 = vmatpush1.msra.mxu0 0.0
  %1729 = vmatprep.subr.mxu0 0.0
  %1730 = vmatpush1.msra.mxu0 0.0
  %1731 = vmatprep.subr.mxu0 0.0
  %1732 = vmatpush1.msra.mxu0 0.0
  %1733 = vmatprep.subr.mxu0 0.0
  %1734 = vmatpush1.msra.mxu0 0.0
  %1735 = vmatprep.subr.mxu0 0.0
  %1736 = vmatpush1.msra.mxu0 0.0
  %1737 = vmatprep.mubr.f32.mxu0 0.0
  %1738 = vmatmul.mubr.f32.gmra.mrb[0].mxu0 %v1665
  %v1739 = vpop.f32.mrb[0].mxu0
  %v1740 = vadd.f32 0.0, %v1739
  %v1741 = vpop.f32.mrb[0].mxu0
  %1742 = vmatprep.mubr.f32.mxu0 0.0
  %1743 = vmatmul.mubr.f32.gmra.mrb[0].mxu0 %v1668
  %v1744 = vpop.f32.mrb[0].mxu0
  %v1745 = vadd.f32 0.0, %v1744
  %v1746 = vpop.f32.mrb[0].mxu0
  %1747 = vmatprep.mubr.f32.mxu0 0.0
  %1748 = vmatmul.mubr.f32.gmra.mrb[0].mxu0 %v1671
  %v1749 = vpop.f32.mrb[0].mxu0
  %v1750 = vadd.f32 0.0, %v1749
  %v1751 = vpop.f32.mrb[0].mxu0
  %1752 = vdwg.mxu0
  %v1753 = vadd.f32 %v448, %v1740
  %v1754 = vadd.f32 %v453, %v1745
  %v1755 = vadd.f32 %v458, %v1750
  %v1756 = vxor.u32 %v1753, 2147483648
  %v1757 = vxor.u32 %v1754, 2147483648
  %v1758 = vxor.u32 %v1755, 2147483648
  %v1759 = vmul.f32 %v1756, 1.442695
  %v1760 = vpow.pop %v1759
  %v1761 = vmul.f32 %v1757, 1.442695
  %v1762 = vpow.pop %v1761
  %v1763 = vmul.f32 %v1758, 1.442695
  %v1764 = vpow.pop %v1763
  %v1765 = vadd.f32 %v1760, 1.0
  %v1766 = vadd.f32 %v1762, 1.0
  %v1767 = vadd.f32 %v1764, 1.0
  %v1768 = vrcp.pop %v1765
  %v1769 = vmul.f32 1.0, %v1768
  %v1770 = vrcp.pop %v1766
  %v1771 = vmul.f32 1.0, %v1770
  %v1772 = vrcp.pop %v1767
  %v1773 = vmul.f32 1.0, %v1772
  %v1774 = vtanh.pop %v1753
  %v1775 = vtanh.pop %v1754
  %v1776 = vtanh.pop %v1755
  %v1777 = vmul.f32 %v1769, %v1613
  %v1778 = vmul.f32 %v1771, %v1614
  %v1779 = vmul.f32 %v1773, %v1615
  %1783 = vrot.lane.b32.xlu0 %v1774, 53
  %v1784 = vpop.permute.xlu0 %1783
  %1785 = vrot.lane.b32.xlu0 %v1775, 53
  %v1786 = vpop.permute.xlu0 %1785
  %1787 = vrot.lane.b32.xlu0 %v1776, 53
  %v1788 = vpop.permute.xlu0 %1787
  %v1792 = vmul.f32 %v1769, %v1784
  %v1793 = vmul.f32 %v1771, %v1786
  %v1794 = vmul.f32 %v1773, %v1788
  %1798 = vrot.lane.b32.xlu0 %v1792, 25
  %v1799 = vpop.permute.xlu0 %1798
  %1800 = vrot.lane.b32.xlu0 %v1793, 25
  %v1801 = vpop.permute.xlu0 %1800
  %1802 = vrot.lane.b32.xlu0 %v1794, 25
  %v1803 = vpop.permute.xlu0 %1802
  %v1807 = vadd.f32 %v1777, %v1799
  %v1808 = vadd.f32 %v1778, %v1801
  %v1809 = vadd.f32 %v1779, %v1803
  %v1810 = vtanh.pop %v1807
  %v1811 = vtanh.pop %v1808
  %v1812 = vtanh.pop %v1809
  %1816 = vrot.lane.b32.xlu0 %v1810, 25
  %v1817 = vpop.permute.xlu0 %1816
  %1818 = vrot.lane.b32.xlu0 %v1811, 25
  %v1819 = vpop.permute.xlu0 %1818
  %1820 = vrot.lane.b32.xlu0 %v1812, 25
  %v1821 = vpop.permute.xlu0 %1820
  %v1825 = vmul.f32 %v1769, %v1817
  %v1826 = vmul.f32 %v1771, %v1819
  %v1827 = vmul.f32 %v1773, %v1821
  %1831 = vrot.lane.b32.xlu0 %v1825, 78
  %v1832 = vpop.permute.xlu0 %1831
  %1833 = vrot.lane.b32.xlu0 %v1826, 78
  %v1834 = vpop.permute.xlu0 %1833
  %1835 = vrot.lane.b32.xlu0 %v1827, 78
  %v1836 = vpop.permute.xlu0 %1835
  %1840 = vrot.lane.b32.xlu0 %v1825, 103
  %v1841 = vpop.permute.xlu0 %1840
  %1842 = vrot.lane.b32.xlu0 %v1826, 103
  %v1843 = vpop.permute.xlu0 %1842
  %1844 = vrot.lane.b32.xlu0 %v1827, 103
  %v1845 = vpop.permute.xlu0 %1844
  %v1849 = vsel %vm877, %v1832, %v1841
  %v1850 = vsel %vm877, %v1834, %v1843
  %v1851 = vsel %vm877, %v1836, %v1845
  %v1852 = vsel %vm881, %v1849, %v1825
  %v1853 = vsel %vm881, %v1850, %v1826
  %v1854 = vsel %vm881, %v1851, %v1827
  %v1855 = vmul.f32 %v1852, %v681
  %v1856 = vmul.f32 %v1853, %v682
  %v1857 = vmul.f32 %v1854, %v683
  %v1859 = vsel %vm687, %v1855, 0
  %v1862 = vsel %vm687, %v1856, 0
  %v1865 = vsel %vm687, %v1857, 0
  %1867 = vmatprep.subr.mxu0 0.0
  %1868 = vmatpush1.msra.mxu0 %v671
  %1869 = vmatprep.subr.mxu0 0.0
  %1870 = vmatpush1.msra.mxu0 %v672
  %1871 = vmatprep.subr.mxu0 0.0
  %1872 = vmatpush1.msra.mxu0 %v673
  %1873 = vmatprep.subr.mxu0 0.0
  %1874 = vmatpush1.msra.mxu0 %v674
  %1875 = vmatprep.subr.mxu0 0.0
  %1876 = vmatpush1.msra.mxu0 %v675
  %1877 = vmatprep.subr.mxu0 0.0
  %1878 = vmatpush1.msra.mxu0 %v676
  %1879 = vmatprep.subr.mxu0 0.0
  %1880 = vmatpush1.msra.mxu0 %v677
  %1881 = vmatprep.subr.mxu0 0.0
  %1882 = vmatpush1.msra.mxu0 %v678
  %1883 = vmatprep.subr.mxu0 0.0
  %1884 = vmatpush1.msra.mxu0 %v679
  %1885 = vmatprep.subr.mxu0 0.0
  %1886 = vmatpush1.msra.mxu0 %v699
  %1887 = vmatprep.subr.mxu0 0.0
  %1888 = vmatpush1.msra.mxu0 0.0
  %1889 = vmatprep.subr.mxu0 0.0
  %1890 = vmatpush1.msra.mxu0 0.0
  %1891 = vmatprep.subr.mxu0 0.0
  %1892 = vmatpush1.msra.mxu0 0.0
  %1893 = vmatprep.subr.mxu0 0.0
  %1894 = vmatpush1.msra.mxu0 0.0
  %1895 = vmatprep.subr.mxu0 0.0
  %1896 = vmatpush1.msra.mxu0 0.0
  %1897 = vmatprep.subr.mxu0 0.0
  %1898 = vmatpush1.msra.mxu0 0.0
  %1899 = vmatprep.subr.mxu0 0.0
  %1900 = vmatpush1.msra.mxu0 0.0
  %1901 = vmatprep.subr.mxu0 0.0
  %1902 = vmatpush1.msra.mxu0 0.0
  %1903 = vmatprep.subr.mxu0 0.0
  %1904 = vmatpush1.msra.mxu0 0.0
  %1905 = vmatprep.subr.mxu0 0.0
  %1906 = vmatpush1.msra.mxu0 0.0
  %1907 = vmatprep.subr.mxu0 0.0
  %1908 = vmatpush1.msra.mxu0 0.0
  %1909 = vmatprep.subr.mxu0 0.0
  %1910 = vmatpush1.msra.mxu0 0.0
  %1911 = vmatprep.subr.mxu0 0.0
  %1912 = vmatpush1.msra.mxu0 0.0
  %1913 = vmatprep.subr.mxu0 0.0
  %1914 = vmatpush1.msra.mxu0 0.0
  %1915 = vmatprep.subr.mxu0 0.0
  %1916 = vmatpush1.msra.mxu0 0.0
  %1917 = vmatprep.subr.mxu0 0.0
  %1918 = vmatpush1.msra.mxu0 0.0
  %1919 = vmatprep.subr.mxu0 0.0
  %1920 = vmatpush1.msra.mxu0 0.0
  %1921 = vmatprep.subr.mxu0 0.0
  %1922 = vmatpush1.msra.mxu0 0.0
  %1923 = vmatprep.subr.mxu0 0.0
  %1924 = vmatpush1.msra.mxu0 0.0
  %1925 = vmatprep.subr.mxu0 0.0
  %1926 = vmatpush1.msra.mxu0 0.0
  %1927 = vmatprep.subr.mxu0 0.0
  %1928 = vmatpush1.msra.mxu0 0.0
  %1929 = vmatprep.subr.mxu0 0.0
  %1930 = vmatpush1.msra.mxu0 0.0
  %1931 = vmatprep.mubr.f32.mxu0 0.0
  %1932 = vmatmul.mubr.f32.gmra.mrb[0].mxu0 %v1859
  %v1933 = vpop.f32.mrb[0].mxu0
  %v1934 = vadd.f32 0.0, %v1933
  %v1935 = vpop.f32.mrb[0].mxu0
  %1936 = vmatprep.mubr.f32.mxu0 0.0
  %1937 = vmatmul.mubr.f32.gmra.mrb[0].mxu0 %v1862
  %v1938 = vpop.f32.mrb[0].mxu0
  %v1939 = vadd.f32 0.0, %v1938
  %v1940 = vpop.f32.mrb[0].mxu0
  %1941 = vmatprep.mubr.f32.mxu0 0.0
  %1942 = vmatmul.mubr.f32.gmra.mrb[0].mxu0 %v1865
  %v1943 = vpop.f32.mrb[0].mxu0
  %v1944 = vadd.f32 0.0, %v1943
  %v1945 = vpop.f32.mrb[0].mxu0
  %1946 = vdwg.mxu0
  %v1947 = vadd.f32 %v463, %v1934
  %v1948 = vadd.f32 %v468, %v1939
  %v1949 = vadd.f32 %v473, %v1944
  %v1950 = vxor.u32 %v1947, 2147483648
  %v1951 = vxor.u32 %v1948, 2147483648
  %v1952 = vxor.u32 %v1949, 2147483648
  %v1953 = vmul.f32 %v1950, 1.442695
  %v1954 = vpow.pop %v1953
  %v1955 = vmul.f32 %v1951, 1.442695
  %v1956 = vpow.pop %v1955
  %v1957 = vmul.f32 %v1952, 1.442695
  %v1958 = vpow.pop %v1957
  %v1959 = vadd.f32 %v1954, 1.0
  %v1960 = vadd.f32 %v1956, 1.0
  %v1961 = vadd.f32 %v1958, 1.0
  %v1962 = vrcp.pop %v1959
  %v1963 = vmul.f32 1.0, %v1962
  %v1964 = vrcp.pop %v1960
  %v1965 = vmul.f32 1.0, %v1964
  %v1966 = vrcp.pop %v1961
  %v1967 = vmul.f32 1.0, %v1966
  %v1968 = vtanh.pop %v1947
  %v1969 = vtanh.pop %v1948
  %v1970 = vtanh.pop %v1949
  %v1971 = vmul.f32 %v1963, %v1807
  %v1972 = vmul.f32 %v1965, %v1808
  %v1973 = vmul.f32 %v1967, %v1809
  %1977 = vrot.lane.b32.xlu0 %v1968, 53
  %v1978 = vpop.permute.xlu0 %1977
  %1979 = vrot.lane.b32.xlu0 %v1969, 53
  %v1980 = vpop.permute.xlu0 %1979
  %1981 = vrot.lane.b32.xlu0 %v1970, 53
  %v1982 = vpop.permute.xlu0 %1981
  %v1986 = vmul.f32 %v1963, %v1978
  %v1987 = vmul.f32 %v1965, %v1980
  %v1988 = vmul.f32 %v1967, %v1982
  %1992 = vrot.lane.b32.xlu0 %v1986, 25
  %v1993 = vpop.permute.xlu0 %1992
  %1994 = vrot.lane.b32.xlu0 %v1987, 25
  %v1995 = vpop.permute.xlu0 %1994
  %1996 = vrot.lane.b32.xlu0 %v1988, 25
  %v1997 = vpop.permute.xlu0 %1996
  %v2001 = vadd.f32 %v1971, %v1993
  %v2002 = vadd.f32 %v1972, %v1995
  %v2003 = vadd.f32 %v1973, %v1997
  %v2004 = vtanh.pop %v2001
  %v2005 = vtanh.pop %v2002
  %v2006 = vtanh.pop %v2003
  %2010 = vrot.lane.b32.xlu0 %v2004, 25
  %v2011 = vpop.permute.xlu0 %2010
  %2012 = vrot.lane.b32.xlu0 %v2005, 25
  %v2013 = vpop.permute.xlu0 %2012
  %2014 = vrot.lane.b32.xlu0 %v2006, 25
  %v2015 = vpop.permute.xlu0 %2014
  %v2019 = vmul.f32 %v1963, %v2011
  %v2020 = vmul.f32 %v1965, %v2013
  %v2021 = vmul.f32 %v1967, %v2015
  %2025 = vrot.lane.b32.xlu0 %v2019, 78
  %v2026 = vpop.permute.xlu0 %2025
  %2027 = vrot.lane.b32.xlu0 %v2020, 78
  %v2028 = vpop.permute.xlu0 %2027
  %2029 = vrot.lane.b32.xlu0 %v2021, 78
  %v2030 = vpop.permute.xlu0 %2029
  %2034 = vrot.lane.b32.xlu0 %v2019, 103
  %v2035 = vpop.permute.xlu0 %2034
  %2036 = vrot.lane.b32.xlu0 %v2020, 103
  %v2037 = vpop.permute.xlu0 %2036
  %2038 = vrot.lane.b32.xlu0 %v2021, 103
  %v2039 = vpop.permute.xlu0 %2038
  %v2043 = vsel %vm877, %v2026, %v2035
  %v2044 = vsel %vm877, %v2028, %v2037
  %v2045 = vsel %vm877, %v2030, %v2039
  %v2046 = vsel %vm881, %v2043, %v2019
  %v2047 = vsel %vm881, %v2044, %v2020
  %v2048 = vsel %vm881, %v2045, %v2021
  %v2049 = vmul.f32 %v2046, %v681
  %v2050 = vmul.f32 %v2047, %v682
  %v2051 = vmul.f32 %v2048, %v683
  %v2053 = vsel %vm687, %v2049, 0
  %v2056 = vsel %vm687, %v2050, 0
  %v2059 = vsel %vm687, %v2051, 0
  %2061 = vmatprep.subr.mxu0 0.0
  %2062 = vmatpush1.msra.mxu0 %v671
  %2063 = vmatprep.subr.mxu0 0.0
  %2064 = vmatpush1.msra.mxu0 %v672
  %2065 = vmatprep.subr.mxu0 0.0
  %2066 = vmatpush1.msra.mxu0 %v673
  %2067 = vmatprep.subr.mxu0 0.0
  %2068 = vmatpush1.msra.mxu0 %v674
  %2069 = vmatprep.subr.mxu0 0.0
  %2070 = vmatpush1.msra.mxu0 %v675
  %2071 = vmatprep.subr.mxu0 0.0
  %2072 = vmatpush1.msra.mxu0 %v676
  %2073 = vmatprep.subr.mxu0 0.0
  %2074 = vmatpush1.msra.mxu0 %v677
  %2075 = vmatprep.subr.mxu0 0.0
  %2076 = vmatpush1.msra.mxu0 %v678
  %2077 = vmatprep.subr.mxu0 0.0
  %2078 = vmatpush1.msra.mxu0 %v679
  %2079 = vmatprep.subr.mxu0 0.0
  %2080 = vmatpush1.msra.mxu0 %v699
  %2081 = vmatprep.subr.mxu0 0.0
  %2082 = vmatpush1.msra.mxu0 0.0
  %2083 = vmatprep.subr.mxu0 0.0
  %2084 = vmatpush1.msra.mxu0 0.0
  %2085 = vmatprep.subr.mxu0 0.0
  %2086 = vmatpush1.msra.mxu0 0.0
  %2087 = vmatprep.subr.mxu0 0.0
  %2088 = vmatpush1.msra.mxu0 0.0
  %2089 = vmatprep.subr.mxu0 0.0
  %2090 = vmatpush1.msra.mxu0 0.0
  %2091 = vmatprep.subr.mxu0 0.0
  %2092 = vmatpush1.msra.mxu0 0.0
  %2093 = vmatprep.subr.mxu0 0.0
  %2094 = vmatpush1.msra.mxu0 0.0
  %2095 = vmatprep.subr.mxu0 0.0
  %2096 = vmatpush1.msra.mxu0 0.0
  %2097 = vmatprep.subr.mxu0 0.0
  %2098 = vmatpush1.msra.mxu0 0.0
  %2099 = vmatprep.subr.mxu0 0.0
  %2100 = vmatpush1.msra.mxu0 0.0
  %2101 = vmatprep.subr.mxu0 0.0
  %2102 = vmatpush1.msra.mxu0 0.0
  %2103 = vmatprep.subr.mxu0 0.0
  %2104 = vmatpush1.msra.mxu0 0.0
  %2105 = vmatprep.subr.mxu0 0.0
  %2106 = vmatpush1.msra.mxu0 0.0
  %2107 = vmatprep.subr.mxu0 0.0
  %2108 = vmatpush1.msra.mxu0 0.0
  %2109 = vmatprep.subr.mxu0 0.0
  %2110 = vmatpush1.msra.mxu0 0.0
  %2111 = vmatprep.subr.mxu0 0.0
  %2112 = vmatpush1.msra.mxu0 0.0
  %2113 = vmatprep.subr.mxu0 0.0
  %2114 = vmatpush1.msra.mxu0 0.0
  %2115 = vmatprep.subr.mxu0 0.0
  %2116 = vmatpush1.msra.mxu0 0.0
  %2117 = vmatprep.subr.mxu0 0.0
  %2118 = vmatpush1.msra.mxu0 0.0
  %2119 = vmatprep.subr.mxu0 0.0
  %2120 = vmatpush1.msra.mxu0 0.0
  %2121 = vmatprep.subr.mxu0 0.0
  %2122 = vmatpush1.msra.mxu0 0.0
  %2123 = vmatprep.subr.mxu0 0.0
  %2124 = vmatpush1.msra.mxu0 0.0
  %2125 = vmatprep.mubr.f32.mxu0 0.0
  %2126 = vmatmul.mubr.f32.gmra.mrb[0].mxu0 %v2053
  %v2127 = vpop.f32.mrb[0].mxu0
  %v2128 = vadd.f32 0.0, %v2127
  %v2129 = vpop.f32.mrb[0].mxu0
  %2130 = vmatprep.mubr.f32.mxu0 0.0
  %2131 = vmatmul.mubr.f32.gmra.mrb[0].mxu0 %v2056
  %v2132 = vpop.f32.mrb[0].mxu0
  %v2133 = vadd.f32 0.0, %v2132
  %v2134 = vpop.f32.mrb[0].mxu0
  %2135 = vmatprep.mubr.f32.mxu0 0.0
  %2136 = vmatmul.mubr.f32.gmra.mrb[0].mxu0 %v2059
  %v2137 = vpop.f32.mrb[0].mxu0
  %v2138 = vadd.f32 0.0, %v2137
  %v2139 = vpop.f32.mrb[0].mxu0
  %2140 = vdwg.mxu0
  %v2141 = vadd.f32 %v478, %v2128
  %v2142 = vadd.f32 %v483, %v2133
  %v2143 = vadd.f32 %v488, %v2138
  %v2144 = vxor.u32 %v2141, 2147483648
  %v2145 = vxor.u32 %v2142, 2147483648
  %v2146 = vxor.u32 %v2143, 2147483648
  %v2147 = vmul.f32 %v2144, 1.442695
  %v2148 = vpow.pop %v2147
  %v2149 = vmul.f32 %v2145, 1.442695
  %v2150 = vpow.pop %v2149
  %v2151 = vmul.f32 %v2146, 1.442695
  %v2152 = vpow.pop %v2151
  %v2153 = vadd.f32 %v2148, 1.0
  %v2154 = vadd.f32 %v2150, 1.0
  %v2155 = vadd.f32 %v2152, 1.0
  %v2156 = vrcp.pop %v2153
  %v2157 = vmul.f32 1.0, %v2156
  %v2158 = vrcp.pop %v2154
  %v2159 = vmul.f32 1.0, %v2158
  %v2160 = vrcp.pop %v2155
  %v2161 = vmul.f32 1.0, %v2160
  %v2162 = vtanh.pop %v2141
  %v2163 = vtanh.pop %v2142
  %v2164 = vtanh.pop %v2143
  %v2165 = vmul.f32 %v2157, %v2001
  %v2166 = vmul.f32 %v2159, %v2002
  %v2167 = vmul.f32 %v2161, %v2003
  %2171 = vrot.lane.b32.xlu0 %v2162, 53
  %v2172 = vpop.permute.xlu0 %2171
  %2173 = vrot.lane.b32.xlu0 %v2163, 53
  %v2174 = vpop.permute.xlu0 %2173
  %2175 = vrot.lane.b32.xlu0 %v2164, 53
  %v2176 = vpop.permute.xlu0 %2175
  %v2180 = vmul.f32 %v2157, %v2172
  %v2181 = vmul.f32 %v2159, %v2174
  %v2182 = vmul.f32 %v2161, %v2176
  %2186 = vrot.lane.b32.xlu0 %v2180, 25
  %v2187 = vpop.permute.xlu0 %2186
  %2188 = vrot.lane.b32.xlu0 %v2181, 25
  %v2189 = vpop.permute.xlu0 %2188
  %2190 = vrot.lane.b32.xlu0 %v2182, 25
  %v2191 = vpop.permute.xlu0 %2190
  %v2195 = vadd.f32 %v2165, %v2187
  %v2196 = vadd.f32 %v2166, %v2189
  %v2197 = vadd.f32 %v2167, %v2191
  %v2198 = vtanh.pop %v2195
  %v2199 = vtanh.pop %v2196
  %v2200 = vtanh.pop %v2197
  %2204 = vrot.lane.b32.xlu0 %v2198, 25
  %v2205 = vpop.permute.xlu0 %2204
  %2206 = vrot.lane.b32.xlu0 %v2199, 25
  %v2207 = vpop.permute.xlu0 %2206
  %2208 = vrot.lane.b32.xlu0 %v2200, 25
  %v2209 = vpop.permute.xlu0 %2208
  %v2213 = vmul.f32 %v2157, %v2205
  %v2214 = vmul.f32 %v2159, %v2207
  %v2215 = vmul.f32 %v2161, %v2209
  %2219 = vrot.lane.b32.xlu0 %v2213, 78
  %v2220 = vpop.permute.xlu0 %2219
  %2221 = vrot.lane.b32.xlu0 %v2214, 78
  %v2222 = vpop.permute.xlu0 %2221
  %2223 = vrot.lane.b32.xlu0 %v2215, 78
  %v2224 = vpop.permute.xlu0 %2223
  %2228 = vrot.lane.b32.xlu0 %v2213, 103
  %v2229 = vpop.permute.xlu0 %2228
  %2230 = vrot.lane.b32.xlu0 %v2214, 103
  %v2231 = vpop.permute.xlu0 %2230
  %2232 = vrot.lane.b32.xlu0 %v2215, 103
  %v2233 = vpop.permute.xlu0 %2232
  %v2237 = vsel %vm877, %v2220, %v2229
  %v2238 = vsel %vm877, %v2222, %v2231
  %v2239 = vsel %vm877, %v2224, %v2233
  %v2240 = vsel %vm881, %v2237, %v2213
  %v2241 = vsel %vm881, %v2238, %v2214
  %v2242 = vsel %vm881, %v2239, %v2215
  %v2243 = vmul.f32 %v2240, %v681
  %v2244 = vmul.f32 %v2241, %v682
  %v2245 = vmul.f32 %v2242, %v683
  %v2247 = vsel %vm687, %v2243, 0
  %v2250 = vsel %vm687, %v2244, 0
  %v2253 = vsel %vm687, %v2245, 0
  %2255 = vmatprep.subr.mxu0 0.0
  %2256 = vmatpush1.msra.mxu0 %v671
  %2257 = vmatprep.subr.mxu0 0.0
  %2258 = vmatpush1.msra.mxu0 %v672
  %2259 = vmatprep.subr.mxu0 0.0
  %2260 = vmatpush1.msra.mxu0 %v673
  %2261 = vmatprep.subr.mxu0 0.0
  %2262 = vmatpush1.msra.mxu0 %v674
  %2263 = vmatprep.subr.mxu0 0.0
  %2264 = vmatpush1.msra.mxu0 %v675
  %2265 = vmatprep.subr.mxu0 0.0
  %2266 = vmatpush1.msra.mxu0 %v676
  %2267 = vmatprep.subr.mxu0 0.0
  %2268 = vmatpush1.msra.mxu0 %v677
  %2269 = vmatprep.subr.mxu0 0.0
  %2270 = vmatpush1.msra.mxu0 %v678
  %2271 = vmatprep.subr.mxu0 0.0
  %2272 = vmatpush1.msra.mxu0 %v679
  %2273 = vmatprep.subr.mxu0 0.0
  %2274 = vmatpush1.msra.mxu0 %v699
  %2275 = vmatprep.subr.mxu0 0.0
  %2276 = vmatpush1.msra.mxu0 0.0
  %2277 = vmatprep.subr.mxu0 0.0
  %2278 = vmatpush1.msra.mxu0 0.0
  %2279 = vmatprep.subr.mxu0 0.0
  %2280 = vmatpush1.msra.mxu0 0.0
  %2281 = vmatprep.subr.mxu0 0.0
  %2282 = vmatpush1.msra.mxu0 0.0
  %2283 = vmatprep.subr.mxu0 0.0
  %2284 = vmatpush1.msra.mxu0 0.0
  %2285 = vmatprep.subr.mxu0 0.0
  %2286 = vmatpush1.msra.mxu0 0.0
  %2287 = vmatprep.subr.mxu0 0.0
  %2288 = vmatpush1.msra.mxu0 0.0
  %2289 = vmatprep.subr.mxu0 0.0
  %2290 = vmatpush1.msra.mxu0 0.0
  %2291 = vmatprep.subr.mxu0 0.0
  %2292 = vmatpush1.msra.mxu0 0.0
  %2293 = vmatprep.subr.mxu0 0.0
  %2294 = vmatpush1.msra.mxu0 0.0
  %2295 = vmatprep.subr.mxu0 0.0
  %2296 = vmatpush1.msra.mxu0 0.0
  %2297 = vmatprep.subr.mxu0 0.0
  %2298 = vmatpush1.msra.mxu0 0.0
  %2299 = vmatprep.subr.mxu0 0.0
  %2300 = vmatpush1.msra.mxu0 0.0
  %2301 = vmatprep.subr.mxu0 0.0
  %2302 = vmatpush1.msra.mxu0 0.0
  %2303 = vmatprep.subr.mxu0 0.0
  %2304 = vmatpush1.msra.mxu0 0.0
  %2305 = vmatprep.subr.mxu0 0.0
  %2306 = vmatpush1.msra.mxu0 0.0
  %2307 = vmatprep.subr.mxu0 0.0
  %2308 = vmatpush1.msra.mxu0 0.0
  %2309 = vmatprep.subr.mxu0 0.0
  %2310 = vmatpush1.msra.mxu0 0.0
  %2311 = vmatprep.subr.mxu0 0.0
  %2312 = vmatpush1.msra.mxu0 0.0
  %2313 = vmatprep.subr.mxu0 0.0
  %2314 = vmatpush1.msra.mxu0 0.0
  %2315 = vmatprep.subr.mxu0 0.0
  %2316 = vmatpush1.msra.mxu0 0.0
  %2317 = vmatprep.subr.mxu0 0.0
  %2318 = vmatpush1.msra.mxu0 0.0
  %2319 = vmatprep.mubr.f32.mxu0 0.0
  %2320 = vmatmul.mubr.f32.gmra.mrb[0].mxu0 %v2247
  %v2321 = vpop.f32.mrb[0].mxu0
  %v2322 = vadd.f32 0.0, %v2321
  %v2323 = vpop.f32.mrb[0].mxu0
  %2324 = vmatprep.mubr.f32.mxu0 0.0
  %2325 = vmatmul.mubr.f32.gmra.mrb[0].mxu0 %v2250
  %v2326 = vpop.f32.mrb[0].mxu0
  %v2327 = vadd.f32 0.0, %v2326
  %v2328 = vpop.f32.mrb[0].mxu0
  %2329 = vmatprep.mubr.f32.mxu0 0.0
  %2330 = vmatmul.mubr.f32.gmra.mrb[0].mxu0 %v2253
  %v2331 = vpop.f32.mrb[0].mxu0
  %v2332 = vadd.f32 0.0, %v2331
  %v2333 = vpop.f32.mrb[0].mxu0
  %2334 = vdwg.mxu0
  %v2335 = vadd.f32 %v493, %v2322
  %v2336 = vadd.f32 %v498, %v2327
  %v2337 = vadd.f32 %v503, %v2332
  %v2338 = vxor.u32 %v2335, 2147483648
  %v2339 = vxor.u32 %v2336, 2147483648
  %v2340 = vxor.u32 %v2337, 2147483648
  %v2341 = vmul.f32 %v2338, 1.442695
  %v2342 = vpow.pop %v2341
  %v2343 = vmul.f32 %v2339, 1.442695
  %v2344 = vpow.pop %v2343
  %v2345 = vmul.f32 %v2340, 1.442695
  %v2346 = vpow.pop %v2345
  %v2347 = vadd.f32 %v2342, 1.0
  %v2348 = vadd.f32 %v2344, 1.0
  %v2349 = vadd.f32 %v2346, 1.0
  %v2350 = vrcp.pop %v2347
  %v2351 = vmul.f32 1.0, %v2350
  %v2352 = vrcp.pop %v2348
  %v2353 = vmul.f32 1.0, %v2352
  %v2354 = vrcp.pop %v2349
  %v2355 = vmul.f32 1.0, %v2354
  %v2356 = vtanh.pop %v2335
  %v2357 = vtanh.pop %v2336
  %v2358 = vtanh.pop %v2337
  %v2359 = vmul.f32 %v2351, %v2195
  %v2360 = vmul.f32 %v2353, %v2196
  %v2361 = vmul.f32 %v2355, %v2197
  %2365 = vrot.lane.b32.xlu0 %v2356, 53
  %v2366 = vpop.permute.xlu0 %2365
  %2367 = vrot.lane.b32.xlu0 %v2357, 53
  %v2368 = vpop.permute.xlu0 %2367
  %2369 = vrot.lane.b32.xlu0 %v2358, 53
  %v2370 = vpop.permute.xlu0 %2369
  %v2374 = vmul.f32 %v2351, %v2366
  %v2375 = vmul.f32 %v2353, %v2368
  %v2376 = vmul.f32 %v2355, %v2370
  %2380 = vrot.lane.b32.xlu0 %v2374, 25
  %v2381 = vpop.permute.xlu0 %2380
  %2382 = vrot.lane.b32.xlu0 %v2375, 25
  %v2383 = vpop.permute.xlu0 %2382
  %2384 = vrot.lane.b32.xlu0 %v2376, 25
  %v2385 = vpop.permute.xlu0 %2384
  %v2389 = vadd.f32 %v2359, %v2381
  %v2390 = vadd.f32 %v2360, %v2383
  %v2391 = vadd.f32 %v2361, %v2385
  %v2392 = vtanh.pop %v2389
  %v2393 = vtanh.pop %v2390
  %v2394 = vtanh.pop %v2391
  %2398 = vrot.lane.b32.xlu0 %v2392, 25
  %v2399 = vpop.permute.xlu0 %2398
  %2400 = vrot.lane.b32.xlu0 %v2393, 25
  %v2401 = vpop.permute.xlu0 %2400
  %2402 = vrot.lane.b32.xlu0 %v2394, 25
  %v2403 = vpop.permute.xlu0 %2402
  %v2407 = vmul.f32 %v2351, %v2399
  %v2408 = vmul.f32 %v2353, %v2401
  %v2409 = vmul.f32 %v2355, %v2403
  %2413 = vrot.lane.b32.xlu0 %v2407, 78
  %v2414 = vpop.permute.xlu0 %2413
  %2415 = vrot.lane.b32.xlu0 %v2408, 78
  %v2416 = vpop.permute.xlu0 %2415
  %2417 = vrot.lane.b32.xlu0 %v2409, 78
  %v2418 = vpop.permute.xlu0 %2417
  %2422 = vrot.lane.b32.xlu0 %v2407, 103
  %v2423 = vpop.permute.xlu0 %2422
  %2424 = vrot.lane.b32.xlu0 %v2408, 103
  %v2425 = vpop.permute.xlu0 %2424
  %2426 = vrot.lane.b32.xlu0 %v2409, 103
  %v2427 = vpop.permute.xlu0 %2426
  %v2431 = vsel %vm877, %v2414, %v2423
  %v2432 = vsel %vm877, %v2416, %v2425
  %v2433 = vsel %vm877, %v2418, %v2427
  %v2434 = vsel %vm881, %v2431, %v2407
  %v2435 = vsel %vm881, %v2432, %v2408
  %v2436 = vsel %vm881, %v2433, %v2409
  %v2437 = vmul.f32 %v2434, %v681
  %v2438 = vmul.f32 %v2435, %v682
  %v2439 = vmul.f32 %v2436, %v683
  %v2441 = vsel %vm687, %v2437, 0
  %v2444 = vsel %vm687, %v2438, 0
  %v2447 = vsel %vm687, %v2439, 0
  %2449 = vmatprep.subr.mxu0 0.0
  %2450 = vmatpush1.msra.mxu0 %v671
  %2451 = vmatprep.subr.mxu0 0.0
  %2452 = vmatpush1.msra.mxu0 %v672
  %2453 = vmatprep.subr.mxu0 0.0
  %2454 = vmatpush1.msra.mxu0 %v673
  %2455 = vmatprep.subr.mxu0 0.0
  %2456 = vmatpush1.msra.mxu0 %v674
  %2457 = vmatprep.subr.mxu0 0.0
  %2458 = vmatpush1.msra.mxu0 %v675
  %2459 = vmatprep.subr.mxu0 0.0
  %2460 = vmatpush1.msra.mxu0 %v676
  %2461 = vmatprep.subr.mxu0 0.0
  %2462 = vmatpush1.msra.mxu0 %v677
  %2463 = vmatprep.subr.mxu0 0.0
  %2464 = vmatpush1.msra.mxu0 %v678
  %2465 = vmatprep.subr.mxu0 0.0
  %2466 = vmatpush1.msra.mxu0 %v679
  %2467 = vmatprep.subr.mxu0 0.0
  %2468 = vmatpush1.msra.mxu0 %v699
  %2469 = vmatprep.subr.mxu0 0.0
  %2470 = vmatpush1.msra.mxu0 0.0
  %2471 = vmatprep.subr.mxu0 0.0
  %2472 = vmatpush1.msra.mxu0 0.0
  %2473 = vmatprep.subr.mxu0 0.0
  %2474 = vmatpush1.msra.mxu0 0.0
  %2475 = vmatprep.subr.mxu0 0.0
  %2476 = vmatpush1.msra.mxu0 0.0
  %2477 = vmatprep.subr.mxu0 0.0
  %2478 = vmatpush1.msra.mxu0 0.0
  %2479 = vmatprep.subr.mxu0 0.0
  %2480 = vmatpush1.msra.mxu0 0.0
  %2481 = vmatprep.subr.mxu0 0.0
  %2482 = vmatpush1.msra.mxu0 0.0
  %2483 = vmatprep.subr.mxu0 0.0
  %2484 = vmatpush1.msra.mxu0 0.0
  %2485 = vmatprep.subr.mxu0 0.0
  %2486 = vmatpush1.msra.mxu0 0.0
  %2487 = vmatprep.subr.mxu0 0.0
  %2488 = vmatpush1.msra.mxu0 0.0
  %2489 = vmatprep.subr.mxu0 0.0
  %2490 = vmatpush1.msra.mxu0 0.0
  %2491 = vmatprep.subr.mxu0 0.0
  %2492 = vmatpush1.msra.mxu0 0.0
  %2493 = vmatprep.subr.mxu0 0.0
  %2494 = vmatpush1.msra.mxu0 0.0
  %2495 = vmatprep.subr.mxu0 0.0
  %2496 = vmatpush1.msra.mxu0 0.0
  %2497 = vmatprep.subr.mxu0 0.0
  %2498 = vmatpush1.msra.mxu0 0.0
  %2499 = vmatprep.subr.mxu0 0.0
  %2500 = vmatpush1.msra.mxu0 0.0
  %2501 = vmatprep.subr.mxu0 0.0
  %2502 = vmatpush1.msra.mxu0 0.0
  %2503 = vmatprep.subr.mxu0 0.0
  %2504 = vmatpush1.msra.mxu0 0.0
  %2505 = vmatprep.subr.mxu0 0.0
  %2506 = vmatpush1.msra.mxu0 0.0
  %2507 = vmatprep.subr.mxu0 0.0
  %2508 = vmatpush1.msra.mxu0 0.0
  %2509 = vmatprep.subr.mxu0 0.0
  %2510 = vmatpush1.msra.mxu0 0.0
  %2511 = vmatprep.subr.mxu0 0.0
  %2512 = vmatpush1.msra.mxu0 0.0
  %2513 = vmatprep.mubr.f32.mxu0 0.0
  %2514 = vmatmul.mubr.f32.gmra.mrb[0].mxu0 %v2441
  %v2515 = vpop.f32.mrb[0].mxu0
  %v2516 = vadd.f32 0.0, %v2515
  %v2517 = vpop.f32.mrb[0].mxu0
  %2518 = vmatprep.mubr.f32.mxu0 0.0
  %2519 = vmatmul.mubr.f32.gmra.mrb[0].mxu0 %v2444
  %v2520 = vpop.f32.mrb[0].mxu0
  %v2521 = vadd.f32 0.0, %v2520
  %v2522 = vpop.f32.mrb[0].mxu0
  %2523 = vmatprep.mubr.f32.mxu0 0.0
  %2524 = vmatmul.mubr.f32.gmra.mrb[0].mxu0 %v2447
  %v2525 = vpop.f32.mrb[0].mxu0
  %v2526 = vadd.f32 0.0, %v2525
  %v2527 = vpop.f32.mrb[0].mxu0
  %2528 = vdwg.mxu0
  %v2529 = vadd.f32 %v508, %v2516
  %v2530 = vadd.f32 %v513, %v2521
  %v2531 = vadd.f32 %v518, %v2526
  %v2532 = vxor.u32 %v2529, 2147483648
  %v2533 = vxor.u32 %v2530, 2147483648
  %v2534 = vxor.u32 %v2531, 2147483648
  %v2535 = vmul.f32 %v2532, 1.442695
  %v2536 = vpow.pop %v2535
  %v2537 = vmul.f32 %v2533, 1.442695
  %v2538 = vpow.pop %v2537
  %v2539 = vmul.f32 %v2534, 1.442695
  %v2540 = vpow.pop %v2539
  %v2541 = vadd.f32 %v2536, 1.0
  %v2542 = vadd.f32 %v2538, 1.0
  %v2543 = vadd.f32 %v2540, 1.0
  %v2544 = vrcp.pop %v2541
  %v2545 = vmul.f32 1.0, %v2544
  %v2546 = vrcp.pop %v2542
  %v2547 = vmul.f32 1.0, %v2546
  %v2548 = vrcp.pop %v2543
  %v2549 = vmul.f32 1.0, %v2548
  %v2550 = vtanh.pop %v2529
  %v2551 = vtanh.pop %v2530
  %v2552 = vtanh.pop %v2531
  %v2553 = vmul.f32 %v2545, %v2389
  %v2554 = vmul.f32 %v2547, %v2390
  %v2555 = vmul.f32 %v2549, %v2391
  %2559 = vrot.lane.b32.xlu0 %v2550, 53
  %v2560 = vpop.permute.xlu0 %2559
  %2561 = vrot.lane.b32.xlu0 %v2551, 53
  %v2562 = vpop.permute.xlu0 %2561
  %2563 = vrot.lane.b32.xlu0 %v2552, 53
  %v2564 = vpop.permute.xlu0 %2563
  %v2568 = vmul.f32 %v2545, %v2560
  %v2569 = vmul.f32 %v2547, %v2562
  %v2570 = vmul.f32 %v2549, %v2564
  %2574 = vrot.lane.b32.xlu0 %v2568, 25
  %v2575 = vpop.permute.xlu0 %2574
  %2576 = vrot.lane.b32.xlu0 %v2569, 25
  %v2577 = vpop.permute.xlu0 %2576
  %2578 = vrot.lane.b32.xlu0 %v2570, 25
  %v2579 = vpop.permute.xlu0 %2578
  %v2583 = vadd.f32 %v2553, %v2575
  %v2584 = vadd.f32 %v2554, %v2577
  %v2585 = vadd.f32 %v2555, %v2579
  %v2586 = vtanh.pop %v2583
  %v2587 = vtanh.pop %v2584
  %v2588 = vtanh.pop %v2585
  %2592 = vrot.lane.b32.xlu0 %v2586, 25
  %v2593 = vpop.permute.xlu0 %2592
  %2594 = vrot.lane.b32.xlu0 %v2587, 25
  %v2595 = vpop.permute.xlu0 %2594
  %2596 = vrot.lane.b32.xlu0 %v2588, 25
  %v2597 = vpop.permute.xlu0 %2596
  %v2601 = vmul.f32 %v2545, %v2593
  %v2602 = vmul.f32 %v2547, %v2595
  %v2603 = vmul.f32 %v2549, %v2597
  %2607 = vrot.lane.b32.xlu0 %v2601, 78
  %v2608 = vpop.permute.xlu0 %2607
  %2609 = vrot.lane.b32.xlu0 %v2602, 78
  %v2610 = vpop.permute.xlu0 %2609
  %2611 = vrot.lane.b32.xlu0 %v2603, 78
  %v2612 = vpop.permute.xlu0 %2611
  %2616 = vrot.lane.b32.xlu0 %v2601, 103
  %v2617 = vpop.permute.xlu0 %2616
  %2618 = vrot.lane.b32.xlu0 %v2602, 103
  %v2619 = vpop.permute.xlu0 %2618
  %2620 = vrot.lane.b32.xlu0 %v2603, 103
  %v2621 = vpop.permute.xlu0 %2620
  %v2625 = vsel %vm877, %v2608, %v2617
  %v2626 = vsel %vm877, %v2610, %v2619
  %v2627 = vsel %vm877, %v2612, %v2621
  %v2628 = vsel %vm881, %v2625, %v2601
  %v2629 = vsel %vm881, %v2626, %v2602
  %v2630 = vsel %vm881, %v2627, %v2603
  %v2631 = vmul.f32 %v2628, %v681
  %v2632 = vmul.f32 %v2629, %v682
  %v2633 = vmul.f32 %v2630, %v683
  %v2635 = vsel %vm687, %v2631, 0
  %v2638 = vsel %vm687, %v2632, 0
  %v2641 = vsel %vm687, %v2633, 0
  %2643 = vmatprep.subr.mxu0 0.0
  %2644 = vmatpush1.msra.mxu0 %v671
  %2645 = vmatprep.subr.mxu0 0.0
  %2646 = vmatpush1.msra.mxu0 %v672
  %2647 = vmatprep.subr.mxu0 0.0
  %2648 = vmatpush1.msra.mxu0 %v673
  %2649 = vmatprep.subr.mxu0 0.0
  %2650 = vmatpush1.msra.mxu0 %v674
  %2651 = vmatprep.subr.mxu0 0.0
  %2652 = vmatpush1.msra.mxu0 %v675
  %2653 = vmatprep.subr.mxu0 0.0
  %2654 = vmatpush1.msra.mxu0 %v676
  %2655 = vmatprep.subr.mxu0 0.0
  %2656 = vmatpush1.msra.mxu0 %v677
  %2657 = vmatprep.subr.mxu0 0.0
  %2658 = vmatpush1.msra.mxu0 %v678
  %2659 = vmatprep.subr.mxu0 0.0
  %2660 = vmatpush1.msra.mxu0 %v679
  %2661 = vmatprep.subr.mxu0 0.0
  %2662 = vmatpush1.msra.mxu0 %v699
  %2663 = vmatprep.subr.mxu0 0.0
  %2664 = vmatpush1.msra.mxu0 0.0
  %2665 = vmatprep.subr.mxu0 0.0
  %2666 = vmatpush1.msra.mxu0 0.0
  %2667 = vmatprep.subr.mxu0 0.0
  %2668 = vmatpush1.msra.mxu0 0.0
  %2669 = vmatprep.subr.mxu0 0.0
  %2670 = vmatpush1.msra.mxu0 0.0
  %2671 = vmatprep.subr.mxu0 0.0
  %2672 = vmatpush1.msra.mxu0 0.0
  %2673 = vmatprep.subr.mxu0 0.0
  %2674 = vmatpush1.msra.mxu0 0.0
  %2675 = vmatprep.subr.mxu0 0.0
  %2676 = vmatpush1.msra.mxu0 0.0
  %2677 = vmatprep.subr.mxu0 0.0
  %2678 = vmatpush1.msra.mxu0 0.0
  %2679 = vmatprep.subr.mxu0 0.0
  %2680 = vmatpush1.msra.mxu0 0.0
  %2681 = vmatprep.subr.mxu0 0.0
  %2682 = vmatpush1.msra.mxu0 0.0
  %2683 = vmatprep.subr.mxu0 0.0
  %2684 = vmatpush1.msra.mxu0 0.0
  %2685 = vmatprep.subr.mxu0 0.0
  %2686 = vmatpush1.msra.mxu0 0.0
  %2687 = vmatprep.subr.mxu0 0.0
  %2688 = vmatpush1.msra.mxu0 0.0
  %2689 = vmatprep.subr.mxu0 0.0
  %2690 = vmatpush1.msra.mxu0 0.0
  %2691 = vmatprep.subr.mxu0 0.0
  %2692 = vmatpush1.msra.mxu0 0.0
  %2693 = vmatprep.subr.mxu0 0.0
  %2694 = vmatpush1.msra.mxu0 0.0
  %2695 = vmatprep.subr.mxu0 0.0
  %2696 = vmatpush1.msra.mxu0 0.0
  %2697 = vmatprep.subr.mxu0 0.0
  %2698 = vmatpush1.msra.mxu0 0.0
  %2699 = vmatprep.subr.mxu0 0.0
  %2700 = vmatpush1.msra.mxu0 0.0
  %2701 = vmatprep.subr.mxu0 0.0
  %2702 = vmatpush1.msra.mxu0 0.0
  %2703 = vmatprep.subr.mxu0 0.0
  %2704 = vmatpush1.msra.mxu0 0.0
  %2705 = vmatprep.subr.mxu0 0.0
  %2706 = vmatpush1.msra.mxu0 0.0
  %2707 = vmatprep.mubr.f32.mxu0 0.0
  %2708 = vmatmul.mubr.f32.gmra.mrb[0].mxu0 %v2635
  %v2709 = vpop.f32.mrb[0].mxu0
  %v2710 = vadd.f32 0.0, %v2709
  %v2711 = vpop.f32.mrb[0].mxu0
  %2712 = vmatprep.mubr.f32.mxu0 0.0
  %2713 = vmatmul.mubr.f32.gmra.mrb[0].mxu0 %v2638
  %v2714 = vpop.f32.mrb[0].mxu0
  %v2715 = vadd.f32 0.0, %v2714
  %v2716 = vpop.f32.mrb[0].mxu0
  %2717 = vmatprep.mubr.f32.mxu0 0.0
  %2718 = vmatmul.mubr.f32.gmra.mrb[0].mxu0 %v2641
  %v2719 = vpop.f32.mrb[0].mxu0
  %v2720 = vadd.f32 0.0, %v2719
  %v2721 = vpop.f32.mrb[0].mxu0
  %2722 = vdwg.mxu0
  %v2723 = vadd.f32 %v523, %v2710
  %v2724 = vadd.f32 %v528, %v2715
  %v2725 = vadd.f32 %v533, %v2720
  %v2726 = vxor.u32 %v2723, 2147483648
  %v2727 = vxor.u32 %v2724, 2147483648
  %v2728 = vxor.u32 %v2725, 2147483648
  %v2729 = vmul.f32 %v2726, 1.442695
  %v2730 = vpow.pop %v2729
  %v2731 = vmul.f32 %v2727, 1.442695
  %v2732 = vpow.pop %v2731
  %v2733 = vmul.f32 %v2728, 1.442695
  %v2734 = vpow.pop %v2733
  %v2735 = vadd.f32 %v2730, 1.0
  %v2736 = vadd.f32 %v2732, 1.0
  %v2737 = vadd.f32 %v2734, 1.0
  %v2738 = vrcp.pop %v2735
  %v2739 = vmul.f32 1.0, %v2738
  %v2740 = vrcp.pop %v2736
  %v2741 = vmul.f32 1.0, %v2740
  %v2742 = vrcp.pop %v2737
  %v2743 = vmul.f32 1.0, %v2742
  %v2744 = vtanh.pop %v2723
  %v2745 = vtanh.pop %v2724
  %v2746 = vtanh.pop %v2725
  %v2747 = vmul.f32 %v2739, %v2583
  %v2748 = vmul.f32 %v2741, %v2584
  %v2749 = vmul.f32 %v2743, %v2585
  %2753 = vrot.lane.b32.xlu0 %v2744, 53
  %v2754 = vpop.permute.xlu0 %2753
  %2755 = vrot.lane.b32.xlu0 %v2745, 53
  %v2756 = vpop.permute.xlu0 %2755
  %2757 = vrot.lane.b32.xlu0 %v2746, 53
  %v2758 = vpop.permute.xlu0 %2757
  %v2762 = vmul.f32 %v2739, %v2754
  %v2763 = vmul.f32 %v2741, %v2756
  %v2764 = vmul.f32 %v2743, %v2758
  %2768 = vrot.lane.b32.xlu0 %v2762, 25
  %v2769 = vpop.permute.xlu0 %2768
  %2770 = vrot.lane.b32.xlu0 %v2763, 25
  %v2771 = vpop.permute.xlu0 %2770
  %2772 = vrot.lane.b32.xlu0 %v2764, 25
  %v2773 = vpop.permute.xlu0 %2772
  %v2777 = vadd.f32 %v2747, %v2769
  %v2778 = vadd.f32 %v2748, %v2771
  %v2779 = vadd.f32 %v2749, %v2773
  %v2780 = vtanh.pop %v2777
  %v2781 = vtanh.pop %v2778
  %v2782 = vtanh.pop %v2779
  %2786 = vrot.lane.b32.xlu0 %v2780, 25
  %v2787 = vpop.permute.xlu0 %2786
  %2788 = vrot.lane.b32.xlu0 %v2781, 25
  %v2789 = vpop.permute.xlu0 %2788
  %2790 = vrot.lane.b32.xlu0 %v2782, 25
  %v2791 = vpop.permute.xlu0 %2790
  %v2795 = vmul.f32 %v2739, %v2787
  %v2796 = vmul.f32 %v2741, %v2789
  %v2797 = vmul.f32 %v2743, %v2791
  %2801 = vrot.lane.b32.xlu0 %v2795, 78
  %v2802 = vpop.permute.xlu0 %2801
  %2803 = vrot.lane.b32.xlu0 %v2796, 78
  %v2804 = vpop.permute.xlu0 %2803
  %2805 = vrot.lane.b32.xlu0 %v2797, 78
  %v2806 = vpop.permute.xlu0 %2805
  %2810 = vrot.lane.b32.xlu0 %v2795, 103
  %v2811 = vpop.permute.xlu0 %2810
  %2812 = vrot.lane.b32.xlu0 %v2796, 103
  %v2813 = vpop.permute.xlu0 %2812
  %2814 = vrot.lane.b32.xlu0 %v2797, 103
  %v2815 = vpop.permute.xlu0 %2814
  %v2819 = vsel %vm877, %v2802, %v2811
  %v2820 = vsel %vm877, %v2804, %v2813
  %v2821 = vsel %vm877, %v2806, %v2815
  %v2822 = vsel %vm881, %v2819, %v2795
  %v2823 = vsel %vm881, %v2820, %v2796
  %v2824 = vsel %vm881, %v2821, %v2797
  %v2825 = vmul.f32 %v2822, %v681
  %v2826 = vmul.f32 %v2823, %v682
  %v2827 = vmul.f32 %v2824, %v683
  %v2829 = vsel %vm687, %v2825, 0
  %v2832 = vsel %vm687, %v2826, 0
  %v2835 = vsel %vm687, %v2827, 0
  %2837 = vmatprep.subr.mxu0 0.0
  %2838 = vmatpush1.msra.mxu0 %v671
  %2839 = vmatprep.subr.mxu0 0.0
  %2840 = vmatpush1.msra.mxu0 %v672
  %2841 = vmatprep.subr.mxu0 0.0
  %2842 = vmatpush1.msra.mxu0 %v673
  %2843 = vmatprep.subr.mxu0 0.0
  %2844 = vmatpush1.msra.mxu0 %v674
  %2845 = vmatprep.subr.mxu0 0.0
  %2846 = vmatpush1.msra.mxu0 %v675
  %2847 = vmatprep.subr.mxu0 0.0
  %2848 = vmatpush1.msra.mxu0 %v676
  %2849 = vmatprep.subr.mxu0 0.0
  %2850 = vmatpush1.msra.mxu0 %v677
  %2851 = vmatprep.subr.mxu0 0.0
  %2852 = vmatpush1.msra.mxu0 %v678
  %2853 = vmatprep.subr.mxu0 0.0
  %2854 = vmatpush1.msra.mxu0 %v679
  %2855 = vmatprep.subr.mxu0 0.0
  %2856 = vmatpush1.msra.mxu0 %v699
  %2857 = vmatprep.subr.mxu0 0.0
  %2858 = vmatpush1.msra.mxu0 0.0
  %2859 = vmatprep.subr.mxu0 0.0
  %2860 = vmatpush1.msra.mxu0 0.0
  %2861 = vmatprep.subr.mxu0 0.0
  %2862 = vmatpush1.msra.mxu0 0.0
  %2863 = vmatprep.subr.mxu0 0.0
  %2864 = vmatpush1.msra.mxu0 0.0
  %2865 = vmatprep.subr.mxu0 0.0
  %2866 = vmatpush1.msra.mxu0 0.0
  %2867 = vmatprep.subr.mxu0 0.0
  %2868 = vmatpush1.msra.mxu0 0.0
  %2869 = vmatprep.subr.mxu0 0.0
  %2870 = vmatpush1.msra.mxu0 0.0
  %2871 = vmatprep.subr.mxu0 0.0
  %2872 = vmatpush1.msra.mxu0 0.0
  %2873 = vmatprep.subr.mxu0 0.0
  %2874 = vmatpush1.msra.mxu0 0.0
  %2875 = vmatprep.subr.mxu0 0.0
  %2876 = vmatpush1.msra.mxu0 0.0
  %2877 = vmatprep.subr.mxu0 0.0
  %2878 = vmatpush1.msra.mxu0 0.0
  %2879 = vmatprep.subr.mxu0 0.0
  %2880 = vmatpush1.msra.mxu0 0.0
  %2881 = vmatprep.subr.mxu0 0.0
  %2882 = vmatpush1.msra.mxu0 0.0
  %2883 = vmatprep.subr.mxu0 0.0
  %2884 = vmatpush1.msra.mxu0 0.0
  %2885 = vmatprep.subr.mxu0 0.0
  %2886 = vmatpush1.msra.mxu0 0.0
  %2887 = vmatprep.subr.mxu0 0.0
  %2888 = vmatpush1.msra.mxu0 0.0
  %2889 = vmatprep.subr.mxu0 0.0
  %2890 = vmatpush1.msra.mxu0 0.0
  %2891 = vmatprep.subr.mxu0 0.0
  %2892 = vmatpush1.msra.mxu0 0.0
  %2893 = vmatprep.subr.mxu0 0.0
  %2894 = vmatpush1.msra.mxu0 0.0
  %2895 = vmatprep.subr.mxu0 0.0
  %2896 = vmatpush1.msra.mxu0 0.0
  %2897 = vmatprep.subr.mxu0 0.0
  %2898 = vmatpush1.msra.mxu0 0.0
  %2899 = vmatprep.subr.mxu0 0.0
  %2900 = vmatpush1.msra.mxu0 0.0
  %2901 = vmatprep.mubr.f32.mxu0 0.0
  %2902 = vmatmul.mubr.f32.gmra.mrb[0].mxu0 %v2829
  %v2903 = vpop.f32.mrb[0].mxu0
  %v2904 = vadd.f32 0.0, %v2903
  %v2905 = vpop.f32.mrb[0].mxu0
  %2906 = vmatprep.mubr.f32.mxu0 0.0
  %2907 = vmatmul.mubr.f32.gmra.mrb[0].mxu0 %v2832
  %v2908 = vpop.f32.mrb[0].mxu0
  %v2909 = vadd.f32 0.0, %v2908
  %v2910 = vpop.f32.mrb[0].mxu0
  %2911 = vmatprep.mubr.f32.mxu0 0.0
  %2912 = vmatmul.mubr.f32.gmra.mrb[0].mxu0 %v2835
  %v2913 = vpop.f32.mrb[0].mxu0
  %v2914 = vadd.f32 0.0, %v2913
  %v2915 = vpop.f32.mrb[0].mxu0
  %2916 = vdwg.mxu0
  %v2917 = vadd.f32 %v538, %v2904
  %v2918 = vadd.f32 %v543, %v2909
  %v2919 = vadd.f32 %v548, %v2914
  %v2920 = vxor.u32 %v2917, 2147483648
  %v2921 = vxor.u32 %v2918, 2147483648
  %v2922 = vxor.u32 %v2919, 2147483648
  %v2923 = vmul.f32 %v2920, 1.442695
  %v2924 = vpow.pop %v2923
  %v2925 = vmul.f32 %v2921, 1.442695
  %v2926 = vpow.pop %v2925
  %v2927 = vmul.f32 %v2922, 1.442695
  %v2928 = vpow.pop %v2927
  %v2929 = vadd.f32 %v2924, 1.0
  %v2930 = vadd.f32 %v2926, 1.0
  %v2931 = vadd.f32 %v2928, 1.0
  %v2932 = vrcp.pop %v2929
  %v2933 = vmul.f32 1.0, %v2932
  %v2934 = vrcp.pop %v2930
  %v2935 = vmul.f32 1.0, %v2934
  %v2936 = vrcp.pop %v2931
  %v2937 = vmul.f32 1.0, %v2936
  %v2938 = vtanh.pop %v2917
  %v2939 = vtanh.pop %v2918
  %v2940 = vtanh.pop %v2919
  %v2941 = vmul.f32 %v2933, %v2777
  %v2942 = vmul.f32 %v2935, %v2778
  %v2943 = vmul.f32 %v2937, %v2779
  %2947 = vrot.lane.b32.xlu0 %v2938, 53
  %v2948 = vpop.permute.xlu0 %2947
  %2949 = vrot.lane.b32.xlu0 %v2939, 53
  %v2950 = vpop.permute.xlu0 %2949
  %2951 = vrot.lane.b32.xlu0 %v2940, 53
  %v2952 = vpop.permute.xlu0 %2951
  %v2956 = vmul.f32 %v2933, %v2948
  %v2957 = vmul.f32 %v2935, %v2950
  %v2958 = vmul.f32 %v2937, %v2952
  %2962 = vrot.lane.b32.xlu0 %v2956, 25
  %v2963 = vpop.permute.xlu0 %2962
  %2964 = vrot.lane.b32.xlu0 %v2957, 25
  %v2965 = vpop.permute.xlu0 %2964
  %2966 = vrot.lane.b32.xlu0 %v2958, 25
  %v2967 = vpop.permute.xlu0 %2966
  %v2971 = vadd.f32 %v2941, %v2963
  %v2972 = vadd.f32 %v2942, %v2965
  %v2973 = vadd.f32 %v2943, %v2967
  %v2974 = vtanh.pop %v2971
  %v2975 = vtanh.pop %v2972
  %v2976 = vtanh.pop %v2973
  %2980 = vrot.lane.b32.xlu0 %v2974, 25
  %v2981 = vpop.permute.xlu0 %2980
  %2982 = vrot.lane.b32.xlu0 %v2975, 25
  %v2983 = vpop.permute.xlu0 %2982
  %2984 = vrot.lane.b32.xlu0 %v2976, 25
  %v2985 = vpop.permute.xlu0 %2984
  %v2989 = vmul.f32 %v2933, %v2981
  %v2990 = vmul.f32 %v2935, %v2983
  %v2991 = vmul.f32 %v2937, %v2985
  %2995 = vrot.lane.b32.xlu0 %v2989, 78
  %v2996 = vpop.permute.xlu0 %2995
  %2997 = vrot.lane.b32.xlu0 %v2990, 78
  %v2998 = vpop.permute.xlu0 %2997
  %2999 = vrot.lane.b32.xlu0 %v2991, 78
  %v3000 = vpop.permute.xlu0 %2999
  %3004 = vrot.lane.b32.xlu0 %v2989, 103
  %v3005 = vpop.permute.xlu0 %3004
  %3006 = vrot.lane.b32.xlu0 %v2990, 103
  %v3007 = vpop.permute.xlu0 %3006
  %3008 = vrot.lane.b32.xlu0 %v2991, 103
  %v3009 = vpop.permute.xlu0 %3008
  %v3013 = vsel %vm877, %v2996, %v3005
  %v3014 = vsel %vm877, %v2998, %v3007
  %v3015 = vsel %vm877, %v3000, %v3009
  %v3016 = vsel %vm881, %v3013, %v2989
  %v3017 = vsel %vm881, %v3014, %v2990
  %v3018 = vsel %vm881, %v3015, %v2991
  %v3019 = vmul.f32 %v3016, %v681
  %v3020 = vmul.f32 %v3017, %v682
  %v3021 = vmul.f32 %v3018, %v683
  %v3023 = vsel %vm687, %v3019, 0
  %v3026 = vsel %vm687, %v3020, 0
  %v3029 = vsel %vm687, %v3021, 0
  %3031 = vmatprep.subr.mxu0 0.0
  %3032 = vmatpush1.msra.mxu0 %v671
  %3033 = vmatprep.subr.mxu0 0.0
  %3034 = vmatpush1.msra.mxu0 %v672
  %3035 = vmatprep.subr.mxu0 0.0
  %3036 = vmatpush1.msra.mxu0 %v673
  %3037 = vmatprep.subr.mxu0 0.0
  %3038 = vmatpush1.msra.mxu0 %v674
  %3039 = vmatprep.subr.mxu0 0.0
  %3040 = vmatpush1.msra.mxu0 %v675
  %3041 = vmatprep.subr.mxu0 0.0
  %3042 = vmatpush1.msra.mxu0 %v676
  %3043 = vmatprep.subr.mxu0 0.0
  %3044 = vmatpush1.msra.mxu0 %v677
  %3045 = vmatprep.subr.mxu0 0.0
  %3046 = vmatpush1.msra.mxu0 %v678
  %3047 = vmatprep.subr.mxu0 0.0
  %3048 = vmatpush1.msra.mxu0 %v679
  %3049 = vmatprep.subr.mxu0 0.0
  %3050 = vmatpush1.msra.mxu0 %v699
  %3051 = vmatprep.subr.mxu0 0.0
  %3052 = vmatpush1.msra.mxu0 0.0
  %3053 = vmatprep.subr.mxu0 0.0
  %3054 = vmatpush1.msra.mxu0 0.0
  %3055 = vmatprep.subr.mxu0 0.0
  %3056 = vmatpush1.msra.mxu0 0.0
  %3057 = vmatprep.subr.mxu0 0.0
  %3058 = vmatpush1.msra.mxu0 0.0
  %3059 = vmatprep.subr.mxu0 0.0
  %3060 = vmatpush1.msra.mxu0 0.0
  %3061 = vmatprep.subr.mxu0 0.0
  %3062 = vmatpush1.msra.mxu0 0.0
  %3063 = vmatprep.subr.mxu0 0.0
  %3064 = vmatpush1.msra.mxu0 0.0
  %3065 = vmatprep.subr.mxu0 0.0
  %3066 = vmatpush1.msra.mxu0 0.0
  %3067 = vmatprep.subr.mxu0 0.0
  %3068 = vmatpush1.msra.mxu0 0.0
  %3069 = vmatprep.subr.mxu0 0.0
  %3070 = vmatpush1.msra.mxu0 0.0
  %3071 = vmatprep.subr.mxu0 0.0
  %3072 = vmatpush1.msra.mxu0 0.0
  %3073 = vmatprep.subr.mxu0 0.0
  %3074 = vmatpush1.msra.mxu0 0.0
  %3075 = vmatprep.subr.mxu0 0.0
  %3076 = vmatpush1.msra.mxu0 0.0
  %3077 = vmatprep.subr.mxu0 0.0
  %3078 = vmatpush1.msra.mxu0 0.0
  %3079 = vmatprep.subr.mxu0 0.0
  %3080 = vmatpush1.msra.mxu0 0.0
  %3081 = vmatprep.subr.mxu0 0.0
  %3082 = vmatpush1.msra.mxu0 0.0
  %3083 = vmatprep.subr.mxu0 0.0
  %3084 = vmatpush1.msra.mxu0 0.0
  %3085 = vmatprep.subr.mxu0 0.0
  %3086 = vmatpush1.msra.mxu0 0.0
  %3087 = vmatprep.subr.mxu0 0.0
  %3088 = vmatpush1.msra.mxu0 0.0
  %3089 = vmatprep.subr.mxu0 0.0
  %3090 = vmatpush1.msra.mxu0 0.0
  %3091 = vmatprep.subr.mxu0 0.0
  %3092 = vmatpush1.msra.mxu0 0.0
  %3093 = vmatprep.subr.mxu0 0.0
  %3094 = vmatpush1.msra.mxu0 0.0
  %3095 = vmatprep.mubr.f32.mxu0 0.0
  %3096 = vmatmul.mubr.f32.gmra.mrb[0].mxu0 %v3023
  %v3097 = vpop.f32.mrb[0].mxu0
  %v3098 = vadd.f32 0.0, %v3097
  %v3099 = vpop.f32.mrb[0].mxu0
  %3100 = vmatprep.mubr.f32.mxu0 0.0
  %3101 = vmatmul.mubr.f32.gmra.mrb[0].mxu0 %v3026
  %v3102 = vpop.f32.mrb[0].mxu0
  %v3103 = vadd.f32 0.0, %v3102
  %v3104 = vpop.f32.mrb[0].mxu0
  %3105 = vmatprep.mubr.f32.mxu0 0.0
  %3106 = vmatmul.mubr.f32.gmra.mrb[0].mxu0 %v3029
  %v3107 = vpop.f32.mrb[0].mxu0
  %v3108 = vadd.f32 0.0, %v3107
  %v3109 = vpop.f32.mrb[0].mxu0
  %3110 = vdwg.mxu0
  %v3111 = vadd.f32 %v553, %v3098
  %v3112 = vadd.f32 %v558, %v3103
  %v3113 = vadd.f32 %v563, %v3108
  %v3114 = vxor.u32 %v3111, 2147483648
  %v3115 = vxor.u32 %v3112, 2147483648
  %v3116 = vxor.u32 %v3113, 2147483648
  %v3117 = vmul.f32 %v3114, 1.442695
  %v3118 = vpow.pop %v3117
  %v3119 = vmul.f32 %v3115, 1.442695
  %v3120 = vpow.pop %v3119
  %v3121 = vmul.f32 %v3116, 1.442695
  %v3122 = vpow.pop %v3121
  %v3123 = vadd.f32 %v3118, 1.0
  %v3124 = vadd.f32 %v3120, 1.0
  %v3125 = vadd.f32 %v3122, 1.0
  %v3126 = vrcp.pop %v3123
  %v3127 = vmul.f32 1.0, %v3126
  %v3128 = vrcp.pop %v3124
  %v3129 = vmul.f32 1.0, %v3128
  %v3130 = vrcp.pop %v3125
  %v3131 = vmul.f32 1.0, %v3130
  %v3132 = vtanh.pop %v3111
  %v3133 = vtanh.pop %v3112
  %v3134 = vtanh.pop %v3113
  %v3135 = vmul.f32 %v3127, %v2971
  %v3136 = vmul.f32 %v3129, %v2972
  %v3137 = vmul.f32 %v3131, %v2973
  %3141 = vrot.lane.b32.xlu0 %v3132, 53
  %v3142 = vpop.permute.xlu0 %3141
  %3143 = vrot.lane.b32.xlu0 %v3133, 53
  %v3144 = vpop.permute.xlu0 %3143
  %3145 = vrot.lane.b32.xlu0 %v3134, 53
  %v3146 = vpop.permute.xlu0 %3145
  %v3150 = vmul.f32 %v3127, %v3142
  %v3151 = vmul.f32 %v3129, %v3144
  %v3152 = vmul.f32 %v3131, %v3146
  %3156 = vrot.lane.b32.xlu0 %v3150, 25
  %v3157 = vpop.permute.xlu0 %3156
  %3158 = vrot.lane.b32.xlu0 %v3151, 25
  %v3159 = vpop.permute.xlu0 %3158
  %3160 = vrot.lane.b32.xlu0 %v3152, 25
  %v3161 = vpop.permute.xlu0 %3160
  %v3165 = vadd.f32 %v3135, %v3157
  %v3166 = vadd.f32 %v3136, %v3159
  %v3167 = vadd.f32 %v3137, %v3161
  %v3168 = vtanh.pop %v3165
  %v3169 = vtanh.pop %v3166
  %v3170 = vtanh.pop %v3167
  %3174 = vrot.lane.b32.xlu0 %v3168, 25
  %v3175 = vpop.permute.xlu0 %3174
  %3176 = vrot.lane.b32.xlu0 %v3169, 25
  %v3177 = vpop.permute.xlu0 %3176
  %3178 = vrot.lane.b32.xlu0 %v3170, 25
  %v3179 = vpop.permute.xlu0 %3178
  %v3183 = vmul.f32 %v3127, %v3175
  %v3184 = vmul.f32 %v3129, %v3177
  %v3185 = vmul.f32 %v3131, %v3179
  %3189 = vrot.lane.b32.xlu0 %v3183, 78
  %v3190 = vpop.permute.xlu0 %3189
  %3191 = vrot.lane.b32.xlu0 %v3184, 78
  %v3192 = vpop.permute.xlu0 %3191
  %3193 = vrot.lane.b32.xlu0 %v3185, 78
  %v3194 = vpop.permute.xlu0 %3193
  %3198 = vrot.lane.b32.xlu0 %v3183, 103
  %v3199 = vpop.permute.xlu0 %3198
  %3200 = vrot.lane.b32.xlu0 %v3184, 103
  %v3201 = vpop.permute.xlu0 %3200
  %3202 = vrot.lane.b32.xlu0 %v3185, 103
  %v3203 = vpop.permute.xlu0 %3202
  %v3207 = vsel %vm877, %v3190, %v3199
  %v3208 = vsel %vm877, %v3192, %v3201
  %v3209 = vsel %vm877, %v3194, %v3203
  %v3210 = vsel %vm881, %v3207, %v3183
  %v3211 = vsel %vm881, %v3208, %v3184
  %v3212 = vsel %vm881, %v3209, %v3185
  %v3213 = vmul.f32 %v3210, %v681
  %v3214 = vmul.f32 %v3211, %v682
  %v3215 = vmul.f32 %v3212, %v683
  %v3217 = vsel %vm687, %v3213, 0
  %v3220 = vsel %vm687, %v3214, 0
  %v3223 = vsel %vm687, %v3215, 0
  %3225 = vmatprep.subr.mxu0 0.0
  %3226 = vmatpush1.msra.mxu0 %v671
  %3227 = vmatprep.subr.mxu0 0.0
  %3228 = vmatpush1.msra.mxu0 %v672
  %3229 = vmatprep.subr.mxu0 0.0
  %3230 = vmatpush1.msra.mxu0 %v673
  %3231 = vmatprep.subr.mxu0 0.0
  %3232 = vmatpush1.msra.mxu0 %v674
  %3233 = vmatprep.subr.mxu0 0.0
  %3234 = vmatpush1.msra.mxu0 %v675
  %3235 = vmatprep.subr.mxu0 0.0
  %3236 = vmatpush1.msra.mxu0 %v676
  %3237 = vmatprep.subr.mxu0 0.0
  %3238 = vmatpush1.msra.mxu0 %v677
  %3239 = vmatprep.subr.mxu0 0.0
  %3240 = vmatpush1.msra.mxu0 %v678
  %3241 = vmatprep.subr.mxu0 0.0
  %3242 = vmatpush1.msra.mxu0 %v679
  %3243 = vmatprep.subr.mxu0 0.0
  %3244 = vmatpush1.msra.mxu0 %v699
  %3245 = vmatprep.subr.mxu0 0.0
  %3246 = vmatpush1.msra.mxu0 0.0
  %3247 = vmatprep.subr.mxu0 0.0
  %3248 = vmatpush1.msra.mxu0 0.0
  %3249 = vmatprep.subr.mxu0 0.0
  %3250 = vmatpush1.msra.mxu0 0.0
  %3251 = vmatprep.subr.mxu0 0.0
  %3252 = vmatpush1.msra.mxu0 0.0
  %3253 = vmatprep.subr.mxu0 0.0
  %3254 = vmatpush1.msra.mxu0 0.0
  %3255 = vmatprep.subr.mxu0 0.0
  %3256 = vmatpush1.msra.mxu0 0.0
  %3257 = vmatprep.subr.mxu0 0.0
  %3258 = vmatpush1.msra.mxu0 0.0
  %3259 = vmatprep.subr.mxu0 0.0
  %3260 = vmatpush1.msra.mxu0 0.0
  %3261 = vmatprep.subr.mxu0 0.0
  %3262 = vmatpush1.msra.mxu0 0.0
  %3263 = vmatprep.subr.mxu0 0.0
  %3264 = vmatpush1.msra.mxu0 0.0
  %3265 = vmatprep.subr.mxu0 0.0
  %3266 = vmatpush1.msra.mxu0 0.0
  %3267 = vmatprep.subr.mxu0 0.0
  %3268 = vmatpush1.msra.mxu0 0.0
  %3269 = vmatprep.subr.mxu0 0.0
  %3270 = vmatpush1.msra.mxu0 0.0
  %3271 = vmatprep.subr.mxu0 0.0
  %3272 = vmatpush1.msra.mxu0 0.0
  %3273 = vmatprep.subr.mxu0 0.0
  %3274 = vmatpush1.msra.mxu0 0.0
  %3275 = vmatprep.subr.mxu0 0.0
  %3276 = vmatpush1.msra.mxu0 0.0
  %3277 = vmatprep.subr.mxu0 0.0
  %3278 = vmatpush1.msra.mxu0 0.0
  %3279 = vmatprep.subr.mxu0 0.0
  %3280 = vmatpush1.msra.mxu0 0.0
  %3281 = vmatprep.subr.mxu0 0.0
  %3282 = vmatpush1.msra.mxu0 0.0
  %3283 = vmatprep.subr.mxu0 0.0
  %3284 = vmatpush1.msra.mxu0 0.0
  %3285 = vmatprep.subr.mxu0 0.0
  %3286 = vmatpush1.msra.mxu0 0.0
  %3287 = vmatprep.subr.mxu0 0.0
  %3288 = vmatpush1.msra.mxu0 0.0
  %3289 = vmatprep.mubr.f32.mxu0 0.0
  %3290 = vmatmul.mubr.f32.gmra.mrb[0].mxu0 %v3217
  %v3291 = vpop.f32.mrb[0].mxu0
  %v3292 = vadd.f32 0.0, %v3291
  %v3293 = vpop.f32.mrb[0].mxu0
  %3294 = vmatprep.mubr.f32.mxu0 0.0
  %3295 = vmatmul.mubr.f32.gmra.mrb[0].mxu0 %v3220
  %v3296 = vpop.f32.mrb[0].mxu0
  %v3297 = vadd.f32 0.0, %v3296
  %v3298 = vpop.f32.mrb[0].mxu0
  %3299 = vmatprep.mubr.f32.mxu0 0.0
  %3300 = vmatmul.mubr.f32.gmra.mrb[0].mxu0 %v3223
  %v3301 = vpop.f32.mrb[0].mxu0
  %v3302 = vadd.f32 0.0, %v3301
  %v3303 = vpop.f32.mrb[0].mxu0
  %3304 = vdwg.mxu0
  %v3305 = vadd.f32 %v568, %v3292
  %v3306 = vadd.f32 %v573, %v3297
  %v3307 = vadd.f32 %v578, %v3302
  %v3308 = vxor.u32 %v3305, 2147483648
  %v3309 = vxor.u32 %v3306, 2147483648
  %v3310 = vxor.u32 %v3307, 2147483648
  %v3311 = vmul.f32 %v3308, 1.442695
  %v3312 = vpow.pop %v3311
  %v3313 = vmul.f32 %v3309, 1.442695
  %v3314 = vpow.pop %v3313
  %v3315 = vmul.f32 %v3310, 1.442695
  %v3316 = vpow.pop %v3315
  %v3317 = vadd.f32 %v3312, 1.0
  %v3318 = vadd.f32 %v3314, 1.0
  %v3319 = vadd.f32 %v3316, 1.0
  %v3320 = vrcp.pop %v3317
  %v3321 = vmul.f32 1.0, %v3320
  %v3322 = vrcp.pop %v3318
  %v3323 = vmul.f32 1.0, %v3322
  %v3324 = vrcp.pop %v3319
  %v3325 = vmul.f32 1.0, %v3324
  %v3326 = vtanh.pop %v3305
  %v3327 = vtanh.pop %v3306
  %v3328 = vtanh.pop %v3307
  %v3329 = vmul.f32 %v3321, %v3165
  %v3330 = vmul.f32 %v3323, %v3166
  %v3331 = vmul.f32 %v3325, %v3167
  %3335 = vrot.lane.b32.xlu0 %v3326, 53
  %v3336 = vpop.permute.xlu0 %3335
  %3337 = vrot.lane.b32.xlu0 %v3327, 53
  %v3338 = vpop.permute.xlu0 %3337
  %3339 = vrot.lane.b32.xlu0 %v3328, 53
  %v3340 = vpop.permute.xlu0 %3339
  %v3344 = vmul.f32 %v3321, %v3336
  %v3345 = vmul.f32 %v3323, %v3338
  %v3346 = vmul.f32 %v3325, %v3340
  %3350 = vrot.lane.b32.xlu0 %v3344, 25
  %v3351 = vpop.permute.xlu0 %3350
  %3352 = vrot.lane.b32.xlu0 %v3345, 25
  %v3353 = vpop.permute.xlu0 %3352
  %3354 = vrot.lane.b32.xlu0 %v3346, 25
  %v3355 = vpop.permute.xlu0 %3354
  %v3359 = vadd.f32 %v3329, %v3351
  %v3360 = vadd.f32 %v3330, %v3353
  %v3361 = vadd.f32 %v3331, %v3355
  %v3362 = vtanh.pop %v3359
  %v3363 = vtanh.pop %v3360
  %v3364 = vtanh.pop %v3361
  %3368 = vrot.lane.b32.xlu0 %v3362, 25
  %v3369 = vpop.permute.xlu0 %3368
  %3370 = vrot.lane.b32.xlu0 %v3363, 25
  %v3371 = vpop.permute.xlu0 %3370
  %3372 = vrot.lane.b32.xlu0 %v3364, 25
  %v3373 = vpop.permute.xlu0 %3372
  %v3377 = vmul.f32 %v3321, %v3369
  %v3378 = vmul.f32 %v3323, %v3371
  %v3379 = vmul.f32 %v3325, %v3373
  %3383 = vrot.lane.b32.xlu0 %v3377, 78
  %v3384 = vpop.permute.xlu0 %3383
  %3385 = vrot.lane.b32.xlu0 %v3378, 78
  %v3386 = vpop.permute.xlu0 %3385
  %3387 = vrot.lane.b32.xlu0 %v3379, 78
  %v3388 = vpop.permute.xlu0 %3387
  %3392 = vrot.lane.b32.xlu0 %v3377, 103
  %v3393 = vpop.permute.xlu0 %3392
  %3394 = vrot.lane.b32.xlu0 %v3378, 103
  %v3395 = vpop.permute.xlu0 %3394
  %3396 = vrot.lane.b32.xlu0 %v3379, 103
  %v3397 = vpop.permute.xlu0 %3396
  %v3401 = vsel %vm877, %v3384, %v3393
  %v3402 = vsel %vm877, %v3386, %v3395
  %v3403 = vsel %vm877, %v3388, %v3397
  %v3404 = vsel %vm881, %v3401, %v3377
  %v3405 = vsel %vm881, %v3402, %v3378
  %v3406 = vsel %vm881, %v3403, %v3379
  %v3407 = vmul.f32 %v3404, %v681
  %v3408 = vmul.f32 %v3405, %v682
  %v3409 = vmul.f32 %v3406, %v683
  %v3411 = vsel %vm687, %v3407, 0
  %v3414 = vsel %vm687, %v3408, 0
  %v3417 = vsel %vm687, %v3409, 0
  %3419 = vmatprep.subr.mxu0 0.0
  %3420 = vmatpush1.msra.mxu0 %v671
  %3421 = vmatprep.subr.mxu0 0.0
  %3422 = vmatpush1.msra.mxu0 %v672
  %3423 = vmatprep.subr.mxu0 0.0
  %3424 = vmatpush1.msra.mxu0 %v673
  %3425 = vmatprep.subr.mxu0 0.0
  %3426 = vmatpush1.msra.mxu0 %v674
  %3427 = vmatprep.subr.mxu0 0.0
  %3428 = vmatpush1.msra.mxu0 %v675
  %3429 = vmatprep.subr.mxu0 0.0
  %3430 = vmatpush1.msra.mxu0 %v676
  %3431 = vmatprep.subr.mxu0 0.0
  %3432 = vmatpush1.msra.mxu0 %v677
  %3433 = vmatprep.subr.mxu0 0.0
  %3434 = vmatpush1.msra.mxu0 %v678
  %3435 = vmatprep.subr.mxu0 0.0
  %3436 = vmatpush1.msra.mxu0 %v679
  %3437 = vmatprep.subr.mxu0 0.0
  %3438 = vmatpush1.msra.mxu0 %v699
  %3439 = vmatprep.subr.mxu0 0.0
  %3440 = vmatpush1.msra.mxu0 0.0
  %3441 = vmatprep.subr.mxu0 0.0
  %3442 = vmatpush1.msra.mxu0 0.0
  %3443 = vmatprep.subr.mxu0 0.0
  %3444 = vmatpush1.msra.mxu0 0.0
  %3445 = vmatprep.subr.mxu0 0.0
  %3446 = vmatpush1.msra.mxu0 0.0
  %3447 = vmatprep.subr.mxu0 0.0
  %3448 = vmatpush1.msra.mxu0 0.0
  %3449 = vmatprep.subr.mxu0 0.0
  %3450 = vmatpush1.msra.mxu0 0.0
  %3451 = vmatprep.subr.mxu0 0.0
  %3452 = vmatpush1.msra.mxu0 0.0
  %3453 = vmatprep.subr.mxu0 0.0
  %3454 = vmatpush1.msra.mxu0 0.0
  %3455 = vmatprep.subr.mxu0 0.0
  %3456 = vmatpush1.msra.mxu0 0.0
  %3457 = vmatprep.subr.mxu0 0.0
  %3458 = vmatpush1.msra.mxu0 0.0
  %3459 = vmatprep.subr.mxu0 0.0
  %3460 = vmatpush1.msra.mxu0 0.0
  %3461 = vmatprep.subr.mxu0 0.0
  %3462 = vmatpush1.msra.mxu0 0.0
  %3463 = vmatprep.subr.mxu0 0.0
  %3464 = vmatpush1.msra.mxu0 0.0
  %3465 = vmatprep.subr.mxu0 0.0
  %3466 = vmatpush1.msra.mxu0 0.0
  %3467 = vmatprep.subr.mxu0 0.0
  %3468 = vmatpush1.msra.mxu0 0.0
  %3469 = vmatprep.subr.mxu0 0.0
  %3470 = vmatpush1.msra.mxu0 0.0
  %3471 = vmatprep.subr.mxu0 0.0
  %3472 = vmatpush1.msra.mxu0 0.0
  %3473 = vmatprep.subr.mxu0 0.0
  %3474 = vmatpush1.msra.mxu0 0.0
  %3475 = vmatprep.subr.mxu0 0.0
  %3476 = vmatpush1.msra.mxu0 0.0
  %3477 = vmatprep.subr.mxu0 0.0
  %3478 = vmatpush1.msra.mxu0 0.0
  %3479 = vmatprep.subr.mxu0 0.0
  %3480 = vmatpush1.msra.mxu0 0.0
  %3481 = vmatprep.subr.mxu0 0.0
  %3482 = vmatpush1.msra.mxu0 0.0
  %3483 = vmatprep.mubr.f32.mxu0 0.0
  %3484 = vmatmul.mubr.f32.gmra.mrb[0].mxu0 %v3411
  %v3485 = vpop.f32.mrb[0].mxu0
  %v3486 = vadd.f32 0.0, %v3485
  %v3487 = vpop.f32.mrb[0].mxu0
  %3488 = vmatprep.mubr.f32.mxu0 0.0
  %3489 = vmatmul.mubr.f32.gmra.mrb[0].mxu0 %v3414
  %v3490 = vpop.f32.mrb[0].mxu0
  %v3491 = vadd.f32 0.0, %v3490
  %v3492 = vpop.f32.mrb[0].mxu0
  %3493 = vmatprep.mubr.f32.mxu0 0.0
  %3494 = vmatmul.mubr.f32.gmra.mrb[0].mxu0 %v3417
  %v3495 = vpop.f32.mrb[0].mxu0
  %v3496 = vadd.f32 0.0, %v3495
  %v3497 = vpop.f32.mrb[0].mxu0
  %3498 = vdwg.mxu0
  %v3499 = vadd.f32 %v583, %v3486
  %v3500 = vadd.f32 %v588, %v3491
  %v3501 = vadd.f32 %v593, %v3496
  %v3502 = vxor.u32 %v3499, 2147483648
  %v3503 = vxor.u32 %v3500, 2147483648
  %v3504 = vxor.u32 %v3501, 2147483648
  %v3505 = vmul.f32 %v3502, 1.442695
  %v3506 = vpow.pop %v3505
  %v3507 = vmul.f32 %v3503, 1.442695
  %v3508 = vpow.pop %v3507
  %v3509 = vmul.f32 %v3504, 1.442695
  %v3510 = vpow.pop %v3509
  %v3511 = vadd.f32 %v3506, 1.0
  %v3512 = vadd.f32 %v3508, 1.0
  %v3513 = vadd.f32 %v3510, 1.0
  %v3514 = vrcp.pop %v3511
  %v3515 = vmul.f32 1.0, %v3514
  %v3516 = vrcp.pop %v3512
  %v3517 = vmul.f32 1.0, %v3516
  %v3518 = vrcp.pop %v3513
  %v3519 = vmul.f32 1.0, %v3518
  %v3520 = vtanh.pop %v3499
  %v3521 = vtanh.pop %v3500
  %v3522 = vtanh.pop %v3501
  %v3523 = vmul.f32 %v3515, %v3359
  %v3524 = vmul.f32 %v3517, %v3360
  %v3525 = vmul.f32 %v3519, %v3361
  %3529 = vrot.lane.b32.xlu0 %v3520, 53
  %v3530 = vpop.permute.xlu0 %3529
  %3531 = vrot.lane.b32.xlu0 %v3521, 53
  %v3532 = vpop.permute.xlu0 %3531
  %3533 = vrot.lane.b32.xlu0 %v3522, 53
  %v3534 = vpop.permute.xlu0 %3533
  %v3538 = vmul.f32 %v3515, %v3530
  %v3539 = vmul.f32 %v3517, %v3532
  %v3540 = vmul.f32 %v3519, %v3534
  %3544 = vrot.lane.b32.xlu0 %v3538, 25
  %v3545 = vpop.permute.xlu0 %3544
  %3546 = vrot.lane.b32.xlu0 %v3539, 25
  %v3547 = vpop.permute.xlu0 %3546
  %3548 = vrot.lane.b32.xlu0 %v3540, 25
  %v3549 = vpop.permute.xlu0 %3548
  %v3553 = vadd.f32 %v3523, %v3545
  %v3554 = vadd.f32 %v3524, %v3547
  %v3555 = vadd.f32 %v3525, %v3549
  %v3556 = vtanh.pop %v3553
  %v3557 = vtanh.pop %v3554
  %v3558 = vtanh.pop %v3555
  %3562 = vrot.lane.b32.xlu0 %v3556, 25
  %v3563 = vpop.permute.xlu0 %3562
  %3564 = vrot.lane.b32.xlu0 %v3557, 25
  %v3565 = vpop.permute.xlu0 %3564
  %3566 = vrot.lane.b32.xlu0 %v3558, 25
  %v3567 = vpop.permute.xlu0 %3566
  %v3571 = vmul.f32 %v3515, %v3563
  %v3572 = vmul.f32 %v3517, %v3565
  %v3573 = vmul.f32 %v3519, %v3567
  %3577 = vrot.lane.b32.xlu0 %v3571, 78
  %v3578 = vpop.permute.xlu0 %3577
  %3579 = vrot.lane.b32.xlu0 %v3572, 78
  %v3580 = vpop.permute.xlu0 %3579
  %3581 = vrot.lane.b32.xlu0 %v3573, 78
  %v3582 = vpop.permute.xlu0 %3581
  %3586 = vrot.lane.b32.xlu0 %v3571, 103
  %v3587 = vpop.permute.xlu0 %3586
  %3588 = vrot.lane.b32.xlu0 %v3572, 103
  %v3589 = vpop.permute.xlu0 %3588
  %3590 = vrot.lane.b32.xlu0 %v3573, 103
  %v3591 = vpop.permute.xlu0 %3590
  %v3595 = vsel %vm877, %v3578, %v3587
  %v3596 = vsel %vm877, %v3580, %v3589
  %v3597 = vsel %vm877, %v3582, %v3591
  %v3598 = vsel %vm881, %v3595, %v3571
  %v3599 = vsel %vm881, %v3596, %v3572
  %v3600 = vsel %vm881, %v3597, %v3573
  %v3601 = vmul.f32 %v3598, %v681
  %v3602 = vmul.f32 %v3599, %v682
  %v3603 = vmul.f32 %v3600, %v683
  %v3605 = vsel %vm687, %v3601, 0
  %v3608 = vsel %vm687, %v3602, 0
  %v3611 = vsel %vm687, %v3603, 0
  %3613 = vmatprep.subr.mxu0 0.0
  %3614 = vmatpush1.msra.mxu0 %v671
  %3615 = vmatprep.subr.mxu0 0.0
  %3616 = vmatpush1.msra.mxu0 %v672
  %3617 = vmatprep.subr.mxu0 0.0
  %3618 = vmatpush1.msra.mxu0 %v673
  %3619 = vmatprep.subr.mxu0 0.0
  %3620 = vmatpush1.msra.mxu0 %v674
  %3621 = vmatprep.subr.mxu0 0.0
  %3622 = vmatpush1.msra.mxu0 %v675
  %3623 = vmatprep.subr.mxu0 0.0
  %3624 = vmatpush1.msra.mxu0 %v676
  %3625 = vmatprep.subr.mxu0 0.0
  %3626 = vmatpush1.msra.mxu0 %v677
  %3627 = vmatprep.subr.mxu0 0.0
  %3628 = vmatpush1.msra.mxu0 %v678
  %3629 = vmatprep.subr.mxu0 0.0
  %3630 = vmatpush1.msra.mxu0 %v679
  %3631 = vmatprep.subr.mxu0 0.0
  %3632 = vmatpush1.msra.mxu0 %v699
  %3633 = vmatprep.subr.mxu0 0.0
  %3634 = vmatpush1.msra.mxu0 0.0
  %3635 = vmatprep.subr.mxu0 0.0
  %3636 = vmatpush1.msra.mxu0 0.0
  %3637 = vmatprep.subr.mxu0 0.0
  %3638 = vmatpush1.msra.mxu0 0.0
  %3639 = vmatprep.subr.mxu0 0.0
  %3640 = vmatpush1.msra.mxu0 0.0
  %3641 = vmatprep.subr.mxu0 0.0
  %3642 = vmatpush1.msra.mxu0 0.0
  %3643 = vmatprep.subr.mxu0 0.0
  %3644 = vmatpush1.msra.mxu0 0.0
  %3645 = vmatprep.subr.mxu0 0.0
  %3646 = vmatpush1.msra.mxu0 0.0
  %3647 = vmatprep.subr.mxu0 0.0
  %3648 = vmatpush1.msra.mxu0 0.0
  %3649 = vmatprep.subr.mxu0 0.0
  %3650 = vmatpush1.msra.mxu0 0.0
  %3651 = vmatprep.subr.mxu0 0.0
  %3652 = vmatpush1.msra.mxu0 0.0
  %3653 = vmatprep.subr.mxu0 0.0
  %3654 = vmatpush1.msra.mxu0 0.0
  %3655 = vmatprep.subr.mxu0 0.0
  %3656 = vmatpush1.msra.mxu0 0.0
  %3657 = vmatprep.subr.mxu0 0.0
  %3658 = vmatpush1.msra.mxu0 0.0
  %3659 = vmatprep.subr.mxu0 0.0
  %3660 = vmatpush1.msra.mxu0 0.0
  %3661 = vmatprep.subr.mxu0 0.0
  %3662 = vmatpush1.msra.mxu0 0.0
  %3663 = vmatprep.subr.mxu0 0.0
  %3664 = vmatpush1.msra.mxu0 0.0
  %3665 = vmatprep.subr.mxu0 0.0
  %3666 = vmatpush1.msra.mxu0 0.0
  %3667 = vmatprep.subr.mxu0 0.0
  %3668 = vmatpush1.msra.mxu0 0.0
  %3669 = vmatprep.subr.mxu0 0.0
  %3670 = vmatpush1.msra.mxu0 0.0
  %3671 = vmatprep.subr.mxu0 0.0
  %3672 = vmatpush1.msra.mxu0 0.0
  %3673 = vmatprep.subr.mxu0 0.0
  %3674 = vmatpush1.msra.mxu0 0.0
  %3675 = vmatprep.subr.mxu0 0.0
  %3676 = vmatpush1.msra.mxu0 0.0
  %3677 = vmatprep.mubr.f32.mxu0 0.0
  %3678 = vmatmul.mubr.f32.gmra.mrb[0].mxu0 %v3605
  %v3679 = vpop.f32.mrb[0].mxu0
  %v3680 = vadd.f32 0.0, %v3679
  %v3681 = vpop.f32.mrb[0].mxu0
  %3682 = vmatprep.mubr.f32.mxu0 0.0
  %3683 = vmatmul.mubr.f32.gmra.mrb[0].mxu0 %v3608
  %v3684 = vpop.f32.mrb[0].mxu0
  %v3685 = vadd.f32 0.0, %v3684
  %v3686 = vpop.f32.mrb[0].mxu0
  %3687 = vmatprep.mubr.f32.mxu0 0.0
  %3688 = vmatmul.mubr.f32.gmra.mrb[0].mxu0 %v3611
  %v3689 = vpop.f32.mrb[0].mxu0
  %v3690 = vadd.f32 0.0, %v3689
  %v3691 = vpop.f32.mrb[0].mxu0
  %3692 = vdwg.mxu0
  %v3693 = vadd.f32 %v598, %v3680
  %v3694 = vadd.f32 %v603, %v3685
  %v3695 = vadd.f32 %v608, %v3690
  %v3696 = vxor.u32 %v3693, 2147483648
  %v3697 = vxor.u32 %v3694, 2147483648
  %v3698 = vxor.u32 %v3695, 2147483648
  %v3699 = vmul.f32 %v3696, 1.442695
  %v3700 = vpow.pop %v3699
  %v3701 = vmul.f32 %v3697, 1.442695
  %v3702 = vpow.pop %v3701
  %v3703 = vmul.f32 %v3698, 1.442695
  %v3704 = vpow.pop %v3703
  %v3705 = vadd.f32 %v3700, 1.0
  %v3706 = vadd.f32 %v3702, 1.0
  %v3707 = vadd.f32 %v3704, 1.0
  %v3708 = vrcp.pop %v3705
  %v3709 = vmul.f32 1.0, %v3708
  %v3710 = vrcp.pop %v3706
  %v3711 = vmul.f32 1.0, %v3710
  %v3712 = vrcp.pop %v3707
  %v3713 = vmul.f32 1.0, %v3712
  %v3714 = vtanh.pop %v3693
  %v3715 = vtanh.pop %v3694
  %v3716 = vtanh.pop %v3695
  %v3717 = vmul.f32 %v3709, %v3553
  %v3718 = vmul.f32 %v3711, %v3554
  %v3719 = vmul.f32 %v3713, %v3555
  %3723 = vrot.lane.b32.xlu0 %v3714, 53
  %v3724 = vpop.permute.xlu0 %3723
  %3725 = vrot.lane.b32.xlu0 %v3715, 53
  %v3726 = vpop.permute.xlu0 %3725
  %3727 = vrot.lane.b32.xlu0 %v3716, 53
  %v3728 = vpop.permute.xlu0 %3727
  %v3732 = vmul.f32 %v3709, %v3724
  %v3733 = vmul.f32 %v3711, %v3726
  %v3734 = vmul.f32 %v3713, %v3728
  %3738 = vrot.lane.b32.xlu0 %v3732, 25
  %v3739 = vpop.permute.xlu0 %3738
  %3740 = vrot.lane.b32.xlu0 %v3733, 25
  %v3741 = vpop.permute.xlu0 %3740
  %3742 = vrot.lane.b32.xlu0 %v3734, 25
  %v3743 = vpop.permute.xlu0 %3742
  %v3747 = vadd.f32 %v3717, %v3739
  %v3748 = vadd.f32 %v3718, %v3741
  %v3749 = vadd.f32 %v3719, %v3743
  %v3750 = vtanh.pop %v3747
  %v3751 = vtanh.pop %v3748
  %v3752 = vtanh.pop %v3749
  %3756 = vrot.lane.b32.xlu0 %v3750, 25
  %v3757 = vpop.permute.xlu0 %3756
  %3758 = vrot.lane.b32.xlu0 %v3751, 25
  %v3759 = vpop.permute.xlu0 %3758
  %3760 = vrot.lane.b32.xlu0 %v3752, 25
  %v3761 = vpop.permute.xlu0 %3760
  %v3765 = vmul.f32 %v3709, %v3757
  %v3766 = vmul.f32 %v3711, %v3759
  %v3767 = vmul.f32 %v3713, %v3761
  %3771 = vrot.lane.b32.xlu0 %v3765, 78
  %v3772 = vpop.permute.xlu0 %3771
  %3773 = vrot.lane.b32.xlu0 %v3766, 78
  %v3774 = vpop.permute.xlu0 %3773
  %3775 = vrot.lane.b32.xlu0 %v3767, 78
  %v3776 = vpop.permute.xlu0 %3775
  %3780 = vrot.lane.b32.xlu0 %v3765, 103
  %v3781 = vpop.permute.xlu0 %3780
  %3782 = vrot.lane.b32.xlu0 %v3766, 103
  %v3783 = vpop.permute.xlu0 %3782
  %3784 = vrot.lane.b32.xlu0 %v3767, 103
  %v3785 = vpop.permute.xlu0 %3784
  %v3789 = vsel %vm877, %v3772, %v3781
  %v3790 = vsel %vm877, %v3774, %v3783
  %v3791 = vsel %vm877, %v3776, %v3785
  %v3792 = vsel %vm881, %v3789, %v3765
  %v3793 = vsel %vm881, %v3790, %v3766
  %v3794 = vsel %vm881, %v3791, %v3767
  %v3795 = vmul.f32 %v3792, %v681
  %v3796 = vmul.f32 %v3793, %v682
  %v3797 = vmul.f32 %v3794, %v683
  %v3799 = vsel %vm687, %v3795, 0
  %v3802 = vsel %vm687, %v3796, 0
  %v3805 = vsel %vm687, %v3797, 0
  %3807 = vmatprep.subr.mxu0 0.0
  %3808 = vmatpush1.msra.mxu0 %v671
  %3809 = vmatprep.subr.mxu0 0.0
  %3810 = vmatpush1.msra.mxu0 %v672
  %3811 = vmatprep.subr.mxu0 0.0
  %3812 = vmatpush1.msra.mxu0 %v673
  %3813 = vmatprep.subr.mxu0 0.0
  %3814 = vmatpush1.msra.mxu0 %v674
  %3815 = vmatprep.subr.mxu0 0.0
  %3816 = vmatpush1.msra.mxu0 %v675
  %3817 = vmatprep.subr.mxu0 0.0
  %3818 = vmatpush1.msra.mxu0 %v676
  %3819 = vmatprep.subr.mxu0 0.0
  %3820 = vmatpush1.msra.mxu0 %v677
  %3821 = vmatprep.subr.mxu0 0.0
  %3822 = vmatpush1.msra.mxu0 %v678
  %3823 = vmatprep.subr.mxu0 0.0
  %3824 = vmatpush1.msra.mxu0 %v679
  %3825 = vmatprep.subr.mxu0 0.0
  %3826 = vmatpush1.msra.mxu0 %v699
  %3827 = vmatprep.subr.mxu0 0.0
  %3828 = vmatpush1.msra.mxu0 0.0
  %3829 = vmatprep.subr.mxu0 0.0
  %3830 = vmatpush1.msra.mxu0 0.0
  %3831 = vmatprep.subr.mxu0 0.0
  %3832 = vmatpush1.msra.mxu0 0.0
  %3833 = vmatprep.subr.mxu0 0.0
  %3834 = vmatpush1.msra.mxu0 0.0
  %3835 = vmatprep.subr.mxu0 0.0
  %3836 = vmatpush1.msra.mxu0 0.0
  %3837 = vmatprep.subr.mxu0 0.0
  %3838 = vmatpush1.msra.mxu0 0.0
  %3839 = vmatprep.subr.mxu0 0.0
  %3840 = vmatpush1.msra.mxu0 0.0
  %3841 = vmatprep.subr.mxu0 0.0
  %3842 = vmatpush1.msra.mxu0 0.0
  %3843 = vmatprep.subr.mxu0 0.0
  %3844 = vmatpush1.msra.mxu0 0.0
  %3845 = vmatprep.subr.mxu0 0.0
  %3846 = vmatpush1.msra.mxu0 0.0
  %3847 = vmatprep.subr.mxu0 0.0
  %3848 = vmatpush1.msra.mxu0 0.0
  %3849 = vmatprep.subr.mxu0 0.0
  %3850 = vmatpush1.msra.mxu0 0.0
  %3851 = vmatprep.subr.mxu0 0.0
  %3852 = vmatpush1.msra.mxu0 0.0
  %3853 = vmatprep.subr.mxu0 0.0
  %3854 = vmatpush1.msra.mxu0 0.0
  %3855 = vmatprep.subr.mxu0 0.0
  %3856 = vmatpush1.msra.mxu0 0.0
  %3857 = vmatprep.subr.mxu0 0.0
  %3858 = vmatpush1.msra.mxu0 0.0
  %3859 = vmatprep.subr.mxu0 0.0
  %3860 = vmatpush1.msra.mxu0 0.0
  %3861 = vmatprep.subr.mxu0 0.0
  %3862 = vmatpush1.msra.mxu0 0.0
  %3863 = vmatprep.subr.mxu0 0.0
  %3864 = vmatpush1.msra.mxu0 0.0
  %3865 = vmatprep.subr.mxu0 0.0
  %3866 = vmatpush1.msra.mxu0 0.0
  %3867 = vmatprep.subr.mxu0 0.0
  %3868 = vmatpush1.msra.mxu0 0.0
  %3869 = vmatprep.subr.mxu0 0.0
  %3870 = vmatpush1.msra.mxu0 0.0
  %3871 = vmatprep.mubr.f32.mxu0 0.0
  %3872 = vmatmul.mubr.f32.gmra.mrb[0].mxu0 %v3799
  %v3873 = vpop.f32.mrb[0].mxu0
  %v3874 = vadd.f32 0.0, %v3873
  %v3875 = vpop.f32.mrb[0].mxu0
  %3876 = vmatprep.mubr.f32.mxu0 0.0
  %3877 = vmatmul.mubr.f32.gmra.mrb[0].mxu0 %v3802
  %v3878 = vpop.f32.mrb[0].mxu0
  %v3879 = vadd.f32 0.0, %v3878
  %v3880 = vpop.f32.mrb[0].mxu0
  %3881 = vmatprep.mubr.f32.mxu0 0.0
  %3882 = vmatmul.mubr.f32.gmra.mrb[0].mxu0 %v3805
  %v3883 = vpop.f32.mrb[0].mxu0
  %v3884 = vadd.f32 0.0, %v3883
  %v3885 = vpop.f32.mrb[0].mxu0
  %3886 = vdwg.mxu0
  %v3887 = vadd.f32 %v613, %v3874
  %v3888 = vadd.f32 %v618, %v3879
  %v3889 = vadd.f32 %v623, %v3884
  %v3890 = vxor.u32 %v3887, 2147483648
  %v3891 = vxor.u32 %v3888, 2147483648
  %v3892 = vxor.u32 %v3889, 2147483648
  %v3893 = vmul.f32 %v3890, 1.442695
  %v3894 = vpow.pop %v3893
  %v3895 = vmul.f32 %v3891, 1.442695
  %v3896 = vpow.pop %v3895
  %v3897 = vmul.f32 %v3892, 1.442695
  %v3898 = vpow.pop %v3897
  %v3899 = vadd.f32 %v3894, 1.0
  %v3900 = vadd.f32 %v3896, 1.0
  %v3901 = vadd.f32 %v3898, 1.0
  %v3902 = vrcp.pop %v3899
  %v3903 = vmul.f32 1.0, %v3902
  %v3904 = vrcp.pop %v3900
  %v3905 = vmul.f32 1.0, %v3904
  %v3906 = vrcp.pop %v3901
  %v3907 = vmul.f32 1.0, %v3906
  %v3908 = vtanh.pop %v3887
  %v3909 = vtanh.pop %v3888
  %v3910 = vtanh.pop %v3889
  %v3911 = vmul.f32 %v3903, %v3747
  %v3912 = vmul.f32 %v3905, %v3748
  %v3913 = vmul.f32 %v3907, %v3749
  %3917 = vrot.lane.b32.xlu0 %v3908, 53
  %v3918 = vpop.permute.xlu0 %3917
  %3919 = vrot.lane.b32.xlu0 %v3909, 53
  %v3920 = vpop.permute.xlu0 %3919
  %3921 = vrot.lane.b32.xlu0 %v3910, 53
  %v3922 = vpop.permute.xlu0 %3921
  %v3926 = vmul.f32 %v3903, %v3918
  %v3927 = vmul.f32 %v3905, %v3920
  %v3928 = vmul.f32 %v3907, %v3922
  %3932 = vrot.lane.b32.xlu0 %v3926, 25
  %v3933 = vpop.permute.xlu0 %3932
  %3934 = vrot.lane.b32.xlu0 %v3927, 25
  %v3935 = vpop.permute.xlu0 %3934
  %3936 = vrot.lane.b32.xlu0 %v3928, 25
  %v3937 = vpop.permute.xlu0 %3936
  %v3941 = vadd.f32 %v3911, %v3933
  %v3942 = vadd.f32 %v3912, %v3935
  %v3943 = vadd.f32 %v3913, %v3937
  %v3944 = vtanh.pop %v3941
  %v3945 = vtanh.pop %v3942
  %v3946 = vtanh.pop %v3943
  %3950 = vrot.lane.b32.xlu0 %v3944, 25
  %v3951 = vpop.permute.xlu0 %3950
  %3952 = vrot.lane.b32.xlu0 %v3945, 25
  %v3953 = vpop.permute.xlu0 %3952
  %3954 = vrot.lane.b32.xlu0 %v3946, 25
  %v3955 = vpop.permute.xlu0 %3954
  %v3959 = vmul.f32 %v3903, %v3951
  %v3960 = vmul.f32 %v3905, %v3953
  %v3961 = vmul.f32 %v3907, %v3955
  %3965 = vrot.lane.b32.xlu0 %v3959, 78
  %v3966 = vpop.permute.xlu0 %3965
  %3967 = vrot.lane.b32.xlu0 %v3960, 78
  %v3968 = vpop.permute.xlu0 %3967
  %3969 = vrot.lane.b32.xlu0 %v3961, 78
  %v3970 = vpop.permute.xlu0 %3969
  %3974 = vrot.lane.b32.xlu0 %v3959, 103
  %v3975 = vpop.permute.xlu0 %3974
  %3976 = vrot.lane.b32.xlu0 %v3960, 103
  %v3977 = vpop.permute.xlu0 %3976
  %3978 = vrot.lane.b32.xlu0 %v3961, 103
  %v3979 = vpop.permute.xlu0 %3978
  %v3983 = vsel %vm877, %v3966, %v3975
  %v3984 = vsel %vm877, %v3968, %v3977
  %v3985 = vsel %vm877, %v3970, %v3979
  %v3986 = vsel %vm881, %v3983, %v3959
  %v3987 = vsel %vm881, %v3984, %v3960
  %v3988 = vsel %vm881, %v3985, %v3961
  %v3989 = vmul.f32 %v3986, %v681
  %v3990 = vmul.f32 %v3987, %v682
  %v3991 = vmul.f32 %v3988, %v683
  %v3993 = vsel %vm687, %v3989, 0
  %v3996 = vsel %vm687, %v3990, 0
  %v3999 = vsel %vm687, %v3991, 0
  %4001 = vmatprep.subr.mxu0 0.0
  %4002 = vmatpush1.msra.mxu0 %v671
  %4003 = vmatprep.subr.mxu0 0.0
  %4004 = vmatpush1.msra.mxu0 %v672
  %4005 = vmatprep.subr.mxu0 0.0
  %4006 = vmatpush1.msra.mxu0 %v673
  %4007 = vmatprep.subr.mxu0 0.0
  %4008 = vmatpush1.msra.mxu0 %v674
  %4009 = vmatprep.subr.mxu0 0.0
  %4010 = vmatpush1.msra.mxu0 %v675
  %4011 = vmatprep.subr.mxu0 0.0
  %4012 = vmatpush1.msra.mxu0 %v676
  %4013 = vmatprep.subr.mxu0 0.0
  %4014 = vmatpush1.msra.mxu0 %v677
  %4015 = vmatprep.subr.mxu0 0.0
  %4016 = vmatpush1.msra.mxu0 %v678
  %4017 = vmatprep.subr.mxu0 0.0
  %4018 = vmatpush1.msra.mxu0 %v679
  %4019 = vmatprep.subr.mxu0 0.0
  %4020 = vmatpush1.msra.mxu0 %v699
  %4021 = vmatprep.subr.mxu0 0.0
  %4022 = vmatpush1.msra.mxu0 0.0
  %4023 = vmatprep.subr.mxu0 0.0
  %4024 = vmatpush1.msra.mxu0 0.0
  %4025 = vmatprep.subr.mxu0 0.0
  %4026 = vmatpush1.msra.mxu0 0.0
  %4027 = vmatprep.subr.mxu0 0.0
  %4028 = vmatpush1.msra.mxu0 0.0
  %4029 = vmatprep.subr.mxu0 0.0
  %4030 = vmatpush1.msra.mxu0 0.0
  %4031 = vmatprep.subr.mxu0 0.0
  %4032 = vmatpush1.msra.mxu0 0.0
  %4033 = vmatprep.subr.mxu0 0.0
  %4034 = vmatpush1.msra.mxu0 0.0
  %4035 = vmatprep.subr.mxu0 0.0
  %4036 = vmatpush1.msra.mxu0 0.0
  %4037 = vmatprep.subr.mxu0 0.0
  %4038 = vmatpush1.msra.mxu0 0.0
  %4039 = vmatprep.subr.mxu0 0.0
  %4040 = vmatpush1.msra.mxu0 0.0
  %4041 = vmatprep.subr.mxu0 0.0
  %4042 = vmatpush1.msra.mxu0 0.0
  %4043 = vmatprep.subr.mxu0 0.0
  %4044 = vmatpush1.msra.mxu0 0.0
  %4045 = vmatprep.subr.mxu0 0.0
  %4046 = vmatpush1.msra.mxu0 0.0
  %4047 = vmatprep.subr.mxu0 0.0
  %4048 = vmatpush1.msra.mxu0 0.0
  %4049 = vmatprep.subr.mxu0 0.0
  %4050 = vmatpush1.msra.mxu0 0.0
  %4051 = vmatprep.subr.mxu0 0.0
  %4052 = vmatpush1.msra.mxu0 0.0
  %4053 = vmatprep.subr.mxu0 0.0
  %4054 = vmatpush1.msra.mxu0 0.0
  %4055 = vmatprep.subr.mxu0 0.0
  %4056 = vmatpush1.msra.mxu0 0.0
  %4057 = vmatprep.subr.mxu0 0.0
  %4058 = vmatpush1.msra.mxu0 0.0
  %4059 = vmatprep.subr.mxu0 0.0
  %4060 = vmatpush1.msra.mxu0 0.0
  %4061 = vmatprep.subr.mxu0 0.0
  %4062 = vmatpush1.msra.mxu0 0.0
  %4063 = vmatprep.subr.mxu0 0.0
  %4064 = vmatpush1.msra.mxu0 0.0
  %4065 = vmatprep.mubr.f32.mxu0 0.0
  %4066 = vmatmul.mubr.f32.gmra.mrb[0].mxu0 %v3993
  %v4067 = vpop.f32.mrb[0].mxu0
  %v4068 = vadd.f32 0.0, %v4067
  %v4069 = vpop.f32.mrb[0].mxu0
  %4070 = vmatprep.mubr.f32.mxu0 0.0
  %4071 = vmatmul.mubr.f32.gmra.mrb[0].mxu0 %v3996
  %v4072 = vpop.f32.mrb[0].mxu0
  %v4073 = vadd.f32 0.0, %v4072
  %v4074 = vpop.f32.mrb[0].mxu0
  %4075 = vmatprep.mubr.f32.mxu0 0.0
  %4076 = vmatmul.mubr.f32.gmra.mrb[0].mxu0 %v3999
  %v4077 = vpop.f32.mrb[0].mxu0
  %v4078 = vadd.f32 0.0, %v4077
  %v4079 = vpop.f32.mrb[0].mxu0
  %4080 = vdwg.mxu0
  %v4081 = vadd.f32 %v628, %v4068
  %v4082 = vadd.f32 %v633, %v4073
  %v4083 = vadd.f32 %v638, %v4078
  %v4084 = vxor.u32 %v4081, 2147483648
  %v4085 = vxor.u32 %v4082, 2147483648
  %v4086 = vxor.u32 %v4083, 2147483648
  %v4087 = vmul.f32 %v4084, 1.442695
  %v4088 = vpow.pop %v4087
  %v4089 = vmul.f32 %v4085, 1.442695
  %v4090 = vpow.pop %v4089
  %v4091 = vmul.f32 %v4086, 1.442695
  %v4092 = vpow.pop %v4091
  %v4093 = vadd.f32 %v4088, 1.0
  %v4094 = vadd.f32 %v4090, 1.0
  %v4095 = vadd.f32 %v4092, 1.0
  %v4096 = vrcp.pop %v4093
  %v4097 = vmul.f32 1.0, %v4096
  %v4098 = vrcp.pop %v4094
  %v4099 = vmul.f32 1.0, %v4098
  %v4100 = vrcp.pop %v4095
  %v4101 = vmul.f32 1.0, %v4100
  %v4102 = vtanh.pop %v4081
  %v4103 = vtanh.pop %v4082
  %v4104 = vtanh.pop %v4083
  %v4105 = vmul.f32 %v4097, %v3941
  %v4106 = vmul.f32 %v4099, %v3942
  %v4107 = vmul.f32 %v4101, %v3943
  %4111 = vrot.lane.b32.xlu0 %v4102, 53
  %v4112 = vpop.permute.xlu0 %4111
  %4113 = vrot.lane.b32.xlu0 %v4103, 53
  %v4114 = vpop.permute.xlu0 %4113
  %4115 = vrot.lane.b32.xlu0 %v4104, 53
  %v4116 = vpop.permute.xlu0 %4115
  %v4120 = vmul.f32 %v4097, %v4112
  %v4121 = vmul.f32 %v4099, %v4114
  %v4122 = vmul.f32 %v4101, %v4116
  %4126 = vrot.lane.b32.xlu0 %v4120, 25
  %v4127 = vpop.permute.xlu0 %4126
  %4128 = vrot.lane.b32.xlu0 %v4121, 25
  %v4129 = vpop.permute.xlu0 %4128
  %4130 = vrot.lane.b32.xlu0 %v4122, 25
  %v4131 = vpop.permute.xlu0 %4130
  %v4135 = vadd.f32 %v4105, %v4127
  %v4136 = vadd.f32 %v4106, %v4129
  %v4137 = vadd.f32 %v4107, %v4131
  %v4138 = vtanh.pop %v4135
  %v4139 = vtanh.pop %v4136
  %v4140 = vtanh.pop %v4137
  %4144 = vrot.lane.b32.xlu0 %v4138, 25
  %v4145 = vpop.permute.xlu0 %4144
  %4146 = vrot.lane.b32.xlu0 %v4139, 25
  %v4147 = vpop.permute.xlu0 %4146
  %4148 = vrot.lane.b32.xlu0 %v4140, 25
  %v4149 = vpop.permute.xlu0 %4148
  %v4153 = vmul.f32 %v4097, %v4145
  %v4154 = vmul.f32 %v4099, %v4147
  %v4155 = vmul.f32 %v4101, %v4149
  %4159 = vrot.lane.b32.xlu0 %v4153, 78
  %v4160 = vpop.permute.xlu0 %4159
  %4161 = vrot.lane.b32.xlu0 %v4154, 78
  %v4162 = vpop.permute.xlu0 %4161
  %4163 = vrot.lane.b32.xlu0 %v4155, 78
  %v4164 = vpop.permute.xlu0 %4163
  %4168 = vrot.lane.b32.xlu0 %v4153, 103
  %v4169 = vpop.permute.xlu0 %4168
  %4170 = vrot.lane.b32.xlu0 %v4154, 103
  %v4171 = vpop.permute.xlu0 %4170
  %4172 = vrot.lane.b32.xlu0 %v4155, 103
  %v4173 = vpop.permute.xlu0 %4172
  %v4177 = vsel %vm877, %v4160, %v4169
  %v4178 = vsel %vm877, %v4162, %v4171
  %v4179 = vsel %vm877, %v4164, %v4173
  %v4180 = vsel %vm881, %v4177, %v4153
  %v4181 = vsel %vm881, %v4178, %v4154
  %v4182 = vsel %vm881, %v4179, %v4155
  %v4183 = vmul.f32 %v4180, %v681
  %v4184 = vmul.f32 %v4181, %v682
  %v4185 = vmul.f32 %v4182, %v683
  %v4187 = vsel %vm687, %v4183, 0
  %v4190 = vsel %vm687, %v4184, 0
  %v4193 = vsel %vm687, %v4185, 0
  %4195 = vmatprep.subr.mxu0 0.0
  %4196 = vmatpush1.msra.mxu0 %v671
  %4197 = vmatprep.subr.mxu0 0.0
  %4198 = vmatpush1.msra.mxu0 %v672
  %4199 = vmatprep.subr.mxu0 0.0
  %4200 = vmatpush1.msra.mxu0 %v673
  %4201 = vmatprep.subr.mxu0 0.0
  %4202 = vmatpush1.msra.mxu0 %v674
  %4203 = vmatprep.subr.mxu0 0.0
  %4204 = vmatpush1.msra.mxu0 %v675
  %4205 = vmatprep.subr.mxu0 0.0
  %4206 = vmatpush1.msra.mxu0 %v676
  %4207 = vmatprep.subr.mxu0 0.0
  %4208 = vmatpush1.msra.mxu0 %v677
  %4209 = vmatprep.subr.mxu0 0.0
  %4210 = vmatpush1.msra.mxu0 %v678
  %4211 = vmatprep.subr.mxu0 0.0
  %4212 = vmatpush1.msra.mxu0 %v679
  %4213 = vmatprep.subr.mxu0 0.0
  %4214 = vmatpush1.msra.mxu0 %v699
  %4215 = vmatprep.subr.mxu0 0.0
  %4216 = vmatpush1.msra.mxu0 0.0
  %4217 = vmatprep.subr.mxu0 0.0
  %4218 = vmatpush1.msra.mxu0 0.0
  %4219 = vmatprep.subr.mxu0 0.0
  %4220 = vmatpush1.msra.mxu0 0.0
  %4221 = vmatprep.subr.mxu0 0.0
  %4222 = vmatpush1.msra.mxu0 0.0
  %4223 = vmatprep.subr.mxu0 0.0
  %4224 = vmatpush1.msra.mxu0 0.0
  %4225 = vmatprep.subr.mxu0 0.0
  %4226 = vmatpush1.msra.mxu0 0.0
  %4227 = vmatprep.subr.mxu0 0.0
  %4228 = vmatpush1.msra.mxu0 0.0
  %4229 = vmatprep.subr.mxu0 0.0
  %4230 = vmatpush1.msra.mxu0 0.0
  %4231 = vmatprep.subr.mxu0 0.0
  %4232 = vmatpush1.msra.mxu0 0.0
  %4233 = vmatprep.subr.mxu0 0.0
  %4234 = vmatpush1.msra.mxu0 0.0
  %4235 = vmatprep.subr.mxu0 0.0
  %4236 = vmatpush1.msra.mxu0 0.0
  %4237 = vmatprep.subr.mxu0 0.0
  %4238 = vmatpush1.msra.mxu0 0.0
  %4239 = vmatprep.subr.mxu0 0.0
  %4240 = vmatpush1.msra.mxu0 0.0
  %4241 = vmatprep.subr.mxu0 0.0
  %4242 = vmatpush1.msra.mxu0 0.0
  %4243 = vmatprep.subr.mxu0 0.0
  %4244 = vmatpush1.msra.mxu0 0.0
  %4245 = vmatprep.subr.mxu0 0.0
  %4246 = vmatpush1.msra.mxu0 0.0
  %4247 = vmatprep.subr.mxu0 0.0
  %4248 = vmatpush1.msra.mxu0 0.0
  %4249 = vmatprep.subr.mxu0 0.0
  %4250 = vmatpush1.msra.mxu0 0.0
  %4251 = vmatprep.subr.mxu0 0.0
  %4252 = vmatpush1.msra.mxu0 0.0
  %4253 = vmatprep.subr.mxu0 0.0
  %4254 = vmatpush1.msra.mxu0 0.0
  %4255 = vmatprep.subr.mxu0 0.0
  %4256 = vmatpush1.msra.mxu0 0.0
  %4257 = vmatprep.subr.mxu0 0.0
  %4258 = vmatpush1.msra.mxu0 0.0
  %4259 = vmatprep.mubr.f32.mxu0 0.0
  %4260 = vmatmul.mubr.f32.gmra.mrb[0].mxu0 %v4187
  %v4261 = vpop.f32.mrb[0].mxu0
  %v4262 = vadd.f32 0.0, %v4261
  %v4263 = vpop.f32.mrb[0].mxu0
  %4264 = vmatprep.mubr.f32.mxu0 0.0
  %4265 = vmatmul.mubr.f32.gmra.mrb[0].mxu0 %v4190
  %v4266 = vpop.f32.mrb[0].mxu0
  %v4267 = vadd.f32 0.0, %v4266
  %v4268 = vpop.f32.mrb[0].mxu0
  %4269 = vmatprep.mubr.f32.mxu0 0.0
  %4270 = vmatmul.mubr.f32.gmra.mrb[0].mxu0 %v4193
  %v4271 = vpop.f32.mrb[0].mxu0
  %v4272 = vadd.f32 0.0, %v4271
  %v4273 = vpop.f32.mrb[0].mxu0
  %4274 = vdwg.mxu0
  %v4275 = vadd.f32 %v643, %v4262
  %v4276 = vadd.f32 %v648, %v4267
  %v4277 = vadd.f32 %v653, %v4272
  %v4278 = vxor.u32 %v4275, 2147483648
  %v4279 = vxor.u32 %v4276, 2147483648
  %v4280 = vxor.u32 %v4277, 2147483648
  %v4281 = vmul.f32 %v4278, 1.442695
  %v4282 = vpow.pop %v4281
  %v4283 = vmul.f32 %v4279, 1.442695
  %v4284 = vpow.pop %v4283
  %v4285 = vmul.f32 %v4280, 1.442695
  %v4286 = vpow.pop %v4285
  %v4287 = vadd.f32 %v4282, 1.0
  %v4288 = vadd.f32 %v4284, 1.0
  %v4289 = vadd.f32 %v4286, 1.0
  %v4290 = vrcp.pop %v4287
  %v4291 = vmul.f32 1.0, %v4290
  %v4292 = vrcp.pop %v4288
  %v4293 = vmul.f32 1.0, %v4292
  %v4294 = vrcp.pop %v4289
  %v4295 = vmul.f32 1.0, %v4294
  %v4296 = vtanh.pop %v4275
  %v4297 = vtanh.pop %v4276
  %v4298 = vtanh.pop %v4277
  %v4299 = vmul.f32 %v4291, %v4135
  %v4300 = vmul.f32 %v4293, %v4136
  %v4301 = vmul.f32 %v4295, %v4137
  %4305 = vrot.lane.b32.xlu0 %v4296, 53
  %v4306 = vpop.permute.xlu0 %4305
  %4307 = vrot.lane.b32.xlu0 %v4297, 53
  %v4308 = vpop.permute.xlu0 %4307
  %4309 = vrot.lane.b32.xlu0 %v4298, 53
  %v4310 = vpop.permute.xlu0 %4309
  %v4314 = vmul.f32 %v4291, %v4306
  %v4315 = vmul.f32 %v4293, %v4308
  %v4316 = vmul.f32 %v4295, %v4310
  %4320 = vrot.lane.b32.xlu0 %v4314, 25
  %v4321 = vpop.permute.xlu0 %4320
  %4322 = vrot.lane.b32.xlu0 %v4315, 25
  %v4323 = vpop.permute.xlu0 %4322
  %4324 = vrot.lane.b32.xlu0 %v4316, 25
  %v4325 = vpop.permute.xlu0 %4324
  %v4329 = vadd.f32 %v4299, %v4321
  %v4330 = vadd.f32 %v4300, %v4323
  %v4331 = vadd.f32 %v4301, %v4325
  %v4332 = vtanh.pop %v4329
  %v4333 = vtanh.pop %v4330
  %v4334 = vtanh.pop %v4331
  %4338 = vrot.lane.b32.xlu0 %v4332, 25
  %v4339 = vpop.permute.xlu0 %4338
  %4340 = vrot.lane.b32.xlu0 %v4333, 25
  %v4341 = vpop.permute.xlu0 %4340
  %4342 = vrot.lane.b32.xlu0 %v4334, 25
  %v4343 = vpop.permute.xlu0 %4342
  %v4347 = vmul.f32 %v4291, %v4339
  %v4348 = vmul.f32 %v4293, %v4341
  %v4349 = vmul.f32 %v4295, %v4343
  %4353 = vrot.lane.b32.xlu0 %v4347, 78
  %v4354 = vpop.permute.xlu0 %4353
  %4355 = vrot.lane.b32.xlu0 %v4348, 78
  %v4356 = vpop.permute.xlu0 %4355
  %4357 = vrot.lane.b32.xlu0 %v4349, 78
  %v4358 = vpop.permute.xlu0 %4357
  %4362 = vrot.lane.b32.xlu0 %v4347, 103
  %v4363 = vpop.permute.xlu0 %4362
  %4364 = vrot.lane.b32.xlu0 %v4348, 103
  %v4365 = vpop.permute.xlu0 %4364
  %4366 = vrot.lane.b32.xlu0 %v4349, 103
  %v4367 = vpop.permute.xlu0 %4366
  %v4371 = vsel %vm877, %v4354, %v4363
  %v4372 = vsel %vm877, %v4356, %v4365
  %v4373 = vsel %vm877, %v4358, %v4367
  %v4374 = vsel %vm881, %v4371, %v4347
  %v4375 = vsel %vm881, %v4372, %v4348
  %v4376 = vsel %vm881, %v4373, %v4349
  %v4377 = vmul.f32 %v4374, %v681
  %v4378 = vmul.f32 %v4375, %v682
  %v4379 = vmul.f32 %v4376, %v683
  %v4381 = vsel %vm687, %v4377, 0
  %v4384 = vsel %vm687, %v4378, 0
  %v4387 = vsel %vm687, %v4379, 0
  %4389 = vmatprep.subr.mxu0 0.0
  %4390 = vmatpush1.msra.mxu0 %v671
  %4391 = vmatprep.subr.mxu0 0.0
  %4392 = vmatpush1.msra.mxu0 %v672
  %4393 = vmatprep.subr.mxu0 0.0
  %4394 = vmatpush1.msra.mxu0 %v673
  %4395 = vmatprep.subr.mxu0 0.0
  %4396 = vmatpush1.msra.mxu0 %v674
  %4397 = vmatprep.subr.mxu0 0.0
  %4398 = vmatpush1.msra.mxu0 %v675
  %4399 = vmatprep.subr.mxu0 0.0
  %4400 = vmatpush1.msra.mxu0 %v676
  %4401 = vmatprep.subr.mxu0 0.0
  %4402 = vmatpush1.msra.mxu0 %v677
  %4403 = vmatprep.subr.mxu0 0.0
  %4404 = vmatpush1.msra.mxu0 %v678
  %4405 = vmatprep.subr.mxu0 0.0
  %4406 = vmatpush1.msra.mxu0 %v679
  %4407 = vmatprep.subr.mxu0 0.0
  %4408 = vmatpush1.msra.mxu0 %v699
  %4409 = vmatprep.subr.mxu0 0.0
  %4410 = vmatpush1.msra.mxu0 0.0
  %4411 = vmatprep.subr.mxu0 0.0
  %4412 = vmatpush1.msra.mxu0 0.0
  %4413 = vmatprep.subr.mxu0 0.0
  %4414 = vmatpush1.msra.mxu0 0.0
  %4415 = vmatprep.subr.mxu0 0.0
  %4416 = vmatpush1.msra.mxu0 0.0
  %4417 = vmatprep.subr.mxu0 0.0
  %4418 = vmatpush1.msra.mxu0 0.0
  %4419 = vmatprep.subr.mxu0 0.0
  %4420 = vmatpush1.msra.mxu0 0.0
  %4421 = vmatprep.subr.mxu0 0.0
  %4422 = vmatpush1.msra.mxu0 0.0
  %4423 = vmatprep.subr.mxu0 0.0
  %4424 = vmatpush1.msra.mxu0 0.0
  %4425 = vmatprep.subr.mxu0 0.0
  %4426 = vmatpush1.msra.mxu0 0.0
  %4427 = vmatprep.subr.mxu0 0.0
  %4428 = vmatpush1.msra.mxu0 0.0
  %4429 = vmatprep.subr.mxu0 0.0
  %4430 = vmatpush1.msra.mxu0 0.0
  %4431 = vmatprep.subr.mxu0 0.0
  %4432 = vmatpush1.msra.mxu0 0.0
  %4433 = vmatprep.subr.mxu0 0.0
  %4434 = vmatpush1.msra.mxu0 0.0
  %4435 = vmatprep.subr.mxu0 0.0
  %4436 = vmatpush1.msra.mxu0 0.0
  %4437 = vmatprep.subr.mxu0 0.0
  %4438 = vmatpush1.msra.mxu0 0.0
  %4439 = vmatprep.subr.mxu0 0.0
  %4440 = vmatpush1.msra.mxu0 0.0
  %4441 = vmatprep.subr.mxu0 0.0
  %4442 = vmatpush1.msra.mxu0 0.0
  %4443 = vmatprep.subr.mxu0 0.0
  %4444 = vmatpush1.msra.mxu0 0.0
  %4445 = vmatprep.subr.mxu0 0.0
  %4446 = vmatpush1.msra.mxu0 0.0
  %4447 = vmatprep.subr.mxu0 0.0
  %4448 = vmatpush1.msra.mxu0 0.0
  %4449 = vmatprep.subr.mxu0 0.0
  %4450 = vmatpush1.msra.mxu0 0.0
  %4451 = vmatprep.subr.mxu0 0.0
  %4452 = vmatpush1.msra.mxu0 0.0
  %4453 = vmatprep.mubr.f32.mxu0 0.0
  %4454 = vmatmul.mubr.f32.gmra.mrb[0].mxu0 %v4381
  %v4455 = vpop.f32.mrb[0].mxu0
  %v4456 = vadd.f32 0.0, %v4455
  %v4457 = vpop.f32.mrb[0].mxu0
  %4458 = vmatprep.mubr.f32.mxu0 0.0
  %4459 = vmatmul.mubr.f32.gmra.mrb[0].mxu0 %v4384
  %v4460 = vpop.f32.mrb[0].mxu0
  %v4461 = vadd.f32 0.0, %v4460
  %v4462 = vpop.f32.mrb[0].mxu0
  %4463 = vmatprep.mubr.f32.mxu0 0.0
  %4464 = vmatmul.mubr.f32.gmra.mrb[0].mxu0 %v4387
  %v4465 = vpop.f32.mrb[0].mxu0
  %v4466 = vadd.f32 0.0, %v4465
  %v4467 = vpop.f32.mrb[0].mxu0
  %4468 = vdwg.mxu0
  %v4469 = vadd.f32 %v658, %v4456
  %v4470 = vadd.f32 %v663, %v4461
  %v4471 = vadd.f32 %v668, %v4466
  %v4472 = vxor.u32 %v4469, 2147483648
  %v4473 = vxor.u32 %v4470, 2147483648
  %v4474 = vxor.u32 %v4471, 2147483648
  %v4475 = vmul.f32 %v4472, 1.442695
  %v4476 = vpow.pop %v4475
  %v4477 = vmul.f32 %v4473, 1.442695
  %v4478 = vpow.pop %v4477
  %v4479 = vmul.f32 %v4474, 1.442695
  %v4480 = vpow.pop %v4479
  %v4481 = vadd.f32 %v4476, 1.0
  %v4482 = vadd.f32 %v4478, 1.0
  %v4483 = vadd.f32 %v4480, 1.0
  %v4484 = vrcp.pop %v4481
  %v4485 = vmul.f32 1.0, %v4484
  %v4486 = vrcp.pop %v4482
  %v4487 = vmul.f32 1.0, %v4486
  %v4488 = vrcp.pop %v4483
  %v4489 = vmul.f32 1.0, %v4488
  %v4490 = vtanh.pop %v4469
  %v4491 = vtanh.pop %v4470
  %v4492 = vtanh.pop %v4471
  %v4493 = vmul.f32 %v4485, %v4329
  %v4494 = vmul.f32 %v4487, %v4330
  %v4495 = vmul.f32 %v4489, %v4331
  %4499 = vrot.lane.b32.xlu0 %v4490, 53
  %v4500 = vpop.permute.xlu0 %4499
  %4501 = vrot.lane.b32.xlu0 %v4491, 53
  %v4502 = vpop.permute.xlu0 %4501
  %4503 = vrot.lane.b32.xlu0 %v4492, 53
  %v4504 = vpop.permute.xlu0 %4503
  %v4508 = vmul.f32 %v4485, %v4500
  %v4509 = vmul.f32 %v4487, %v4502
  %v4510 = vmul.f32 %v4489, %v4504
  %4514 = vrot.lane.b32.xlu0 %v4508, 25
  %v4515 = vpop.permute.xlu0 %4514
  %4516 = vrot.lane.b32.xlu0 %v4509, 25
  %v4517 = vpop.permute.xlu0 %4516
  %4518 = vrot.lane.b32.xlu0 %v4510, 25
  %v4519 = vpop.permute.xlu0 %4518
  %v4523 = vadd.f32 %v4493, %v4515
  %v4524 = vadd.f32 %v4494, %v4517
  %v4525 = vadd.f32 %v4495, %v4519
  %v4526 = vtanh.pop %v4523
  %4528 = vrot.lane.b32.xlu0 %v4526, 25
  %v4529 = vpop.permute.xlu0 %4528
  %v4531 = vmul.f32 %v4485, %v4529
  %v4533 = vrot.slane %v4524, 2
  %vm4536 = vcmask 1045504
  %v4537 = vrot.slane %v4525, 2
  %v4538 = vsel %vm4536, %v4533, %v4537
  %v4541 = vrot.slane %v4523, 2
  %v4542 = vsel %vm4536, %v4541, %v4533
  %vm4544 = vcmask 1041408
  %v4545 = vsel %vm4544, %v4533, %v4538
  %4547 = vrot.lane.b32.xlu0 %v4545, 103
  %v4548 = vpop.permute.xlu0 %4547
  %4549 = vrot.lane.b32.xlu0 %v4542, 103
  %v4550 = vpop.permute.xlu0 %4549
  %4553 = vrot.lane.b32.xlu0 %v4545, 25
  %v4554 = vpop.permute.xlu0 %4553
  %4555 = vrot.lane.b32.xlu0 %v4542, 25
  %v4556 = vpop.permute.xlu0 %4555
  %v4559 = vsel %vm877, %v4548, %v4545
  %v4560 = vsel %vm877, %v4550, %v4542
  %v4561 = vsel %vm881, %v4559, %v4554
  %v4562 = vsel %vm881, %v4560, %v4556
  %v4563 = vld [vmem:[%s11] sm:$0xff]
  %v4564 = vld [vmem:[%s11 + $0x8] sm:$0xff]
  %v4565 = vmul.f32 %v4561, %v4563
  %v4566 = vmul.f32 %v4562, %v4564
  %v4567 = vld [vmem:[%s7] sm:$0xff]
  %v4568 = vld [vmem:[%s7 + $0x8] sm:$0xff]
  %v4569 = vld [vmem:[%s7 + $0x10] sm:$0xff]
  %v4570 = vld [vmem:[%s7 + $0x18] sm:$0xff]
  %v4571 = vld [vmem:[%s7 + $0x20] sm:$0xff]
  %v4572 = vld [vmem:[%s7 + $0x28] sm:$0xff]
  %v4573 = vld [vmem:[%s7 + $0x30] sm:$0xff]
  %v4574 = vld [vmem:[%s7 + $0x38] sm:$0xff]
  %v4575 = vld [vmem:[%s7 + $0x40] sm:$0xff]
  %v4576 = vld [vmem:[%s7 + $0x48] sm:$0x7]
  %v4578 = vsel %vm687, %v4565, 0
  %v4581 = vsel %vm687, %v4566, 0
  %v4584 = vsel %vm697, %v4576, 0
  %4586 = vmatprep.subr.mxu0 0.0
  %4587 = vmatpush1.msra.mxu0 %v4567
  %4588 = vmatprep.subr.mxu0 0.0
  %4589 = vmatpush1.msra.mxu0 %v4568
  %4590 = vmatprep.subr.mxu0 0.0
  %4591 = vmatpush1.msra.mxu0 %v4569
  %4592 = vmatprep.subr.mxu0 0.0
  %4593 = vmatpush1.msra.mxu0 %v4570
  %4594 = vmatprep.subr.mxu0 0.0
  %4595 = vmatpush1.msra.mxu0 %v4571
  %4596 = vmatprep.subr.mxu0 0.0
  %4597 = vmatpush1.msra.mxu0 %v4572
  %4598 = vmatprep.subr.mxu0 0.0
  %4599 = vmatpush1.msra.mxu0 %v4573
  %4600 = vmatprep.subr.mxu0 0.0
  %4601 = vmatpush1.msra.mxu0 %v4574
  %4602 = vmatprep.subr.mxu0 0.0
  %4603 = vmatpush1.msra.mxu0 %v4575
  %4604 = vmatprep.subr.mxu0 0.0
  %4605 = vmatpush1.msra.mxu0 %v4584
  %4606 = vmatprep.subr.mxu0 0.0
  %4607 = vmatpush1.msra.mxu0 0.0
  %4608 = vmatprep.subr.mxu0 0.0
  %4609 = vmatpush1.msra.mxu0 0.0
  %4610 = vmatprep.subr.mxu0 0.0
  %4611 = vmatpush1.msra.mxu0 0.0
  %4612 = vmatprep.subr.mxu0 0.0
  %4613 = vmatpush1.msra.mxu0 0.0
  %4614 = vmatprep.subr.mxu0 0.0
  %4615 = vmatpush1.msra.mxu0 0.0
  %4616 = vmatprep.subr.mxu0 0.0
  %4617 = vmatpush1.msra.mxu0 0.0
  %4618 = vmatprep.subr.mxu0 0.0
  %4619 = vmatpush1.msra.mxu0 0.0
  %4620 = vmatprep.subr.mxu0 0.0
  %4621 = vmatpush1.msra.mxu0 0.0
  %4622 = vmatprep.subr.mxu0 0.0
  %4623 = vmatpush1.msra.mxu0 0.0
  %4624 = vmatprep.subr.mxu0 0.0
  %4625 = vmatpush1.msra.mxu0 0.0
  %4626 = vmatprep.subr.mxu0 0.0
  %4627 = vmatpush1.msra.mxu0 0.0
  %4628 = vmatprep.subr.mxu0 0.0
  %4629 = vmatpush1.msra.mxu0 0.0
  %4630 = vmatprep.subr.mxu0 0.0
  %4631 = vmatpush1.msra.mxu0 0.0
  %4632 = vmatprep.subr.mxu0 0.0
  %4633 = vmatpush1.msra.mxu0 0.0
  %4634 = vmatprep.subr.mxu0 0.0
  %4635 = vmatpush1.msra.mxu0 0.0
  %4636 = vmatprep.subr.mxu0 0.0
  %4637 = vmatpush1.msra.mxu0 0.0
  %4638 = vmatprep.subr.mxu0 0.0
  %4639 = vmatpush1.msra.mxu0 0.0
  %4640 = vmatprep.subr.mxu0 0.0
  %4641 = vmatpush1.msra.mxu0 0.0
  %4642 = vmatprep.subr.mxu0 0.0
  %4643 = vmatpush1.msra.mxu0 0.0
  %4644 = vmatprep.subr.mxu0 0.0
  %4645 = vmatpush1.msra.mxu0 0.0
  %4646 = vmatprep.subr.mxu0 0.0
  %4647 = vmatpush1.msra.mxu0 0.0
  %4648 = vmatprep.subr.mxu0 0.0
  %4649 = vmatpush1.msra.mxu0 0.0
  %4650 = vmatprep.mubr.f32.mxu0 0.0
  %4651 = vmatmul.mubr.f32.gmra.mrb[0].mxu0 %v4578
  %v4652 = vpop.f32.mrb[0].mxu0
  %v4653 = vadd.f32 0.0, %v4652
  %v4654 = vpop.f32.mrb[0].mxu0
  %4655 = vmatprep.mubr.f32.mxu0 0.0
  %4656 = vmatmul.mubr.f32.gmra.mrb[0].mxu0 %v4581
  %v4657 = vpop.f32.mrb[0].mxu0
  %v4658 = vadd.f32 0.0, %v4657
  %v4659 = vpop.f32.mrb[0].mxu0
  %4660 = vdwg.mxu0
  %v4661 = vld [vmem:[%s8] sm:$0xff]
  %v4662 = vld [vmem:[%s8 + $0x8] sm:$0xff]
  %v4663 = vld [vmem:[%s8 + $0x10] sm:$0xff]
  %v4664 = vld [vmem:[%s8 + $0x18] sm:$0xff]
  %v4665 = vld [vmem:[%s8 + $0x20] sm:$0xff]
  %v4666 = vld [vmem:[%s8 + $0x28] sm:$0xff]
  %v4667 = vld [vmem:[%s8 + $0x30] sm:$0xff]
  %v4668 = vld [vmem:[%s8 + $0x38] sm:$0xff]
  %v4669 = vld [vmem:[%s8 + $0x40] sm:$0xff]
  %v4670 = vld [vmem:[%s8 + $0x48] sm:$0x7]
  %v4671 = vld [vmem:[%s9] sm:$0xff]
  %v4672 = vld [vmem:[%s9 + $0x8] sm:$0xff]
  %v4673 = vld [vmem:[%s9 + $0x10] sm:$0xff]
  %v4674 = vld [vmem:[%s9 + $0x18] sm:$0x1]
  %4675 = vrot.lane.b32.xlu0 %v4523, 103
  %v4676 = vpop.permute.xlu0 %4675
  %v4677 = vsel %vm877, %v4676, 0
  %v4680 = vsel %vm302, %v4674, 0
  %4682 = vmatprep.subr.mxu0 0.0
  %4683 = vmatpush1.msra.mxu0 %v4671
  %4684 = vmatprep.subr.mxu0 0.0
  %4685 = vmatpush1.msra.mxu0 %v4672
  %4686 = vmatprep.subr.mxu0 0.0
  %4687 = vmatpush1.msra.mxu0 %v4673
  %4688 = vmatprep.subr.mxu0 0.0
  %4689 = vmatpush1.msra.mxu0 %v4680
  %4690 = vmatprep.subr.mxu0 0.0
  %4691 = vmatpush1.msra.mxu0 0.0
  %4692 = vmatprep.subr.mxu0 0.0
  %4693 = vmatpush1.msra.mxu0 0.0
  %4694 = vmatprep.subr.mxu0 0.0
  %4695 = vmatpush1.msra.mxu0 0.0
  %4696 = vmatprep.subr.mxu0 0.0
  %4697 = vmatpush1.msra.mxu0 0.0
  %4698 = vmatprep.subr.mxu0 0.0
  %4699 = vmatpush1.msra.mxu0 0.0
  %4700 = vmatprep.subr.mxu0 0.0
  %4701 = vmatpush1.msra.mxu0 0.0
  %4702 = vmatprep.subr.mxu0 0.0
  %4703 = vmatpush1.msra.mxu0 0.0
  %4704 = vmatprep.subr.mxu0 0.0
  %4705 = vmatpush1.msra.mxu0 0.0
  %4706 = vmatprep.subr.mxu0 0.0
  %4707 = vmatpush1.msra.mxu0 0.0
  %4708 = vmatprep.subr.mxu0 0.0
  %4709 = vmatpush1.msra.mxu0 0.0
  %4710 = vmatprep.subr.mxu0 0.0
  %4711 = vmatpush1.msra.mxu0 0.0
  %4712 = vmatprep.subr.mxu0 0.0
  %4713 = vmatpush1.msra.mxu0 0.0
  %4714 = vmatprep.subr.mxu0 0.0
  %4715 = vmatpush1.msra.mxu0 0.0
  %4716 = vmatprep.subr.mxu0 0.0
  %4717 = vmatpush1.msra.mxu0 0.0
  %4718 = vmatprep.subr.mxu0 0.0
  %4719 = vmatpush1.msra.mxu0 0.0
  %4720 = vmatprep.subr.mxu0 0.0
  %4721 = vmatpush1.msra.mxu0 0.0
  %4722 = vmatprep.subr.mxu0 0.0
  %4723 = vmatpush1.msra.mxu0 0.0
  %4724 = vmatprep.subr.mxu0 0.0
  %4725 = vmatpush1.msra.mxu0 0.0
  %4726 = vmatprep.subr.mxu0 0.0
  %4727 = vmatpush1.msra.mxu0 0.0
  %4728 = vmatprep.subr.mxu0 0.0
  %4729 = vmatpush1.msra.mxu0 0.0
  %4730 = vmatprep.subr.mxu0 0.0
  %4731 = vmatpush1.msra.mxu0 0.0
  %4732 = vmatprep.subr.mxu0 0.0
  %4733 = vmatpush1.msra.mxu0 0.0
  %4734 = vmatprep.subr.mxu0 0.0
  %4735 = vmatpush1.msra.mxu0 0.0
  %4736 = vmatprep.subr.mxu0 0.0
  %4737 = vmatpush1.msra.mxu0 0.0
  %4738 = vmatprep.subr.mxu0 0.0
  %4739 = vmatpush1.msra.mxu0 0.0
  %4740 = vmatprep.subr.mxu0 0.0
  %4741 = vmatpush1.msra.mxu0 0.0
  %4742 = vmatprep.subr.mxu0 0.0
  %4743 = vmatpush1.msra.mxu0 0.0
  %4744 = vmatprep.subr.mxu0 0.0
  %4745 = vmatpush1.msra.mxu0 0.0
  %4746 = vmatprep.mubr.f32.mxu0 0.0
  %4747 = vmatmul.mubr.f32.gmra.mrb[0].mxu0 %v4677
  %v4748 = vpop.f32.mrb[0].mxu0
  %v4749 = vadd.f32 0.0, %v4748
  %v4750 = vpop.f32.mrb[0].mxu0
  %4751 = vdwg.mxu0
  %s4752 = scalar_lea.vmem %s9, 32
  %v4753 = vld [vmem:[%s4752] sm:$0xff]
  %v4754 = vld [vmem:[%s4752 + $0x8] sm:$0xff]
  %v4755 = vld [vmem:[%s4752 + $0x10] sm:$0xff]
  %v4756 = vld [vmem:[%s4752 + $0x18] sm:$0x1]
  %v4758 = vsel %vm302, %v4756, 0
  %4760 = vmatprep.subr.mxu0 0.0
  %4761 = vmatpush1.msra.mxu0 %v4753
  %4762 = vmatprep.subr.mxu0 0.0
  %4763 = vmatpush1.msra.mxu0 %v4754
  %4764 = vmatprep.subr.mxu0 0.0
  %4765 = vmatpush1.msra.mxu0 %v4755
  %4766 = vmatprep.subr.mxu0 0.0
  %4767 = vmatpush1.msra.mxu0 %v4758
  %4768 = vmatprep.subr.mxu0 0.0
  %4769 = vmatpush1.msra.mxu0 0.0
  %4770 = vmatprep.subr.mxu0 0.0
  %4771 = vmatpush1.msra.mxu0 0.0
  %4772 = vmatprep.subr.mxu0 0.0
  %4773 = vmatpush1.msra.mxu0 0.0
  %4774 = vmatprep.subr.mxu0 0.0
  %4775 = vmatpush1.msra.mxu0 0.0
  %4776 = vmatprep.subr.mxu0 0.0
  %4777 = vmatpush1.msra.mxu0 0.0
  %4778 = vmatprep.subr.mxu0 0.0
  %4779 = vmatpush1.msra.mxu0 0.0
  %4780 = vmatprep.subr.mxu0 0.0
  %4781 = vmatpush1.msra.mxu0 0.0
  %4782 = vmatprep.subr.mxu0 0.0
  %4783 = vmatpush1.msra.mxu0 0.0
  %4784 = vmatprep.subr.mxu0 0.0
  %4785 = vmatpush1.msra.mxu0 0.0
  %4786 = vmatprep.subr.mxu0 0.0
  %4787 = vmatpush1.msra.mxu0 0.0
  %4788 = vmatprep.subr.mxu0 0.0
  %4789 = vmatpush1.msra.mxu0 0.0
  %4790 = vmatprep.subr.mxu0 0.0
  %4791 = vmatpush1.msra.mxu0 0.0
  %4792 = vmatprep.subr.mxu0 0.0
  %4793 = vmatpush1.msra.mxu0 0.0
  %4794 = vmatprep.subr.mxu0 0.0
  %4795 = vmatpush1.msra.mxu0 0.0
  %4796 = vmatprep.subr.mxu0 0.0
  %4797 = vmatpush1.msra.mxu0 0.0
  %4798 = vmatprep.subr.mxu0 0.0
  %4799 = vmatpush1.msra.mxu0 0.0
  %4800 = vmatprep.subr.mxu0 0.0
  %4801 = vmatpush1.msra.mxu0 0.0
  %4802 = vmatprep.subr.mxu0 0.0
  %4803 = vmatpush1.msra.mxu0 0.0
  %4804 = vmatprep.subr.mxu0 0.0
  %4805 = vmatpush1.msra.mxu0 0.0
  %4806 = vmatprep.subr.mxu0 0.0
  %4807 = vmatpush1.msra.mxu0 0.0
  %4808 = vmatprep.subr.mxu0 0.0
  %4809 = vmatpush1.msra.mxu0 0.0
  %4810 = vmatprep.subr.mxu0 0.0
  %4811 = vmatpush1.msra.mxu0 0.0
  %4812 = vmatprep.subr.mxu0 0.0
  %4813 = vmatpush1.msra.mxu0 0.0
  %4814 = vmatprep.subr.mxu0 0.0
  %4815 = vmatpush1.msra.mxu0 0.0
  %4816 = vmatprep.subr.mxu0 0.0
  %4817 = vmatpush1.msra.mxu0 0.0
  %4818 = vmatprep.subr.mxu0 0.0
  %4819 = vmatpush1.msra.mxu0 0.0
  %4820 = vmatprep.subr.mxu0 0.0
  %4821 = vmatpush1.msra.mxu0 0.0
  %4822 = vmatprep.subr.mxu0 0.0
  %4823 = vmatpush1.msra.mxu0 0.0
  %4824 = vmatprep.mubr.f32.mxu0 0.0
  %4825 = vmatmul.mubr.f32.gmra.mrb[0].mxu0 %v4677
  %v4826 = vpop.f32.mrb[0].mxu0
  %v4827 = vadd.f32 0.0, %v4826
  %v4828 = vpop.f32.mrb[0].mxu0
  %4829 = vdwg.mxu0
  %s4830 = scalar_lea.vmem %s9, 64
  %v4831 = vld [vmem:[%s4830] sm:$0xff]
  %v4832 = vld [vmem:[%s4830 + $0x8] sm:$0xff]
  %v4833 = vld [vmem:[%s4830 + $0x10] sm:$0xff]
  %v4834 = vld [vmem:[%s4830 + $0x18] sm:$0x1]
  %v4836 = vsel %vm302, %v4834, 0
  %4838 = vmatprep.subr.mxu0 0.0
  %4839 = vmatpush1.msra.mxu0 %v4831
  %4840 = vmatprep.subr.mxu0 0.0
  %4841 = vmatpush1.msra.mxu0 %v4832
  %4842 = vmatprep.subr.mxu0 0.0
  %4843 = vmatpush1.msra.mxu0 %v4833
  %4844 = vmatprep.subr.mxu0 0.0
  %4845 = vmatpush1.msra.mxu0 %v4836
  %4846 = vmatprep.subr.mxu0 0.0
  %4847 = vmatpush1.msra.mxu0 0.0
  %4848 = vmatprep.subr.mxu0 0.0
  %4849 = vmatpush1.msra.mxu0 0.0
  %4850 = vmatprep.subr.mxu0 0.0
  %4851 = vmatpush1.msra.mxu0 0.0
  %4852 = vmatprep.subr.mxu0 0.0
  %4853 = vmatpush1.msra.mxu0 0.0
  %4854 = vmatprep.subr.mxu0 0.0
  %4855 = vmatpush1.msra.mxu0 0.0
  %4856 = vmatprep.subr.mxu0 0.0
  %4857 = vmatpush1.msra.mxu0 0.0
  %4858 = vmatprep.subr.mxu0 0.0
  %4859 = vmatpush1.msra.mxu0 0.0
  %4860 = vmatprep.subr.mxu0 0.0
  %4861 = vmatpush1.msra.mxu0 0.0
  %4862 = vmatprep.subr.mxu0 0.0
  %4863 = vmatpush1.msra.mxu0 0.0
  %4864 = vmatprep.subr.mxu0 0.0
  %4865 = vmatpush1.msra.mxu0 0.0
  %4866 = vmatprep.subr.mxu0 0.0
  %4867 = vmatpush1.msra.mxu0 0.0
  %4868 = vmatprep.subr.mxu0 0.0
  %4869 = vmatpush1.msra.mxu0 0.0
  %4870 = vmatprep.subr.mxu0 0.0
  %4871 = vmatpush1.msra.mxu0 0.0
  %4872 = vmatprep.subr.mxu0 0.0
  %4873 = vmatpush1.msra.mxu0 0.0
  %4874 = vmatprep.subr.mxu0 0.0
  %4875 = vmatpush1.msra.mxu0 0.0
  %4876 = vmatprep.subr.mxu0 0.0
  %4877 = vmatpush1.msra.mxu0 0.0
  %4878 = vmatprep.subr.mxu0 0.0
  %4879 = vmatpush1.msra.mxu0 0.0
  %4880 = vmatprep.subr.mxu0 0.0
  %4881 = vmatpush1.msra.mxu0 0.0
  %4882 = vmatprep.subr.mxu0 0.0
  %4883 = vmatpush1.msra.mxu0 0.0
  %4884 = vmatprep.subr.mxu0 0.0
  %4885 = vmatpush1.msra.mxu0 0.0
  %4886 = vmatprep.subr.mxu0 0.0
  %4887 = vmatpush1.msra.mxu0 0.0
  %4888 = vmatprep.subr.mxu0 0.0
  %4889 = vmatpush1.msra.mxu0 0.0
  %4890 = vmatprep.subr.mxu0 0.0
  %4891 = vmatpush1.msra.mxu0 0.0
  %4892 = vmatprep.subr.mxu0 0.0
  %4893 = vmatpush1.msra.mxu0 0.0
  %4894 = vmatprep.subr.mxu0 0.0
  %4895 = vmatpush1.msra.mxu0 0.0
  %4896 = vmatprep.subr.mxu0 0.0
  %4897 = vmatpush1.msra.mxu0 0.0
  %4898 = vmatprep.subr.mxu0 0.0
  %4899 = vmatpush1.msra.mxu0 0.0
  %4900 = vmatprep.subr.mxu0 0.0
  %4901 = vmatpush1.msra.mxu0 0.0
  %4902 = vmatprep.mubr.f32.mxu0 0.0
  %4903 = vmatmul.mubr.f32.gmra.mrb[0].mxu0 %v4677
  %v4904 = vpop.f32.mrb[0].mxu0
  %v4905 = vadd.f32 0.0, %v4904
  %v4906 = vpop.f32.mrb[0].mxu0
  %4907 = vdwg.mxu0
  %v4909 = vrot.slane %v4827, 6
  %v4912 = vrot.slane %v4905, 4
  %v4914 = vsel %vm4544, %v4749, %v4909
  %vm4915 = vcmask 1043456
  %v4916 = vsel %vm4915, %v4914, %v4912
  %v4917 = vld [vmem:[%s12] sm:$0xff]
  %v4918 = vld [vmem:[%s12 + $0x8] sm:$0xff]
  %vm4919 = vcmask 48128
  %v4921 = vsel %vm4919, %v4917, 0
  %v4924 = vsel %vm4919, %v4918, 0
  %v4927 = vsel %vm4536, %v4916, 0
  %4929 = vmatprep.subr.mxu0 0.0
  %4930 = vmatpush1.msra.mxu0 %v4927
  %4931 = vmatprep.subr.mxu0 0.0
  %4932 = vmatpush1.msra.mxu0 0.0
  %4933 = vmatprep.subr.mxu0 0.0
  %4934 = vmatpush1.msra.mxu0 0.0
  %4935 = vmatprep.subr.mxu0 0.0
  %4936 = vmatpush1.msra.mxu0 0.0
  %4937 = vmatprep.subr.mxu0 0.0
  %4938 = vmatpush1.msra.mxu0 0.0
  %4939 = vmatprep.subr.mxu0 0.0
  %4940 = vmatpush1.msra.mxu0 0.0
  %4941 = vmatprep.subr.mxu0 0.0
  %4942 = vmatpush1.msra.mxu0 0.0
  %4943 = vmatprep.subr.mxu0 0.0
  %4944 = vmatpush1.msra.mxu0 0.0
  %4945 = vmatprep.subr.mxu0 0.0
  %4946 = vmatpush1.msra.mxu0 0.0
  %4947 = vmatprep.subr.mxu0 0.0
  %4948 = vmatpush1.msra.mxu0 0.0
  %4949 = vmatprep.subr.mxu0 0.0
  %4950 = vmatpush1.msra.mxu0 0.0
  %4951 = vmatprep.subr.mxu0 0.0
  %4952 = vmatpush1.msra.mxu0 0.0
  %4953 = vmatprep.subr.mxu0 0.0
  %4954 = vmatpush1.msra.mxu0 0.0
  %4955 = vmatprep.subr.mxu0 0.0
  %4956 = vmatpush1.msra.mxu0 0.0
  %4957 = vmatprep.subr.mxu0 0.0
  %4958 = vmatpush1.msra.mxu0 0.0
  %4959 = vmatprep.subr.mxu0 0.0
  %4960 = vmatpush1.msra.mxu0 0.0
  %4961 = vmatprep.subr.mxu0 0.0
  %4962 = vmatpush1.msra.mxu0 0.0
  %4963 = vmatprep.subr.mxu0 0.0
  %4964 = vmatpush1.msra.mxu0 0.0
  %4965 = vmatprep.subr.mxu0 0.0
  %4966 = vmatpush1.msra.mxu0 0.0
  %4967 = vmatprep.subr.mxu0 0.0
  %4968 = vmatpush1.msra.mxu0 0.0
  %4969 = vmatprep.subr.mxu0 0.0
  %4970 = vmatpush1.msra.mxu0 0.0
  %4971 = vmatprep.subr.mxu0 0.0
  %4972 = vmatpush1.msra.mxu0 0.0
  %4973 = vmatprep.subr.mxu0 0.0
  %4974 = vmatpush1.msra.mxu0 0.0
  %4975 = vmatprep.subr.mxu0 0.0
  %4976 = vmatpush1.msra.mxu0 0.0
  %4977 = vmatprep.subr.mxu0 0.0
  %4978 = vmatpush1.msra.mxu0 0.0
  %4979 = vmatprep.subr.mxu0 0.0
  %4980 = vmatpush1.msra.mxu0 0.0
  %4981 = vmatprep.subr.mxu0 0.0
  %4982 = vmatpush1.msra.mxu0 0.0
  %4983 = vmatprep.subr.mxu0 0.0
  %4984 = vmatpush1.msra.mxu0 0.0
  %4985 = vmatprep.subr.mxu0 0.0
  %4986 = vmatpush1.msra.mxu0 0.0
  %4987 = vmatprep.subr.mxu0 0.0
  %4988 = vmatpush1.msra.mxu0 0.0
  %4989 = vmatprep.subr.mxu0 0.0
  %4990 = vmatpush1.msra.mxu0 0.0
  %4991 = vmatprep.subr.mxu0 0.0
  %4992 = vmatpush1.msra.mxu0 0.0
  %4993 = vmatprep.mubr.f32.mxu0 0.0
  %4994 = vmatmul.mubr.f32.gmra.mrb[0].mxu0 %v4921
  %v4995 = vpop.f32.mrb[0].mxu0
  %v4996 = vadd.f32 0.0, %v4995
  %v4997 = vpop.f32.mrb[0].mxu0
  %4998 = vmatprep.mubr.f32.mxu0 0.0
  %4999 = vmatmul.mubr.f32.gmra.mrb[0].mxu0 %v4924
  %v5000 = vpop.f32.mrb[0].mxu0
  %v5001 = vadd.f32 0.0, %v5000
  %v5002 = vpop.f32.mrb[0].mxu0
  %5003 = vdwg.mxu0
  %v5005 = vsel %vm697, %v4670, 0
  %5007 = vmatprep.subr.mxu0 0.0
  %5008 = vmatpush1.msra.mxu0 %v4661
  %5009 = vmatprep.subr.mxu0 0.0
  %5010 = vmatpush1.msra.mxu0 %v4662
  %5011 = vmatprep.subr.mxu0 0.0
  %5012 = vmatpush1.msra.mxu0 %v4663
  %5013 = vmatprep.subr.mxu0 0.0
  %5014 = vmatpush1.msra.mxu0 %v4664
  %5015 = vmatprep.subr.mxu0 0.0
  %5016 = vmatpush1.msra.mxu0 %v4665
  %5017 = vmatprep.subr.mxu0 0.0
  %5018 = vmatpush1.msra.mxu0 %v4666
  %5019 = vmatprep.subr.mxu0 0.0
  %5020 = vmatpush1.msra.mxu0 %v4667
  %5021 = vmatprep.subr.mxu0 0.0
  %5022 = vmatpush1.msra.mxu0 %v4668
  %5023 = vmatprep.subr.mxu0 0.0
  %5024 = vmatpush1.msra.mxu0 %v4669
  %5025 = vmatprep.subr.mxu0 0.0
  %5026 = vmatpush1.msra.mxu0 %v5005
  %5027 = vmatprep.subr.mxu0 0.0
  %5028 = vmatpush1.msra.mxu0 0.0
  %5029 = vmatprep.subr.mxu0 0.0
  %5030 = vmatpush1.msra.mxu0 0.0
  %5031 = vmatprep.subr.mxu0 0.0
  %5032 = vmatpush1.msra.mxu0 0.0
  %5033 = vmatprep.subr.mxu0 0.0
  %5034 = vmatpush1.msra.mxu0 0.0
  %5035 = vmatprep.subr.mxu0 0.0
  %5036 = vmatpush1.msra.mxu0 0.0
  %5037 = vmatprep.subr.mxu0 0.0
  %5038 = vmatpush1.msra.mxu0 0.0
  %5039 = vmatprep.subr.mxu0 0.0
  %5040 = vmatpush1.msra.mxu0 0.0
  %5041 = vmatprep.subr.mxu0 0.0
  %5042 = vmatpush1.msra.mxu0 0.0
  %5043 = vmatprep.subr.mxu0 0.0
  %5044 = vmatpush1.msra.mxu0 0.0
  %5045 = vmatprep.subr.mxu0 0.0
  %5046 = vmatpush1.msra.mxu0 0.0
  %5047 = vmatprep.subr.mxu0 0.0
  %5048 = vmatpush1.msra.mxu0 0.0
  %5049 = vmatprep.subr.mxu0 0.0
  %5050 = vmatpush1.msra.mxu0 0.0
  %5051 = vmatprep.subr.mxu0 0.0
  %5052 = vmatpush1.msra.mxu0 0.0
  %5053 = vmatprep.subr.mxu0 0.0
  %5054 = vmatpush1.msra.mxu0 0.0
  %5055 = vmatprep.subr.mxu0 0.0
  %5056 = vmatpush1.msra.mxu0 0.0
  %5057 = vmatprep.subr.mxu0 0.0
  %5058 = vmatpush1.msra.mxu0 0.0
  %5059 = vmatprep.subr.mxu0 0.0
  %5060 = vmatpush1.msra.mxu0 0.0
  %5061 = vmatprep.subr.mxu0 0.0
  %5062 = vmatpush1.msra.mxu0 0.0
  %5063 = vmatprep.subr.mxu0 0.0
  %5064 = vmatpush1.msra.mxu0 0.0
  %5065 = vmatprep.subr.mxu0 0.0
  %5066 = vmatpush1.msra.mxu0 0.0
  %5067 = vmatprep.subr.mxu0 0.0
  %5068 = vmatpush1.msra.mxu0 0.0
  %5069 = vmatprep.subr.mxu0 0.0
  %5070 = vmatpush1.msra.mxu0 0.0
  %5071 = vmatprep.mubr.f32.mxu0 0.0
  %5072 = vmatmul.mubr.f32.gmra.mrb[0].mxu0 %v4578
  %v5073 = vpop.f32.mrb[0].mxu0
  %v5074 = vadd.f32 %v4996, %v5073
  %v5075 = vpop.f32.mrb[0].mxu0
  %5076 = vmatprep.mubr.f32.mxu0 0.0
  %5077 = vmatmul.mubr.f32.gmra.mrb[0].mxu0 %v4581
  %v5078 = vpop.f32.mrb[0].mxu0
  %v5079 = vadd.f32 %v5001, %v5078
  %v5080 = vpop.f32.mrb[0].mxu0
  %5081 = vdwg.mxu0
  %vm5082 = vcmp.gt.f32.partialorder %v5074, 0.0
  %vm5083 = vcmp.gt.f32.partialorder %v5079, 0.0
  %v5084 = vmul.f32 %v5074, 0.2
  %v5085 = vmul.f32 %v5079, 0.2
  %v5086 = vsel %vm5082, %v5074, %v5084
  %v5087 = vsel %vm5083, %v5079, %v5085
  %vm5088 = vcmask 39936
  %v5089 = vsel %vm5088, %v5086, -inf
  %v5090 = vsel %vm5088, %v5087, -inf
  %v5091 = vmax.f32 %v5089, %v5090
  %v5092 = vrot.slane %v5091, 4
  %v5093 = vmax.f32 %v5091, %v5092
  %v5094 = vrot.slane %v5093, 2
  %v5095 = vmax.f32 %v5093, %v5094
  %v5096 = vrot.slane %v5095, 1
  %v5097 = vmax.f32 %v5095, %v5096
  %v5098 = vsub.f32 %v5086, %v5097
  %v5099 = vsub.f32 %v5087, %v5097
  %v5100 = vmul.f32 %v5098, 1.442695
  %v5101 = vpow.pop %v5100
  %v5102 = vmul.f32 %v5099, 1.442695
  %v5103 = vpow.pop %v5102
  %v5104 = vld [vmem:[%s13] sm:$0x3f]
  %vm5105 = vcmask 130048
  %v5107 = vsel %vm5105, %v5104, 0
  %5109 = vmatprep.subr.mxu0 0.0
  %5110 = vmatpush1.msra.mxu0 %v5101
  %5111 = vmatprep.subr.mxu0 0.0
  %5112 = vmatpush1.msra.mxu0 %v5103
  %5113 = vmatprep.subr.mxu0 0.0
  %5114 = vmatpush1.msra.mxu0 0.0
  %5115 = vmatprep.subr.mxu0 0.0
  %5116 = vmatpush1.msra.mxu0 0.0
  %5117 = vmatprep.subr.mxu0 0.0
  %5118 = vmatpush1.msra.mxu0 0.0
  %5119 = vmatprep.subr.mxu0 0.0
  %5120 = vmatpush1.msra.mxu0 0.0
  %5121 = vmatprep.subr.mxu0 0.0
  %5122 = vmatpush1.msra.mxu0 0.0
  %5123 = vmatprep.subr.mxu0 0.0
  %5124 = vmatpush1.msra.mxu0 0.0
  %5125 = vmatprep.subr.mxu0 0.0
  %5126 = vmatpush1.msra.mxu0 0.0
  %5127 = vmatprep.subr.mxu0 0.0
  %5128 = vmatpush1.msra.mxu0 0.0
  %5129 = vmatprep.subr.mxu0 0.0
  %5130 = vmatpush1.msra.mxu0 0.0
  %5131 = vmatprep.subr.mxu0 0.0
  %5132 = vmatpush1.msra.mxu0 0.0
  %5133 = vmatprep.subr.mxu0 0.0
  %5134 = vmatpush1.msra.mxu0 0.0
  %5135 = vmatprep.subr.mxu0 0.0
  %5136 = vmatpush1.msra.mxu0 0.0
  %5137 = vmatprep.subr.mxu0 0.0
  %5138 = vmatpush1.msra.mxu0 0.0
  %5139 = vmatprep.subr.mxu0 0.0
  %5140 = vmatpush1.msra.mxu0 0.0
  %5141 = vmatprep.subr.mxu0 0.0
  %5142 = vmatpush1.msra.mxu0 0.0
  %5143 = vmatprep.subr.mxu0 0.0
  %5144 = vmatpush1.msra.mxu0 0.0
  %5145 = vmatprep.subr.mxu0 0.0
  %5146 = vmatpush1.msra.mxu0 0.0
  %5147 = vmatprep.subr.mxu0 0.0
  %5148 = vmatpush1.msra.mxu0 0.0
  %5149 = vmatprep.subr.mxu0 0.0
  %5150 = vmatpush1.msra.mxu0 0.0
  %5151 = vmatprep.subr.mxu0 0.0
  %5152 = vmatpush1.msra.mxu0 0.0
  %5153 = vmatprep.subr.mxu0 0.0
  %5154 = vmatpush1.msra.mxu0 0.0
  %5155 = vmatprep.subr.mxu0 0.0
  %5156 = vmatpush1.msra.mxu0 0.0
  %5157 = vmatprep.subr.mxu0 0.0
  %5158 = vmatpush1.msra.mxu0 0.0
  %5159 = vmatprep.subr.mxu0 0.0
  %5160 = vmatpush1.msra.mxu0 0.0
  %5161 = vmatprep.subr.mxu0 0.0
  %5162 = vmatpush1.msra.mxu0 0.0
  %5163 = vmatprep.subr.mxu0 0.0
  %5164 = vmatpush1.msra.mxu0 0.0
  %5165 = vmatprep.subr.mxu0 0.0
  %5166 = vmatpush1.msra.mxu0 0.0
  %5167 = vmatprep.subr.mxu0 0.0
  %5168 = vmatpush1.msra.mxu0 0.0
  %5169 = vmatprep.subr.mxu0 0.0
  %5170 = vmatpush1.msra.mxu0 0.0
  %5171 = vmatprep.subr.mxu0 0.0
  %5172 = vmatpush1.msra.mxu0 0.0
  %5173 = vmatprep.mubr.f32.mxu0 0.0
  %5174 = vmatmul.mubr.f32.gmra.mrb[0].mxu0 %v5107
  %v5175 = vpop.f32.mrb[0].mxu0
  %v5176 = vadd.f32 0.0, %v5175
  %v5177 = vpop.f32.mrb[0].mxu0
  %5178 = vdwg.mxu0
  %v5179 = vmax.f32 %v5176, 1e-20
  %v5180 = vrcp.pop %v5179
  %v5182 = vsel %vm4536, %v5180, 0
  %5184 = vmatprep.subr.mxu0 0.0
  %5185 = vmatpush1.msra.mxu0 %v5182
  %5186 = vmatprep.subr.mxu0 0.0
  %5187 = vmatpush1.msra.mxu0 0.0
  %5188 = vmatprep.subr.mxu0 0.0
  %5189 = vmatpush1.msra.mxu0 0.0
  %5190 = vmatprep.subr.mxu0 0.0
  %5191 = vmatpush1.msra.mxu0 0.0
  %5192 = vmatprep.subr.mxu0 0.0
  %5193 = vmatpush1.msra.mxu0 0.0
  %5194 = vmatprep.subr.mxu0 0.0
  %5195 = vmatpush1.msra.mxu0 0.0
  %5196 = vmatprep.subr.mxu0 0.0
  %5197 = vmatpush1.msra.mxu0 0.0
  %5198 = vmatprep.subr.mxu0 0.0
  %5199 = vmatpush1.msra.mxu0 0.0
  %5200 = vmatprep.subr.mxu0 0.0
  %5201 = vmatpush1.msra.mxu0 0.0
  %5202 = vmatprep.subr.mxu0 0.0
  %5203 = vmatpush1.msra.mxu0 0.0
  %5204 = vmatprep.subr.mxu0 0.0
  %5205 = vmatpush1.msra.mxu0 0.0
  %5206 = vmatprep.subr.mxu0 0.0
  %5207 = vmatpush1.msra.mxu0 0.0
  %5208 = vmatprep.subr.mxu0 0.0
  %5209 = vmatpush1.msra.mxu0 0.0
  %5210 = vmatprep.subr.mxu0 0.0
  %5211 = vmatpush1.msra.mxu0 0.0
  %5212 = vmatprep.subr.mxu0 0.0
  %5213 = vmatpush1.msra.mxu0 0.0
  %5214 = vmatprep.subr.mxu0 0.0
  %5215 = vmatpush1.msra.mxu0 0.0
  %5216 = vmatprep.subr.mxu0 0.0
  %5217 = vmatpush1.msra.mxu0 0.0
  %5218 = vmatprep.subr.mxu0 0.0
  %5219 = vmatpush1.msra.mxu0 0.0
  %5220 = vmatprep.subr.mxu0 0.0
  %5221 = vmatpush1.msra.mxu0 0.0
  %5222 = vmatprep.subr.mxu0 0.0
  %5223 = vmatpush1.msra.mxu0 0.0
  %5224 = vmatprep.subr.mxu0 0.0
  %5225 = vmatpush1.msra.mxu0 0.0
  %5226 = vmatprep.subr.mxu0 0.0
  %5227 = vmatpush1.msra.mxu0 0.0
  %5228 = vmatprep.subr.mxu0 0.0
  %5229 = vmatpush1.msra.mxu0 0.0
  %5230 = vmatprep.subr.mxu0 0.0
  %5231 = vmatpush1.msra.mxu0 0.0
  %5232 = vmatprep.subr.mxu0 0.0
  %5233 = vmatpush1.msra.mxu0 0.0
  %5234 = vmatprep.subr.mxu0 0.0
  %5235 = vmatpush1.msra.mxu0 0.0
  %5236 = vmatprep.subr.mxu0 0.0
  %5237 = vmatpush1.msra.mxu0 0.0
  %5238 = vmatprep.subr.mxu0 0.0
  %5239 = vmatpush1.msra.mxu0 0.0
  %5240 = vmatprep.subr.mxu0 0.0
  %5241 = vmatpush1.msra.mxu0 0.0
  %5242 = vmatprep.subr.mxu0 0.0
  %5243 = vmatpush1.msra.mxu0 0.0
  %5244 = vmatprep.subr.mxu0 0.0
  %5245 = vmatpush1.msra.mxu0 0.0
  %5246 = vmatprep.subr.mxu0 0.0
  %5247 = vmatpush1.msra.mxu0 0.0
  %5248 = vmatprep.mubr.f32.mxu0 0.0
  %5249 = vmatmul.mubr.f32.gmra.mrb[0].mxu0 %v4921
  %v5250 = vpop.f32.mrb[0].mxu0
  %v5251 = vadd.f32 0.0, %v5250
  %v5252 = vpop.f32.mrb[0].mxu0
  %5253 = vmatprep.mubr.f32.mxu0 0.0
  %5254 = vmatmul.mubr.f32.gmra.mrb[0].mxu0 %v4924
  %v5255 = vpop.f32.mrb[0].mxu0
  %v5256 = vadd.f32 0.0, %v5255
  %v5257 = vpop.f32.mrb[0].mxu0
  %5258 = vdwg.mxu0
  %v5259 = vmul.f32 %v5101, %v5251
  %v5260 = vmul.f32 %v5103, %v5256
  %v5261 = vld [vmem:[%s15] sm:$0x1f]
  %v5263 = vsel %vm5088, %v5259, 0
  %v5266 = vsel %vm5088, %v5260, 0
  %vm5268 = vcmask 1044480
  %v5270 = vsel %vm5268, %v5261, 0
  %5272 = vmatprep.subr.mxu0 0.0
  %5273 = vmatpush1.msra.mxu0 %v5270
  %5274 = vmatprep.subr.mxu0 0.0
  %5275 = vmatpush1.msra.mxu0 0.0
  %5276 = vmatprep.subr.mxu0 0.0
  %5277 = vmatpush1.msra.mxu0 0.0
  %5278 = vmatprep.subr.mxu0 0.0
  %5279 = vmatpush1.msra.mxu0 0.0
  %5280 = vmatprep.subr.mxu0 0.0
  %5281 = vmatpush1.msra.mxu0 0.0
  %5282 = vmatprep.subr.mxu0 0.0
  %5283 = vmatpush1.msra.mxu0 0.0
  %5284 = vmatprep.subr.mxu0 0.0
  %5285 = vmatpush1.msra.mxu0 0.0
  %5286 = vmatprep.subr.mxu0 0.0
  %5287 = vmatpush1.msra.mxu0 0.0
  %5288 = vmatprep.subr.mxu0 0.0
  %5289 = vmatpush1.msra.mxu0 0.0
  %5290 = vmatprep.subr.mxu0 0.0
  %5291 = vmatpush1.msra.mxu0 0.0
  %5292 = vmatprep.subr.mxu0 0.0
  %5293 = vmatpush1.msra.mxu0 0.0
  %5294 = vmatprep.subr.mxu0 0.0
  %5295 = vmatpush1.msra.mxu0 0.0
  %5296 = vmatprep.subr.mxu0 0.0
  %5297 = vmatpush1.msra.mxu0 0.0
  %5298 = vmatprep.subr.mxu0 0.0
  %5299 = vmatpush1.msra.mxu0 0.0
  %5300 = vmatprep.subr.mxu0 0.0
  %5301 = vmatpush1.msra.mxu0 0.0
  %5302 = vmatprep.subr.mxu0 0.0
  %5303 = vmatpush1.msra.mxu0 0.0
  %5304 = vmatprep.subr.mxu0 0.0
  %5305 = vmatpush1.msra.mxu0 0.0
  %5306 = vmatprep.subr.mxu0 0.0
  %5307 = vmatpush1.msra.mxu0 0.0
  %5308 = vmatprep.subr.mxu0 0.0
  %5309 = vmatpush1.msra.mxu0 0.0
  %5310 = vmatprep.subr.mxu0 0.0
  %5311 = vmatpush1.msra.mxu0 0.0
  %5312 = vmatprep.subr.mxu0 0.0
  %5313 = vmatpush1.msra.mxu0 0.0
  %5314 = vmatprep.subr.mxu0 0.0
  %5315 = vmatpush1.msra.mxu0 0.0
  %5316 = vmatprep.subr.mxu0 0.0
  %5317 = vmatpush1.msra.mxu0 0.0
  %5318 = vmatprep.subr.mxu0 0.0
  %5319 = vmatpush1.msra.mxu0 0.0
  %5320 = vmatprep.subr.mxu0 0.0
  %5321 = vmatpush1.msra.mxu0 0.0
  %5322 = vmatprep.subr.mxu0 0.0
  %5323 = vmatpush1.msra.mxu0 0.0
  %5324 = vmatprep.subr.mxu0 0.0
  %5325 = vmatpush1.msra.mxu0 0.0
  %5326 = vmatprep.subr.mxu0 0.0
  %5327 = vmatpush1.msra.mxu0 0.0
  %5328 = vmatprep.subr.mxu0 0.0
  %5329 = vmatpush1.msra.mxu0 0.0
  %5330 = vmatprep.subr.mxu0 0.0
  %5331 = vmatpush1.msra.mxu0 0.0
  %5332 = vmatprep.subr.mxu0 0.0
  %5333 = vmatpush1.msra.mxu0 0.0
  %5334 = vmatprep.subr.mxu0 0.0
  %5335 = vmatpush1.msra.mxu0 0.0
  %5336 = vmatprep.mubr.f32.mxu0 0.0
  %5337 = vmatmul.mubr.f32.gmra.mrb[0].mxu0 %v5263
  %v5338 = vpop.f32.mrb[0].mxu0
  %v5339 = vadd.f32 0.0, %v5338
  %v5340 = vpop.f32.mrb[0].mxu0
  %5341 = vmatprep.mubr.f32.mxu0 0.0
  %5342 = vmatmul.mubr.f32.gmra.mrb[0].mxu0 %v5266
  %v5343 = vpop.f32.mrb[0].mxu0
  %v5344 = vadd.f32 0.0, %v5343
  %v5345 = vpop.f32.mrb[0].mxu0
  %5346 = vdwg.mxu0
  %v5347 = vld [vmem:[%s14] sm:$0x3]
  %v5348 = vmul.f32 %v5339, %v4653
  %v5349 = vmul.f32 %v5344, %v4658
  %v5350 = vld [vmem:[%s10] sm:$0x1]
  %v5352 = vlaneseq
  %v5353 = vshrl.u32 %v5352, 7
  %v5354 = vsub.s32 0, %v5353
  %v5355 = vrot.slane %v5350, %v5354
  %v5358 = vsel %vm5105, %v5347, 0
  %5360 = vmatprep.subr.mxu0 0.0
  %5361 = vmatpush1.msra.mxu0 %v5348
  %5362 = vmatprep.subr.mxu0 0.0
  %5363 = vmatpush1.msra.mxu0 %v5349
  %5364 = vmatprep.subr.mxu0 0.0
  %5365 = vmatpush1.msra.mxu0 0.0
  %5366 = vmatprep.subr.mxu0 0.0
  %5367 = vmatpush1.msra.mxu0 0.0
  %5368 = vmatprep.subr.mxu0 0.0
  %5369 = vmatpush1.msra.mxu0 0.0
  %5370 = vmatprep.subr.mxu0 0.0
  %5371 = vmatpush1.msra.mxu0 0.0
  %5372 = vmatprep.subr.mxu0 0.0
  %5373 = vmatpush1.msra.mxu0 0.0
  %5374 = vmatprep.subr.mxu0 0.0
  %5375 = vmatpush1.msra.mxu0 0.0
  %5376 = vmatprep.subr.mxu0 0.0
  %5377 = vmatpush1.msra.mxu0 0.0
  %5378 = vmatprep.subr.mxu0 0.0
  %5379 = vmatpush1.msra.mxu0 0.0
  %5380 = vmatprep.subr.mxu0 0.0
  %5381 = vmatpush1.msra.mxu0 0.0
  %5382 = vmatprep.subr.mxu0 0.0
  %5383 = vmatpush1.msra.mxu0 0.0
  %5384 = vmatprep.subr.mxu0 0.0
  %5385 = vmatpush1.msra.mxu0 0.0
  %5386 = vmatprep.subr.mxu0 0.0
  %5387 = vmatpush1.msra.mxu0 0.0
  %5388 = vmatprep.subr.mxu0 0.0
  %5389 = vmatpush1.msra.mxu0 0.0
  %5390 = vmatprep.subr.mxu0 0.0
  %5391 = vmatpush1.msra.mxu0 0.0
  %5392 = vmatprep.subr.mxu0 0.0
  %5393 = vmatpush1.msra.mxu0 0.0
  %5394 = vmatprep.subr.mxu0 0.0
  %5395 = vmatpush1.msra.mxu0 0.0
  %5396 = vmatprep.subr.mxu0 0.0
  %5397 = vmatpush1.msra.mxu0 0.0
  %5398 = vmatprep.subr.mxu0 0.0
  %5399 = vmatpush1.msra.mxu0 0.0
  %5400 = vmatprep.subr.mxu0 0.0
  %5401 = vmatpush1.msra.mxu0 0.0
  %5402 = vmatprep.subr.mxu0 0.0
  %5403 = vmatpush1.msra.mxu0 0.0
  %5404 = vmatprep.subr.mxu0 0.0
  %5405 = vmatpush1.msra.mxu0 0.0
  %5406 = vmatprep.subr.mxu0 0.0
  %5407 = vmatpush1.msra.mxu0 0.0
  %5408 = vmatprep.subr.mxu0 0.0
  %5409 = vmatpush1.msra.mxu0 0.0
  %5410 = vmatprep.subr.mxu0 0.0
  %5411 = vmatpush1.msra.mxu0 0.0
  %5412 = vmatprep.subr.mxu0 0.0
  %5413 = vmatpush1.msra.mxu0 0.0
  %5414 = vmatprep.subr.mxu0 0.0
  %5415 = vmatpush1.msra.mxu0 0.0
  %5416 = vmatprep.subr.mxu0 0.0
  %5417 = vmatpush1.msra.mxu0 0.0
  %5418 = vmatprep.subr.mxu0 0.0
  %5419 = vmatpush1.msra.mxu0 0.0
  %5420 = vmatprep.subr.mxu0 0.0
  %5421 = vmatpush1.msra.mxu0 0.0
  %5422 = vmatprep.subr.mxu0 0.0
  %5423 = vmatpush1.msra.mxu0 0.0
  %5424 = vmatprep.mubr.f32.mxu0 0.0
  %5425 = vmatmul.mubr.f32.gmra.mrb[0].mxu0 %v5358
  %v5426 = vpop.f32.mrb[0].mxu0
  %v5427 = vadd.f32 %v5355, %v5426
  %v5428 = vpop.f32.mrb[0].mxu0
  %5429 = vdwg.mxu0
  %v5430 = vmul.f32 %v5427, 0.33333334
  %v5431 = vld [vmem:[%s5] sm:$0xff]
  %v5432 = vld [vmem:[%s5 + $0x8] sm:$0xff]
  %v5433 = vld [vmem:[%s5 + $0x10] sm:$0xff]
  %v5434 = vld [vmem:[%s5 + $0x18] sm:$0x1]
  %v5435 = vlaneseq
  %v5436 = vshrl.u32 %v5435, 7
  %v5437 = vadd.s32 %v5436, 8
  %v5438 = vadd.s32 %v5436, 16
  %v5439 = vadd.s32 %v5436, 24
  %v5440 = vcvt.s32.f32 %v5436
  %v5441 = vcvt.s32.f32 %v5437
  %v5442 = vcvt.s32.f32 %v5438
  %v5443 = vcvt.s32.f32 %v5439
  %v5444 = vmul.f32 %v5440, 0.1
  %v5445 = vmul.f32 %v5441, 0.1
  %v5446 = vmul.f32 %v5442, 0.1
  %v5447 = vmul.f32 %v5443, 0.1
  %v5448 = vld [vmem:[%s4] sm:$0x1]
  %v5450 = vlaneseq
  %v5451 = vshrl.u32 %v5450, 7
  %v5452 = vsub.s32 0, %v5451
  %v5453 = vrot.slane %v5448, %v5452
  %v5455 = vmul.f32 %v5444, %v5453
  %v5456 = vmul.f32 %v5445, %v5453
  %v5457 = vmul.f32 %v5446, %v5453
  %v5458 = vmul.f32 %v5447, %v5453
  %v5459 = vld [vmem:[%s6] sm:$0x1]
  %v5461 = vlaneseq
  %v5462 = vshrl.u32 %v5461, 7
  %v5463 = vsub.s32 0, %v5462
  %v5464 = vrot.slane %v5459, %v5463
  %v5466 = vadd.f32 %v5455, %v5464
  %v5467 = vadd.f32 %v5456, %v5464
  %v5468 = vadd.f32 %v5457, %v5464
  %v5469 = vadd.f32 %v5458, %v5464
  %5471 = vrot.lane.b32.xlu0 %v5430, 25
  %v5472 = vpop.permute.xlu0 %5471
  %v5474 = vadd.f32 %v4523, %v5472
  %5476 = vrot.lane.b32.xlu0 %v4531, 78
  %v5477 = vpop.permute.xlu0 %5476
  %v5478 = vsel %vm877, %v5477, 0
  %v5481 = vsel %vm302, %v5434, 0
  %5483 = vmatprep.subr.mxu0 0.0
  %5484 = vmatpush1.msra.mxu0 %v5431
  %5485 = vmatprep.subr.mxu0 0.0
  %5486 = vmatpush1.msra.mxu0 %v5432
  %5487 = vmatprep.subr.mxu0 0.0
  %5488 = vmatpush1.msra.mxu0 %v5433
  %5489 = vmatprep.subr.mxu0 0.0
  %5490 = vmatpush1.msra.mxu0 %v5481
  %5491 = vmatprep.subr.mxu0 0.0
  %5492 = vmatpush1.msra.mxu0 0.0
  %5493 = vmatprep.subr.mxu0 0.0
  %5494 = vmatpush1.msra.mxu0 0.0
  %5495 = vmatprep.subr.mxu0 0.0
  %5496 = vmatpush1.msra.mxu0 0.0
  %5497 = vmatprep.subr.mxu0 0.0
  %5498 = vmatpush1.msra.mxu0 0.0
  %5499 = vmatprep.subr.mxu0 0.0
  %5500 = vmatpush1.msra.mxu0 0.0
  %5501 = vmatprep.subr.mxu0 0.0
  %5502 = vmatpush1.msra.mxu0 0.0
  %5503 = vmatprep.subr.mxu0 0.0
  %5504 = vmatpush1.msra.mxu0 0.0
  %5505 = vmatprep.subr.mxu0 0.0
  %5506 = vmatpush1.msra.mxu0 0.0
  %5507 = vmatprep.subr.mxu0 0.0
  %5508 = vmatpush1.msra.mxu0 0.0
  %5509 = vmatprep.subr.mxu0 0.0
  %5510 = vmatpush1.msra.mxu0 0.0
  %5511 = vmatprep.subr.mxu0 0.0
  %5512 = vmatpush1.msra.mxu0 0.0
  %5513 = vmatprep.subr.mxu0 0.0
  %5514 = vmatpush1.msra.mxu0 0.0
  %5515 = vmatprep.subr.mxu0 0.0
  %5516 = vmatpush1.msra.mxu0 0.0
  %5517 = vmatprep.subr.mxu0 0.0
  %5518 = vmatpush1.msra.mxu0 0.0
  %5519 = vmatprep.subr.mxu0 0.0
  %5520 = vmatpush1.msra.mxu0 0.0
  %5521 = vmatprep.subr.mxu0 0.0
  %5522 = vmatpush1.msra.mxu0 0.0
  %5523 = vmatprep.subr.mxu0 0.0
  %5524 = vmatpush1.msra.mxu0 0.0
  %5525 = vmatprep.subr.mxu0 0.0
  %5526 = vmatpush1.msra.mxu0 0.0
  %5527 = vmatprep.subr.mxu0 0.0
  %5528 = vmatpush1.msra.mxu0 0.0
  %5529 = vmatprep.subr.mxu0 0.0
  %5530 = vmatpush1.msra.mxu0 0.0
  %5531 = vmatprep.subr.mxu0 0.0
  %5532 = vmatpush1.msra.mxu0 0.0
  %5533 = vmatprep.subr.mxu0 0.0
  %5534 = vmatpush1.msra.mxu0 0.0
  %5535 = vmatprep.subr.mxu0 0.0
  %5536 = vmatpush1.msra.mxu0 0.0
  %5537 = vmatprep.subr.mxu0 0.0
  %5538 = vmatpush1.msra.mxu0 0.0
  %5539 = vmatprep.subr.mxu0 0.0
  %5540 = vmatpush1.msra.mxu0 0.0
  %5541 = vmatprep.subr.mxu0 0.0
  %5542 = vmatpush1.msra.mxu0 0.0
  %5543 = vmatprep.subr.mxu0 0.0
  %5544 = vmatpush1.msra.mxu0 0.0
  %5545 = vmatprep.subr.mxu0 0.0
  %5546 = vmatpush1.msra.mxu0 0.0
  %5547 = vmatprep.mubr.f32.mxu0 0.0
  %5548 = vmatmul.mubr.f32.gmra.mrb[0].mxu0 %v5478
  %v5549 = vpop.f32.mrb[0].mxu0
  %v5550 = vadd.f32 0.0, %v5549
  %v5551 = vpop.f32.mrb[0].mxu0
  %5552 = vdwg.mxu0
  %v5553 = vlaneseq
  %v5554 = vshrl.u32 %v5553, 7
  %v5555 = vsub.s32 0, %v5554
  %v5556 = vrot.slane %v5466, %v5555
  %v5557 = vadd.f32 %v5556, %v5550
  %v5558 = vxor.u32 %v5557, 2147483648
  %v5559 = vmul.f32 %v5558, 1.442695
  %v5560 = vpow.pop %v5559
  %v5561 = vadd.f32 %v5560, 1.0
  %v5562 = vrcp.pop %v5561
  %v5563 = vmul.f32 1.0, %v5562
  %v5564 = vtanh.pop %v5557
  %v5565 = vmul.f32 %v5563, %v5474
  %5567 = vrot.lane.b32.xlu0 %v5564, 53
  %v5568 = vpop.permute.xlu0 %5567
  %v5570 = vmul.f32 %v5563, %v5568
  %5572 = vrot.lane.b32.xlu0 %v5570, 25
  %v5573 = vpop.permute.xlu0 %5572
  %v5575 = vadd.f32 %v5565, %v5573
  %v5576 = vtanh.pop %v5575
  %5578 = vrot.lane.b32.xlu0 %v5576, 25
  %v5579 = vpop.permute.xlu0 %5578
  %v5581 = vmul.f32 %v5563, %v5579
  %5583 = vrot.lane.b32.xlu0 %v5581, 78
  %v5584 = vpop.permute.xlu0 %5583
  %vm5586 = vcmask 197632
  %5587 = vst.msk [vmem:[#allocation2] sm:$0x3] %vm5586, %v5584
  %v5588 = vsel %vm877, %v5584, 0
  %5590 = vmatprep.subr.mxu0 0.0
  %5591 = vmatpush1.msra.mxu0 %v5431
  %5592 = vmatprep.subr.mxu0 0.0
  %5593 = vmatpush1.msra.mxu0 %v5432
  %5594 = vmatprep.subr.mxu0 0.0
  %5595 = vmatpush1.msra.mxu0 %v5433
  %5596 = vmatprep.subr.mxu0 0.0
  %5597 = vmatpush1.msra.mxu0 %v5481
  %5598 = vmatprep.subr.mxu0 0.0
  %5599 = vmatpush1.msra.mxu0 0.0
  %5600 = vmatprep.subr.mxu0 0.0
  %5601 = vmatpush1.msra.mxu0 0.0
  %5602 = vmatprep.subr.mxu0 0.0
  %5603 = vmatpush1.msra.mxu0 0.0
  %5604 = vmatprep.subr.mxu0 0.0
  %5605 = vmatpush1.msra.mxu0 0.0
  %5606 = vmatprep.subr.mxu0 0.0
  %5607 = vmatpush1.msra.mxu0 0.0
  %5608 = vmatprep.subr.mxu0 0.0
  %5609 = vmatpush1.msra.mxu0 0.0
  %5610 = vmatprep.subr.mxu0 0.0
  %5611 = vmatpush1.msra.mxu0 0.0
  %5612 = vmatprep.subr.mxu0 0.0
  %5613 = vmatpush1.msra.mxu0 0.0
  %5614 = vmatprep.subr.mxu0 0.0
  %5615 = vmatpush1.msra.mxu0 0.0
  %5616 = vmatprep.subr.mxu0 0.0
  %5617 = vmatpush1.msra.mxu0 0.0
  %5618 = vmatprep.subr.mxu0 0.0
  %5619 = vmatpush1.msra.mxu0 0.0
  %5620 = vmatprep.subr.mxu0 0.0
  %5621 = vmatpush1.msra.mxu0 0.0
  %5622 = vmatprep.subr.mxu0 0.0
  %5623 = vmatpush1.msra.mxu0 0.0
  %5624 = vmatprep.subr.mxu0 0.0
  %5625 = vmatpush1.msra.mxu0 0.0
  %5626 = vmatprep.subr.mxu0 0.0
  %5627 = vmatpush1.msra.mxu0 0.0
  %5628 = vmatprep.subr.mxu0 0.0
  %5629 = vmatpush1.msra.mxu0 0.0
  %5630 = vmatprep.subr.mxu0 0.0
  %5631 = vmatpush1.msra.mxu0 0.0
  %5632 = vmatprep.subr.mxu0 0.0
  %5633 = vmatpush1.msra.mxu0 0.0
  %5634 = vmatprep.subr.mxu0 0.0
  %5635 = vmatpush1.msra.mxu0 0.0
  %5636 = vmatprep.subr.mxu0 0.0
  %5637 = vmatpush1.msra.mxu0 0.0
  %5638 = vmatprep.subr.mxu0 0.0
  %5639 = vmatpush1.msra.mxu0 0.0
  %5640 = vmatprep.subr.mxu0 0.0
  %5641 = vmatpush1.msra.mxu0 0.0
  %5642 = vmatprep.subr.mxu0 0.0
  %5643 = vmatpush1.msra.mxu0 0.0
  %5644 = vmatprep.subr.mxu0 0.0
  %5645 = vmatpush1.msra.mxu0 0.0
  %5646 = vmatprep.subr.mxu0 0.0
  %5647 = vmatpush1.msra.mxu0 0.0
  %5648 = vmatprep.subr.mxu0 0.0
  %5649 = vmatpush1.msra.mxu0 0.0
  %5650 = vmatprep.subr.mxu0 0.0
  %5651 = vmatpush1.msra.mxu0 0.0
  %5652 = vmatprep.subr.mxu0 0.0
  %5653 = vmatpush1.msra.mxu0 0.0
  %5654 = vmatprep.mubr.f32.mxu0 0.0
  %5655 = vmatmul.mubr.f32.gmra.mrb[0].mxu0 %v5588
  %v5656 = vpop.f32.mrb[0].mxu0
  %v5657 = vadd.f32 0.0, %v5656
  %v5658 = vpop.f32.mrb[0].mxu0
  %5659 = vdwg.mxu0
  %v5660 = vlaneseq
  %v5661 = vshrl.u32 %v5660, 7
  %v5662 = vsub.s32 1, %v5661
  %v5663 = vrot.slane %v5466, %v5662
  %v5664 = vadd.f32 %v5663, %v5657
  %v5665 = vxor.u32 %v5664, 2147483648
  %v5666 = vmul.f32 %v5665, 1.442695
  %v5667 = vpow.pop %v5666
  %v5668 = vadd.f32 %v5667, 1.0
  %v5669 = vrcp.pop %v5668
  %v5670 = vmul.f32 1.0, %v5669
  %v5671 = vtanh.pop %v5664
  %v5672 = vmul.f32 %v5670, %v5575
  %5674 = vrot.lane.b32.xlu0 %v5671, 53
  %v5675 = vpop.permute.xlu0 %5674
  %v5677 = vmul.f32 %v5670, %v5675
  %5679 = vrot.lane.b32.xlu0 %v5677, 25
  %v5680 = vpop.permute.xlu0 %5679
  %v5682 = vadd.f32 %v5672, %v5680
  %v5683 = vtanh.pop %v5682
  %5685 = vrot.lane.b32.xlu0 %v5683, 25
  %v5686 = vpop.permute.xlu0 %5685
  %v5688 = vmul.f32 %v5670, %v5686
  %5690 = vrot.lane.b32.xlu0 %v5688, 78
  %v5691 = vpop.permute.xlu0 %5690
  %5693 = vst.msk [vmem:[#allocation2 + $0x2] sm:$0x3] %vm5586, %v5691
  %v5694 = vsel %vm877, %v5691, 0
  %5696 = vmatprep.subr.mxu0 0.0
  %5697 = vmatpush1.msra.mxu0 %v5431
  %5698 = vmatprep.subr.mxu0 0.0
  %5699 = vmatpush1.msra.mxu0 %v5432
  %5700 = vmatprep.subr.mxu0 0.0
  %5701 = vmatpush1.msra.mxu0 %v5433
  %5702 = vmatprep.subr.mxu0 0.0
  %5703 = vmatpush1.msra.mxu0 %v5481
  %5704 = vmatprep.subr.mxu0 0.0
  %5705 = vmatpush1.msra.mxu0 0.0
  %5706 = vmatprep.subr.mxu0 0.0
  %5707 = vmatpush1.msra.mxu0 0.0
  %5708 = vmatprep.subr.mxu0 0.0
  %5709 = vmatpush1.msra.mxu0 0.0
  %5710 = vmatprep.subr.mxu0 0.0
  %5711 = vmatpush1.msra.mxu0 0.0
  %5712 = vmatprep.subr.mxu0 0.0
  %5713 = vmatpush1.msra.mxu0 0.0
  %5714 = vmatprep.subr.mxu0 0.0
  %5715 = vmatpush1.msra.mxu0 0.0
  %5716 = vmatprep.subr.mxu0 0.0
  %5717 = vmatpush1.msra.mxu0 0.0
  %5718 = vmatprep.subr.mxu0 0.0
  %5719 = vmatpush1.msra.mxu0 0.0
  %5720 = vmatprep.subr.mxu0 0.0
  %5721 = vmatpush1.msra.mxu0 0.0
  %5722 = vmatprep.subr.mxu0 0.0
  %5723 = vmatpush1.msra.mxu0 0.0
  %5724 = vmatprep.subr.mxu0 0.0
  %5725 = vmatpush1.msra.mxu0 0.0
  %5726 = vmatprep.subr.mxu0 0.0
  %5727 = vmatpush1.msra.mxu0 0.0
  %5728 = vmatprep.subr.mxu0 0.0
  %5729 = vmatpush1.msra.mxu0 0.0
  %5730 = vmatprep.subr.mxu0 0.0
  %5731 = vmatpush1.msra.mxu0 0.0
  %5732 = vmatprep.subr.mxu0 0.0
  %5733 = vmatpush1.msra.mxu0 0.0
  %5734 = vmatprep.subr.mxu0 0.0
  %5735 = vmatpush1.msra.mxu0 0.0
  %5736 = vmatprep.subr.mxu0 0.0
  %5737 = vmatpush1.msra.mxu0 0.0
  %5738 = vmatprep.subr.mxu0 0.0
  %5739 = vmatpush1.msra.mxu0 0.0
  %5740 = vmatprep.subr.mxu0 0.0
  %5741 = vmatpush1.msra.mxu0 0.0
  %5742 = vmatprep.subr.mxu0 0.0
  %5743 = vmatpush1.msra.mxu0 0.0
  %5744 = vmatprep.subr.mxu0 0.0
  %5745 = vmatpush1.msra.mxu0 0.0
  %5746 = vmatprep.subr.mxu0 0.0
  %5747 = vmatpush1.msra.mxu0 0.0
  %5748 = vmatprep.subr.mxu0 0.0
  %5749 = vmatpush1.msra.mxu0 0.0
  %5750 = vmatprep.subr.mxu0 0.0
  %5751 = vmatpush1.msra.mxu0 0.0
  %5752 = vmatprep.subr.mxu0 0.0
  %5753 = vmatpush1.msra.mxu0 0.0
  %5754 = vmatprep.subr.mxu0 0.0
  %5755 = vmatpush1.msra.mxu0 0.0
  %5756 = vmatprep.subr.mxu0 0.0
  %5757 = vmatpush1.msra.mxu0 0.0
  %5758 = vmatprep.subr.mxu0 0.0
  %5759 = vmatpush1.msra.mxu0 0.0
  %5760 = vmatprep.mubr.f32.mxu0 0.0
  %5761 = vmatmul.mubr.f32.gmra.mrb[0].mxu0 %v5694
  %v5762 = vpop.f32.mrb[0].mxu0
  %v5763 = vadd.f32 0.0, %v5762
  %v5764 = vpop.f32.mrb[0].mxu0
  %5765 = vdwg.mxu0
  %v5766 = vlaneseq
  %v5767 = vshrl.u32 %v5766, 7
  %v5768 = vsub.s32 2, %v5767
  %v5769 = vrot.slane %v5466, %v5768
  %v5770 = vadd.f32 %v5769, %v5763
  %v5771 = vxor.u32 %v5770, 2147483648
  %v5772 = vmul.f32 %v5771, 1.442695
  %v5773 = vpow.pop %v5772
  %v5774 = vadd.f32 %v5773, 1.0
  %v5775 = vrcp.pop %v5774
  %v5776 = vmul.f32 1.0, %v5775
  %v5777 = vtanh.pop %v5770
  %v5778 = vmul.f32 %v5776, %v5682
  %5780 = vrot.lane.b32.xlu0 %v5777, 53
  %v5781 = vpop.permute.xlu0 %5780
  %v5783 = vmul.f32 %v5776, %v5781
  %5785 = vrot.lane.b32.xlu0 %v5783, 25
  %v5786 = vpop.permute.xlu0 %5785
  %v5788 = vadd.f32 %v5778, %v5786
  %v5789 = vtanh.pop %v5788
  %5791 = vrot.lane.b32.xlu0 %v5789, 25
  %v5792 = vpop.permute.xlu0 %5791
  %v5794 = vmul.f32 %v5776, %v5792
  %5796 = vrot.lane.b32.xlu0 %v5794, 78
  %v5797 = vpop.permute.xlu0 %5796
  %5799 = vst.msk [vmem:[#allocation2 + $0x4] sm:$0x3] %vm5586, %v5797
  %v5800 = vsel %vm877, %v5797, 0
  %5802 = vmatprep.subr.mxu0 0.0
  %5803 = vmatpush1.msra.mxu0 %v5431
  %5804 = vmatprep.subr.mxu0 0.0
  %5805 = vmatpush1.msra.mxu0 %v5432
  %5806 = vmatprep.subr.mxu0 0.0
  %5807 = vmatpush1.msra.mxu0 %v5433
  %5808 = vmatprep.subr.mxu0 0.0
  %5809 = vmatpush1.msra.mxu0 %v5481
  %5810 = vmatprep.subr.mxu0 0.0
  %5811 = vmatpush1.msra.mxu0 0.0
  %5812 = vmatprep.subr.mxu0 0.0
  %5813 = vmatpush1.msra.mxu0 0.0
  %5814 = vmatprep.subr.mxu0 0.0
  %5815 = vmatpush1.msra.mxu0 0.0
  %5816 = vmatprep.subr.mxu0 0.0
  %5817 = vmatpush1.msra.mxu0 0.0
  %5818 = vmatprep.subr.mxu0 0.0
  %5819 = vmatpush1.msra.mxu0 0.0
  %5820 = vmatprep.subr.mxu0 0.0
  %5821 = vmatpush1.msra.mxu0 0.0
  %5822 = vmatprep.subr.mxu0 0.0
  %5823 = vmatpush1.msra.mxu0 0.0
  %5824 = vmatprep.subr.mxu0 0.0
  %5825 = vmatpush1.msra.mxu0 0.0
  %5826 = vmatprep.subr.mxu0 0.0
  %5827 = vmatpush1.msra.mxu0 0.0
  %5828 = vmatprep.subr.mxu0 0.0
  %5829 = vmatpush1.msra.mxu0 0.0
  %5830 = vmatprep.subr.mxu0 0.0
  %5831 = vmatpush1.msra.mxu0 0.0
  %5832 = vmatprep.subr.mxu0 0.0
  %5833 = vmatpush1.msra.mxu0 0.0
  %5834 = vmatprep.subr.mxu0 0.0
  %5835 = vmatpush1.msra.mxu0 0.0
  %5836 = vmatprep.subr.mxu0 0.0
  %5837 = vmatpush1.msra.mxu0 0.0
  %5838 = vmatprep.subr.mxu0 0.0
  %5839 = vmatpush1.msra.mxu0 0.0
  %5840 = vmatprep.subr.mxu0 0.0
  %5841 = vmatpush1.msra.mxu0 0.0
  %5842 = vmatprep.subr.mxu0 0.0
  %5843 = vmatpush1.msra.mxu0 0.0
  %5844 = vmatprep.subr.mxu0 0.0
  %5845 = vmatpush1.msra.mxu0 0.0
  %5846 = vmatprep.subr.mxu0 0.0
  %5847 = vmatpush1.msra.mxu0 0.0
  %5848 = vmatprep.subr.mxu0 0.0
  %5849 = vmatpush1.msra.mxu0 0.0
  %5850 = vmatprep.subr.mxu0 0.0
  %5851 = vmatpush1.msra.mxu0 0.0
  %5852 = vmatprep.subr.mxu0 0.0
  %5853 = vmatpush1.msra.mxu0 0.0
  %5854 = vmatprep.subr.mxu0 0.0
  %5855 = vmatpush1.msra.mxu0 0.0
  %5856 = vmatprep.subr.mxu0 0.0
  %5857 = vmatpush1.msra.mxu0 0.0
  %5858 = vmatprep.subr.mxu0 0.0
  %5859 = vmatpush1.msra.mxu0 0.0
  %5860 = vmatprep.subr.mxu0 0.0
  %5861 = vmatpush1.msra.mxu0 0.0
  %5862 = vmatprep.subr.mxu0 0.0
  %5863 = vmatpush1.msra.mxu0 0.0
  %5864 = vmatprep.subr.mxu0 0.0
  %5865 = vmatpush1.msra.mxu0 0.0
  %5866 = vmatprep.mubr.f32.mxu0 0.0
  %5867 = vmatmul.mubr.f32.gmra.mrb[0].mxu0 %v5800
  %v5868 = vpop.f32.mrb[0].mxu0
  %v5869 = vadd.f32 0.0, %v5868
  %v5870 = vpop.f32.mrb[0].mxu0
  %5871 = vdwg.mxu0
  %v5872 = vlaneseq
  %v5873 = vshrl.u32 %v5872, 7
  %v5874 = vsub.s32 3, %v5873
  %v5875 = vrot.slane %v5466, %v5874
  %v5876 = vadd.f32 %v5875, %v5869
  %v5877 = vxor.u32 %v5876, 2147483648
  %v5878 = vmul.f32 %v5877, 1.442695
  %v5879 = vpow.pop %v5878
  %v5880 = vadd.f32 %v5879, 1.0
  %v5881 = vrcp.pop %v5880
  %v5882 = vmul.f32 1.0, %v5881
  %v5883 = vtanh.pop %v5876
  %v5884 = vmul.f32 %v5882, %v5788
  %5886 = vrot.lane.b32.xlu0 %v5883, 53
  %v5887 = vpop.permute.xlu0 %5886
  %v5889 = vmul.f32 %v5882, %v5887
  %5891 = vrot.lane.b32.xlu0 %v5889, 25
  %v5892 = vpop.permute.xlu0 %5891
  %v5894 = vadd.f32 %v5884, %v5892
  %v5895 = vtanh.pop %v5894
  %5897 = vrot.lane.b32.xlu0 %v5895, 25
  %v5898 = vpop.permute.xlu0 %5897
  %v5900 = vmul.f32 %v5882, %v5898
  %5902 = vrot.lane.b32.xlu0 %v5900, 78
  %v5903 = vpop.permute.xlu0 %5902
  %5905 = vst.msk [vmem:[#allocation2 + $0x6] sm:$0x3] %vm5586, %v5903
  %v5906 = vsel %vm877, %v5903, 0
  %5908 = vmatprep.subr.mxu0 0.0
  %5909 = vmatpush1.msra.mxu0 %v5431
  %5910 = vmatprep.subr.mxu0 0.0
  %5911 = vmatpush1.msra.mxu0 %v5432
  %5912 = vmatprep.subr.mxu0 0.0
  %5913 = vmatpush1.msra.mxu0 %v5433
  %5914 = vmatprep.subr.mxu0 0.0
  %5915 = vmatpush1.msra.mxu0 %v5481
  %5916 = vmatprep.subr.mxu0 0.0
  %5917 = vmatpush1.msra.mxu0 0.0
  %5918 = vmatprep.subr.mxu0 0.0
  %5919 = vmatpush1.msra.mxu0 0.0
  %5920 = vmatprep.subr.mxu0 0.0
  %5921 = vmatpush1.msra.mxu0 0.0
  %5922 = vmatprep.subr.mxu0 0.0
  %5923 = vmatpush1.msra.mxu0 0.0
  %5924 = vmatprep.subr.mxu0 0.0
  %5925 = vmatpush1.msra.mxu0 0.0
  %5926 = vmatprep.subr.mxu0 0.0
  %5927 = vmatpush1.msra.mxu0 0.0
  %5928 = vmatprep.subr.mxu0 0.0
  %5929 = vmatpush1.msra.mxu0 0.0
  %5930 = vmatprep.subr.mxu0 0.0
  %5931 = vmatpush1.msra.mxu0 0.0
  %5932 = vmatprep.subr.mxu0 0.0
  %5933 = vmatpush1.msra.mxu0 0.0
  %5934 = vmatprep.subr.mxu0 0.0
  %5935 = vmatpush1.msra.mxu0 0.0
  %5936 = vmatprep.subr.mxu0 0.0
  %5937 = vmatpush1.msra.mxu0 0.0
  %5938 = vmatprep.subr.mxu0 0.0
  %5939 = vmatpush1.msra.mxu0 0.0
  %5940 = vmatprep.subr.mxu0 0.0
  %5941 = vmatpush1.msra.mxu0 0.0
  %5942 = vmatprep.subr.mxu0 0.0
  %5943 = vmatpush1.msra.mxu0 0.0
  %5944 = vmatprep.subr.mxu0 0.0
  %5945 = vmatpush1.msra.mxu0 0.0
  %5946 = vmatprep.subr.mxu0 0.0
  %5947 = vmatpush1.msra.mxu0 0.0
  %5948 = vmatprep.subr.mxu0 0.0
  %5949 = vmatpush1.msra.mxu0 0.0
  %5950 = vmatprep.subr.mxu0 0.0
  %5951 = vmatpush1.msra.mxu0 0.0
  %5952 = vmatprep.subr.mxu0 0.0
  %5953 = vmatpush1.msra.mxu0 0.0
  %5954 = vmatprep.subr.mxu0 0.0
  %5955 = vmatpush1.msra.mxu0 0.0
  %5956 = vmatprep.subr.mxu0 0.0
  %5957 = vmatpush1.msra.mxu0 0.0
  %5958 = vmatprep.subr.mxu0 0.0
  %5959 = vmatpush1.msra.mxu0 0.0
  %5960 = vmatprep.subr.mxu0 0.0
  %5961 = vmatpush1.msra.mxu0 0.0
  %5962 = vmatprep.subr.mxu0 0.0
  %5963 = vmatpush1.msra.mxu0 0.0
  %5964 = vmatprep.subr.mxu0 0.0
  %5965 = vmatpush1.msra.mxu0 0.0
  %5966 = vmatprep.subr.mxu0 0.0
  %5967 = vmatpush1.msra.mxu0 0.0
  %5968 = vmatprep.subr.mxu0 0.0
  %5969 = vmatpush1.msra.mxu0 0.0
  %5970 = vmatprep.subr.mxu0 0.0
  %5971 = vmatpush1.msra.mxu0 0.0
  %5972 = vmatprep.mubr.f32.mxu0 0.0
  %5973 = vmatmul.mubr.f32.gmra.mrb[0].mxu0 %v5906
  %v5974 = vpop.f32.mrb[0].mxu0
  %v5975 = vadd.f32 0.0, %v5974
  %v5976 = vpop.f32.mrb[0].mxu0
  %5977 = vdwg.mxu0
  %v5978 = vlaneseq
  %v5979 = vshrl.u32 %v5978, 7
  %v5980 = vsub.s32 4, %v5979
  %v5981 = vrot.slane %v5466, %v5980
  %v5982 = vadd.f32 %v5981, %v5975
  %v5983 = vxor.u32 %v5982, 2147483648
  %v5984 = vmul.f32 %v5983, 1.442695
  %v5985 = vpow.pop %v5984
  %v5986 = vadd.f32 %v5985, 1.0
  %v5987 = vrcp.pop %v5986
  %v5988 = vmul.f32 1.0, %v5987
  %v5989 = vtanh.pop %v5982
  %v5990 = vmul.f32 %v5988, %v5894
  %5992 = vrot.lane.b32.xlu0 %v5989, 53
  %v5993 = vpop.permute.xlu0 %5992
  %v5995 = vmul.f32 %v5988, %v5993
  %5997 = vrot.lane.b32.xlu0 %v5995, 25
  %v5998 = vpop.permute.xlu0 %5997
  %v6000 = vadd.f32 %v5990, %v5998
  %v6001 = vtanh.pop %v6000
  %6003 = vrot.lane.b32.xlu0 %v6001, 25
  %v6004 = vpop.permute.xlu0 %6003
  %v6006 = vmul.f32 %v5988, %v6004
  %6008 = vrot.lane.b32.xlu0 %v6006, 78
  %v6009 = vpop.permute.xlu0 %6008
  %6011 = vst.msk [vmem:[#allocation2 + $0x8] sm:$0x3] %vm5586, %v6009
  %v6012 = vsel %vm877, %v6009, 0
  %6014 = vmatprep.subr.mxu0 0.0
  %6015 = vmatpush1.msra.mxu0 %v5431
  %6016 = vmatprep.subr.mxu0 0.0
  %6017 = vmatpush1.msra.mxu0 %v5432
  %6018 = vmatprep.subr.mxu0 0.0
  %6019 = vmatpush1.msra.mxu0 %v5433
  %6020 = vmatprep.subr.mxu0 0.0
  %6021 = vmatpush1.msra.mxu0 %v5481
  %6022 = vmatprep.subr.mxu0 0.0
  %6023 = vmatpush1.msra.mxu0 0.0
  %6024 = vmatprep.subr.mxu0 0.0
  %6025 = vmatpush1.msra.mxu0 0.0
  %6026 = vmatprep.subr.mxu0 0.0
  %6027 = vmatpush1.msra.mxu0 0.0
  %6028 = vmatprep.subr.mxu0 0.0
  %6029 = vmatpush1.msra.mxu0 0.0
  %6030 = vmatprep.subr.mxu0 0.0
  %6031 = vmatpush1.msra.mxu0 0.0
  %6032 = vmatprep.subr.mxu0 0.0
  %6033 = vmatpush1.msra.mxu0 0.0
  %6034 = vmatprep.subr.mxu0 0.0
  %6035 = vmatpush1.msra.mxu0 0.0
  %6036 = vmatprep.subr.mxu0 0.0
  %6037 = vmatpush1.msra.mxu0 0.0
  %6038 = vmatprep.subr.mxu0 0.0
  %6039 = vmatpush1.msra.mxu0 0.0
  %6040 = vmatprep.subr.mxu0 0.0
  %6041 = vmatpush1.msra.mxu0 0.0
  %6042 = vmatprep.subr.mxu0 0.0
  %6043 = vmatpush1.msra.mxu0 0.0
  %6044 = vmatprep.subr.mxu0 0.0
  %6045 = vmatpush1.msra.mxu0 0.0
  %6046 = vmatprep.subr.mxu0 0.0
  %6047 = vmatpush1.msra.mxu0 0.0
  %6048 = vmatprep.subr.mxu0 0.0
  %6049 = vmatpush1.msra.mxu0 0.0
  %6050 = vmatprep.subr.mxu0 0.0
  %6051 = vmatpush1.msra.mxu0 0.0
  %6052 = vmatprep.subr.mxu0 0.0
  %6053 = vmatpush1.msra.mxu0 0.0
  %6054 = vmatprep.subr.mxu0 0.0
  %6055 = vmatpush1.msra.mxu0 0.0
  %6056 = vmatprep.subr.mxu0 0.0
  %6057 = vmatpush1.msra.mxu0 0.0
  %6058 = vmatprep.subr.mxu0 0.0
  %6059 = vmatpush1.msra.mxu0 0.0
  %6060 = vmatprep.subr.mxu0 0.0
  %6061 = vmatpush1.msra.mxu0 0.0
  %6062 = vmatprep.subr.mxu0 0.0
  %6063 = vmatpush1.msra.mxu0 0.0
  %6064 = vmatprep.subr.mxu0 0.0
  %6065 = vmatpush1.msra.mxu0 0.0
  %6066 = vmatprep.subr.mxu0 0.0
  %6067 = vmatpush1.msra.mxu0 0.0
  %6068 = vmatprep.subr.mxu0 0.0
  %6069 = vmatpush1.msra.mxu0 0.0
  %6070 = vmatprep.subr.mxu0 0.0
  %6071 = vmatpush1.msra.mxu0 0.0
  %6072 = vmatprep.subr.mxu0 0.0
  %6073 = vmatpush1.msra.mxu0 0.0
  %6074 = vmatprep.subr.mxu0 0.0
  %6075 = vmatpush1.msra.mxu0 0.0
  %6076 = vmatprep.subr.mxu0 0.0
  %6077 = vmatpush1.msra.mxu0 0.0
  %6078 = vmatprep.mubr.f32.mxu0 0.0
  %6079 = vmatmul.mubr.f32.gmra.mrb[0].mxu0 %v6012
  %v6080 = vpop.f32.mrb[0].mxu0
  %v6081 = vadd.f32 0.0, %v6080
  %v6082 = vpop.f32.mrb[0].mxu0
  %6083 = vdwg.mxu0
  %v6084 = vlaneseq
  %v6085 = vshrl.u32 %v6084, 7
  %v6086 = vsub.s32 5, %v6085
  %v6087 = vrot.slane %v5466, %v6086
  %v6088 = vadd.f32 %v6087, %v6081
  %v6089 = vxor.u32 %v6088, 2147483648
  %v6090 = vmul.f32 %v6089, 1.442695
  %v6091 = vpow.pop %v6090
  %v6092 = vadd.f32 %v6091, 1.0
  %v6093 = vrcp.pop %v6092
  %v6094 = vmul.f32 1.0, %v6093
  %v6095 = vtanh.pop %v6088
  %v6096 = vmul.f32 %v6094, %v6000
  %6098 = vrot.lane.b32.xlu0 %v6095, 53
  %v6099 = vpop.permute.xlu0 %6098
  %v6101 = vmul.f32 %v6094, %v6099
  %6103 = vrot.lane.b32.xlu0 %v6101, 25
  %v6104 = vpop.permute.xlu0 %6103
  %v6106 = vadd.f32 %v6096, %v6104
  %v6107 = vtanh.pop %v6106
  %6109 = vrot.lane.b32.xlu0 %v6107, 25
  %v6110 = vpop.permute.xlu0 %6109
  %v6112 = vmul.f32 %v6094, %v6110
  %6114 = vrot.lane.b32.xlu0 %v6112, 78
  %v6115 = vpop.permute.xlu0 %6114
  %6117 = vst.msk [vmem:[#allocation2 + $0xa] sm:$0x3] %vm5586, %v6115
  %v6118 = vsel %vm877, %v6115, 0
  %6120 = vmatprep.subr.mxu0 0.0
  %6121 = vmatpush1.msra.mxu0 %v5431
  %6122 = vmatprep.subr.mxu0 0.0
  %6123 = vmatpush1.msra.mxu0 %v5432
  %6124 = vmatprep.subr.mxu0 0.0
  %6125 = vmatpush1.msra.mxu0 %v5433
  %6126 = vmatprep.subr.mxu0 0.0
  %6127 = vmatpush1.msra.mxu0 %v5481
  %6128 = vmatprep.subr.mxu0 0.0
  %6129 = vmatpush1.msra.mxu0 0.0
  %6130 = vmatprep.subr.mxu0 0.0
  %6131 = vmatpush1.msra.mxu0 0.0
  %6132 = vmatprep.subr.mxu0 0.0
  %6133 = vmatpush1.msra.mxu0 0.0
  %6134 = vmatprep.subr.mxu0 0.0
  %6135 = vmatpush1.msra.mxu0 0.0
  %6136 = vmatprep.subr.mxu0 0.0
  %6137 = vmatpush1.msra.mxu0 0.0
  %6138 = vmatprep.subr.mxu0 0.0
  %6139 = vmatpush1.msra.mxu0 0.0
  %6140 = vmatprep.subr.mxu0 0.0
  %6141 = vmatpush1.msra.mxu0 0.0
  %6142 = vmatprep.subr.mxu0 0.0
  %6143 = vmatpush1.msra.mxu0 0.0
  %6144 = vmatprep.subr.mxu0 0.0
  %6145 = vmatpush1.msra.mxu0 0.0
  %6146 = vmatprep.subr.mxu0 0.0
  %6147 = vmatpush1.msra.mxu0 0.0
  %6148 = vmatprep.subr.mxu0 0.0
  %6149 = vmatpush1.msra.mxu0 0.0
  %6150 = vmatprep.subr.mxu0 0.0
  %6151 = vmatpush1.msra.mxu0 0.0
  %6152 = vmatprep.subr.mxu0 0.0
  %6153 = vmatpush1.msra.mxu0 0.0
  %6154 = vmatprep.subr.mxu0 0.0
  %6155 = vmatpush1.msra.mxu0 0.0
  %6156 = vmatprep.subr.mxu0 0.0
  %6157 = vmatpush1.msra.mxu0 0.0
  %6158 = vmatprep.subr.mxu0 0.0
  %6159 = vmatpush1.msra.mxu0 0.0
  %6160 = vmatprep.subr.mxu0 0.0
  %6161 = vmatpush1.msra.mxu0 0.0
  %6162 = vmatprep.subr.mxu0 0.0
  %6163 = vmatpush1.msra.mxu0 0.0
  %6164 = vmatprep.subr.mxu0 0.0
  %6165 = vmatpush1.msra.mxu0 0.0
  %6166 = vmatprep.subr.mxu0 0.0
  %6167 = vmatpush1.msra.mxu0 0.0
  %6168 = vmatprep.subr.mxu0 0.0
  %6169 = vmatpush1.msra.mxu0 0.0
  %6170 = vmatprep.subr.mxu0 0.0
  %6171 = vmatpush1.msra.mxu0 0.0
  %6172 = vmatprep.subr.mxu0 0.0
  %6173 = vmatpush1.msra.mxu0 0.0
  %6174 = vmatprep.subr.mxu0 0.0
  %6175 = vmatpush1.msra.mxu0 0.0
  %6176 = vmatprep.subr.mxu0 0.0
  %6177 = vmatpush1.msra.mxu0 0.0
  %6178 = vmatprep.subr.mxu0 0.0
  %6179 = vmatpush1.msra.mxu0 0.0
  %6180 = vmatprep.subr.mxu0 0.0
  %6181 = vmatpush1.msra.mxu0 0.0
  %6182 = vmatprep.subr.mxu0 0.0
  %6183 = vmatpush1.msra.mxu0 0.0
  %6184 = vmatprep.mubr.f32.mxu0 0.0
  %6185 = vmatmul.mubr.f32.gmra.mrb[0].mxu0 %v6118
  %v6186 = vpop.f32.mrb[0].mxu0
  %v6187 = vadd.f32 0.0, %v6186
  %v6188 = vpop.f32.mrb[0].mxu0
  %6189 = vdwg.mxu0
  %v6190 = vlaneseq
  %v6191 = vshrl.u32 %v6190, 7
  %v6192 = vsub.s32 6, %v6191
  %v6193 = vrot.slane %v5466, %v6192
  %v6194 = vadd.f32 %v6193, %v6187
  %v6195 = vxor.u32 %v6194, 2147483648
  %v6196 = vmul.f32 %v6195, 1.442695
  %v6197 = vpow.pop %v6196
  %v6198 = vadd.f32 %v6197, 1.0
  %v6199 = vrcp.pop %v6198
  %v6200 = vmul.f32 1.0, %v6199
  %v6201 = vtanh.pop %v6194
  %v6202 = vmul.f32 %v6200, %v6106
  %6204 = vrot.lane.b32.xlu0 %v6201, 53
  %v6205 = vpop.permute.xlu0 %6204
  %v6207 = vmul.f32 %v6200, %v6205
  %6209 = vrot.lane.b32.xlu0 %v6207, 25
  %v6210 = vpop.permute.xlu0 %6209
  %v6212 = vadd.f32 %v6202, %v6210
  %v6213 = vtanh.pop %v6212
  %6215 = vrot.lane.b32.xlu0 %v6213, 25
  %v6216 = vpop.permute.xlu0 %6215
  %v6218 = vmul.f32 %v6200, %v6216
  %6220 = vrot.lane.b32.xlu0 %v6218, 78
  %v6221 = vpop.permute.xlu0 %6220
  %6223 = vst.msk [vmem:[#allocation2 + $0xc] sm:$0x3] %vm5586, %v6221
  %v6224 = vsel %vm877, %v6221, 0
  %6226 = vmatprep.subr.mxu0 0.0
  %6227 = vmatpush1.msra.mxu0 %v5431
  %6228 = vmatprep.subr.mxu0 0.0
  %6229 = vmatpush1.msra.mxu0 %v5432
  %6230 = vmatprep.subr.mxu0 0.0
  %6231 = vmatpush1.msra.mxu0 %v5433
  %6232 = vmatprep.subr.mxu0 0.0
  %6233 = vmatpush1.msra.mxu0 %v5481
  %6234 = vmatprep.subr.mxu0 0.0
  %6235 = vmatpush1.msra.mxu0 0.0
  %6236 = vmatprep.subr.mxu0 0.0
  %6237 = vmatpush1.msra.mxu0 0.0
  %6238 = vmatprep.subr.mxu0 0.0
  %6239 = vmatpush1.msra.mxu0 0.0
  %6240 = vmatprep.subr.mxu0 0.0
  %6241 = vmatpush1.msra.mxu0 0.0
  %6242 = vmatprep.subr.mxu0 0.0
  %6243 = vmatpush1.msra.mxu0 0.0
  %6244 = vmatprep.subr.mxu0 0.0
  %6245 = vmatpush1.msra.mxu0 0.0
  %6246 = vmatprep.subr.mxu0 0.0
  %6247 = vmatpush1.msra.mxu0 0.0
  %6248 = vmatprep.subr.mxu0 0.0
  %6249 = vmatpush1.msra.mxu0 0.0
  %6250 = vmatprep.subr.mxu0 0.0
  %6251 = vmatpush1.msra.mxu0 0.0
  %6252 = vmatprep.subr.mxu0 0.0
  %6253 = vmatpush1.msra.mxu0 0.0
  %6254 = vmatprep.subr.mxu0 0.0
  %6255 = vmatpush1.msra.mxu0 0.0
  %6256 = vmatprep.subr.mxu0 0.0
  %6257 = vmatpush1.msra.mxu0 0.0
  %6258 = vmatprep.subr.mxu0 0.0
  %6259 = vmatpush1.msra.mxu0 0.0
  %6260 = vmatprep.subr.mxu0 0.0
  %6261 = vmatpush1.msra.mxu0 0.0
  %6262 = vmatprep.subr.mxu0 0.0
  %6263 = vmatpush1.msra.mxu0 0.0
  %6264 = vmatprep.subr.mxu0 0.0
  %6265 = vmatpush1.msra.mxu0 0.0
  %6266 = vmatprep.subr.mxu0 0.0
  %6267 = vmatpush1.msra.mxu0 0.0
  %6268 = vmatprep.subr.mxu0 0.0
  %6269 = vmatpush1.msra.mxu0 0.0
  %6270 = vmatprep.subr.mxu0 0.0
  %6271 = vmatpush1.msra.mxu0 0.0
  %6272 = vmatprep.subr.mxu0 0.0
  %6273 = vmatpush1.msra.mxu0 0.0
  %6274 = vmatprep.subr.mxu0 0.0
  %6275 = vmatpush1.msra.mxu0 0.0
  %6276 = vmatprep.subr.mxu0 0.0
  %6277 = vmatpush1.msra.mxu0 0.0
  %6278 = vmatprep.subr.mxu0 0.0
  %6279 = vmatpush1.msra.mxu0 0.0
  %6280 = vmatprep.subr.mxu0 0.0
  %6281 = vmatpush1.msra.mxu0 0.0
  %6282 = vmatprep.subr.mxu0 0.0
  %6283 = vmatpush1.msra.mxu0 0.0
  %6284 = vmatprep.subr.mxu0 0.0
  %6285 = vmatpush1.msra.mxu0 0.0
  %6286 = vmatprep.subr.mxu0 0.0
  %6287 = vmatpush1.msra.mxu0 0.0
  %6288 = vmatprep.subr.mxu0 0.0
  %6289 = vmatpush1.msra.mxu0 0.0
  %6290 = vmatprep.mubr.f32.mxu0 0.0
  %6291 = vmatmul.mubr.f32.gmra.mrb[0].mxu0 %v6224
  %v6292 = vpop.f32.mrb[0].mxu0
  %v6293 = vadd.f32 0.0, %v6292
  %v6294 = vpop.f32.mrb[0].mxu0
  %6295 = vdwg.mxu0
  %v6296 = vlaneseq
  %v6297 = vshrl.u32 %v6296, 7
  %v6298 = vsub.s32 7, %v6297
  %v6299 = vrot.slane %v5466, %v6298
  %v6300 = vadd.f32 %v6299, %v6293
  %v6301 = vxor.u32 %v6300, 2147483648
  %v6302 = vmul.f32 %v6301, 1.442695
  %v6303 = vpow.pop %v6302
  %v6304 = vadd.f32 %v6303, 1.0
  %v6305 = vrcp.pop %v6304
  %v6306 = vmul.f32 1.0, %v6305
  %v6307 = vtanh.pop %v6300
  %v6308 = vmul.f32 %v6306, %v6212
  %6310 = vrot.lane.b32.xlu0 %v6307, 53
  %v6311 = vpop.permute.xlu0 %6310
  %v6313 = vmul.f32 %v6306, %v6311
  %6315 = vrot.lane.b32.xlu0 %v6313, 25
  %v6316 = vpop.permute.xlu0 %6315
  %v6318 = vadd.f32 %v6308, %v6316
  %v6319 = vtanh.pop %v6318
  %6321 = vrot.lane.b32.xlu0 %v6319, 25
  %v6322 = vpop.permute.xlu0 %6321
  %v6324 = vmul.f32 %v6306, %v6322
  %6326 = vrot.lane.b32.xlu0 %v6324, 78
  %v6327 = vpop.permute.xlu0 %6326
  %6329 = vst.msk [vmem:[#allocation2 + $0xe] sm:$0x3] %vm5586, %v6327
  %v6330 = vsel %vm877, %v6327, 0
  %6332 = vmatprep.subr.mxu0 0.0
  %6333 = vmatpush1.msra.mxu0 %v5431
  %6334 = vmatprep.subr.mxu0 0.0
  %6335 = vmatpush1.msra.mxu0 %v5432
  %6336 = vmatprep.subr.mxu0 0.0
  %6337 = vmatpush1.msra.mxu0 %v5433
  %6338 = vmatprep.subr.mxu0 0.0
  %6339 = vmatpush1.msra.mxu0 %v5481
  %6340 = vmatprep.subr.mxu0 0.0
  %6341 = vmatpush1.msra.mxu0 0.0
  %6342 = vmatprep.subr.mxu0 0.0
  %6343 = vmatpush1.msra.mxu0 0.0
  %6344 = vmatprep.subr.mxu0 0.0
  %6345 = vmatpush1.msra.mxu0 0.0
  %6346 = vmatprep.subr.mxu0 0.0
  %6347 = vmatpush1.msra.mxu0 0.0
  %6348 = vmatprep.subr.mxu0 0.0
  %6349 = vmatpush1.msra.mxu0 0.0
  %6350 = vmatprep.subr.mxu0 0.0
  %6351 = vmatpush1.msra.mxu0 0.0
  %6352 = vmatprep.subr.mxu0 0.0
  %6353 = vmatpush1.msra.mxu0 0.0
  %6354 = vmatprep.subr.mxu0 0.0
  %6355 = vmatpush1.msra.mxu0 0.0
  %6356 = vmatprep.subr.mxu0 0.0
  %6357 = vmatpush1.msra.mxu0 0.0
  %6358 = vmatprep.subr.mxu0 0.0
  %6359 = vmatpush1.msra.mxu0 0.0
  %6360 = vmatprep.subr.mxu0 0.0
  %6361 = vmatpush1.msra.mxu0 0.0
  %6362 = vmatprep.subr.mxu0 0.0
  %6363 = vmatpush1.msra.mxu0 0.0
  %6364 = vmatprep.subr.mxu0 0.0
  %6365 = vmatpush1.msra.mxu0 0.0
  %6366 = vmatprep.subr.mxu0 0.0
  %6367 = vmatpush1.msra.mxu0 0.0
  %6368 = vmatprep.subr.mxu0 0.0
  %6369 = vmatpush1.msra.mxu0 0.0
  %6370 = vmatprep.subr.mxu0 0.0
  %6371 = vmatpush1.msra.mxu0 0.0
  %6372 = vmatprep.subr.mxu0 0.0
  %6373 = vmatpush1.msra.mxu0 0.0
  %6374 = vmatprep.subr.mxu0 0.0
  %6375 = vmatpush1.msra.mxu0 0.0
  %6376 = vmatprep.subr.mxu0 0.0
  %6377 = vmatpush1.msra.mxu0 0.0
  %6378 = vmatprep.subr.mxu0 0.0
  %6379 = vmatpush1.msra.mxu0 0.0
  %6380 = vmatprep.subr.mxu0 0.0
  %6381 = vmatpush1.msra.mxu0 0.0
  %6382 = vmatprep.subr.mxu0 0.0
  %6383 = vmatpush1.msra.mxu0 0.0
  %6384 = vmatprep.subr.mxu0 0.0
  %6385 = vmatpush1.msra.mxu0 0.0
  %6386 = vmatprep.subr.mxu0 0.0
  %6387 = vmatpush1.msra.mxu0 0.0
  %6388 = vmatprep.subr.mxu0 0.0
  %6389 = vmatpush1.msra.mxu0 0.0
  %6390 = vmatprep.subr.mxu0 0.0
  %6391 = vmatpush1.msra.mxu0 0.0
  %6392 = vmatprep.subr.mxu0 0.0
  %6393 = vmatpush1.msra.mxu0 0.0
  %6394 = vmatprep.subr.mxu0 0.0
  %6395 = vmatpush1.msra.mxu0 0.0
  %6396 = vmatprep.mubr.f32.mxu0 0.0
  %6397 = vmatmul.mubr.f32.gmra.mrb[0].mxu0 %v6330
  %v6398 = vpop.f32.mrb[0].mxu0
  %v6399 = vadd.f32 0.0, %v6398
  %v6400 = vpop.f32.mrb[0].mxu0
  %6401 = vdwg.mxu0
  %v6402 = vlaneseq
  %v6403 = vshrl.u32 %v6402, 7
  %v6404 = vsub.s32 0, %v6403
  %v6405 = vrot.slane %v5467, %v6404
  %v6406 = vadd.f32 %v6405, %v6399
  %v6407 = vxor.u32 %v6406, 2147483648
  %v6408 = vmul.f32 %v6407, 1.442695
  %v6409 = vpow.pop %v6408
  %v6410 = vadd.f32 %v6409, 1.0
  %v6411 = vrcp.pop %v6410
  %v6412 = vmul.f32 1.0, %v6411
  %v6413 = vtanh.pop %v6406
  %v6414 = vmul.f32 %v6412, %v6318
  %6416 = vrot.lane.b32.xlu0 %v6413, 53
  %v6417 = vpop.permute.xlu0 %6416
  %v6419 = vmul.f32 %v6412, %v6417
  %6421 = vrot.lane.b32.xlu0 %v6419, 25
  %v6422 = vpop.permute.xlu0 %6421
  %v6424 = vadd.f32 %v6414, %v6422
  %v6425 = vtanh.pop %v6424
  %6427 = vrot.lane.b32.xlu0 %v6425, 25
  %v6428 = vpop.permute.xlu0 %6427
  %v6430 = vmul.f32 %v6412, %v6428
  %6432 = vrot.lane.b32.xlu0 %v6430, 78
  %v6433 = vpop.permute.xlu0 %6432
  %6435 = vst.msk [vmem:[#allocation2 + $0x10] sm:$0x3] %vm5586, %v6433
  %v6436 = vsel %vm877, %v6433, 0
  %6438 = vmatprep.subr.mxu0 0.0
  %6439 = vmatpush1.msra.mxu0 %v5431
  %6440 = vmatprep.subr.mxu0 0.0
  %6441 = vmatpush1.msra.mxu0 %v5432
  %6442 = vmatprep.subr.mxu0 0.0
  %6443 = vmatpush1.msra.mxu0 %v5433
  %6444 = vmatprep.subr.mxu0 0.0
  %6445 = vmatpush1.msra.mxu0 %v5481
  %6446 = vmatprep.subr.mxu0 0.0
  %6447 = vmatpush1.msra.mxu0 0.0
  %6448 = vmatprep.subr.mxu0 0.0
  %6449 = vmatpush1.msra.mxu0 0.0
  %6450 = vmatprep.subr.mxu0 0.0
  %6451 = vmatpush1.msra.mxu0 0.0
  %6452 = vmatprep.subr.mxu0 0.0
  %6453 = vmatpush1.msra.mxu0 0.0
  %6454 = vmatprep.subr.mxu0 0.0
  %6455 = vmatpush1.msra.mxu0 0.0
  %6456 = vmatprep.subr.mxu0 0.0
  %6457 = vmatpush1.msra.mxu0 0.0
  %6458 = vmatprep.subr.mxu0 0.0
  %6459 = vmatpush1.msra.mxu0 0.0
  %6460 = vmatprep.subr.mxu0 0.0
  %6461 = vmatpush1.msra.mxu0 0.0
  %6462 = vmatprep.subr.mxu0 0.0
  %6463 = vmatpush1.msra.mxu0 0.0
  %6464 = vmatprep.subr.mxu0 0.0
  %6465 = vmatpush1.msra.mxu0 0.0
  %6466 = vmatprep.subr.mxu0 0.0
  %6467 = vmatpush1.msra.mxu0 0.0
  %6468 = vmatprep.subr.mxu0 0.0
  %6469 = vmatpush1.msra.mxu0 0.0
  %6470 = vmatprep.subr.mxu0 0.0
  %6471 = vmatpush1.msra.mxu0 0.0
  %6472 = vmatprep.subr.mxu0 0.0
  %6473 = vmatpush1.msra.mxu0 0.0
  %6474 = vmatprep.subr.mxu0 0.0
  %6475 = vmatpush1.msra.mxu0 0.0
  %6476 = vmatprep.subr.mxu0 0.0
  %6477 = vmatpush1.msra.mxu0 0.0
  %6478 = vmatprep.subr.mxu0 0.0
  %6479 = vmatpush1.msra.mxu0 0.0
  %6480 = vmatprep.subr.mxu0 0.0
  %6481 = vmatpush1.msra.mxu0 0.0
  %6482 = vmatprep.subr.mxu0 0.0
  %6483 = vmatpush1.msra.mxu0 0.0
  %6484 = vmatprep.subr.mxu0 0.0
  %6485 = vmatpush1.msra.mxu0 0.0
  %6486 = vmatprep.subr.mxu0 0.0
  %6487 = vmatpush1.msra.mxu0 0.0
  %6488 = vmatprep.subr.mxu0 0.0
  %6489 = vmatpush1.msra.mxu0 0.0
  %6490 = vmatprep.subr.mxu0 0.0
  %6491 = vmatpush1.msra.mxu0 0.0
  %6492 = vmatprep.subr.mxu0 0.0
  %6493 = vmatpush1.msra.mxu0 0.0
  %6494 = vmatprep.subr.mxu0 0.0
  %6495 = vmatpush1.msra.mxu0 0.0
  %6496 = vmatprep.subr.mxu0 0.0
  %6497 = vmatpush1.msra.mxu0 0.0
  %6498 = vmatprep.subr.mxu0 0.0
  %6499 = vmatpush1.msra.mxu0 0.0
  %6500 = vmatprep.subr.mxu0 0.0
  %6501 = vmatpush1.msra.mxu0 0.0
  %6502 = vmatprep.mubr.f32.mxu0 0.0
  %6503 = vmatmul.mubr.f32.gmra.mrb[0].mxu0 %v6436
  %v6504 = vpop.f32.mrb[0].mxu0
  %v6505 = vadd.f32 0.0, %v6504
  %v6506 = vpop.f32.mrb[0].mxu0
  %6507 = vdwg.mxu0
  %v6508 = vlaneseq
  %v6509 = vshrl.u32 %v6508, 7
  %v6510 = vsub.s32 1, %v6509
  %v6511 = vrot.slane %v5467, %v6510
  %v6512 = vadd.f32 %v6511, %v6505
  %v6513 = vxor.u32 %v6512, 2147483648
  %v6514 = vmul.f32 %v6513, 1.442695
  %v6515 = vpow.pop %v6514
  %v6516 = vadd.f32 %v6515, 1.0
  %v6517 = vrcp.pop %v6516
  %v6518 = vmul.f32 1.0, %v6517
  %v6519 = vtanh.pop %v6512
  %v6520 = vmul.f32 %v6518, %v6424
  %6522 = vrot.lane.b32.xlu0 %v6519, 53
  %v6523 = vpop.permute.xlu0 %6522
  %v6525 = vmul.f32 %v6518, %v6523
  %6527 = vrot.lane.b32.xlu0 %v6525, 25
  %v6528 = vpop.permute.xlu0 %6527
  %v6530 = vadd.f32 %v6520, %v6528
  %v6531 = vtanh.pop %v6530
  %6533 = vrot.lane.b32.xlu0 %v6531, 25
  %v6534 = vpop.permute.xlu0 %6533
  %v6536 = vmul.f32 %v6518, %v6534
  %6538 = vrot.lane.b32.xlu0 %v6536, 78
  %v6539 = vpop.permute.xlu0 %6538
  %6541 = vst.msk [vmem:[#allocation2 + $0x12] sm:$0x3] %vm5586, %v6539
  %v6542 = vsel %vm877, %v6539, 0
  %6544 = vmatprep.subr.mxu0 0.0
  %6545 = vmatpush1.msra.mxu0 %v5431
  %6546 = vmatprep.subr.mxu0 0.0
  %6547 = vmatpush1.msra.mxu0 %v5432
  %6548 = vmatprep.subr.mxu0 0.0
  %6549 = vmatpush1.msra.mxu0 %v5433
  %6550 = vmatprep.subr.mxu0 0.0
  %6551 = vmatpush1.msra.mxu0 %v5481
  %6552 = vmatprep.subr.mxu0 0.0
  %6553 = vmatpush1.msra.mxu0 0.0
  %6554 = vmatprep.subr.mxu0 0.0
  %6555 = vmatpush1.msra.mxu0 0.0
  %6556 = vmatprep.subr.mxu0 0.0
  %6557 = vmatpush1.msra.mxu0 0.0
  %6558 = vmatprep.subr.mxu0 0.0
  %6559 = vmatpush1.msra.mxu0 0.0
  %6560 = vmatprep.subr.mxu0 0.0
  %6561 = vmatpush1.msra.mxu0 0.0
  %6562 = vmatprep.subr.mxu0 0.0
  %6563 = vmatpush1.msra.mxu0 0.0
  %6564 = vmatprep.subr.mxu0 0.0
  %6565 = vmatpush1.msra.mxu0 0.0
  %6566 = vmatprep.subr.mxu0 0.0
  %6567 = vmatpush1.msra.mxu0 0.0
  %6568 = vmatprep.subr.mxu0 0.0
  %6569 = vmatpush1.msra.mxu0 0.0
  %6570 = vmatprep.subr.mxu0 0.0
  %6571 = vmatpush1.msra.mxu0 0.0
  %6572 = vmatprep.subr.mxu0 0.0
  %6573 = vmatpush1.msra.mxu0 0.0
  %6574 = vmatprep.subr.mxu0 0.0
  %6575 = vmatpush1.msra.mxu0 0.0
  %6576 = vmatprep.subr.mxu0 0.0
  %6577 = vmatpush1.msra.mxu0 0.0
  %6578 = vmatprep.subr.mxu0 0.0
  %6579 = vmatpush1.msra.mxu0 0.0
  %6580 = vmatprep.subr.mxu0 0.0
  %6581 = vmatpush1.msra.mxu0 0.0
  %6582 = vmatprep.subr.mxu0 0.0
  %6583 = vmatpush1.msra.mxu0 0.0
  %6584 = vmatprep.subr.mxu0 0.0
  %6585 = vmatpush1.msra.mxu0 0.0
  %6586 = vmatprep.subr.mxu0 0.0
  %6587 = vmatpush1.msra.mxu0 0.0
  %6588 = vmatprep.subr.mxu0 0.0
  %6589 = vmatpush1.msra.mxu0 0.0
  %6590 = vmatprep.subr.mxu0 0.0
  %6591 = vmatpush1.msra.mxu0 0.0
  %6592 = vmatprep.subr.mxu0 0.0
  %6593 = vmatpush1.msra.mxu0 0.0
  %6594 = vmatprep.subr.mxu0 0.0
  %6595 = vmatpush1.msra.mxu0 0.0
  %6596 = vmatprep.subr.mxu0 0.0
  %6597 = vmatpush1.msra.mxu0 0.0
  %6598 = vmatprep.subr.mxu0 0.0
  %6599 = vmatpush1.msra.mxu0 0.0
  %6600 = vmatprep.subr.mxu0 0.0
  %6601 = vmatpush1.msra.mxu0 0.0
  %6602 = vmatprep.subr.mxu0 0.0
  %6603 = vmatpush1.msra.mxu0 0.0
  %6604 = vmatprep.subr.mxu0 0.0
  %6605 = vmatpush1.msra.mxu0 0.0
  %6606 = vmatprep.subr.mxu0 0.0
  %6607 = vmatpush1.msra.mxu0 0.0
  %6608 = vmatprep.mubr.f32.mxu0 0.0
  %6609 = vmatmul.mubr.f32.gmra.mrb[0].mxu0 %v6542
  %v6610 = vpop.f32.mrb[0].mxu0
  %v6611 = vadd.f32 0.0, %v6610
  %v6612 = vpop.f32.mrb[0].mxu0
  %6613 = vdwg.mxu0
  %v6614 = vlaneseq
  %v6615 = vshrl.u32 %v6614, 7
  %v6616 = vsub.s32 2, %v6615
  %v6617 = vrot.slane %v5467, %v6616
  %v6618 = vadd.f32 %v6617, %v6611
  %v6619 = vxor.u32 %v6618, 2147483648
  %v6620 = vmul.f32 %v6619, 1.442695
  %v6621 = vpow.pop %v6620
  %v6622 = vadd.f32 %v6621, 1.0
  %v6623 = vrcp.pop %v6622
  %v6624 = vmul.f32 1.0, %v6623
  %v6625 = vtanh.pop %v6618
  %v6626 = vmul.f32 %v6624, %v6530
  %6628 = vrot.lane.b32.xlu0 %v6625, 53
  %v6629 = vpop.permute.xlu0 %6628
  %v6631 = vmul.f32 %v6624, %v6629
  %6633 = vrot.lane.b32.xlu0 %v6631, 25
  %v6634 = vpop.permute.xlu0 %6633
  %v6636 = vadd.f32 %v6626, %v6634
  %v6637 = vtanh.pop %v6636
  %6639 = vrot.lane.b32.xlu0 %v6637, 25
  %v6640 = vpop.permute.xlu0 %6639
  %v6642 = vmul.f32 %v6624, %v6640
  %6644 = vrot.lane.b32.xlu0 %v6642, 78
  %v6645 = vpop.permute.xlu0 %6644
  %6647 = vst.msk [vmem:[#allocation2 + $0x14] sm:$0x3] %vm5586, %v6645
  %v6648 = vsel %vm877, %v6645, 0
  %6650 = vmatprep.subr.mxu0 0.0
  %6651 = vmatpush1.msra.mxu0 %v5431
  %6652 = vmatprep.subr.mxu0 0.0
  %6653 = vmatpush1.msra.mxu0 %v5432
  %6654 = vmatprep.subr.mxu0 0.0
  %6655 = vmatpush1.msra.mxu0 %v5433
  %6656 = vmatprep.subr.mxu0 0.0
  %6657 = vmatpush1.msra.mxu0 %v5481
  %6658 = vmatprep.subr.mxu0 0.0
  %6659 = vmatpush1.msra.mxu0 0.0
  %6660 = vmatprep.subr.mxu0 0.0
  %6661 = vmatpush1.msra.mxu0 0.0
  %6662 = vmatprep.subr.mxu0 0.0
  %6663 = vmatpush1.msra.mxu0 0.0
  %6664 = vmatprep.subr.mxu0 0.0
  %6665 = vmatpush1.msra.mxu0 0.0
  %6666 = vmatprep.subr.mxu0 0.0
  %6667 = vmatpush1.msra.mxu0 0.0
  %6668 = vmatprep.subr.mxu0 0.0
  %6669 = vmatpush1.msra.mxu0 0.0
  %6670 = vmatprep.subr.mxu0 0.0
  %6671 = vmatpush1.msra.mxu0 0.0
  %6672 = vmatprep.subr.mxu0 0.0
  %6673 = vmatpush1.msra.mxu0 0.0
  %6674 = vmatprep.subr.mxu0 0.0
  %6675 = vmatpush1.msra.mxu0 0.0
  %6676 = vmatprep.subr.mxu0 0.0
  %6677 = vmatpush1.msra.mxu0 0.0
  %6678 = vmatprep.subr.mxu0 0.0
  %6679 = vmatpush1.msra.mxu0 0.0
  %6680 = vmatprep.subr.mxu0 0.0
  %6681 = vmatpush1.msra.mxu0 0.0
  %6682 = vmatprep.subr.mxu0 0.0
  %6683 = vmatpush1.msra.mxu0 0.0
  %6684 = vmatprep.subr.mxu0 0.0
  %6685 = vmatpush1.msra.mxu0 0.0
  %6686 = vmatprep.subr.mxu0 0.0
  %6687 = vmatpush1.msra.mxu0 0.0
  %6688 = vmatprep.subr.mxu0 0.0
  %6689 = vmatpush1.msra.mxu0 0.0
  %6690 = vmatprep.subr.mxu0 0.0
  %6691 = vmatpush1.msra.mxu0 0.0
  %6692 = vmatprep.subr.mxu0 0.0
  %6693 = vmatpush1.msra.mxu0 0.0
  %6694 = vmatprep.subr.mxu0 0.0
  %6695 = vmatpush1.msra.mxu0 0.0
  %6696 = vmatprep.subr.mxu0 0.0
  %6697 = vmatpush1.msra.mxu0 0.0
  %6698 = vmatprep.subr.mxu0 0.0
  %6699 = vmatpush1.msra.mxu0 0.0
  %6700 = vmatprep.subr.mxu0 0.0
  %6701 = vmatpush1.msra.mxu0 0.0
  %6702 = vmatprep.subr.mxu0 0.0
  %6703 = vmatpush1.msra.mxu0 0.0
  %6704 = vmatprep.subr.mxu0 0.0
  %6705 = vmatpush1.msra.mxu0 0.0
  %6706 = vmatprep.subr.mxu0 0.0
  %6707 = vmatpush1.msra.mxu0 0.0
  %6708 = vmatprep.subr.mxu0 0.0
  %6709 = vmatpush1.msra.mxu0 0.0
  %6710 = vmatprep.subr.mxu0 0.0
  %6711 = vmatpush1.msra.mxu0 0.0
  %6712 = vmatprep.subr.mxu0 0.0
  %6713 = vmatpush1.msra.mxu0 0.0
  %6714 = vmatprep.mubr.f32.mxu0 0.0
  %6715 = vmatmul.mubr.f32.gmra.mrb[0].mxu0 %v6648
  %v6716 = vpop.f32.mrb[0].mxu0
  %v6717 = vadd.f32 0.0, %v6716
  %v6718 = vpop.f32.mrb[0].mxu0
  %6719 = vdwg.mxu0
  %v6720 = vlaneseq
  %v6721 = vshrl.u32 %v6720, 7
  %v6722 = vsub.s32 3, %v6721
  %v6723 = vrot.slane %v5467, %v6722
  %v6724 = vadd.f32 %v6723, %v6717
  %v6725 = vxor.u32 %v6724, 2147483648
  %v6726 = vmul.f32 %v6725, 1.442695
  %v6727 = vpow.pop %v6726
  %v6728 = vadd.f32 %v6727, 1.0
  %v6729 = vrcp.pop %v6728
  %v6730 = vmul.f32 1.0, %v6729
  %v6731 = vtanh.pop %v6724
  %v6732 = vmul.f32 %v6730, %v6636
  %6734 = vrot.lane.b32.xlu0 %v6731, 53
  %v6735 = vpop.permute.xlu0 %6734
  %v6737 = vmul.f32 %v6730, %v6735
  %6739 = vrot.lane.b32.xlu0 %v6737, 25
  %v6740 = vpop.permute.xlu0 %6739
  %v6742 = vadd.f32 %v6732, %v6740
  %v6743 = vtanh.pop %v6742
  %6745 = vrot.lane.b32.xlu0 %v6743, 25
  %v6746 = vpop.permute.xlu0 %6745
  %v6748 = vmul.f32 %v6730, %v6746
  %6750 = vrot.lane.b32.xlu0 %v6748, 78
  %v6751 = vpop.permute.xlu0 %6750
  %6753 = vst.msk [vmem:[#allocation2 + $0x16] sm:$0x3] %vm5586, %v6751
  %v6754 = vsel %vm877, %v6751, 0
  %6756 = vmatprep.subr.mxu0 0.0
  %6757 = vmatpush1.msra.mxu0 %v5431
  %6758 = vmatprep.subr.mxu0 0.0
  %6759 = vmatpush1.msra.mxu0 %v5432
  %6760 = vmatprep.subr.mxu0 0.0
  %6761 = vmatpush1.msra.mxu0 %v5433
  %6762 = vmatprep.subr.mxu0 0.0
  %6763 = vmatpush1.msra.mxu0 %v5481
  %6764 = vmatprep.subr.mxu0 0.0
  %6765 = vmatpush1.msra.mxu0 0.0
  %6766 = vmatprep.subr.mxu0 0.0
  %6767 = vmatpush1.msra.mxu0 0.0
  %6768 = vmatprep.subr.mxu0 0.0
  %6769 = vmatpush1.msra.mxu0 0.0
  %6770 = vmatprep.subr.mxu0 0.0
  %6771 = vmatpush1.msra.mxu0 0.0
  %6772 = vmatprep.subr.mxu0 0.0
  %6773 = vmatpush1.msra.mxu0 0.0
  %6774 = vmatprep.subr.mxu0 0.0
  %6775 = vmatpush1.msra.mxu0 0.0
  %6776 = vmatprep.subr.mxu0 0.0
  %6777 = vmatpush1.msra.mxu0 0.0
  %6778 = vmatprep.subr.mxu0 0.0
  %6779 = vmatpush1.msra.mxu0 0.0
  %6780 = vmatprep.subr.mxu0 0.0
  %6781 = vmatpush1.msra.mxu0 0.0
  %6782 = vmatprep.subr.mxu0 0.0
  %6783 = vmatpush1.msra.mxu0 0.0
  %6784 = vmatprep.subr.mxu0 0.0
  %6785 = vmatpush1.msra.mxu0 0.0
  %6786 = vmatprep.subr.mxu0 0.0
  %6787 = vmatpush1.msra.mxu0 0.0
  %6788 = vmatprep.subr.mxu0 0.0
  %6789 = vmatpush1.msra.mxu0 0.0
  %6790 = vmatprep.subr.mxu0 0.0
  %6791 = vmatpush1.msra.mxu0 0.0
  %6792 = vmatprep.subr.mxu0 0.0
  %6793 = vmatpush1.msra.mxu0 0.0
  %6794 = vmatprep.subr.mxu0 0.0
  %6795 = vmatpush1.msra.mxu0 0.0
  %6796 = vmatprep.subr.mxu0 0.0
  %6797 = vmatpush1.msra.mxu0 0.0
  %6798 = vmatprep.subr.mxu0 0.0
  %6799 = vmatpush1.msra.mxu0 0.0
  %6800 = vmatprep.subr.mxu0 0.0
  %6801 = vmatpush1.msra.mxu0 0.0
  %6802 = vmatprep.subr.mxu0 0.0
  %6803 = vmatpush1.msra.mxu0 0.0
  %6804 = vmatprep.subr.mxu0 0.0
  %6805 = vmatpush1.msra.mxu0 0.0
  %6806 = vmatprep.subr.mxu0 0.0
  %6807 = vmatpush1.msra.mxu0 0.0
  %6808 = vmatprep.subr.mxu0 0.0
  %6809 = vmatpush1.msra.mxu0 0.0
  %6810 = vmatprep.subr.mxu0 0.0
  %6811 = vmatpush1.msra.mxu0 0.0
  %6812 = vmatprep.subr.mxu0 0.0
  %6813 = vmatpush1.msra.mxu0 0.0
  %6814 = vmatprep.subr.mxu0 0.0
  %6815 = vmatpush1.msra.mxu0 0.0
  %6816 = vmatprep.subr.mxu0 0.0
  %6817 = vmatpush1.msra.mxu0 0.0
  %6818 = vmatprep.subr.mxu0 0.0
  %6819 = vmatpush1.msra.mxu0 0.0
  %6820 = vmatprep.mubr.f32.mxu0 0.0
  %6821 = vmatmul.mubr.f32.gmra.mrb[0].mxu0 %v6754
  %v6822 = vpop.f32.mrb[0].mxu0
  %v6823 = vadd.f32 0.0, %v6822
  %v6824 = vpop.f32.mrb[0].mxu0
  %6825 = vdwg.mxu0
  %v6826 = vlaneseq
  %v6827 = vshrl.u32 %v6826, 7
  %v6828 = vsub.s32 4, %v6827
  %v6829 = vrot.slane %v5467, %v6828
  %v6830 = vadd.f32 %v6829, %v6823
  %v6831 = vxor.u32 %v6830, 2147483648
  %v6832 = vmul.f32 %v6831, 1.442695
  %v6833 = vpow.pop %v6832
  %v6834 = vadd.f32 %v6833, 1.0
  %v6835 = vrcp.pop %v6834
  %v6836 = vmul.f32 1.0, %v6835
  %v6837 = vtanh.pop %v6830
  %v6838 = vmul.f32 %v6836, %v6742
  %6840 = vrot.lane.b32.xlu0 %v6837, 53
  %v6841 = vpop.permute.xlu0 %6840
  %v6843 = vmul.f32 %v6836, %v6841
  %6845 = vrot.lane.b32.xlu0 %v6843, 25
  %v6846 = vpop.permute.xlu0 %6845
  %v6848 = vadd.f32 %v6838, %v6846
  %v6849 = vtanh.pop %v6848
  %6851 = vrot.lane.b32.xlu0 %v6849, 25
  %v6852 = vpop.permute.xlu0 %6851
  %v6854 = vmul.f32 %v6836, %v6852
  %6856 = vrot.lane.b32.xlu0 %v6854, 78
  %v6857 = vpop.permute.xlu0 %6856
  %6859 = vst.msk [vmem:[#allocation2 + $0x18] sm:$0x3] %vm5586, %v6857
  %v6860 = vsel %vm877, %v6857, 0
  %6862 = vmatprep.subr.mxu0 0.0
  %6863 = vmatpush1.msra.mxu0 %v5431
  %6864 = vmatprep.subr.mxu0 0.0
  %6865 = vmatpush1.msra.mxu0 %v5432
  %6866 = vmatprep.subr.mxu0 0.0
  %6867 = vmatpush1.msra.mxu0 %v5433
  %6868 = vmatprep.subr.mxu0 0.0
  %6869 = vmatpush1.msra.mxu0 %v5481
  %6870 = vmatprep.subr.mxu0 0.0
  %6871 = vmatpush1.msra.mxu0 0.0
  %6872 = vmatprep.subr.mxu0 0.0
  %6873 = vmatpush1.msra.mxu0 0.0
  %6874 = vmatprep.subr.mxu0 0.0
  %6875 = vmatpush1.msra.mxu0 0.0
  %6876 = vmatprep.subr.mxu0 0.0
  %6877 = vmatpush1.msra.mxu0 0.0
  %6878 = vmatprep.subr.mxu0 0.0
  %6879 = vmatpush1.msra.mxu0 0.0
  %6880 = vmatprep.subr.mxu0 0.0
  %6881 = vmatpush1.msra.mxu0 0.0
  %6882 = vmatprep.subr.mxu0 0.0
  %6883 = vmatpush1.msra.mxu0 0.0
  %6884 = vmatprep.subr.mxu0 0.0
  %6885 = vmatpush1.msra.mxu0 0.0
  %6886 = vmatprep.subr.mxu0 0.0
  %6887 = vmatpush1.msra.mxu0 0.0
  %6888 = vmatprep.subr.mxu0 0.0
  %6889 = vmatpush1.msra.mxu0 0.0
  %6890 = vmatprep.subr.mxu0 0.0
  %6891 = vmatpush1.msra.mxu0 0.0
  %6892 = vmatprep.subr.mxu0 0.0
  %6893 = vmatpush1.msra.mxu0 0.0
  %6894 = vmatprep.subr.mxu0 0.0
  %6895 = vmatpush1.msra.mxu0 0.0
  %6896 = vmatprep.subr.mxu0 0.0
  %6897 = vmatpush1.msra.mxu0 0.0
  %6898 = vmatprep.subr.mxu0 0.0
  %6899 = vmatpush1.msra.mxu0 0.0
  %6900 = vmatprep.subr.mxu0 0.0
  %6901 = vmatpush1.msra.mxu0 0.0
  %6902 = vmatprep.subr.mxu0 0.0
  %6903 = vmatpush1.msra.mxu0 0.0
  %6904 = vmatprep.subr.mxu0 0.0
  %6905 = vmatpush1.msra.mxu0 0.0
  %6906 = vmatprep.subr.mxu0 0.0
  %6907 = vmatpush1.msra.mxu0 0.0
  %6908 = vmatprep.subr.mxu0 0.0
  %6909 = vmatpush1.msra.mxu0 0.0
  %6910 = vmatprep.subr.mxu0 0.0
  %6911 = vmatpush1.msra.mxu0 0.0
  %6912 = vmatprep.subr.mxu0 0.0
  %6913 = vmatpush1.msra.mxu0 0.0
  %6914 = vmatprep.subr.mxu0 0.0
  %6915 = vmatpush1.msra.mxu0 0.0
  %6916 = vmatprep.subr.mxu0 0.0
  %6917 = vmatpush1.msra.mxu0 0.0
  %6918 = vmatprep.subr.mxu0 0.0
  %6919 = vmatpush1.msra.mxu0 0.0
  %6920 = vmatprep.subr.mxu0 0.0
  %6921 = vmatpush1.msra.mxu0 0.0
  %6922 = vmatprep.subr.mxu0 0.0
  %6923 = vmatpush1.msra.mxu0 0.0
  %6924 = vmatprep.subr.mxu0 0.0
  %6925 = vmatpush1.msra.mxu0 0.0
  %6926 = vmatprep.mubr.f32.mxu0 0.0
  %6927 = vmatmul.mubr.f32.gmra.mrb[0].mxu0 %v6860
  %v6928 = vpop.f32.mrb[0].mxu0
  %v6929 = vadd.f32 0.0, %v6928
  %v6930 = vpop.f32.mrb[0].mxu0
  %6931 = vdwg.mxu0
  %v6932 = vlaneseq
  %v6933 = vshrl.u32 %v6932, 7
  %v6934 = vsub.s32 5, %v6933
  %v6935 = vrot.slane %v5467, %v6934
  %v6936 = vadd.f32 %v6935, %v6929
  %v6937 = vxor.u32 %v6936, 2147483648
  %v6938 = vmul.f32 %v6937, 1.442695
  %v6939 = vpow.pop %v6938
  %v6940 = vadd.f32 %v6939, 1.0
  %v6941 = vrcp.pop %v6940
  %v6942 = vmul.f32 1.0, %v6941
  %v6943 = vtanh.pop %v6936
  %v6944 = vmul.f32 %v6942, %v6848
  %6946 = vrot.lane.b32.xlu0 %v6943, 53
  %v6947 = vpop.permute.xlu0 %6946
  %v6949 = vmul.f32 %v6942, %v6947
  %6951 = vrot.lane.b32.xlu0 %v6949, 25
  %v6952 = vpop.permute.xlu0 %6951
  %v6954 = vadd.f32 %v6944, %v6952
  %v6955 = vtanh.pop %v6954
  %6957 = vrot.lane.b32.xlu0 %v6955, 25
  %v6958 = vpop.permute.xlu0 %6957
  %v6960 = vmul.f32 %v6942, %v6958
  %6962 = vrot.lane.b32.xlu0 %v6960, 78
  %v6963 = vpop.permute.xlu0 %6962
  %6965 = vst.msk [vmem:[#allocation2 + $0x1a] sm:$0x3] %vm5586, %v6963
  %v6966 = vsel %vm877, %v6963, 0
  %6968 = vmatprep.subr.mxu0 0.0
  %6969 = vmatpush1.msra.mxu0 %v5431
  %6970 = vmatprep.subr.mxu0 0.0
  %6971 = vmatpush1.msra.mxu0 %v5432
  %6972 = vmatprep.subr.mxu0 0.0
  %6973 = vmatpush1.msra.mxu0 %v5433
  %6974 = vmatprep.subr.mxu0 0.0
  %6975 = vmatpush1.msra.mxu0 %v5481
  %6976 = vmatprep.subr.mxu0 0.0
  %6977 = vmatpush1.msra.mxu0 0.0
  %6978 = vmatprep.subr.mxu0 0.0
  %6979 = vmatpush1.msra.mxu0 0.0
  %6980 = vmatprep.subr.mxu0 0.0
  %6981 = vmatpush1.msra.mxu0 0.0
  %6982 = vmatprep.subr.mxu0 0.0
  %6983 = vmatpush1.msra.mxu0 0.0
  %6984 = vmatprep.subr.mxu0 0.0
  %6985 = vmatpush1.msra.mxu0 0.0
  %6986 = vmatprep.subr.mxu0 0.0
  %6987 = vmatpush1.msra.mxu0 0.0
  %6988 = vmatprep.subr.mxu0 0.0
  %6989 = vmatpush1.msra.mxu0 0.0
  %6990 = vmatprep.subr.mxu0 0.0
  %6991 = vmatpush1.msra.mxu0 0.0
  %6992 = vmatprep.subr.mxu0 0.0
  %6993 = vmatpush1.msra.mxu0 0.0
  %6994 = vmatprep.subr.mxu0 0.0
  %6995 = vmatpush1.msra.mxu0 0.0
  %6996 = vmatprep.subr.mxu0 0.0
  %6997 = vmatpush1.msra.mxu0 0.0
  %6998 = vmatprep.subr.mxu0 0.0
  %6999 = vmatpush1.msra.mxu0 0.0
  %7000 = vmatprep.subr.mxu0 0.0
  %7001 = vmatpush1.msra.mxu0 0.0
  %7002 = vmatprep.subr.mxu0 0.0
  %7003 = vmatpush1.msra.mxu0 0.0
  %7004 = vmatprep.subr.mxu0 0.0
  %7005 = vmatpush1.msra.mxu0 0.0
  %7006 = vmatprep.subr.mxu0 0.0
  %7007 = vmatpush1.msra.mxu0 0.0
  %7008 = vmatprep.subr.mxu0 0.0
  %7009 = vmatpush1.msra.mxu0 0.0
  %7010 = vmatprep.subr.mxu0 0.0
  %7011 = vmatpush1.msra.mxu0 0.0
  %7012 = vmatprep.subr.mxu0 0.0
  %7013 = vmatpush1.msra.mxu0 0.0
  %7014 = vmatprep.subr.mxu0 0.0
  %7015 = vmatpush1.msra.mxu0 0.0
  %7016 = vmatprep.subr.mxu0 0.0
  %7017 = vmatpush1.msra.mxu0 0.0
  %7018 = vmatprep.subr.mxu0 0.0
  %7019 = vmatpush1.msra.mxu0 0.0
  %7020 = vmatprep.subr.mxu0 0.0
  %7021 = vmatpush1.msra.mxu0 0.0
  %7022 = vmatprep.subr.mxu0 0.0
  %7023 = vmatpush1.msra.mxu0 0.0
  %7024 = vmatprep.subr.mxu0 0.0
  %7025 = vmatpush1.msra.mxu0 0.0
  %7026 = vmatprep.subr.mxu0 0.0
  %7027 = vmatpush1.msra.mxu0 0.0
  %7028 = vmatprep.subr.mxu0 0.0
  %7029 = vmatpush1.msra.mxu0 0.0
  %7030 = vmatprep.subr.mxu0 0.0
  %7031 = vmatpush1.msra.mxu0 0.0
  %7032 = vmatprep.mubr.f32.mxu0 0.0
  %7033 = vmatmul.mubr.f32.gmra.mrb[0].mxu0 %v6966
  %v7034 = vpop.f32.mrb[0].mxu0
  %v7035 = vadd.f32 0.0, %v7034
  %v7036 = vpop.f32.mrb[0].mxu0
  %7037 = vdwg.mxu0
  %v7038 = vlaneseq
  %v7039 = vshrl.u32 %v7038, 7
  %v7040 = vsub.s32 6, %v7039
  %v7041 = vrot.slane %v5467, %v7040
  %v7042 = vadd.f32 %v7041, %v7035
  %v7043 = vxor.u32 %v7042, 2147483648
  %v7044 = vmul.f32 %v7043, 1.442695
  %v7045 = vpow.pop %v7044
  %v7046 = vadd.f32 %v7045, 1.0
  %v7047 = vrcp.pop %v7046
  %v7048 = vmul.f32 1.0, %v7047
  %v7049 = vtanh.pop %v7042
  %v7050 = vmul.f32 %v7048, %v6954
  %7052 = vrot.lane.b32.xlu0 %v7049, 53
  %v7053 = vpop.permute.xlu0 %7052
  %v7055 = vmul.f32 %v7048, %v7053
  %7057 = vrot.lane.b32.xlu0 %v7055, 25
  %v7058 = vpop.permute.xlu0 %7057
  %v7060 = vadd.f32 %v7050, %v7058
  %v7061 = vtanh.pop %v7060
  %7063 = vrot.lane.b32.xlu0 %v7061, 25
  %v7064 = vpop.permute.xlu0 %7063
  %v7066 = vmul.f32 %v7048, %v7064
  %7068 = vrot.lane.b32.xlu0 %v7066, 78
  %v7069 = vpop.permute.xlu0 %7068
  %7071 = vst.msk [vmem:[#allocation2 + $0x1c] sm:$0x3] %vm5586, %v7069
  %v7072 = vsel %vm877, %v7069, 0
  %7074 = vmatprep.subr.mxu0 0.0
  %7075 = vmatpush1.msra.mxu0 %v5431
  %7076 = vmatprep.subr.mxu0 0.0
  %7077 = vmatpush1.msra.mxu0 %v5432
  %7078 = vmatprep.subr.mxu0 0.0
  %7079 = vmatpush1.msra.mxu0 %v5433
  %7080 = vmatprep.subr.mxu0 0.0
  %7081 = vmatpush1.msra.mxu0 %v5481
  %7082 = vmatprep.subr.mxu0 0.0
  %7083 = vmatpush1.msra.mxu0 0.0
  %7084 = vmatprep.subr.mxu0 0.0
  %7085 = vmatpush1.msra.mxu0 0.0
  %7086 = vmatprep.subr.mxu0 0.0
  %7087 = vmatpush1.msra.mxu0 0.0
  %7088 = vmatprep.subr.mxu0 0.0
  %7089 = vmatpush1.msra.mxu0 0.0
  %7090 = vmatprep.subr.mxu0 0.0
  %7091 = vmatpush1.msra.mxu0 0.0
  %7092 = vmatprep.subr.mxu0 0.0
  %7093 = vmatpush1.msra.mxu0 0.0
  %7094 = vmatprep.subr.mxu0 0.0
  %7095 = vmatpush1.msra.mxu0 0.0
  %7096 = vmatprep.subr.mxu0 0.0
  %7097 = vmatpush1.msra.mxu0 0.0
  %7098 = vmatprep.subr.mxu0 0.0
  %7099 = vmatpush1.msra.mxu0 0.0
  %7100 = vmatprep.subr.mxu0 0.0
  %7101 = vmatpush1.msra.mxu0 0.0
  %7102 = vmatprep.subr.mxu0 0.0
  %7103 = vmatpush1.msra.mxu0 0.0
  %7104 = vmatprep.subr.mxu0 0.0
  %7105 = vmatpush1.msra.mxu0 0.0
  %7106 = vmatprep.subr.mxu0 0.0
  %7107 = vmatpush1.msra.mxu0 0.0
  %7108 = vmatprep.subr.mxu0 0.0
  %7109 = vmatpush1.msra.mxu0 0.0
  %7110 = vmatprep.subr.mxu0 0.0
  %7111 = vmatpush1.msra.mxu0 0.0
  %7112 = vmatprep.subr.mxu0 0.0
  %7113 = vmatpush1.msra.mxu0 0.0
  %7114 = vmatprep.subr.mxu0 0.0
  %7115 = vmatpush1.msra.mxu0 0.0
  %7116 = vmatprep.subr.mxu0 0.0
  %7117 = vmatpush1.msra.mxu0 0.0
  %7118 = vmatprep.subr.mxu0 0.0
  %7119 = vmatpush1.msra.mxu0 0.0
  %7120 = vmatprep.subr.mxu0 0.0
  %7121 = vmatpush1.msra.mxu0 0.0
  %7122 = vmatprep.subr.mxu0 0.0
  %7123 = vmatpush1.msra.mxu0 0.0
  %7124 = vmatprep.subr.mxu0 0.0
  %7125 = vmatpush1.msra.mxu0 0.0
  %7126 = vmatprep.subr.mxu0 0.0
  %7127 = vmatpush1.msra.mxu0 0.0
  %7128 = vmatprep.subr.mxu0 0.0
  %7129 = vmatpush1.msra.mxu0 0.0
  %7130 = vmatprep.subr.mxu0 0.0
  %7131 = vmatpush1.msra.mxu0 0.0
  %7132 = vmatprep.subr.mxu0 0.0
  %7133 = vmatpush1.msra.mxu0 0.0
  %7134 = vmatprep.subr.mxu0 0.0
  %7135 = vmatpush1.msra.mxu0 0.0
  %7136 = vmatprep.subr.mxu0 0.0
  %7137 = vmatpush1.msra.mxu0 0.0
  %7138 = vmatprep.mubr.f32.mxu0 0.0
  %7139 = vmatmul.mubr.f32.gmra.mrb[0].mxu0 %v7072
  %v7140 = vpop.f32.mrb[0].mxu0
  %v7141 = vadd.f32 0.0, %v7140
  %v7142 = vpop.f32.mrb[0].mxu0
  %7143 = vdwg.mxu0
  %v7144 = vlaneseq
  %v7145 = vshrl.u32 %v7144, 7
  %v7146 = vsub.s32 7, %v7145
  %v7147 = vrot.slane %v5467, %v7146
  %v7148 = vadd.f32 %v7147, %v7141
  %v7149 = vxor.u32 %v7148, 2147483648
  %v7150 = vmul.f32 %v7149, 1.442695
  %v7151 = vpow.pop %v7150
  %v7152 = vadd.f32 %v7151, 1.0
  %v7153 = vrcp.pop %v7152
  %v7154 = vmul.f32 1.0, %v7153
  %v7155 = vtanh.pop %v7148
  %v7156 = vmul.f32 %v7154, %v7060
  %7158 = vrot.lane.b32.xlu0 %v7155, 53
  %v7159 = vpop.permute.xlu0 %7158
  %v7161 = vmul.f32 %v7154, %v7159
  %7163 = vrot.lane.b32.xlu0 %v7161, 25
  %v7164 = vpop.permute.xlu0 %7163
  %v7166 = vadd.f32 %v7156, %v7164
  %v7167 = vtanh.pop %v7166
  %7169 = vrot.lane.b32.xlu0 %v7167, 25
  %v7170 = vpop.permute.xlu0 %7169
  %v7172 = vmul.f32 %v7154, %v7170
  %7174 = vrot.lane.b32.xlu0 %v7172, 78
  %v7175 = vpop.permute.xlu0 %7174
  %7177 = vst.msk [vmem:[#allocation2 + $0x1e] sm:$0x3] %vm5586, %v7175
  %v7178 = vsel %vm877, %v7175, 0
  %7180 = vmatprep.subr.mxu0 0.0
  %7181 = vmatpush1.msra.mxu0 %v5431
  %7182 = vmatprep.subr.mxu0 0.0
  %7183 = vmatpush1.msra.mxu0 %v5432
  %7184 = vmatprep.subr.mxu0 0.0
  %7185 = vmatpush1.msra.mxu0 %v5433
  %7186 = vmatprep.subr.mxu0 0.0
  %7187 = vmatpush1.msra.mxu0 %v5481
  %7188 = vmatprep.subr.mxu0 0.0
  %7189 = vmatpush1.msra.mxu0 0.0
  %7190 = vmatprep.subr.mxu0 0.0
  %7191 = vmatpush1.msra.mxu0 0.0
  %7192 = vmatprep.subr.mxu0 0.0
  %7193 = vmatpush1.msra.mxu0 0.0
  %7194 = vmatprep.subr.mxu0 0.0
  %7195 = vmatpush1.msra.mxu0 0.0
  %7196 = vmatprep.subr.mxu0 0.0
  %7197 = vmatpush1.msra.mxu0 0.0
  %7198 = vmatprep.subr.mxu0 0.0
  %7199 = vmatpush1.msra.mxu0 0.0
  %7200 = vmatprep.subr.mxu0 0.0
  %7201 = vmatpush1.msra.mxu0 0.0
  %7202 = vmatprep.subr.mxu0 0.0
  %7203 = vmatpush1.msra.mxu0 0.0
  %7204 = vmatprep.subr.mxu0 0.0
  %7205 = vmatpush1.msra.mxu0 0.0
  %7206 = vmatprep.subr.mxu0 0.0
  %7207 = vmatpush1.msra.mxu0 0.0
  %7208 = vmatprep.subr.mxu0 0.0
  %7209 = vmatpush1.msra.mxu0 0.0
  %7210 = vmatprep.subr.mxu0 0.0
  %7211 = vmatpush1.msra.mxu0 0.0
  %7212 = vmatprep.subr.mxu0 0.0
  %7213 = vmatpush1.msra.mxu0 0.0
  %7214 = vmatprep.subr.mxu0 0.0
  %7215 = vmatpush1.msra.mxu0 0.0
  %7216 = vmatprep.subr.mxu0 0.0
  %7217 = vmatpush1.msra.mxu0 0.0
  %7218 = vmatprep.subr.mxu0 0.0
  %7219 = vmatpush1.msra.mxu0 0.0
  %7220 = vmatprep.subr.mxu0 0.0
  %7221 = vmatpush1.msra.mxu0 0.0
  %7222 = vmatprep.subr.mxu0 0.0
  %7223 = vmatpush1.msra.mxu0 0.0
  %7224 = vmatprep.subr.mxu0 0.0
  %7225 = vmatpush1.msra.mxu0 0.0
  %7226 = vmatprep.subr.mxu0 0.0
  %7227 = vmatpush1.msra.mxu0 0.0
  %7228 = vmatprep.subr.mxu0 0.0
  %7229 = vmatpush1.msra.mxu0 0.0
  %7230 = vmatprep.subr.mxu0 0.0
  %7231 = vmatpush1.msra.mxu0 0.0
  %7232 = vmatprep.subr.mxu0 0.0
  %7233 = vmatpush1.msra.mxu0 0.0
  %7234 = vmatprep.subr.mxu0 0.0
  %7235 = vmatpush1.msra.mxu0 0.0
  %7236 = vmatprep.subr.mxu0 0.0
  %7237 = vmatpush1.msra.mxu0 0.0
  %7238 = vmatprep.subr.mxu0 0.0
  %7239 = vmatpush1.msra.mxu0 0.0
  %7240 = vmatprep.subr.mxu0 0.0
  %7241 = vmatpush1.msra.mxu0 0.0
  %7242 = vmatprep.subr.mxu0 0.0
  %7243 = vmatpush1.msra.mxu0 0.0
  %7244 = vmatprep.mubr.f32.mxu0 0.0
  %7245 = vmatmul.mubr.f32.gmra.mrb[0].mxu0 %v7178
  %v7246 = vpop.f32.mrb[0].mxu0
  %v7247 = vadd.f32 0.0, %v7246
  %v7248 = vpop.f32.mrb[0].mxu0
  %7249 = vdwg.mxu0
  %v7250 = vlaneseq
  %v7251 = vshrl.u32 %v7250, 7
  %v7252 = vsub.s32 0, %v7251
  %v7253 = vrot.slane %v5468, %v7252
  %v7254 = vadd.f32 %v7253, %v7247
  %v7255 = vxor.u32 %v7254, 2147483648
  %v7256 = vmul.f32 %v7255, 1.442695
  %v7257 = vpow.pop %v7256
  %v7258 = vadd.f32 %v7257, 1.0
  %v7259 = vrcp.pop %v7258
  %v7260 = vmul.f32 1.0, %v7259
  %v7261 = vtanh.pop %v7254
  %v7262 = vmul.f32 %v7260, %v7166
  %7264 = vrot.lane.b32.xlu0 %v7261, 53
  %v7265 = vpop.permute.xlu0 %7264
  %v7267 = vmul.f32 %v7260, %v7265
  %7269 = vrot.lane.b32.xlu0 %v7267, 25
  %v7270 = vpop.permute.xlu0 %7269
  %v7272 = vadd.f32 %v7262, %v7270
  %v7273 = vtanh.pop %v7272
  %7275 = vrot.lane.b32.xlu0 %v7273, 25
  %v7276 = vpop.permute.xlu0 %7275
  %v7278 = vmul.f32 %v7260, %v7276
  %7280 = vrot.lane.b32.xlu0 %v7278, 78
  %v7281 = vpop.permute.xlu0 %7280
  %7283 = vst.msk [vmem:[#allocation2 + $0x20] sm:$0x3] %vm5586, %v7281
  %v7284 = vsel %vm877, %v7281, 0
  %7286 = vmatprep.subr.mxu0 0.0
  %7287 = vmatpush1.msra.mxu0 %v5431
  %7288 = vmatprep.subr.mxu0 0.0
  %7289 = vmatpush1.msra.mxu0 %v5432
  %7290 = vmatprep.subr.mxu0 0.0
  %7291 = vmatpush1.msra.mxu0 %v5433
  %7292 = vmatprep.subr.mxu0 0.0
  %7293 = vmatpush1.msra.mxu0 %v5481
  %7294 = vmatprep.subr.mxu0 0.0
  %7295 = vmatpush1.msra.mxu0 0.0
  %7296 = vmatprep.subr.mxu0 0.0
  %7297 = vmatpush1.msra.mxu0 0.0
  %7298 = vmatprep.subr.mxu0 0.0
  %7299 = vmatpush1.msra.mxu0 0.0
  %7300 = vmatprep.subr.mxu0 0.0
  %7301 = vmatpush1.msra.mxu0 0.0
  %7302 = vmatprep.subr.mxu0 0.0
  %7303 = vmatpush1.msra.mxu0 0.0
  %7304 = vmatprep.subr.mxu0 0.0
  %7305 = vmatpush1.msra.mxu0 0.0
  %7306 = vmatprep.subr.mxu0 0.0
  %7307 = vmatpush1.msra.mxu0 0.0
  %7308 = vmatprep.subr.mxu0 0.0
  %7309 = vmatpush1.msra.mxu0 0.0
  %7310 = vmatprep.subr.mxu0 0.0
  %7311 = vmatpush1.msra.mxu0 0.0
  %7312 = vmatprep.subr.mxu0 0.0
  %7313 = vmatpush1.msra.mxu0 0.0
  %7314 = vmatprep.subr.mxu0 0.0
  %7315 = vmatpush1.msra.mxu0 0.0
  %7316 = vmatprep.subr.mxu0 0.0
  %7317 = vmatpush1.msra.mxu0 0.0
  %7318 = vmatprep.subr.mxu0 0.0
  %7319 = vmatpush1.msra.mxu0 0.0
  %7320 = vmatprep.subr.mxu0 0.0
  %7321 = vmatpush1.msra.mxu0 0.0
  %7322 = vmatprep.subr.mxu0 0.0
  %7323 = vmatpush1.msra.mxu0 0.0
  %7324 = vmatprep.subr.mxu0 0.0
  %7325 = vmatpush1.msra.mxu0 0.0
  %7326 = vmatprep.subr.mxu0 0.0
  %7327 = vmatpush1.msra.mxu0 0.0
  %7328 = vmatprep.subr.mxu0 0.0
  %7329 = vmatpush1.msra.mxu0 0.0
  %7330 = vmatprep.subr.mxu0 0.0
  %7331 = vmatpush1.msra.mxu0 0.0
  %7332 = vmatprep.subr.mxu0 0.0
  %7333 = vmatpush1.msra.mxu0 0.0
  %7334 = vmatprep.subr.mxu0 0.0
  %7335 = vmatpush1.msra.mxu0 0.0
  %7336 = vmatprep.subr.mxu0 0.0
  %7337 = vmatpush1.msra.mxu0 0.0
  %7338 = vmatprep.subr.mxu0 0.0
  %7339 = vmatpush1.msra.mxu0 0.0
  %7340 = vmatprep.subr.mxu0 0.0
  %7341 = vmatpush1.msra.mxu0 0.0
  %7342 = vmatprep.subr.mxu0 0.0
  %7343 = vmatpush1.msra.mxu0 0.0
  %7344 = vmatprep.subr.mxu0 0.0
  %7345 = vmatpush1.msra.mxu0 0.0
  %7346 = vmatprep.subr.mxu0 0.0
  %7347 = vmatpush1.msra.mxu0 0.0
  %7348 = vmatprep.subr.mxu0 0.0
  %7349 = vmatpush1.msra.mxu0 0.0
  %7350 = vmatprep.mubr.f32.mxu0 0.0
  %7351 = vmatmul.mubr.f32.gmra.mrb[0].mxu0 %v7284
  %v7352 = vpop.f32.mrb[0].mxu0
  %v7353 = vadd.f32 0.0, %v7352
  %v7354 = vpop.f32.mrb[0].mxu0
  %7355 = vdwg.mxu0
  %v7356 = vlaneseq
  %v7357 = vshrl.u32 %v7356, 7
  %v7358 = vsub.s32 1, %v7357
  %v7359 = vrot.slane %v5468, %v7358
  %v7360 = vadd.f32 %v7359, %v7353
  %v7361 = vxor.u32 %v7360, 2147483648
  %v7362 = vmul.f32 %v7361, 1.442695
  %v7363 = vpow.pop %v7362
  %v7364 = vadd.f32 %v7363, 1.0
  %v7365 = vrcp.pop %v7364
  %v7366 = vmul.f32 1.0, %v7365
  %v7367 = vtanh.pop %v7360
  %v7368 = vmul.f32 %v7366, %v7272
  %7370 = vrot.lane.b32.xlu0 %v7367, 53
  %v7371 = vpop.permute.xlu0 %7370
  %v7373 = vmul.f32 %v7366, %v7371
  %7375 = vrot.lane.b32.xlu0 %v7373, 25
  %v7376 = vpop.permute.xlu0 %7375
  %v7378 = vadd.f32 %v7368, %v7376
  %v7379 = vtanh.pop %v7378
  %7381 = vrot.lane.b32.xlu0 %v7379, 25
  %v7382 = vpop.permute.xlu0 %7381
  %v7384 = vmul.f32 %v7366, %v7382
  %7386 = vrot.lane.b32.xlu0 %v7384, 78
  %v7387 = vpop.permute.xlu0 %7386
  %7389 = vst.msk [vmem:[#allocation2 + $0x22] sm:$0x3] %vm5586, %v7387
  %v7390 = vsel %vm877, %v7387, 0
  %7392 = vmatprep.subr.mxu0 0.0
  %7393 = vmatpush1.msra.mxu0 %v5431
  %7394 = vmatprep.subr.mxu0 0.0
  %7395 = vmatpush1.msra.mxu0 %v5432
  %7396 = vmatprep.subr.mxu0 0.0
  %7397 = vmatpush1.msra.mxu0 %v5433
  %7398 = vmatprep.subr.mxu0 0.0
  %7399 = vmatpush1.msra.mxu0 %v5481
  %7400 = vmatprep.subr.mxu0 0.0
  %7401 = vmatpush1.msra.mxu0 0.0
  %7402 = vmatprep.subr.mxu0 0.0
  %7403 = vmatpush1.msra.mxu0 0.0
  %7404 = vmatprep.subr.mxu0 0.0
  %7405 = vmatpush1.msra.mxu0 0.0
  %7406 = vmatprep.subr.mxu0 0.0
  %7407 = vmatpush1.msra.mxu0 0.0
  %7408 = vmatprep.subr.mxu0 0.0
  %7409 = vmatpush1.msra.mxu0 0.0
  %7410 = vmatprep.subr.mxu0 0.0
  %7411 = vmatpush1.msra.mxu0 0.0
  %7412 = vmatprep.subr.mxu0 0.0
  %7413 = vmatpush1.msra.mxu0 0.0
  %7414 = vmatprep.subr.mxu0 0.0
  %7415 = vmatpush1.msra.mxu0 0.0
  %7416 = vmatprep.subr.mxu0 0.0
  %7417 = vmatpush1.msra.mxu0 0.0
  %7418 = vmatprep.subr.mxu0 0.0
  %7419 = vmatpush1.msra.mxu0 0.0
  %7420 = vmatprep.subr.mxu0 0.0
  %7421 = vmatpush1.msra.mxu0 0.0
  %7422 = vmatprep.subr.mxu0 0.0
  %7423 = vmatpush1.msra.mxu0 0.0
  %7424 = vmatprep.subr.mxu0 0.0
  %7425 = vmatpush1.msra.mxu0 0.0
  %7426 = vmatprep.subr.mxu0 0.0
  %7427 = vmatpush1.msra.mxu0 0.0
  %7428 = vmatprep.subr.mxu0 0.0
  %7429 = vmatpush1.msra.mxu0 0.0
  %7430 = vmatprep.subr.mxu0 0.0
  %7431 = vmatpush1.msra.mxu0 0.0
  %7432 = vmatprep.subr.mxu0 0.0
  %7433 = vmatpush1.msra.mxu0 0.0
  %7434 = vmatprep.subr.mxu0 0.0
  %7435 = vmatpush1.msra.mxu0 0.0
  %7436 = vmatprep.subr.mxu0 0.0
  %7437 = vmatpush1.msra.mxu0 0.0
  %7438 = vmatprep.subr.mxu0 0.0
  %7439 = vmatpush1.msra.mxu0 0.0
  %7440 = vmatprep.subr.mxu0 0.0
  %7441 = vmatpush1.msra.mxu0 0.0
  %7442 = vmatprep.subr.mxu0 0.0
  %7443 = vmatpush1.msra.mxu0 0.0
  %7444 = vmatprep.subr.mxu0 0.0
  %7445 = vmatpush1.msra.mxu0 0.0
  %7446 = vmatprep.subr.mxu0 0.0
  %7447 = vmatpush1.msra.mxu0 0.0
  %7448 = vmatprep.subr.mxu0 0.0
  %7449 = vmatpush1.msra.mxu0 0.0
  %7450 = vmatprep.subr.mxu0 0.0
  %7451 = vmatpush1.msra.mxu0 0.0
  %7452 = vmatprep.subr.mxu0 0.0
  %7453 = vmatpush1.msra.mxu0 0.0
  %7454 = vmatprep.subr.mxu0 0.0
  %7455 = vmatpush1.msra.mxu0 0.0
  %7456 = vmatprep.mubr.f32.mxu0 0.0
  %7457 = vmatmul.mubr.f32.gmra.mrb[0].mxu0 %v7390
  %v7458 = vpop.f32.mrb[0].mxu0
  %v7459 = vadd.f32 0.0, %v7458
  %v7460 = vpop.f32.mrb[0].mxu0
  %7461 = vdwg.mxu0
  %v7462 = vlaneseq
  %v7463 = vshrl.u32 %v7462, 7
  %v7464 = vsub.s32 2, %v7463
  %v7465 = vrot.slane %v5468, %v7464
  %v7466 = vadd.f32 %v7465, %v7459
  %v7467 = vxor.u32 %v7466, 2147483648
  %v7468 = vmul.f32 %v7467, 1.442695
  %v7469 = vpow.pop %v7468
  %v7470 = vadd.f32 %v7469, 1.0
  %v7471 = vrcp.pop %v7470
  %v7472 = vmul.f32 1.0, %v7471
  %v7473 = vtanh.pop %v7466
  %v7474 = vmul.f32 %v7472, %v7378
  %7476 = vrot.lane.b32.xlu0 %v7473, 53
  %v7477 = vpop.permute.xlu0 %7476
  %v7479 = vmul.f32 %v7472, %v7477
  %7481 = vrot.lane.b32.xlu0 %v7479, 25
  %v7482 = vpop.permute.xlu0 %7481
  %v7484 = vadd.f32 %v7474, %v7482
  %v7485 = vtanh.pop %v7484
  %7487 = vrot.lane.b32.xlu0 %v7485, 25
  %v7488 = vpop.permute.xlu0 %7487
  %v7490 = vmul.f32 %v7472, %v7488
  %7492 = vrot.lane.b32.xlu0 %v7490, 78
  %v7493 = vpop.permute.xlu0 %7492
  %7495 = vst.msk [vmem:[#allocation2 + $0x24] sm:$0x3] %vm5586, %v7493
  %v7496 = vsel %vm877, %v7493, 0
  %7498 = vmatprep.subr.mxu0 0.0
  %7499 = vmatpush1.msra.mxu0 %v5431
  %7500 = vmatprep.subr.mxu0 0.0
  %7501 = vmatpush1.msra.mxu0 %v5432
  %7502 = vmatprep.subr.mxu0 0.0
  %7503 = vmatpush1.msra.mxu0 %v5433
  %7504 = vmatprep.subr.mxu0 0.0
  %7505 = vmatpush1.msra.mxu0 %v5481
  %7506 = vmatprep.subr.mxu0 0.0
  %7507 = vmatpush1.msra.mxu0 0.0
  %7508 = vmatprep.subr.mxu0 0.0
  %7509 = vmatpush1.msra.mxu0 0.0
  %7510 = vmatprep.subr.mxu0 0.0
  %7511 = vmatpush1.msra.mxu0 0.0
  %7512 = vmatprep.subr.mxu0 0.0
  %7513 = vmatpush1.msra.mxu0 0.0
  %7514 = vmatprep.subr.mxu0 0.0
  %7515 = vmatpush1.msra.mxu0 0.0
  %7516 = vmatprep.subr.mxu0 0.0
  %7517 = vmatpush1.msra.mxu0 0.0
  %7518 = vmatprep.subr.mxu0 0.0
  %7519 = vmatpush1.msra.mxu0 0.0
  %7520 = vmatprep.subr.mxu0 0.0
  %7521 = vmatpush1.msra.mxu0 0.0
  %7522 = vmatprep.subr.mxu0 0.0
  %7523 = vmatpush1.msra.mxu0 0.0
  %7524 = vmatprep.subr.mxu0 0.0
  %7525 = vmatpush1.msra.mxu0 0.0
  %7526 = vmatprep.subr.mxu0 0.0
  %7527 = vmatpush1.msra.mxu0 0.0
  %7528 = vmatprep.subr.mxu0 0.0
  %7529 = vmatpush1.msra.mxu0 0.0
  %7530 = vmatprep.subr.mxu0 0.0
  %7531 = vmatpush1.msra.mxu0 0.0
  %7532 = vmatprep.subr.mxu0 0.0
  %7533 = vmatpush1.msra.mxu0 0.0
  %7534 = vmatprep.subr.mxu0 0.0
  %7535 = vmatpush1.msra.mxu0 0.0
  %7536 = vmatprep.subr.mxu0 0.0
  %7537 = vmatpush1.msra.mxu0 0.0
  %7538 = vmatprep.subr.mxu0 0.0
  %7539 = vmatpush1.msra.mxu0 0.0
  %7540 = vmatprep.subr.mxu0 0.0
  %7541 = vmatpush1.msra.mxu0 0.0
  %7542 = vmatprep.subr.mxu0 0.0
  %7543 = vmatpush1.msra.mxu0 0.0
  %7544 = vmatprep.subr.mxu0 0.0
  %7545 = vmatpush1.msra.mxu0 0.0
  %7546 = vmatprep.subr.mxu0 0.0
  %7547 = vmatpush1.msra.mxu0 0.0
  %7548 = vmatprep.subr.mxu0 0.0
  %7549 = vmatpush1.msra.mxu0 0.0
  %7550 = vmatprep.subr.mxu0 0.0
  %7551 = vmatpush1.msra.mxu0 0.0
  %7552 = vmatprep.subr.mxu0 0.0
  %7553 = vmatpush1.msra.mxu0 0.0
  %7554 = vmatprep.subr.mxu0 0.0
  %7555 = vmatpush1.msra.mxu0 0.0
  %7556 = vmatprep.subr.mxu0 0.0
  %7557 = vmatpush1.msra.mxu0 0.0
  %7558 = vmatprep.subr.mxu0 0.0
  %7559 = vmatpush1.msra.mxu0 0.0
  %7560 = vmatprep.subr.mxu0 0.0
  %7561 = vmatpush1.msra.mxu0 0.0
  %7562 = vmatprep.mubr.f32.mxu0 0.0
  %7563 = vmatmul.mubr.f32.gmra.mrb[0].mxu0 %v7496
  %v7564 = vpop.f32.mrb[0].mxu0
  %v7565 = vadd.f32 0.0, %v7564
  %v7566 = vpop.f32.mrb[0].mxu0
  %7567 = vdwg.mxu0
  %v7568 = vlaneseq
  %v7569 = vshrl.u32 %v7568, 7
  %v7570 = vsub.s32 3, %v7569
  %v7571 = vrot.slane %v5468, %v7570
  %v7572 = vadd.f32 %v7571, %v7565
  %v7573 = vxor.u32 %v7572, 2147483648
  %v7574 = vmul.f32 %v7573, 1.442695
  %v7575 = vpow.pop %v7574
  %v7576 = vadd.f32 %v7575, 1.0
  %v7577 = vrcp.pop %v7576
  %v7578 = vmul.f32 1.0, %v7577
  %v7579 = vtanh.pop %v7572
  %v7580 = vmul.f32 %v7578, %v7484
  %7582 = vrot.lane.b32.xlu0 %v7579, 53
  %v7583 = vpop.permute.xlu0 %7582
  %v7585 = vmul.f32 %v7578, %v7583
  %7587 = vrot.lane.b32.xlu0 %v7585, 25
  %v7588 = vpop.permute.xlu0 %7587
  %v7590 = vadd.f32 %v7580, %v7588
  %v7591 = vtanh.pop %v7590
  %7593 = vrot.lane.b32.xlu0 %v7591, 25
  %v7594 = vpop.permute.xlu0 %7593
  %v7596 = vmul.f32 %v7578, %v7594
  %7598 = vrot.lane.b32.xlu0 %v7596, 78
  %v7599 = vpop.permute.xlu0 %7598
  %7601 = vst.msk [vmem:[#allocation2 + $0x26] sm:$0x3] %vm5586, %v7599
  %v7602 = vsel %vm877, %v7599, 0
  %7604 = vmatprep.subr.mxu0 0.0
  %7605 = vmatpush1.msra.mxu0 %v5431
  %7606 = vmatprep.subr.mxu0 0.0
  %7607 = vmatpush1.msra.mxu0 %v5432
  %7608 = vmatprep.subr.mxu0 0.0
  %7609 = vmatpush1.msra.mxu0 %v5433
  %7610 = vmatprep.subr.mxu0 0.0
  %7611 = vmatpush1.msra.mxu0 %v5481
  %7612 = vmatprep.subr.mxu0 0.0
  %7613 = vmatpush1.msra.mxu0 0.0
  %7614 = vmatprep.subr.mxu0 0.0
  %7615 = vmatpush1.msra.mxu0 0.0
  %7616 = vmatprep.subr.mxu0 0.0
  %7617 = vmatpush1.msra.mxu0 0.0
  %7618 = vmatprep.subr.mxu0 0.0
  %7619 = vmatpush1.msra.mxu0 0.0
  %7620 = vmatprep.subr.mxu0 0.0
  %7621 = vmatpush1.msra.mxu0 0.0
  %7622 = vmatprep.subr.mxu0 0.0
  %7623 = vmatpush1.msra.mxu0 0.0
  %7624 = vmatprep.subr.mxu0 0.0
  %7625 = vmatpush1.msra.mxu0 0.0
  %7626 = vmatprep.subr.mxu0 0.0
  %7627 = vmatpush1.msra.mxu0 0.0
  %7628 = vmatprep.subr.mxu0 0.0
  %7629 = vmatpush1.msra.mxu0 0.0
  %7630 = vmatprep.subr.mxu0 0.0
  %7631 = vmatpush1.msra.mxu0 0.0
  %7632 = vmatprep.subr.mxu0 0.0
  %7633 = vmatpush1.msra.mxu0 0.0
  %7634 = vmatprep.subr.mxu0 0.0
  %7635 = vmatpush1.msra.mxu0 0.0
  %7636 = vmatprep.subr.mxu0 0.0
  %7637 = vmatpush1.msra.mxu0 0.0
  %7638 = vmatprep.subr.mxu0 0.0
  %7639 = vmatpush1.msra.mxu0 0.0
  %7640 = vmatprep.subr.mxu0 0.0
  %7641 = vmatpush1.msra.mxu0 0.0
  %7642 = vmatprep.subr.mxu0 0.0
  %7643 = vmatpush1.msra.mxu0 0.0
  %7644 = vmatprep.subr.mxu0 0.0
  %7645 = vmatpush1.msra.mxu0 0.0
  %7646 = vmatprep.subr.mxu0 0.0
  %7647 = vmatpush1.msra.mxu0 0.0
  %7648 = vmatprep.subr.mxu0 0.0
  %7649 = vmatpush1.msra.mxu0 0.0
  %7650 = vmatprep.subr.mxu0 0.0
  %7651 = vmatpush1.msra.mxu0 0.0
  %7652 = vmatprep.subr.mxu0 0.0
  %7653 = vmatpush1.msra.mxu0 0.0
  %7654 = vmatprep.subr.mxu0 0.0
  %7655 = vmatpush1.msra.mxu0 0.0
  %7656 = vmatprep.subr.mxu0 0.0
  %7657 = vmatpush1.msra.mxu0 0.0
  %7658 = vmatprep.subr.mxu0 0.0
  %7659 = vmatpush1.msra.mxu0 0.0
  %7660 = vmatprep.subr.mxu0 0.0
  %7661 = vmatpush1.msra.mxu0 0.0
  %7662 = vmatprep.subr.mxu0 0.0
  %7663 = vmatpush1.msra.mxu0 0.0
  %7664 = vmatprep.subr.mxu0 0.0
  %7665 = vmatpush1.msra.mxu0 0.0
  %7666 = vmatprep.subr.mxu0 0.0
  %7667 = vmatpush1.msra.mxu0 0.0
  %7668 = vmatprep.mubr.f32.mxu0 0.0
  %7669 = vmatmul.mubr.f32.gmra.mrb[0].mxu0 %v7602
  %v7670 = vpop.f32.mrb[0].mxu0
  %v7671 = vadd.f32 0.0, %v7670
  %v7672 = vpop.f32.mrb[0].mxu0
  %7673 = vdwg.mxu0
  %v7674 = vlaneseq
  %v7675 = vshrl.u32 %v7674, 7
  %v7676 = vsub.s32 4, %v7675
  %v7677 = vrot.slane %v5468, %v7676
  %v7678 = vadd.f32 %v7677, %v7671
  %v7679 = vxor.u32 %v7678, 2147483648
  %v7680 = vmul.f32 %v7679, 1.442695
  %v7681 = vpow.pop %v7680
  %v7682 = vadd.f32 %v7681, 1.0
  %v7683 = vrcp.pop %v7682
  %v7684 = vmul.f32 1.0, %v7683
  %v7685 = vtanh.pop %v7678
  %v7686 = vmul.f32 %v7684, %v7590
  %7688 = vrot.lane.b32.xlu0 %v7685, 53
  %v7689 = vpop.permute.xlu0 %7688
  %v7691 = vmul.f32 %v7684, %v7689
  %7693 = vrot.lane.b32.xlu0 %v7691, 25
  %v7694 = vpop.permute.xlu0 %7693
  %v7696 = vadd.f32 %v7686, %v7694
  %v7697 = vtanh.pop %v7696
  %7699 = vrot.lane.b32.xlu0 %v7697, 25
  %v7700 = vpop.permute.xlu0 %7699
  %v7702 = vmul.f32 %v7684, %v7700
  %7704 = vrot.lane.b32.xlu0 %v7702, 78
  %v7705 = vpop.permute.xlu0 %7704
  %7707 = vst.msk [vmem:[#allocation2 + $0x28] sm:$0x3] %vm5586, %v7705
  %v7708 = vsel %vm877, %v7705, 0
  %7710 = vmatprep.subr.mxu0 0.0
  %7711 = vmatpush1.msra.mxu0 %v5431
  %7712 = vmatprep.subr.mxu0 0.0
  %7713 = vmatpush1.msra.mxu0 %v5432
  %7714 = vmatprep.subr.mxu0 0.0
  %7715 = vmatpush1.msra.mxu0 %v5433
  %7716 = vmatprep.subr.mxu0 0.0
  %7717 = vmatpush1.msra.mxu0 %v5481
  %7718 = vmatprep.subr.mxu0 0.0
  %7719 = vmatpush1.msra.mxu0 0.0
  %7720 = vmatprep.subr.mxu0 0.0
  %7721 = vmatpush1.msra.mxu0 0.0
  %7722 = vmatprep.subr.mxu0 0.0
  %7723 = vmatpush1.msra.mxu0 0.0
  %7724 = vmatprep.subr.mxu0 0.0
  %7725 = vmatpush1.msra.mxu0 0.0
  %7726 = vmatprep.subr.mxu0 0.0
  %7727 = vmatpush1.msra.mxu0 0.0
  %7728 = vmatprep.subr.mxu0 0.0
  %7729 = vmatpush1.msra.mxu0 0.0
  %7730 = vmatprep.subr.mxu0 0.0
  %7731 = vmatpush1.msra.mxu0 0.0
  %7732 = vmatprep.subr.mxu0 0.0
  %7733 = vmatpush1.msra.mxu0 0.0
  %7734 = vmatprep.subr.mxu0 0.0
  %7735 = vmatpush1.msra.mxu0 0.0
  %7736 = vmatprep.subr.mxu0 0.0
  %7737 = vmatpush1.msra.mxu0 0.0
  %7738 = vmatprep.subr.mxu0 0.0
  %7739 = vmatpush1.msra.mxu0 0.0
  %7740 = vmatprep.subr.mxu0 0.0
  %7741 = vmatpush1.msra.mxu0 0.0
  %7742 = vmatprep.subr.mxu0 0.0
  %7743 = vmatpush1.msra.mxu0 0.0
  %7744 = vmatprep.subr.mxu0 0.0
  %7745 = vmatpush1.msra.mxu0 0.0
  %7746 = vmatprep.subr.mxu0 0.0
  %7747 = vmatpush1.msra.mxu0 0.0
  %7748 = vmatprep.subr.mxu0 0.0
  %7749 = vmatpush1.msra.mxu0 0.0
  %7750 = vmatprep.subr.mxu0 0.0
  %7751 = vmatpush1.msra.mxu0 0.0
  %7752 = vmatprep.subr.mxu0 0.0
  %7753 = vmatpush1.msra.mxu0 0.0
  %7754 = vmatprep.subr.mxu0 0.0
  %7755 = vmatpush1.msra.mxu0 0.0
  %7756 = vmatprep.subr.mxu0 0.0
  %7757 = vmatpush1.msra.mxu0 0.0
  %7758 = vmatprep.subr.mxu0 0.0
  %7759 = vmatpush1.msra.mxu0 0.0
  %7760 = vmatprep.subr.mxu0 0.0
  %7761 = vmatpush1.msra.mxu0 0.0
  %7762 = vmatprep.subr.mxu0 0.0
  %7763 = vmatpush1.msra.mxu0 0.0
  %7764 = vmatprep.subr.mxu0 0.0
  %7765 = vmatpush1.msra.mxu0 0.0
  %7766 = vmatprep.subr.mxu0 0.0
  %7767 = vmatpush1.msra.mxu0 0.0
  %7768 = vmatprep.subr.mxu0 0.0
  %7769 = vmatpush1.msra.mxu0 0.0
  %7770 = vmatprep.subr.mxu0 0.0
  %7771 = vmatpush1.msra.mxu0 0.0
  %7772 = vmatprep.subr.mxu0 0.0
  %7773 = vmatpush1.msra.mxu0 0.0
  %7774 = vmatprep.mubr.f32.mxu0 0.0
  %7775 = vmatmul.mubr.f32.gmra.mrb[0].mxu0 %v7708
  %v7776 = vpop.f32.mrb[0].mxu0
  %v7777 = vadd.f32 0.0, %v7776
  %v7778 = vpop.f32.mrb[0].mxu0
  %7779 = vdwg.mxu0
  %v7780 = vlaneseq
  %v7781 = vshrl.u32 %v7780, 7
  %v7782 = vsub.s32 5, %v7781
  %v7783 = vrot.slane %v5468, %v7782
  %v7784 = vadd.f32 %v7783, %v7777
  %v7785 = vxor.u32 %v7784, 2147483648
  %v7786 = vmul.f32 %v7785, 1.442695
  %v7787 = vpow.pop %v7786
  %v7788 = vadd.f32 %v7787, 1.0
  %v7789 = vrcp.pop %v7788
  %v7790 = vmul.f32 1.0, %v7789
  %v7791 = vtanh.pop %v7784
  %v7792 = vmul.f32 %v7790, %v7696
  %7794 = vrot.lane.b32.xlu0 %v7791, 53
  %v7795 = vpop.permute.xlu0 %7794
  %v7797 = vmul.f32 %v7790, %v7795
  %7799 = vrot.lane.b32.xlu0 %v7797, 25
  %v7800 = vpop.permute.xlu0 %7799
  %v7802 = vadd.f32 %v7792, %v7800
  %v7803 = vtanh.pop %v7802
  %7805 = vrot.lane.b32.xlu0 %v7803, 25
  %v7806 = vpop.permute.xlu0 %7805
  %v7808 = vmul.f32 %v7790, %v7806
  %7810 = vrot.lane.b32.xlu0 %v7808, 78
  %v7811 = vpop.permute.xlu0 %7810
  %7813 = vst.msk [vmem:[#allocation2 + $0x2a] sm:$0x3] %vm5586, %v7811
  %v7814 = vsel %vm877, %v7811, 0
  %7816 = vmatprep.subr.mxu0 0.0
  %7817 = vmatpush1.msra.mxu0 %v5431
  %7818 = vmatprep.subr.mxu0 0.0
  %7819 = vmatpush1.msra.mxu0 %v5432
  %7820 = vmatprep.subr.mxu0 0.0
  %7821 = vmatpush1.msra.mxu0 %v5433
  %7822 = vmatprep.subr.mxu0 0.0
  %7823 = vmatpush1.msra.mxu0 %v5481
  %7824 = vmatprep.subr.mxu0 0.0
  %7825 = vmatpush1.msra.mxu0 0.0
  %7826 = vmatprep.subr.mxu0 0.0
  %7827 = vmatpush1.msra.mxu0 0.0
  %7828 = vmatprep.subr.mxu0 0.0
  %7829 = vmatpush1.msra.mxu0 0.0
  %7830 = vmatprep.subr.mxu0 0.0
  %7831 = vmatpush1.msra.mxu0 0.0
  %7832 = vmatprep.subr.mxu0 0.0
  %7833 = vmatpush1.msra.mxu0 0.0
  %7834 = vmatprep.subr.mxu0 0.0
  %7835 = vmatpush1.msra.mxu0 0.0
  %7836 = vmatprep.subr.mxu0 0.0
  %7837 = vmatpush1.msra.mxu0 0.0
  %7838 = vmatprep.subr.mxu0 0.0
  %7839 = vmatpush1.msra.mxu0 0.0
  %7840 = vmatprep.subr.mxu0 0.0
  %7841 = vmatpush1.msra.mxu0 0.0
  %7842 = vmatprep.subr.mxu0 0.0
  %7843 = vmatpush1.msra.mxu0 0.0
  %7844 = vmatprep.subr.mxu0 0.0
  %7845 = vmatpush1.msra.mxu0 0.0
  %7846 = vmatprep.subr.mxu0 0.0
  %7847 = vmatpush1.msra.mxu0 0.0
  %7848 = vmatprep.subr.mxu0 0.0
  %7849 = vmatpush1.msra.mxu0 0.0
  %7850 = vmatprep.subr.mxu0 0.0
  %7851 = vmatpush1.msra.mxu0 0.0
  %7852 = vmatprep.subr.mxu0 0.0
  %7853 = vmatpush1.msra.mxu0 0.0
  %7854 = vmatprep.subr.mxu0 0.0
  %7855 = vmatpush1.msra.mxu0 0.0
  %7856 = vmatprep.subr.mxu0 0.0
  %7857 = vmatpush1.msra.mxu0 0.0
  %7858 = vmatprep.subr.mxu0 0.0
  %7859 = vmatpush1.msra.mxu0 0.0
  %7860 = vmatprep.subr.mxu0 0.0
  %7861 = vmatpush1.msra.mxu0 0.0
  %7862 = vmatprep.subr.mxu0 0.0
  %7863 = vmatpush1.msra.mxu0 0.0
  %7864 = vmatprep.subr.mxu0 0.0
  %7865 = vmatpush1.msra.mxu0 0.0
  %7866 = vmatprep.subr.mxu0 0.0
  %7867 = vmatpush1.msra.mxu0 0.0
  %7868 = vmatprep.subr.mxu0 0.0
  %7869 = vmatpush1.msra.mxu0 0.0
  %7870 = vmatprep.subr.mxu0 0.0
  %7871 = vmatpush1.msra.mxu0 0.0
  %7872 = vmatprep.subr.mxu0 0.0
  %7873 = vmatpush1.msra.mxu0 0.0
  %7874 = vmatprep.subr.mxu0 0.0
  %7875 = vmatpush1.msra.mxu0 0.0
  %7876 = vmatprep.subr.mxu0 0.0
  %7877 = vmatpush1.msra.mxu0 0.0
  %7878 = vmatprep.subr.mxu0 0.0
  %7879 = vmatpush1.msra.mxu0 0.0
  %7880 = vmatprep.mubr.f32.mxu0 0.0
  %7881 = vmatmul.mubr.f32.gmra.mrb[0].mxu0 %v7814
  %v7882 = vpop.f32.mrb[0].mxu0
  %v7883 = vadd.f32 0.0, %v7882
  %v7884 = vpop.f32.mrb[0].mxu0
  %7885 = vdwg.mxu0
  %v7886 = vlaneseq
  %v7887 = vshrl.u32 %v7886, 7
  %v7888 = vsub.s32 6, %v7887
  %v7889 = vrot.slane %v5468, %v7888
  %v7890 = vadd.f32 %v7889, %v7883
  %v7891 = vxor.u32 %v7890, 2147483648
  %v7892 = vmul.f32 %v7891, 1.442695
  %v7893 = vpow.pop %v7892
  %v7894 = vadd.f32 %v7893, 1.0
  %v7895 = vrcp.pop %v7894
  %v7896 = vmul.f32 1.0, %v7895
  %v7897 = vtanh.pop %v7890
  %v7898 = vmul.f32 %v7896, %v7802
  %7900 = vrot.lane.b32.xlu0 %v7897, 53
  %v7901 = vpop.permute.xlu0 %7900
  %v7903 = vmul.f32 %v7896, %v7901
  %7905 = vrot.lane.b32.xlu0 %v7903, 25
  %v7906 = vpop.permute.xlu0 %7905
  %v7908 = vadd.f32 %v7898, %v7906
  %v7909 = vtanh.pop %v7908
  %7911 = vrot.lane.b32.xlu0 %v7909, 25
  %v7912 = vpop.permute.xlu0 %7911
  %v7914 = vmul.f32 %v7896, %v7912
  %7916 = vrot.lane.b32.xlu0 %v7914, 78
  %v7917 = vpop.permute.xlu0 %7916
  %7919 = vst.msk [vmem:[#allocation2 + $0x2c] sm:$0x3] %vm5586, %v7917
  %v7920 = vsel %vm877, %v7917, 0
  %7922 = vmatprep.subr.mxu0 0.0
  %7923 = vmatpush1.msra.mxu0 %v5431
  %7924 = vmatprep.subr.mxu0 0.0
  %7925 = vmatpush1.msra.mxu0 %v5432
  %7926 = vmatprep.subr.mxu0 0.0
  %7927 = vmatpush1.msra.mxu0 %v5433
  %7928 = vmatprep.subr.mxu0 0.0
  %7929 = vmatpush1.msra.mxu0 %v5481
  %7930 = vmatprep.subr.mxu0 0.0
  %7931 = vmatpush1.msra.mxu0 0.0
  %7932 = vmatprep.subr.mxu0 0.0
  %7933 = vmatpush1.msra.mxu0 0.0
  %7934 = vmatprep.subr.mxu0 0.0
  %7935 = vmatpush1.msra.mxu0 0.0
  %7936 = vmatprep.subr.mxu0 0.0
  %7937 = vmatpush1.msra.mxu0 0.0
  %7938 = vmatprep.subr.mxu0 0.0
  %7939 = vmatpush1.msra.mxu0 0.0
  %7940 = vmatprep.subr.mxu0 0.0
  %7941 = vmatpush1.msra.mxu0 0.0
  %7942 = vmatprep.subr.mxu0 0.0
  %7943 = vmatpush1.msra.mxu0 0.0
  %7944 = vmatprep.subr.mxu0 0.0
  %7945 = vmatpush1.msra.mxu0 0.0
  %7946 = vmatprep.subr.mxu0 0.0
  %7947 = vmatpush1.msra.mxu0 0.0
  %7948 = vmatprep.subr.mxu0 0.0
  %7949 = vmatpush1.msra.mxu0 0.0
  %7950 = vmatprep.subr.mxu0 0.0
  %7951 = vmatpush1.msra.mxu0 0.0
  %7952 = vmatprep.subr.mxu0 0.0
  %7953 = vmatpush1.msra.mxu0 0.0
  %7954 = vmatprep.subr.mxu0 0.0
  %7955 = vmatpush1.msra.mxu0 0.0
  %7956 = vmatprep.subr.mxu0 0.0
  %7957 = vmatpush1.msra.mxu0 0.0
  %7958 = vmatprep.subr.mxu0 0.0
  %7959 = vmatpush1.msra.mxu0 0.0
  %7960 = vmatprep.subr.mxu0 0.0
  %7961 = vmatpush1.msra.mxu0 0.0
  %7962 = vmatprep.subr.mxu0 0.0
  %7963 = vmatpush1.msra.mxu0 0.0
  %7964 = vmatprep.subr.mxu0 0.0
  %7965 = vmatpush1.msra.mxu0 0.0
  %7966 = vmatprep.subr.mxu0 0.0
  %7967 = vmatpush1.msra.mxu0 0.0
  %7968 = vmatprep.subr.mxu0 0.0
  %7969 = vmatpush1.msra.mxu0 0.0
  %7970 = vmatprep.subr.mxu0 0.0
  %7971 = vmatpush1.msra.mxu0 0.0
  %7972 = vmatprep.subr.mxu0 0.0
  %7973 = vmatpush1.msra.mxu0 0.0
  %7974 = vmatprep.subr.mxu0 0.0
  %7975 = vmatpush1.msra.mxu0 0.0
  %7976 = vmatprep.subr.mxu0 0.0
  %7977 = vmatpush1.msra.mxu0 0.0
  %7978 = vmatprep.subr.mxu0 0.0
  %7979 = vmatpush1.msra.mxu0 0.0
  %7980 = vmatprep.subr.mxu0 0.0
  %7981 = vmatpush1.msra.mxu0 0.0
  %7982 = vmatprep.subr.mxu0 0.0
  %7983 = vmatpush1.msra.mxu0 0.0
  %7984 = vmatprep.subr.mxu0 0.0
  %7985 = vmatpush1.msra.mxu0 0.0
  %7986 = vmatprep.mubr.f32.mxu0 0.0
  %7987 = vmatmul.mubr.f32.gmra.mrb[0].mxu0 %v7920
  %v7988 = vpop.f32.mrb[0].mxu0
  %v7989 = vadd.f32 0.0, %v7988
  %v7990 = vpop.f32.mrb[0].mxu0
  %7991 = vdwg.mxu0
  %v7992 = vlaneseq
  %v7993 = vshrl.u32 %v7992, 7
  %v7994 = vsub.s32 7, %v7993
  %v7995 = vrot.slane %v5468, %v7994
  %v7996 = vadd.f32 %v7995, %v7989
  %v7997 = vxor.u32 %v7996, 2147483648
  %v7998 = vmul.f32 %v7997, 1.442695
  %v7999 = vpow.pop %v7998
  %v8000 = vadd.f32 %v7999, 1.0
  %v8001 = vrcp.pop %v8000
  %v8002 = vmul.f32 1.0, %v8001
  %v8003 = vtanh.pop %v7996
  %v8004 = vmul.f32 %v8002, %v7908
  %8006 = vrot.lane.b32.xlu0 %v8003, 53
  %v8007 = vpop.permute.xlu0 %8006
  %v8009 = vmul.f32 %v8002, %v8007
  %8011 = vrot.lane.b32.xlu0 %v8009, 25
  %v8012 = vpop.permute.xlu0 %8011
  %v8014 = vadd.f32 %v8004, %v8012
  %v8015 = vtanh.pop %v8014
  %8017 = vrot.lane.b32.xlu0 %v8015, 25
  %v8018 = vpop.permute.xlu0 %8017
  %v8020 = vmul.f32 %v8002, %v8018
  %8022 = vrot.lane.b32.xlu0 %v8020, 78
  %v8023 = vpop.permute.xlu0 %8022
  %8025 = vst.msk [vmem:[#allocation2 + $0x2e] sm:$0x3] %vm5586, %v8023
  %v8026 = vsel %vm877, %v8023, 0
  %8028 = vmatprep.subr.mxu0 0.0
  %8029 = vmatpush1.msra.mxu0 %v5431
  %8030 = vmatprep.subr.mxu0 0.0
  %8031 = vmatpush1.msra.mxu0 %v5432
  %8032 = vmatprep.subr.mxu0 0.0
  %8033 = vmatpush1.msra.mxu0 %v5433
  %8034 = vmatprep.subr.mxu0 0.0
  %8035 = vmatpush1.msra.mxu0 %v5481
  %8036 = vmatprep.subr.mxu0 0.0
  %8037 = vmatpush1.msra.mxu0 0.0
  %8038 = vmatprep.subr.mxu0 0.0
  %8039 = vmatpush1.msra.mxu0 0.0
  %8040 = vmatprep.subr.mxu0 0.0
  %8041 = vmatpush1.msra.mxu0 0.0
  %8042 = vmatprep.subr.mxu0 0.0
  %8043 = vmatpush1.msra.mxu0 0.0
  %8044 = vmatprep.subr.mxu0 0.0
  %8045 = vmatpush1.msra.mxu0 0.0
  %8046 = vmatprep.subr.mxu0 0.0
  %8047 = vmatpush1.msra.mxu0 0.0
  %8048 = vmatprep.subr.mxu0 0.0
  %8049 = vmatpush1.msra.mxu0 0.0
  %8050 = vmatprep.subr.mxu0 0.0
  %8051 = vmatpush1.msra.mxu0 0.0
  %8052 = vmatprep.subr.mxu0 0.0
  %8053 = vmatpush1.msra.mxu0 0.0
  %8054 = vmatprep.subr.mxu0 0.0
  %8055 = vmatpush1.msra.mxu0 0.0
  %8056 = vmatprep.subr.mxu0 0.0
  %8057 = vmatpush1.msra.mxu0 0.0
  %8058 = vmatprep.subr.mxu0 0.0
  %8059 = vmatpush1.msra.mxu0 0.0
  %8060 = vmatprep.subr.mxu0 0.0
  %8061 = vmatpush1.msra.mxu0 0.0
  %8062 = vmatprep.subr.mxu0 0.0
  %8063 = vmatpush1.msra.mxu0 0.0
  %8064 = vmatprep.subr.mxu0 0.0
  %8065 = vmatpush1.msra.mxu0 0.0
  %8066 = vmatprep.subr.mxu0 0.0
  %8067 = vmatpush1.msra.mxu0 0.0
  %8068 = vmatprep.subr.mxu0 0.0
  %8069 = vmatpush1.msra.mxu0 0.0
  %8070 = vmatprep.subr.mxu0 0.0
  %8071 = vmatpush1.msra.mxu0 0.0
  %8072 = vmatprep.subr.mxu0 0.0
  %8073 = vmatpush1.msra.mxu0 0.0
  %8074 = vmatprep.subr.mxu0 0.0
  %8075 = vmatpush1.msra.mxu0 0.0
  %8076 = vmatprep.subr.mxu0 0.0
  %8077 = vmatpush1.msra.mxu0 0.0
  %8078 = vmatprep.subr.mxu0 0.0
  %8079 = vmatpush1.msra.mxu0 0.0
  %8080 = vmatprep.subr.mxu0 0.0
  %8081 = vmatpush1.msra.mxu0 0.0
  %8082 = vmatprep.subr.mxu0 0.0
  %8083 = vmatpush1.msra.mxu0 0.0
  %8084 = vmatprep.subr.mxu0 0.0
  %8085 = vmatpush1.msra.mxu0 0.0
  %8086 = vmatprep.subr.mxu0 0.0
  %8087 = vmatpush1.msra.mxu0 0.0
  %8088 = vmatprep.subr.mxu0 0.0
  %8089 = vmatpush1.msra.mxu0 0.0
  %8090 = vmatprep.subr.mxu0 0.0
  %8091 = vmatpush1.msra.mxu0 0.0
  %8092 = vmatprep.mubr.f32.mxu0 0.0
  %8093 = vmatmul.mubr.f32.gmra.mrb[0].mxu0 %v8026
  %v8094 = vpop.f32.mrb[0].mxu0
  %v8095 = vadd.f32 0.0, %v8094
  %v8096 = vpop.f32.mrb[0].mxu0
  %8097 = vdwg.mxu0
  %v8098 = vlaneseq
  %v8099 = vshrl.u32 %v8098, 7
  %v8100 = vsub.s32 0, %v8099
  %v8101 = vrot.slane %v5469, %v8100
  %v8102 = vadd.f32 %v8101, %v8095
  %v8103 = vxor.u32 %v8102, 2147483648
  %v8104 = vmul.f32 %v8103, 1.442695
  %v8105 = vpow.pop %v8104
  %v8106 = vadd.f32 %v8105, 1.0
  %v8107 = vrcp.pop %v8106
  %v8108 = vmul.f32 1.0, %v8107
  %v8109 = vtanh.pop %v8102
  %v8110 = vmul.f32 %v8108, %v8014
  %8112 = vrot.lane.b32.xlu0 %v8109, 53
  %v8113 = vpop.permute.xlu0 %8112
  %v8115 = vmul.f32 %v8108, %v8113
  %8117 = vrot.lane.b32.xlu0 %v8115, 25
  %v8118 = vpop.permute.xlu0 %8117
  %v8120 = vadd.f32 %v8110, %v8118
  %v8121 = vtanh.pop %v8120
  %8123 = vrot.lane.b32.xlu0 %v8121, 25
  %v8124 = vpop.permute.xlu0 %8123
  %v8126 = vmul.f32 %v8108, %v8124
  %8128 = vrot.lane.b32.xlu0 %v8126, 78
  %v8129 = vpop.permute.xlu0 %8128
  %8131 = vst.msk [vmem:[#allocation2 + $0x30] sm:$0x3] %vm5586, %v8129
  %v8132 = vsel %vm877, %v8129, 0
  %8134 = vmatprep.subr.mxu0 0.0
  %8135 = vmatpush1.msra.mxu0 %v5431
  %8136 = vmatprep.subr.mxu0 0.0
  %8137 = vmatpush1.msra.mxu0 %v5432
  %8138 = vmatprep.subr.mxu0 0.0
  %8139 = vmatpush1.msra.mxu0 %v5433
  %8140 = vmatprep.subr.mxu0 0.0
  %8141 = vmatpush1.msra.mxu0 %v5481
  %8142 = vmatprep.subr.mxu0 0.0
  %8143 = vmatpush1.msra.mxu0 0.0
  %8144 = vmatprep.subr.mxu0 0.0
  %8145 = vmatpush1.msra.mxu0 0.0
  %8146 = vmatprep.subr.mxu0 0.0
  %8147 = vmatpush1.msra.mxu0 0.0
  %8148 = vmatprep.subr.mxu0 0.0
  %8149 = vmatpush1.msra.mxu0 0.0
  %8150 = vmatprep.subr.mxu0 0.0
  %8151 = vmatpush1.msra.mxu0 0.0
  %8152 = vmatprep.subr.mxu0 0.0
  %8153 = vmatpush1.msra.mxu0 0.0
  %8154 = vmatprep.subr.mxu0 0.0
  %8155 = vmatpush1.msra.mxu0 0.0
  %8156 = vmatprep.subr.mxu0 0.0
  %8157 = vmatpush1.msra.mxu0 0.0
  %8158 = vmatprep.subr.mxu0 0.0
  %8159 = vmatpush1.msra.mxu0 0.0
  %8160 = vmatprep.subr.mxu0 0.0
  %8161 = vmatpush1.msra.mxu0 0.0
  %8162 = vmatprep.subr.mxu0 0.0
  %8163 = vmatpush1.msra.mxu0 0.0
  %8164 = vmatprep.subr.mxu0 0.0
  %8165 = vmatpush1.msra.mxu0 0.0
  %8166 = vmatprep.subr.mxu0 0.0
  %8167 = vmatpush1.msra.mxu0 0.0
  %8168 = vmatprep.subr.mxu0 0.0
  %8169 = vmatpush1.msra.mxu0 0.0
  %8170 = vmatprep.subr.mxu0 0.0
  %8171 = vmatpush1.msra.mxu0 0.0
  %8172 = vmatprep.subr.mxu0 0.0
  %8173 = vmatpush1.msra.mxu0 0.0
  %8174 = vmatprep.subr.mxu0 0.0
  %8175 = vmatpush1.msra.mxu0 0.0
  %8176 = vmatprep.subr.mxu0 0.0
  %8177 = vmatpush1.msra.mxu0 0.0
  %8178 = vmatprep.subr.mxu0 0.0
  %8179 = vmatpush1.msra.mxu0 0.0
  %8180 = vmatprep.subr.mxu0 0.0
  %8181 = vmatpush1.msra.mxu0 0.0
  %8182 = vmatprep.subr.mxu0 0.0
  %8183 = vmatpush1.msra.mxu0 0.0
  %8184 = vmatprep.subr.mxu0 0.0
  %8185 = vmatpush1.msra.mxu0 0.0
  %8186 = vmatprep.subr.mxu0 0.0
  %8187 = vmatpush1.msra.mxu0 0.0
  %8188 = vmatprep.subr.mxu0 0.0
  %8189 = vmatpush1.msra.mxu0 0.0
  %8190 = vmatprep.subr.mxu0 0.0
  %8191 = vmatpush1.msra.mxu0 0.0
  %8192 = vmatprep.subr.mxu0 0.0
  %8193 = vmatpush1.msra.mxu0 0.0
  %8194 = vmatprep.subr.mxu0 0.0
  %8195 = vmatpush1.msra.mxu0 0.0
  %8196 = vmatprep.subr.mxu0 0.0
  %8197 = vmatpush1.msra.mxu0 0.0
  %8198 = vmatprep.mubr.f32.mxu0 0.0
  %8199 = vmatmul.mubr.f32.gmra.mrb[0].mxu0 %v8132
  %v8200 = vpop.f32.mrb[0].mxu0
  %v8201 = vadd.f32 0.0, %v8200
  %v8202 = vpop.f32.mrb[0].mxu0
  %8203 = vdwg.mxu0
  %v8204 = vlaneseq
  %v8205 = vshrl.u32 %v8204, 7
  %v8206 = vsub.s32 1, %v8205
  %v8207 = vrot.slane %v5469, %v8206
  %v8208 = vadd.f32 %v8207, %v8201
  %v8209 = vxor.u32 %v8208, 2147483648
  %v8210 = vmul.f32 %v8209, 1.442695
  %v8211 = vpow.pop %v8210
  %v8212 = vadd.f32 %v8211, 1.0
  %v8213 = vrcp.pop %v8212
  %v8214 = vmul.f32 1.0, %v8213
  %v8215 = vtanh.pop %v8208
  %v8216 = vmul.f32 %v8214, %v8120
  %8218 = vrot.lane.b32.xlu0 %v8215, 53
  %v8219 = vpop.permute.xlu0 %8218
  %v8221 = vmul.f32 %v8214, %v8219
  %8223 = vrot.lane.b32.xlu0 %v8221, 25
  %v8224 = vpop.permute.xlu0 %8223
  %v8226 = vadd.f32 %v8216, %v8224
  %v8227 = vtanh.pop %v8226
  %8229 = vrot.lane.b32.xlu0 %v8227, 25
  %v8230 = vpop.permute.xlu0 %8229
  %v8232 = vmul.f32 %v8214, %v8230
  %8234 = vrot.lane.b32.xlu0 %v8232, 78
  %v8235 = vpop.permute.xlu0 %8234
  %8237 = vst.msk [vmem:[#allocation2 + $0x32] sm:$0x3] %vm5586, %v8235
  %v8238 = vsel %vm877, %v8235, 0
  %8240 = vmatprep.subr.mxu0 0.0
  %8241 = vmatpush1.msra.mxu0 %v5431
  %8242 = vmatprep.subr.mxu0 0.0
  %8243 = vmatpush1.msra.mxu0 %v5432
  %8244 = vmatprep.subr.mxu0 0.0
  %8245 = vmatpush1.msra.mxu0 %v5433
  %8246 = vmatprep.subr.mxu0 0.0
  %8247 = vmatpush1.msra.mxu0 %v5481
  %8248 = vmatprep.subr.mxu0 0.0
  %8249 = vmatpush1.msra.mxu0 0.0
  %8250 = vmatprep.subr.mxu0 0.0
  %8251 = vmatpush1.msra.mxu0 0.0
  %8252 = vmatprep.subr.mxu0 0.0
  %8253 = vmatpush1.msra.mxu0 0.0
  %8254 = vmatprep.subr.mxu0 0.0
  %8255 = vmatpush1.msra.mxu0 0.0
  %8256 = vmatprep.subr.mxu0 0.0
  %8257 = vmatpush1.msra.mxu0 0.0
  %8258 = vmatprep.subr.mxu0 0.0
  %8259 = vmatpush1.msra.mxu0 0.0
  %8260 = vmatprep.subr.mxu0 0.0
  %8261 = vmatpush1.msra.mxu0 0.0
  %8262 = vmatprep.subr.mxu0 0.0
  %8263 = vmatpush1.msra.mxu0 0.0
  %8264 = vmatprep.subr.mxu0 0.0
  %8265 = vmatpush1.msra.mxu0 0.0
  %8266 = vmatprep.subr.mxu0 0.0
  %8267 = vmatpush1.msra.mxu0 0.0
  %8268 = vmatprep.subr.mxu0 0.0
  %8269 = vmatpush1.msra.mxu0 0.0
  %8270 = vmatprep.subr.mxu0 0.0
  %8271 = vmatpush1.msra.mxu0 0.0
  %8272 = vmatprep.subr.mxu0 0.0
  %8273 = vmatpush1.msra.mxu0 0.0
  %8274 = vmatprep.subr.mxu0 0.0
  %8275 = vmatpush1.msra.mxu0 0.0
  %8276 = vmatprep.subr.mxu0 0.0
  %8277 = vmatpush1.msra.mxu0 0.0
  %8278 = vmatprep.subr.mxu0 0.0
  %8279 = vmatpush1.msra.mxu0 0.0
  %8280 = vmatprep.subr.mxu0 0.0
  %8281 = vmatpush1.msra.mxu0 0.0
  %8282 = vmatprep.subr.mxu0 0.0
  %8283 = vmatpush1.msra.mxu0 0.0
  %8284 = vmatprep.subr.mxu0 0.0
  %8285 = vmatpush1.msra.mxu0 0.0
  %8286 = vmatprep.subr.mxu0 0.0
  %8287 = vmatpush1.msra.mxu0 0.0
  %8288 = vmatprep.subr.mxu0 0.0
  %8289 = vmatpush1.msra.mxu0 0.0
  %8290 = vmatprep.subr.mxu0 0.0
  %8291 = vmatpush1.msra.mxu0 0.0
  %8292 = vmatprep.subr.mxu0 0.0
  %8293 = vmatpush1.msra.mxu0 0.0
  %8294 = vmatprep.subr.mxu0 0.0
  %8295 = vmatpush1.msra.mxu0 0.0
  %8296 = vmatprep.subr.mxu0 0.0
  %8297 = vmatpush1.msra.mxu0 0.0
  %8298 = vmatprep.subr.mxu0 0.0
  %8299 = vmatpush1.msra.mxu0 0.0
  %8300 = vmatprep.subr.mxu0 0.0
  %8301 = vmatpush1.msra.mxu0 0.0
  %8302 = vmatprep.subr.mxu0 0.0
  %8303 = vmatpush1.msra.mxu0 0.0
  %8304 = vmatprep.mubr.f32.mxu0 0.0
  %8305 = vmatmul.mubr.f32.gmra.mrb[0].mxu0 %v8238
  %v8306 = vpop.f32.mrb[0].mxu0
  %v8307 = vadd.f32 0.0, %v8306
  %v8308 = vpop.f32.mrb[0].mxu0
  %8309 = vdwg.mxu0
  %v8310 = vlaneseq
  %v8311 = vshrl.u32 %v8310, 7
  %v8312 = vsub.s32 2, %v8311
  %v8313 = vrot.slane %v5469, %v8312
  %v8314 = vadd.f32 %v8313, %v8307
  %v8315 = vxor.u32 %v8314, 2147483648
  %v8316 = vmul.f32 %v8315, 1.442695
  %v8317 = vpow.pop %v8316
  %v8318 = vadd.f32 %v8317, 1.0
  %v8319 = vrcp.pop %v8318
  %v8320 = vmul.f32 1.0, %v8319
  %v8321 = vtanh.pop %v8314
  %v8322 = vmul.f32 %v8320, %v8226
  %8324 = vrot.lane.b32.xlu0 %v8321, 53
  %v8325 = vpop.permute.xlu0 %8324
  %v8327 = vmul.f32 %v8320, %v8325
  %8329 = vrot.lane.b32.xlu0 %v8327, 25
  %v8330 = vpop.permute.xlu0 %8329
  %v8332 = vadd.f32 %v8322, %v8330
  %v8333 = vtanh.pop %v8332
  %8335 = vrot.lane.b32.xlu0 %v8333, 25
  %v8336 = vpop.permute.xlu0 %8335
  %v8338 = vmul.f32 %v8320, %v8336
  %8340 = vrot.lane.b32.xlu0 %v8338, 78
  %v8341 = vpop.permute.xlu0 %8340
  %8343 = vst.msk [vmem:[#allocation2 + $0x34] sm:$0x3] %vm5586, %v8341
  %v8344 = vsel %vm877, %v8341, 0
  %8346 = vmatprep.subr.mxu0 0.0
  %8347 = vmatpush1.msra.mxu0 %v5431
  %8348 = vmatprep.subr.mxu0 0.0
  %8349 = vmatpush1.msra.mxu0 %v5432
  %8350 = vmatprep.subr.mxu0 0.0
  %8351 = vmatpush1.msra.mxu0 %v5433
  %8352 = vmatprep.subr.mxu0 0.0
  %8353 = vmatpush1.msra.mxu0 %v5481
  %8354 = vmatprep.subr.mxu0 0.0
  %8355 = vmatpush1.msra.mxu0 0.0
  %8356 = vmatprep.subr.mxu0 0.0
  %8357 = vmatpush1.msra.mxu0 0.0
  %8358 = vmatprep.subr.mxu0 0.0
  %8359 = vmatpush1.msra.mxu0 0.0
  %8360 = vmatprep.subr.mxu0 0.0
  %8361 = vmatpush1.msra.mxu0 0.0
  %8362 = vmatprep.subr.mxu0 0.0
  %8363 = vmatpush1.msra.mxu0 0.0
  %8364 = vmatprep.subr.mxu0 0.0
  %8365 = vmatpush1.msra.mxu0 0.0
  %8366 = vmatprep.subr.mxu0 0.0
  %8367 = vmatpush1.msra.mxu0 0.0
  %8368 = vmatprep.subr.mxu0 0.0
  %8369 = vmatpush1.msra.mxu0 0.0
  %8370 = vmatprep.subr.mxu0 0.0
  %8371 = vmatpush1.msra.mxu0 0.0
  %8372 = vmatprep.subr.mxu0 0.0
  %8373 = vmatpush1.msra.mxu0 0.0
  %8374 = vmatprep.subr.mxu0 0.0
  %8375 = vmatpush1.msra.mxu0 0.0
  %8376 = vmatprep.subr.mxu0 0.0
  %8377 = vmatpush1.msra.mxu0 0.0
  %8378 = vmatprep.subr.mxu0 0.0
  %8379 = vmatpush1.msra.mxu0 0.0
  %8380 = vmatprep.subr.mxu0 0.0
  %8381 = vmatpush1.msra.mxu0 0.0
  %8382 = vmatprep.subr.mxu0 0.0
  %8383 = vmatpush1.msra.mxu0 0.0
  %8384 = vmatprep.subr.mxu0 0.0
  %8385 = vmatpush1.msra.mxu0 0.0
  %8386 = vmatprep.subr.mxu0 0.0
  %8387 = vmatpush1.msra.mxu0 0.0
  %8388 = vmatprep.subr.mxu0 0.0
  %8389 = vmatpush1.msra.mxu0 0.0
  %8390 = vmatprep.subr.mxu0 0.0
  %8391 = vmatpush1.msra.mxu0 0.0
  %8392 = vmatprep.subr.mxu0 0.0
  %8393 = vmatpush1.msra.mxu0 0.0
  %8394 = vmatprep.subr.mxu0 0.0
  %8395 = vmatpush1.msra.mxu0 0.0
  %8396 = vmatprep.subr.mxu0 0.0
  %8397 = vmatpush1.msra.mxu0 0.0
  %8398 = vmatprep.subr.mxu0 0.0
  %8399 = vmatpush1.msra.mxu0 0.0
  %8400 = vmatprep.subr.mxu0 0.0
  %8401 = vmatpush1.msra.mxu0 0.0
  %8402 = vmatprep.subr.mxu0 0.0
  %8403 = vmatpush1.msra.mxu0 0.0
  %8404 = vmatprep.subr.mxu0 0.0
  %8405 = vmatpush1.msra.mxu0 0.0
  %8406 = vmatprep.subr.mxu0 0.0
  %8407 = vmatpush1.msra.mxu0 0.0
  %8408 = vmatprep.subr.mxu0 0.0
  %8409 = vmatpush1.msra.mxu0 0.0
  %8410 = vmatprep.mubr.f32.mxu0 0.0
  %8411 = vmatmul.mubr.f32.gmra.mrb[0].mxu0 %v8344
  %v8412 = vpop.f32.mrb[0].mxu0
  %v8413 = vadd.f32 0.0, %v8412
  %v8414 = vpop.f32.mrb[0].mxu0
  %8415 = vdwg.mxu0
  %v8416 = vlaneseq
  %v8417 = vshrl.u32 %v8416, 7
  %v8418 = vsub.s32 3, %v8417
  %v8419 = vrot.slane %v5469, %v8418
  %v8420 = vadd.f32 %v8419, %v8413
  %v8421 = vxor.u32 %v8420, 2147483648
  %v8422 = vmul.f32 %v8421, 1.442695
  %v8423 = vpow.pop %v8422
  %v8424 = vadd.f32 %v8423, 1.0
  %v8425 = vrcp.pop %v8424
  %v8426 = vmul.f32 1.0, %v8425
  %v8427 = vtanh.pop %v8420
  %v8428 = vmul.f32 %v8426, %v8332
  %8430 = vrot.lane.b32.xlu0 %v8427, 53
  %v8431 = vpop.permute.xlu0 %8430
  %v8433 = vmul.f32 %v8426, %v8431
  %8435 = vrot.lane.b32.xlu0 %v8433, 25
  %v8436 = vpop.permute.xlu0 %8435
  %v8438 = vadd.f32 %v8428, %v8436
  %v8439 = vtanh.pop %v8438
  %8441 = vrot.lane.b32.xlu0 %v8439, 25
  %v8442 = vpop.permute.xlu0 %8441
  %v8444 = vmul.f32 %v8426, %v8442
  %8446 = vrot.lane.b32.xlu0 %v8444, 78
  %v8447 = vpop.permute.xlu0 %8446
  %8449 = vst.msk [vmem:[#allocation2 + $0x36] sm:$0x3] %vm5586, %v8447
  %v8450 = vsel %vm877, %v8447, 0
  %8452 = vmatprep.subr.mxu0 0.0
  %8453 = vmatpush1.msra.mxu0 %v5431
  %8454 = vmatprep.subr.mxu0 0.0
  %8455 = vmatpush1.msra.mxu0 %v5432
  %8456 = vmatprep.subr.mxu0 0.0
  %8457 = vmatpush1.msra.mxu0 %v5433
  %8458 = vmatprep.subr.mxu0 0.0
  %8459 = vmatpush1.msra.mxu0 %v5481
  %8460 = vmatprep.subr.mxu0 0.0
  %8461 = vmatpush1.msra.mxu0 0.0
  %8462 = vmatprep.subr.mxu0 0.0
  %8463 = vmatpush1.msra.mxu0 0.0
  %8464 = vmatprep.subr.mxu0 0.0
  %8465 = vmatpush1.msra.mxu0 0.0
  %8466 = vmatprep.subr.mxu0 0.0
  %8467 = vmatpush1.msra.mxu0 0.0
  %8468 = vmatprep.subr.mxu0 0.0
  %8469 = vmatpush1.msra.mxu0 0.0
  %8470 = vmatprep.subr.mxu0 0.0
  %8471 = vmatpush1.msra.mxu0 0.0
  %8472 = vmatprep.subr.mxu0 0.0
  %8473 = vmatpush1.msra.mxu0 0.0
  %8474 = vmatprep.subr.mxu0 0.0
  %8475 = vmatpush1.msra.mxu0 0.0
  %8476 = vmatprep.subr.mxu0 0.0
  %8477 = vmatpush1.msra.mxu0 0.0
  %8478 = vmatprep.subr.mxu0 0.0
  %8479 = vmatpush1.msra.mxu0 0.0
  %8480 = vmatprep.subr.mxu0 0.0
  %8481 = vmatpush1.msra.mxu0 0.0
  %8482 = vmatprep.subr.mxu0 0.0
  %8483 = vmatpush1.msra.mxu0 0.0
  %8484 = vmatprep.subr.mxu0 0.0
  %8485 = vmatpush1.msra.mxu0 0.0
  %8486 = vmatprep.subr.mxu0 0.0
  %8487 = vmatpush1.msra.mxu0 0.0
  %8488 = vmatprep.subr.mxu0 0.0
  %8489 = vmatpush1.msra.mxu0 0.0
  %8490 = vmatprep.subr.mxu0 0.0
  %8491 = vmatpush1.msra.mxu0 0.0
  %8492 = vmatprep.subr.mxu0 0.0
  %8493 = vmatpush1.msra.mxu0 0.0
  %8494 = vmatprep.subr.mxu0 0.0
  %8495 = vmatpush1.msra.mxu0 0.0
  %8496 = vmatprep.subr.mxu0 0.0
  %8497 = vmatpush1.msra.mxu0 0.0
  %8498 = vmatprep.subr.mxu0 0.0
  %8499 = vmatpush1.msra.mxu0 0.0
  %8500 = vmatprep.subr.mxu0 0.0
  %8501 = vmatpush1.msra.mxu0 0.0
  %8502 = vmatprep.subr.mxu0 0.0
  %8503 = vmatpush1.msra.mxu0 0.0
  %8504 = vmatprep.subr.mxu0 0.0
  %8505 = vmatpush1.msra.mxu0 0.0
  %8506 = vmatprep.subr.mxu0 0.0
  %8507 = vmatpush1.msra.mxu0 0.0
  %8508 = vmatprep.subr.mxu0 0.0
  %8509 = vmatpush1.msra.mxu0 0.0
  %8510 = vmatprep.subr.mxu0 0.0
  %8511 = vmatpush1.msra.mxu0 0.0
  %8512 = vmatprep.subr.mxu0 0.0
  %8513 = vmatpush1.msra.mxu0 0.0
  %8514 = vmatprep.subr.mxu0 0.0
  %8515 = vmatpush1.msra.mxu0 0.0
  %8516 = vmatprep.mubr.f32.mxu0 0.0
  %8517 = vmatmul.mubr.f32.gmra.mrb[0].mxu0 %v8450
  %v8518 = vpop.f32.mrb[0].mxu0
  %v8519 = vadd.f32 0.0, %v8518
  %v8520 = vpop.f32.mrb[0].mxu0
  %8521 = vdwg.mxu0
  %v8522 = vlaneseq
  %v8523 = vshrl.u32 %v8522, 7
  %v8524 = vsub.s32 4, %v8523
  %v8525 = vrot.slane %v5469, %v8524
  %v8526 = vadd.f32 %v8525, %v8519
  %v8527 = vxor.u32 %v8526, 2147483648
  %v8528 = vmul.f32 %v8527, 1.442695
  %v8529 = vpow.pop %v8528
  %v8530 = vadd.f32 %v8529, 1.0
  %v8531 = vrcp.pop %v8530
  %v8532 = vmul.f32 1.0, %v8531
  %v8533 = vtanh.pop %v8526
  %v8534 = vmul.f32 %v8532, %v8438
  %8536 = vrot.lane.b32.xlu0 %v8533, 53
  %v8537 = vpop.permute.xlu0 %8536
  %v8539 = vmul.f32 %v8532, %v8537
  %8541 = vrot.lane.b32.xlu0 %v8539, 25
  %v8542 = vpop.permute.xlu0 %8541
  %v8544 = vadd.f32 %v8534, %v8542
  %v8545 = vtanh.pop %v8544
  %8547 = vrot.lane.b32.xlu0 %v8545, 25
  %v8548 = vpop.permute.xlu0 %8547
  %v8550 = vmul.f32 %v8532, %v8548
  %8552 = vrot.lane.b32.xlu0 %v8550, 78
  %v8553 = vpop.permute.xlu0 %8552
  %8555 = vst.msk [vmem:[#allocation2 + $0x38] sm:$0x3] %vm5586, %v8553
  %v8556 = vsel %vm877, %v8553, 0
  %8558 = vmatprep.subr.mxu0 0.0
  %8559 = vmatpush1.msra.mxu0 %v5431
  %8560 = vmatprep.subr.mxu0 0.0
  %8561 = vmatpush1.msra.mxu0 %v5432
  %8562 = vmatprep.subr.mxu0 0.0
  %8563 = vmatpush1.msra.mxu0 %v5433
  %8564 = vmatprep.subr.mxu0 0.0
  %8565 = vmatpush1.msra.mxu0 %v5481
  %8566 = vmatprep.subr.mxu0 0.0
  %8567 = vmatpush1.msra.mxu0 0.0
  %8568 = vmatprep.subr.mxu0 0.0
  %8569 = vmatpush1.msra.mxu0 0.0
  %8570 = vmatprep.subr.mxu0 0.0
  %8571 = vmatpush1.msra.mxu0 0.0
  %8572 = vmatprep.subr.mxu0 0.0
  %8573 = vmatpush1.msra.mxu0 0.0
  %8574 = vmatprep.subr.mxu0 0.0
  %8575 = vmatpush1.msra.mxu0 0.0
  %8576 = vmatprep.subr.mxu0 0.0
  %8577 = vmatpush1.msra.mxu0 0.0
  %8578 = vmatprep.subr.mxu0 0.0
  %8579 = vmatpush1.msra.mxu0 0.0
  %8580 = vmatprep.subr.mxu0 0.0
  %8581 = vmatpush1.msra.mxu0 0.0
  %8582 = vmatprep.subr.mxu0 0.0
  %8583 = vmatpush1.msra.mxu0 0.0
  %8584 = vmatprep.subr.mxu0 0.0
  %8585 = vmatpush1.msra.mxu0 0.0
  %8586 = vmatprep.subr.mxu0 0.0
  %8587 = vmatpush1.msra.mxu0 0.0
  %8588 = vmatprep.subr.mxu0 0.0
  %8589 = vmatpush1.msra.mxu0 0.0
  %8590 = vmatprep.subr.mxu0 0.0
  %8591 = vmatpush1.msra.mxu0 0.0
  %8592 = vmatprep.subr.mxu0 0.0
  %8593 = vmatpush1.msra.mxu0 0.0
  %8594 = vmatprep.subr.mxu0 0.0
  %8595 = vmatpush1.msra.mxu0 0.0
  %8596 = vmatprep.subr.mxu0 0.0
  %8597 = vmatpush1.msra.mxu0 0.0
  %8598 = vmatprep.subr.mxu0 0.0
  %8599 = vmatpush1.msra.mxu0 0.0
  %8600 = vmatprep.subr.mxu0 0.0
  %8601 = vmatpush1.msra.mxu0 0.0
  %8602 = vmatprep.subr.mxu0 0.0
  %8603 = vmatpush1.msra.mxu0 0.0
  %8604 = vmatprep.subr.mxu0 0.0
  %8605 = vmatpush1.msra.mxu0 0.0
  %8606 = vmatprep.subr.mxu0 0.0
  %8607 = vmatpush1.msra.mxu0 0.0
  %8608 = vmatprep.subr.mxu0 0.0
  %8609 = vmatpush1.msra.mxu0 0.0
  %8610 = vmatprep.subr.mxu0 0.0
  %8611 = vmatpush1.msra.mxu0 0.0
  %8612 = vmatprep.subr.mxu0 0.0
  %8613 = vmatpush1.msra.mxu0 0.0
  %8614 = vmatprep.subr.mxu0 0.0
  %8615 = vmatpush1.msra.mxu0 0.0
  %8616 = vmatprep.subr.mxu0 0.0
  %8617 = vmatpush1.msra.mxu0 0.0
  %8618 = vmatprep.subr.mxu0 0.0
  %8619 = vmatpush1.msra.mxu0 0.0
  %8620 = vmatprep.subr.mxu0 0.0
  %8621 = vmatpush1.msra.mxu0 0.0
  %8622 = vmatprep.mubr.f32.mxu0 0.0
  %8623 = vmatmul.mubr.f32.gmra.mrb[0].mxu0 %v8556
  %v8624 = vpop.f32.mrb[0].mxu0
  %v8625 = vadd.f32 0.0, %v8624
  %v8626 = vpop.f32.mrb[0].mxu0
  %8627 = vdwg.mxu0
  %v8628 = vlaneseq
  %v8629 = vshrl.u32 %v8628, 7
  %v8630 = vsub.s32 5, %v8629
  %v8631 = vrot.slane %v5469, %v8630
  %v8632 = vadd.f32 %v8631, %v8625
  %v8633 = vxor.u32 %v8632, 2147483648
  %v8634 = vmul.f32 %v8633, 1.442695
  %v8635 = vpow.pop %v8634
  %v8636 = vadd.f32 %v8635, 1.0
  %v8637 = vrcp.pop %v8636
  %v8638 = vmul.f32 1.0, %v8637
  %v8639 = vtanh.pop %v8632
  %v8640 = vmul.f32 %v8638, %v8544
  %8642 = vrot.lane.b32.xlu0 %v8639, 53
  %v8643 = vpop.permute.xlu0 %8642
  %v8645 = vmul.f32 %v8638, %v8643
  %8647 = vrot.lane.b32.xlu0 %v8645, 25
  %v8648 = vpop.permute.xlu0 %8647
  %v8650 = vadd.f32 %v8640, %v8648
  %v8651 = vtanh.pop %v8650
  %8653 = vrot.lane.b32.xlu0 %v8651, 25
  %v8654 = vpop.permute.xlu0 %8653
  %v8656 = vmul.f32 %v8638, %v8654
  %8658 = vrot.lane.b32.xlu0 %v8656, 78
  %v8659 = vpop.permute.xlu0 %8658
  %8661 = vst.msk [vmem:[#allocation2 + $0x3a] sm:$0x3] %vm5586, %v8659
  %v8662 = vld [vmem:[#allocation2] sm:$0xff]
  %v8663 = vld [vmem:[#allocation2 + $0x8] sm:$0xff]
  %v8664 = vld [vmem:[#allocation2 + $0x10] sm:$0xff]
  %v8665 = vld [vmem:[#allocation2 + $0x18] sm:$0xff]
  %v8666 = vld [vmem:[#allocation2 + $0x20] sm:$0xff]
  %v8667 = vld [vmem:[#allocation2 + $0x28] sm:$0xff]
  %v8668 = vld [vmem:[#allocation2 + $0x30] sm:$0xff]
  %v8669 = vld [vmem:[#allocation2 + $0x38] sm:$0xf]
  %v8670 = vld [vmem:[%s16] sm:$0xff]
  %v8671 = vld [vmem:[%s16 + $0x8] sm:$0xff]
  %v8672 = vld [vmem:[%s16 + $0x10] sm:$0xff]
  %v8673 = vld [vmem:[%s16 + $0x18] sm:$0x1]
  %v8674 = vld [vmem:[%s17] sm:$0x1]
  %v8676 = vlaneseq
  %v8677 = vshrl.u32 %v8676, 7
  %v8678 = vsub.s32 0, %v8677
  %v8679 = vrot.slane %v8674, %v8678
  %v8682 = vsel %vm877, %v8662, 0
  %v8685 = vsel %vm877, %v8663, 0
  %v8688 = vsel %vm877, %v8664, 0
  %v8691 = vsel %vm877, %v8665, 0
  %v8694 = vsel %vm877, %v8666, 0
  %v8697 = vsel %vm877, %v8667, 0
  %v8700 = vsel %vm877, %v8668, 0
  %v8703 = vsel %vm877, %v8669, 0
  %v8706 = vsel %vm302, %v8673, 0
  %8708 = vmatprep.subr.mxu0 0.0
  %8709 = vmatpush1.msra.mxu0 %v8670
  %8710 = vmatprep.subr.mxu0 0.0
  %8711 = vmatpush1.msra.mxu0 %v8671
  %8712 = vmatprep.subr.mxu0 0.0
  %8713 = vmatpush1.msra.mxu0 %v8672
  %8714 = vmatprep.subr.mxu0 0.0
  %8715 = vmatpush1.msra.mxu0 %v8706
  %8716 = vmatprep.subr.mxu0 0.0
  %8717 = vmatpush1.msra.mxu0 0.0
  %8718 = vmatprep.subr.mxu0 0.0
  %8719 = vmatpush1.msra.mxu0 0.0
  %8720 = vmatprep.subr.mxu0 0.0
  %8721 = vmatpush1.msra.mxu0 0.0
  %8722 = vmatprep.subr.mxu0 0.0
  %8723 = vmatpush1.msra.mxu0 0.0
  %8724 = vmatprep.subr.mxu0 0.0
  %8725 = vmatpush1.msra.mxu0 0.0
  %8726 = vmatprep.subr.mxu0 0.0
  %8727 = vmatpush1.msra.mxu0 0.0
  %8728 = vmatprep.subr.mxu0 0.0
  %8729 = vmatpush1.msra.mxu0 0.0
  %8730 = vmatprep.subr.mxu0 0.0
  %8731 = vmatpush1.msra.mxu0 0.0
  %8732 = vmatprep.subr.mxu0 0.0
  %8733 = vmatpush1.msra.mxu0 0.0
  %8734 = vmatprep.subr.mxu0 0.0
  %8735 = vmatpush1.msra.mxu0 0.0
  %8736 = vmatprep.subr.mxu0 0.0
  %8737 = vmatpush1.msra.mxu0 0.0
  %8738 = vmatprep.subr.mxu0 0.0
  %8739 = vmatpush1.msra.mxu0 0.0
  %8740 = vmatprep.subr.mxu0 0.0
  %8741 = vmatpush1.msra.mxu0 0.0
  %8742 = vmatprep.subr.mxu0 0.0
  %8743 = vmatpush1.msra.mxu0 0.0
  %8744 = vmatprep.subr.mxu0 0.0
  %8745 = vmatpush1.msra.mxu0 0.0
  %8746 = vmatprep.subr.mxu0 0.0
  %8747 = vmatpush1.msra.mxu0 0.0
  %8748 = vmatprep.subr.mxu0 0.0
  %8749 = vmatpush1.msra.mxu0 0.0
  %8750 = vmatprep.subr.mxu0 0.0
  %8751 = vmatpush1.msra.mxu0 0.0
  %8752 = vmatprep.subr.mxu0 0.0
  %8753 = vmatpush1.msra.mxu0 0.0
  %8754 = vmatprep.subr.mxu0 0.0
  %8755 = vmatpush1.msra.mxu0 0.0
  %8756 = vmatprep.subr.mxu0 0.0
  %8757 = vmatpush1.msra.mxu0 0.0
  %8758 = vmatprep.subr.mxu0 0.0
  %8759 = vmatpush1.msra.mxu0 0.0
  %8760 = vmatprep.subr.mxu0 0.0
  %8761 = vmatpush1.msra.mxu0 0.0
  %8762 = vmatprep.subr.mxu0 0.0
  %8763 = vmatpush1.msra.mxu0 0.0
  %8764 = vmatprep.subr.mxu0 0.0
  %8765 = vmatpush1.msra.mxu0 0.0
  %8766 = vmatprep.subr.mxu0 0.0
  %8767 = vmatpush1.msra.mxu0 0.0
  %8768 = vmatprep.subr.mxu0 0.0
  %8769 = vmatpush1.msra.mxu0 0.0
  %8770 = vmatprep.subr.mxu0 0.0
  %8771 = vmatpush1.msra.mxu0 0.0
  %8772 = vmatprep.mubr.f32.mxu0 0.0
  %8773 = vmatmul.mubr.f32.gmra.mrb[0].mxu0 %v8682
  %v8774 = vpop.f32.mrb[0].mxu0
  %v8775 = vadd.f32 %v8679, %v8774
  %v8776 = vpop.f32.mrb[0].mxu0
  %8777 = vmatprep.mubr.f32.mxu0 0.0
  %8778 = vmatmul.mubr.f32.gmra.mrb[0].mxu0 %v8685
  %v8779 = vpop.f32.mrb[0].mxu0
  %v8780 = vadd.f32 %v8679, %v8779
  %v8781 = vpop.f32.mrb[0].mxu0
  %8782 = vmatprep.mubr.f32.mxu0 0.0
  %8783 = vmatmul.mubr.f32.gmra.mrb[0].mxu0 %v8688
  %v8784 = vpop.f32.mrb[0].mxu0
  %v8785 = vadd.f32 %v8679, %v8784
  %v8786 = vpop.f32.mrb[0].mxu0
  %8787 = vmatprep.mubr.f32.mxu0 0.0
  %8788 = vmatmul.mubr.f32.gmra.mrb[0].mxu0 %v8691
  %v8789 = vpop.f32.mrb[0].mxu0
  %v8790 = vadd.f32 %v8679, %v8789
  %v8791 = vpop.f32.mrb[0].mxu0
  %8792 = vmatprep.mubr.f32.mxu0 0.0
  %8793 = vmatmul.mubr.f32.gmra.mrb[0].mxu0 %v8694
  %v8794 = vpop.f32.mrb[0].mxu0
  %v8795 = vadd.f32 %v8679, %v8794
  %v8796 = vpop.f32.mrb[0].mxu0
  %8797 = vmatprep.mubr.f32.mxu0 0.0
  %8798 = vmatmul.mubr.f32.gmra.mrb[0].mxu0 %v8697
  %v8799 = vpop.f32.mrb[0].mxu0
  %v8800 = vadd.f32 %v8679, %v8799
  %v8801 = vpop.f32.mrb[0].mxu0
  %8802 = vmatprep.mubr.f32.mxu0 0.0
  %8803 = vmatmul.mubr.f32.gmra.mrb[0].mxu0 %v8700
  %v8804 = vpop.f32.mrb[0].mxu0
  %v8805 = vadd.f32 %v8679, %v8804
  %v8806 = vpop.f32.mrb[0].mxu0
  %8807 = vmatprep.mubr.f32.mxu0 0.0
  %8808 = vmatmul.mubr.f32.gmra.mrb[0].mxu0 %v8703
  %v8809 = vpop.f32.mrb[0].mxu0
  %v8810 = vadd.f32 %v8679, %v8809
  %v8811 = vpop.f32.mrb[0].mxu0
  %8812 = vdwg.mxu0
  %vm8813 = vcmask 15360
  %8814 = vst.msk [vmem:[%s18] sm:$0xff] %vm8813, %v8775
  %8815 = vst.msk [vmem:[%s18 + $0x8] sm:$0xff] %vm8813, %v8780
  %8816 = vst.msk [vmem:[%s18 + $0x10] sm:$0xff] %vm8813, %v8785
  %8817 = vst.msk [vmem:[%s18 + $0x18] sm:$0xff] %vm8813, %v8790
  %8818 = vst.msk [vmem:[%s18 + $0x20] sm:$0xff] %vm8813, %v8795
  %8819 = vst.msk [vmem:[%s18 + $0x28] sm:$0xff] %vm8813, %v8800
  %8820 = vst.msk [vmem:[%s18 + $0x30] sm:$0xff] %vm8813, %v8805
  %vm8821 = vcmask 11264
  %8822 = vst.msk [vmem:[%s18 + $0x38] sm:$0xf] %vm8821, %v8810
  // Predicated region
  $region74: #{my_model_forward.1} parent=0 // pred_check
    _
  $region75: #{my_model_forward.1} parent=0 // pred_check_branch
    %8824 = sbr.rel (0) target = $region77
  $region76: #{my_model_forward.1} parent=0 // pred_region
    _
  $region77: #{my_model_forward.1} parent=0 // pred_fallthru
    _
  // Predicated region
  $region78: #{my_model_forward.1} parent=0 // pred_check
    _
  $region79: #{my_model_forward.1} parent=0 // pred_check_branch
    %8826 = sbr.rel (0) target = $region81
  $region80: #{my_model_forward.1} parent=0 // pred_region
    _
  $region81: #{my_model_forward.1} parent=0 // pred_fallthru
    _

</llo_original>
